<compile_context>
chip_gen: v7x
topology: tpu7x:2x2x1
jax: 0.10.0
libtpu: 0.0.40
codegen_flags: <defaults>
</compile_context>

<pallas_src>
import numpy as np

import jax
import jax.numpy as jnp
from jax.experimental import pallas as pl
from jax.experimental.pallas import tpu as pltpu


# ---------------------------------------------------------------------------
# Constant 0/1 tap-gather matrices (built in numpy at trace time).
# g[t, out_pos, in_pos] = 1 iff output position out_pos reads input position
# in_pos for tap t = kh*3 + kw (zero rows where the tap falls in the padding).
# ---------------------------------------------------------------------------
def _conv_gather(in_h, in_w, k, stride, padding, dilation=1):
    out_h = (in_h + 2 * padding - dilation * (k - 1) - 1) // stride + 1
    out_w = (in_w + 2 * padding - dilation * (k - 1) - 1) // stride + 1
    g = np.zeros((k * k, out_h * out_w, in_h * in_w), np.float32)
    for kh in range(k):
        for kw in range(k):
            t = kh * k + kw
            for oh in range(out_h):
                ih = oh * stride + kh * dilation - padding
                if not (0 <= ih < in_h):
                    continue
                for ow in range(out_w):
                    iw = ow * stride + kw * dilation - padding
                    if 0 <= iw < in_w:
                        g[t, oh * out_w + ow, ih * in_w + iw] = 1.0
    return g, out_h, out_w


def _two_core_chip():
    """True on chips with 2 TensorCores (v7x); safe fallback elsewhere."""
    try:
        kind = jax.devices()[0].device_kind.lower()
    except Exception:
        return False
    return ("v7" in kind) or ("7x" in kind)


# ---------------------------------------------------------------------------
# The fused kernel: one grid step processes `ips` images; everything stays
# on-chip, activations are channels-last (channels on the lane axis).
# ---------------------------------------------------------------------------
def _net_kernel(cols1_ref, w1_ref, b1_ref,
                g2_ref, w2_ref, b2_ref,
                gd_ref, wd_ref, bd_ref,
                wp_ref, bp_ref,
                g3_ref, w3_ref, b3_ref,
                wf_ref, bf_ref,
                o_ref):
    f32, bf16 = jnp.float32, jnp.bfloat16
    ips, p1, kc1 = cols1_ref.shape            # images per step, 256, 27

    def mm(a, b):                              # bf16 x bf16 -> f32 accumulate
        return jnp.dot(a, b, preferred_element_type=f32)

    # --- conv1 (3x3, stride 2): whole-step batch as ONE GEMM (M = ips*256).
    a1 = mm(cols1_ref[...].reshape(ips * p1, kc1), w1_ref[...])
    a1 = jnp.maximum(a1 + b1_ref[...], 0.0)                      # (ips*256, 16) f32

    def im2col(g_ref, act, rows_in):
        # act: (ips*rows_in, C) f32 -> (ips*rows_out, 9*C) bf16.
        # 9 *independent* 0/1 gather matmuls per image (exact in bf16), taps
        # concatenated along lanes so the conv below is ONE K=9*C GEMM.
        act = act.astype(bf16)
        blocks = []
        for i in range(ips):
            a_i = act[i * rows_in:(i + 1) * rows_in]
            taps = [mm(g_ref[t], a_i) for t in range(9)]
            blocks.append(jnp.concatenate(taps, axis=1))
        return jnp.concatenate(blocks, axis=0).astype(bf16)

    # --- conv2 (3x3, stride 2): (ips*64, 144) @ (144, 32) single GEMM.
    a2 = jnp.maximum(mm(im2col(g2_ref, a1, p1), w2_ref[...]) + b2_ref[...], 0.0)

    # --- depthwise 3x3 stride 2: 9 gathered VPU multiply-accumulates.
    a2b = a2.astype(bf16)
    rows2 = a2.shape[0] // ips                                    # 64
    dw_blocks = []
    for i in range(ips):
        a_i = a2b[i * rows2:(i + 1) * rows2]
        acc = mm(gd_ref[0], a_i) * wd_ref[0]
        for t in range(1, 9):
            acc = acc + mm(gd_ref[t], a_i) * wd_ref[t]
        dw_blocks.append(acc)
    a_dw = jnp.maximum(jnp.concatenate(dw_blocks, axis=0) + bd_ref[...], 0.0)  # (ips*16, 32)

    # --- pointwise 1x1.
    a_pw = jnp.maximum(mm(a_dw.astype(bf16), wp_ref[...]) + bp_ref[...], 0.0)  # (ips*16, 64)

    # --- conv3 (3x3, dilation 2, pad 2): (ips*16, 576) @ (576, 128) GEMM.
    rows3 = a_pw.shape[0] // ips                                  # 16
    a3 = jnp.maximum(mm(im2col(g3_ref, a_pw, rows3), w3_ref[...]) + b3_ref[...], 0.0)

    # --- AdaptiveAvgPool2d(1) + fc (zero-padded to a lane-dense 128 store).
    pooled = jnp.concatenate(
        [jnp.mean(a3[i * rows3:(i + 1) * rows3], axis=0, keepdims=True)
         for i in range(ips)], axis=0)                            # (ips, 128) f32
    logits = mm(pooled.astype(bf16), wf_ref[...]) + bf_ref[...]   # (ips, 128) f32
    o_ref[...] = logits[:, None, :]


def _fixed_spec(arr):
    """Full-array block re-used (block index 0) at every grid step."""
    zeros = (0,) * arr.ndim
    return pl.BlockSpec(arr.shape, lambda n, _z=zeros: _z)


# ---------------------------------------------------------------------------
# Forward pass (matches Net.forward).  Wrapper glue: pad + one constant-index
# gather for the conv1 patches, weight/gather constant prep, one pallas_call.
# ---------------------------------------------------------------------------
def forward(x, p):
    N, Cin, H, W = x.shape
    f32, bf16 = jnp.float32, jnp.bfloat16

    H1, W1 = (H + 2 - 3) // 2 + 1, (W + 2 - 3) // 2 + 1           # 16, 16
    Hp, Wp = H + 2, W + 2

    # conv1 im2col as ONE gather with a constant index table straight from the
    # padded NCHW tensor (no transpose / 9 slices / stack in the XLA wrapper).
    idx = np.empty((H1 * W1, 9 * Cin), np.int32)
    for oh in range(H1):
        for ow in range(W1):
            o = oh * W1 + ow
            for kh in range(3):
                for kw in range(3):
                    for c in range(Cin):
                        idx[o, (kh * 3 + kw) * Cin + c] = (
                            c * Hp * Wp + (2 * oh + kh) * Wp + (2 * ow + kw))
    xp = jnp.pad(x, ((0, 0), (0, 0), (1, 1), (1, 1))).reshape(N, Cin * Hp * Wp)
    cols1 = jnp.take(xp, jnp.asarray(idx.reshape(-1)), axis=1)
    cols1 = cols1.reshape(N, H1 * W1, 9 * Cin).astype(bf16)       # (N, 256, 27)

    # Constant 0/1 tap-gather matrices (exact in bf16: pure selection).
    g2_np, H2, W2 = _conv_gather(H1, W1, 3, 2, 1)                 # (9, 64, 256)
    gd_np, H3, W3 = _conv_gather(H2, W2, 3, 2, 1)                 # (9, 16,  64)
    g3_np, H4, W4 = _conv_gather(H3, W3, 3, 1, 2, dilation=2)     # (9, 16,  16)
    g2 = jnp.asarray(g2_np, bf16)
    gd = jnp.asarray(gd_np, bf16)
    g3 = jnp.asarray(g3_np, bf16)

    # Weights: channels-last, tap-major; MXU operands bf16, biases/VPU f32.
    w1 = jnp.transpose(p["conv1_w"], (2, 3, 1, 0)).reshape(9 * Cin, 16).astype(bf16)
    b1 = p["conv1_b"].reshape(1, 16)
    w2 = jnp.transpose(p["conv2_w"], (2, 3, 1, 0)).reshape(9 * 16, 32).astype(bf16)
    b2 = p["conv2_b"].reshape(1, 32)
    wd = jnp.transpose(p["dw_w"].reshape(32, 9), (1, 0)).reshape(9, 1, 32)   # f32 (VPU)
    bd = p["dw_b"].reshape(1, 32)
    wp = p["pw_w"].reshape(64, 32).T.astype(bf16)
    bp = p["pw_b"].reshape(1, 64)
    w3 = jnp.transpose(p["conv3_w"], (2, 3, 1, 0)).reshape(9 * 64, 128).astype(bf16)
    b3 = p["conv3_b"].reshape(1, 128)
    # fc padded to 128 output lanes so the only HBM store is lane-dense.
    wf = jnp.zeros((128, 128), bf16).at[:, :10].set(p["fc_w"].T.astype(bf16))
    bf = jnp.zeros((1, 128), f32).at[:, :10].set(p["fc_b"].reshape(1, 10))

    # grid=1 with the batch stacked along M on single-TC chips (v5e/v6e);
    # grid=(N,) "parallel" so images land on the 2 TensorCores on v7x.
    ips = 1 if (_two_core_chip() and N > 1) else N

    operands = (cols1, w1, b1, g2, w2, b2, gd, wd, bd, wp, bp, g3, w3, b3, wf, bf)
    in_specs = [pl.BlockSpec((ips, H1 * W1, 9 * Cin), lambda n: (n, 0, 0))]
    in_specs += [_fixed_spec(a) for a in operands[1:]]

    p1, p2, p3, p4 = H1 * W1, H2 * W2, H3 * W3, H4 * W4
    flops = N * (
        p1 * 9 * Cin * 16 * 2 +            # conv1 GEMM
        9 * p2 * p1 * 16 * 2 +             # conv2 tap gathers
        p2 * 9 * 16 * 32 * 2 +             # conv2 GEMM
        9 * p3 * p2 * 32 * 2 +             # depthwise tap gathers
        p3 * 32 * 9 * 2 +                  # depthwise MACs
        p3 * 32 * 64 * 2 +                 # pointwise
        9 * p4 * p3 * 64 * 2 +             # conv3 tap gathers
        p4 * 9 * 64 * 128 * 2 +            # conv3 GEMM
        128 * 128 * 2)                     # fc
    bytes_accessed = sum(int(np.prod(a.shape)) * a.dtype.itemsize for a in operands)
    bytes_accessed += N * 128 * 4

    out = pl.pallas_call(
        _net_kernel,
        out_shape=jax.ShapeDtypeStruct((N, 1, 128), f32),
        grid=(N // ips,),
        in_specs=in_specs,
        out_specs=pl.BlockSpec((ips, 1, 128), lambda n: (n, 0, 0)),
        compiler_params=pltpu.CompilerParams(
            dimension_semantics=("parallel",)),
        cost_estimate=pl.CostEstimate(
            flops=int(flops), transcendentals=0,
            bytes_accessed=int(bytes_accessed)),
    )(*operands)

    return out.reshape(N, 128)[:, :10]


# ---------------------------------------------------------------------------
# Parameters (deterministic, PyTorch-default-style uniform init)
# ---------------------------------------------------------------------------
def init_params():
    key = jax.random.PRNGKey(42)
    keys = jax.random.split(key, 12)

    def u(k, shape, fan_in):
        bound = 1.0 / jnp.sqrt(fan_in)
        return jax.random.uniform(k, shape, jnp.float32, -bound, bound)

    p = {}
    p["conv1_w"] = u(keys[0], (16, 3, 3, 3), 3 * 9)
    p["conv1_b"] = u(keys[1], (16,), 3 * 9)
    p["conv2_w"] = u(keys[2], (32, 16, 3, 3), 16 * 9)
    p["conv2_b"] = u(keys[3], (32,), 16 * 9)
    p["dw_w"] = u(keys[4], (32, 1, 3, 3), 1 * 9)
    p["dw_b"] = u(keys[5], (32,), 1 * 9)
    p["pw_w"] = u(keys[6], (64, 32, 1, 1), 32 * 1)
    p["pw_b"] = u(keys[7], (64,), 32 * 1)
    p["conv3_w"] = u(keys[8], (128, 64, 3, 3), 64 * 9)
    p["conv3_b"] = u(keys[9], (128,), 64 * 9)
    p["fc_w"] = u(keys[10], (10, 128), 128)
    p["fc_b"] = u(keys[11], (10,), 128)
    return p


# ---------------------------------------------------------------------------
# Pure-JAX reference (lax convs, all-f32) for a correctness sanity check
# ---------------------------------------------------------------------------
def ref_forward(x, p):
    def conv(x, w, b, stride, padding, dilation=1, groups=1):
        out = jax.lax.conv_general_dilated(
            x, w, window_strides=(stride, stride),
            padding=[(padding, padding), (padding, padding)],
            rhs_dilation=(dilation, dilation),
            dimension_numbers=("NCHW", "OIHW", "NCHW"),
            feature_group_count=groups)
        return out + b.reshape(1, -1, 1, 1)

    x = jax.nn.relu(conv(x, p["conv1_w"], p["conv1_b"], 2, 1))
    x = jax.nn.relu(conv(x, p["conv2_w"], p["conv2_b"], 2, 1))
    x = jax.nn.relu(conv(x, p["dw_w"], p["dw_b"], 2, 1, groups=32))
    x = jax.nn.relu(conv(x, p["pw_w"], p["pw_b"], 1, 0))
    x = jax.nn.relu(conv(x, p["conv3_w"], p["conv3_b"], 1, 2, dilation=2))
    x = jnp.mean(x, axis=(2, 3))
    return x @ p["fc_w"].T + p["fc_b"]


if __name__ == "__main__":
    params = init_params()
    x = jax.random.normal(jax.random.PRNGKey(0), (2, 3, 32, 32), jnp.float32)

    fwd = jax.jit(forward)
    out = jax.block_until_ready(fwd(x, params))
    assert out.shape == (2, 10) and out.dtype == jnp.float32

    ref = jax.block_until_ready(ref_forward(x, params))
    # Tolerance covers bf16 MXU inputs (weights + activations rounded to bf16,
    # f32 accumulation) vs the all-f32 lax reference; expected drift is ~1e-3
    # on logits of magnitude ~0.1, any structural bug would show O(0.1) error.
    assert jnp.allclose(out, ref, atol=2e-2, rtol=2e-2), "mismatch vs lax reference"

    print("KERNEL_OK")
</pallas_src>

<mosaic_0001>
module attributes {stable_mosaic.version = 11 : i64} {
  func.func @_net_kernel(%arg0: i32, %arg1: memref<2x256x27xbf16, #tpu.memory_space<vmem>>, %arg2: memref<27x16xbf16, #tpu.memory_space<vmem>>, %arg3: memref<1x16xf32, #tpu.memory_space<vmem>>, %arg4: memref<9x64x256xbf16, #tpu.memory_space<vmem>>, %arg5: memref<144x32xbf16, #tpu.memory_space<vmem>>, %arg6: memref<1x32xf32, #tpu.memory_space<vmem>>, %arg7: memref<9x16x64xbf16, #tpu.memory_space<vmem>>, %arg8: memref<9x1x32xf32, #tpu.memory_space<vmem>>, %arg9: memref<1x32xf32, #tpu.memory_space<vmem>>, %arg10: memref<32x64xbf16, #tpu.memory_space<vmem>>, %arg11: memref<1x64xf32, #tpu.memory_space<vmem>>, %arg12: memref<9x16x16xbf16, #tpu.memory_space<vmem>>, %arg13: memref<576x128xbf16, #tpu.memory_space<vmem>>, %arg14: memref<1x128xf32, #tpu.memory_space<vmem>>, %arg15: memref<128x128xbf16, #tpu.memory_space<vmem>>, %arg16: memref<1x128xf32, #tpu.memory_space<vmem>>, %arg17: memref<2x1x128xf32, #tpu.memory_space<vmem>>) attributes {dimension_semantics = [#tpu.dimension_semantics<parallel>], iteration_bounds = array<i64: 1>, scalar_prefetch = 0 : i64, scratch_operands = 0 : i64, tpu.core_type = #tpu.core_type<tc>, window_params = [{transform_indices = @transform_0, window_bounds = array<i64: 2, 256, 27>}, {pipeline_mode = #tpu.pipeline_mode<synchronous>, transform_indices = @transform_1, window_bounds = array<i64: 27, 16>}, {pipeline_mode = #tpu.pipeline_mode<synchronous>, transform_indices = @transform_2, window_bounds = array<i64: 1, 16>}, {pipeline_mode = #tpu.pipeline_mode<synchronous>, transform_indices = @transform_3, window_bounds = array<i64: 9, 64, 256>}, {pipeline_mode = #tpu.pipeline_mode<synchronous>, transform_indices = @transform_4, window_bounds = array<i64: 144, 32>}, {pipeline_mode = #tpu.pipeline_mode<synchronous>, transform_indices = @transform_5, window_bounds = array<i64: 1, 32>}, {pipeline_mode = #tpu.pipeline_mode<synchronous>, transform_indices = @transform_6, window_bounds = array<i64: 9, 16, 64>}, {pipeline_mode = #tpu.pipeline_mode<synchronous>, transform_indices = @transform_7, window_bounds = array<i64: 9, 1, 32>}, {pipeline_mode = #tpu.pipeline_mode<synchronous>, transform_indices = @transform_8, window_bounds = array<i64: 1, 32>}, {pipeline_mode = #tpu.pipeline_mode<synchronous>, transform_indices = @transform_9, window_bounds = array<i64: 32, 64>}, {pipeline_mode = #tpu.pipeline_mode<synchronous>, transform_indices = @transform_10, window_bounds = array<i64: 1, 64>}, {pipeline_mode = #tpu.pipeline_mode<synchronous>, transform_indices = @transform_11, window_bounds = array<i64: 9, 16, 16>}, {pipeline_mode = #tpu.pipeline_mode<synchronous>, transform_indices = @transform_12, window_bounds = array<i64: 576, 128>}, {pipeline_mode = #tpu.pipeline_mode<synchronous>, transform_indices = @transform_13, window_bounds = array<i64: 1, 128>}, {pipeline_mode = #tpu.pipeline_mode<synchronous>, transform_indices = @transform_14, window_bounds = array<i64: 128, 128>}, {pipeline_mode = #tpu.pipeline_mode<synchronous>, transform_indices = @transform_15, window_bounds = array<i64: 1, 128>}, {transform_indices = @transform_16, window_bounds = array<i64: 2, 1, 128>}]} {
    %c0 = arith.constant 0 : index
    %c0_0 = arith.constant 0 : index
    %c0_1 = arith.constant 0 : index
    %0 = vector.load %arg1[%c0, %c0_0, %c0_1] : memref<2x256x27xbf16, #tpu.memory_space<vmem>>, vector<2x256x27xbf16>
    %1 = vector.shape_cast %0 : vector<2x256x27xbf16> to vector<512x27xbf16>
    %c0_2 = arith.constant 0 : index
    %c0_3 = arith.constant 0 : index
    %2 = vector.load %arg2[%c0_2, %c0_3] : memref<27x16xbf16, #tpu.memory_space<vmem>>, vector<27x16xbf16>
    %cst = arith.constant dense<0.000000e+00> : vector<512x16xf32>
    %3 = tpu.matmul %1, %2, %cst {dimension_numbers = #tpu.dot_dimension_numbers<[1], [0], [0], [1], [0, 0, 1, 1], [], []>} : vector<512x27xbf16>, vector<27x16xbf16>, vector<512x16xf32> -> vector<512x16xf32>
    %c0_4 = arith.constant 0 : index
    %c0_5 = arith.constant 0 : index
    %4 = vector.load %arg3[%c0_4, %c0_5] : memref<1x16xf32, #tpu.memory_space<vmem>>, vector<1x16xf32>
    %5 = vector.broadcast %4 : vector<1x16xf32> to vector<512x16xf32>
    %6 = arith.addf %3, %5 : vector<512x16xf32>
    %cst_6 = arith.constant 0.000000e+00 : f32
    %7 = vector.broadcast %cst_6 : f32 to vector<512x16xf32>
    %8 = arith.maximumf %6, %7 : vector<512x16xf32>
    %9 = arith.truncf %8 : vector<512x16xf32> to vector<512x16xbf16>
    %10 = vector.extract_strided_slice %9 {offsets = [0, 0], sizes = [256, 16], strides = [1, 1]} : vector<512x16xbf16> to vector<256x16xbf16>
    %c0_7 = arith.constant 0 : index
    %c0_8 = arith.constant 0 : index
    %c0_9 = arith.constant 0 : index
    %11 = vector.load %arg4[%c0_7, %c0_8, %c0_9] : memref<9x64x256xbf16, #tpu.memory_space<vmem>>, vector<1x64x256xbf16>
    %12 = vector.shape_cast %11 : vector<1x64x256xbf16> to vector<64x256xbf16>
    %cst_10 = arith.constant dense<0.000000e+00> : vector<64x16xf32>
    %13 = tpu.matmul %12, %10, %cst_10 {dimension_numbers = #tpu.dot_dimension_numbers<[1], [0], [0], [1], [0, 0, 1, 1], [], []>} : vector<64x256xbf16>, vector<256x16xbf16>, vector<64x16xf32> -> vector<64x16xf32>
    %c1 = arith.constant 1 : index
    %c0_11 = arith.constant 0 : index
    %c0_12 = arith.constant 0 : index
    %14 = vector.load %arg4[%c1, %c0_11, %c0_12] : memref<9x64x256xbf16, #tpu.memory_space<vmem>>, vector<1x64x256xbf16>
    %15 = vector.shape_cast %14 : vector<1x64x256xbf16> to vector<64x256xbf16>
    %cst_13 = arith.constant dense<0.000000e+00> : vector<64x16xf32>
    %16 = tpu.matmul %15, %10, %cst_13 {dimension_numbers = #tpu.dot_dimension_numbers<[1], [0], [0], [1], [0, 0, 1, 1], [], []>} : vector<64x256xbf16>, vector<256x16xbf16>, vector<64x16xf32> -> vector<64x16xf32>
    %c2 = arith.constant 2 : index
    %c0_14 = arith.constant 0 : index
    %c0_15 = arith.constant 0 : index
    %17 = vector.load %arg4[%c2, %c0_14, %c0_15] : memref<9x64x256xbf16, #tpu.memory_space<vmem>>, vector<1x64x256xbf16>
    %18 = vector.shape_cast %17 : vector<1x64x256xbf16> to vector<64x256xbf16>
    %cst_16 = arith.constant dense<0.000000e+00> : vector<64x16xf32>
    %19 = tpu.matmul %18, %10, %cst_16 {dimension_numbers = #tpu.dot_dimension_numbers<[1], [0], [0], [1], [0, 0, 1, 1], [], []>} : vector<64x256xbf16>, vector<256x16xbf16>, vector<64x16xf32> -> vector<64x16xf32>
    %c3 = arith.constant 3 : index
    %c0_17 = arith.constant 0 : index
    %c0_18 = arith.constant 0 : index
    %20 = vector.load %arg4[%c3, %c0_17, %c0_18] : memref<9x64x256xbf16, #tpu.memory_space<vmem>>, vector<1x64x256xbf16>
    %21 = vector.shape_cast %20 : vector<1x64x256xbf16> to vector<64x256xbf16>
    %cst_19 = arith.constant dense<0.000000e+00> : vector<64x16xf32>
    %22 = tpu.matmul %21, %10, %cst_19 {dimension_numbers = #tpu.dot_dimension_numbers<[1], [0], [0], [1], [0, 0, 1, 1], [], []>} : vector<64x256xbf16>, vector<256x16xbf16>, vector<64x16xf32> -> vector<64x16xf32>
    %c4 = arith.constant 4 : index
    %c0_20 = arith.constant 0 : index
    %c0_21 = arith.constant 0 : index
    %23 = vector.load %arg4[%c4, %c0_20, %c0_21] : memref<9x64x256xbf16, #tpu.memory_space<vmem>>, vector<1x64x256xbf16>
    %24 = vector.shape_cast %23 : vector<1x64x256xbf16> to vector<64x256xbf16>
    %cst_22 = arith.constant dense<0.000000e+00> : vector<64x16xf32>
    %25 = tpu.matmul %24, %10, %cst_22 {dimension_numbers = #tpu.dot_dimension_numbers<[1], [0], [0], [1], [0, 0, 1, 1], [], []>} : vector<64x256xbf16>, vector<256x16xbf16>, vector<64x16xf32> -> vector<64x16xf32>
    %c5 = arith.constant 5 : index
    %c0_23 = arith.constant 0 : index
    %c0_24 = arith.constant 0 : index
    %26 = vector.load %arg4[%c5, %c0_23, %c0_24] : memref<9x64x256xbf16, #tpu.memory_space<vmem>>, vector<1x64x256xbf16>
    %27 = vector.shape_cast %26 : vector<1x64x256xbf16> to vector<64x256xbf16>
    %cst_25 = arith.constant dense<0.000000e+00> : vector<64x16xf32>
    %28 = tpu.matmul %27, %10, %cst_25 {dimension_numbers = #tpu.dot_dimension_numbers<[1], [0], [0], [1], [0, 0, 1, 1], [], []>} : vector<64x256xbf16>, vector<256x16xbf16>, vector<64x16xf32> -> vector<64x16xf32>
    %c6 = arith.constant 6 : index
    %c0_26 = arith.constant 0 : index
    %c0_27 = arith.constant 0 : index
    %29 = vector.load %arg4[%c6, %c0_26, %c0_27] : memref<9x64x256xbf16, #tpu.memory_space<vmem>>, vector<1x64x256xbf16>
    %30 = vector.shape_cast %29 : vector<1x64x256xbf16> to vector<64x256xbf16>
    %cst_28 = arith.constant dense<0.000000e+00> : vector<64x16xf32>
    %31 = tpu.matmul %30, %10, %cst_28 {dimension_numbers = #tpu.dot_dimension_numbers<[1], [0], [0], [1], [0, 0, 1, 1], [], []>} : vector<64x256xbf16>, vector<256x16xbf16>, vector<64x16xf32> -> vector<64x16xf32>
    %c7 = arith.constant 7 : index
    %c0_29 = arith.constant 0 : index
    %c0_30 = arith.constant 0 : index
    %32 = vector.load %arg4[%c7, %c0_29, %c0_30] : memref<9x64x256xbf16, #tpu.memory_space<vmem>>, vector<1x64x256xbf16>
    %33 = vector.shape_cast %32 : vector<1x64x256xbf16> to vector<64x256xbf16>
    %cst_31 = arith.constant dense<0.000000e+00> : vector<64x16xf32>
    %34 = tpu.matmul %33, %10, %cst_31 {dimension_numbers = #tpu.dot_dimension_numbers<[1], [0], [0], [1], [0, 0, 1, 1], [], []>} : vector<64x256xbf16>, vector<256x16xbf16>, vector<64x16xf32> -> vector<64x16xf32>
    %c8 = arith.constant 8 : index
    %c0_32 = arith.constant 0 : index
    %c0_33 = arith.constant 0 : index
    %35 = vector.load %arg4[%c8, %c0_32, %c0_33] : memref<9x64x256xbf16, #tpu.memory_space<vmem>>, vector<1x64x256xbf16>
    %36 = vector.shape_cast %35 : vector<1x64x256xbf16> to vector<64x256xbf16>
    %cst_34 = arith.constant dense<0.000000e+00> : vector<64x16xf32>
    %37 = tpu.matmul %36, %10, %cst_34 {dimension_numbers = #tpu.dot_dimension_numbers<[1], [0], [0], [1], [0, 0, 1, 1], [], []>} : vector<64x256xbf16>, vector<256x16xbf16>, vector<64x16xf32> -> vector<64x16xf32>
    %38 = tpu.concatenate %13, %16, %19, %22, %25, %28, %31, %34, %37 in 1 : vector<64x16xf32>, vector<64x16xf32>, vector<64x16xf32>, vector<64x16xf32>, vector<64x16xf32>, vector<64x16xf32>, vector<64x16xf32>, vector<64x16xf32>, vector<64x16xf32> -> vector<64x144xf32>
    %39 = vector.extract_strided_slice %9 {offsets = [256, 0], sizes = [256, 16], strides = [1, 1]} : vector<512x16xbf16> to vector<256x16xbf16>
    %c0_35 = arith.constant 0 : index
    %c0_36 = arith.constant 0 : index
    %c0_37 = arith.constant 0 : index
    %40 = vector.load %arg4[%c0_35, %c0_36, %c0_37] : memref<9x64x256xbf16, #tpu.memory_space<vmem>>, vector<1x64x256xbf16>
    %41 = vector.shape_cast %40 : vector<1x64x256xbf16> to vector<64x256xbf16>
    %cst_38 = arith.constant dense<0.000000e+00> : vector<64x16xf32>
    %42 = tpu.matmul %41, %39, %cst_38 {dimension_numbers = #tpu.dot_dimension_numbers<[1], [0], [0], [1], [0, 0, 1, 1], [], []>} : vector<64x256xbf16>, vector<256x16xbf16>, vector<64x16xf32> -> vector<64x16xf32>
    %c1_39 = arith.constant 1 : index
    %c0_40 = arith.constant 0 : index
    %c0_41 = arith.constant 0 : index
    %43 = vector.load %arg4[%c1_39, %c0_40, %c0_41] : memref<9x64x256xbf16, #tpu.memory_space<vmem>>, vector<1x64x256xbf16>
    %44 = vector.shape_cast %43 : vector<1x64x256xbf16> to vector<64x256xbf16>
    %cst_42 = arith.constant dense<0.000000e+00> : vector<64x16xf32>
    %45 = tpu.matmul %44, %39, %cst_42 {dimension_numbers = #tpu.dot_dimension_numbers<[1], [0], [0], [1], [0, 0, 1, 1], [], []>} : vector<64x256xbf16>, vector<256x16xbf16>, vector<64x16xf32> -> vector<64x16xf32>
    %c2_43 = arith.constant 2 : index
    %c0_44 = arith.constant 0 : index
    %c0_45 = arith.constant 0 : index
    %46 = vector.load %arg4[%c2_43, %c0_44, %c0_45] : memref<9x64x256xbf16, #tpu.memory_space<vmem>>, vector<1x64x256xbf16>
    %47 = vector.shape_cast %46 : vector<1x64x256xbf16> to vector<64x256xbf16>
    %cst_46 = arith.constant dense<0.000000e+00> : vector<64x16xf32>
    %48 = tpu.matmul %47, %39, %cst_46 {dimension_numbers = #tpu.dot_dimension_numbers<[1], [0], [0], [1], [0, 0, 1, 1], [], []>} : vector<64x256xbf16>, vector<256x16xbf16>, vector<64x16xf32> -> vector<64x16xf32>
    %c3_47 = arith.constant 3 : index
    %c0_48 = arith.constant 0 : index
    %c0_49 = arith.constant 0 : index
    %49 = vector.load %arg4[%c3_47, %c0_48, %c0_49] : memref<9x64x256xbf16, #tpu.memory_space<vmem>>, vector<1x64x256xbf16>
    %50 = vector.shape_cast %49 : vector<1x64x256xbf16> to vector<64x256xbf16>
    %cst_50 = arith.constant dense<0.000000e+00> : vector<64x16xf32>
    %51 = tpu.matmul %50, %39, %cst_50 {dimension_numbers = #tpu.dot_dimension_numbers<[1], [0], [0], [1], [0, 0, 1, 1], [], []>} : vector<64x256xbf16>, vector<256x16xbf16>, vector<64x16xf32> -> vector<64x16xf32>
    %c4_51 = arith.constant 4 : index
    %c0_52 = arith.constant 0 : index
    %c0_53 = arith.constant 0 : index
    %52 = vector.load %arg4[%c4_51, %c0_52, %c0_53] : memref<9x64x256xbf16, #tpu.memory_space<vmem>>, vector<1x64x256xbf16>
    %53 = vector.shape_cast %52 : vector<1x64x256xbf16> to vector<64x256xbf16>
    %cst_54 = arith.constant dense<0.000000e+00> : vector<64x16xf32>
    %54 = tpu.matmul %53, %39, %cst_54 {dimension_numbers = #tpu.dot_dimension_numbers<[1], [0], [0], [1], [0, 0, 1, 1], [], []>} : vector<64x256xbf16>, vector<256x16xbf16>, vector<64x16xf32> -> vector<64x16xf32>
    %c5_55 = arith.constant 5 : index
    %c0_56 = arith.constant 0 : index
    %c0_57 = arith.constant 0 : index
    %55 = vector.load %arg4[%c5_55, %c0_56, %c0_57] : memref<9x64x256xbf16, #tpu.memory_space<vmem>>, vector<1x64x256xbf16>
    %56 = vector.shape_cast %55 : vector<1x64x256xbf16> to vector<64x256xbf16>
    %cst_58 = arith.constant dense<0.000000e+00> : vector<64x16xf32>
    %57 = tpu.matmul %56, %39, %cst_58 {dimension_numbers = #tpu.dot_dimension_numbers<[1], [0], [0], [1], [0, 0, 1, 1], [], []>} : vector<64x256xbf16>, vector<256x16xbf16>, vector<64x16xf32> -> vector<64x16xf32>
    %c6_59 = arith.constant 6 : index
    %c0_60 = arith.constant 0 : index
    %c0_61 = arith.constant 0 : index
    %58 = vector.load %arg4[%c6_59, %c0_60, %c0_61] : memref<9x64x256xbf16, #tpu.memory_space<vmem>>, vector<1x64x256xbf16>
    %59 = vector.shape_cast %58 : vector<1x64x256xbf16> to vector<64x256xbf16>
    %cst_62 = arith.constant dense<0.000000e+00> : vector<64x16xf32>
    %60 = tpu.matmul %59, %39, %cst_62 {dimension_numbers = #tpu.dot_dimension_numbers<[1], [0], [0], [1], [0, 0, 1, 1], [], []>} : vector<64x256xbf16>, vector<256x16xbf16>, vector<64x16xf32> -> vector<64x16xf32>
    %c7_63 = arith.constant 7 : index
    %c0_64 = arith.constant 0 : index
    %c0_65 = arith.constant 0 : index
    %61 = vector.load %arg4[%c7_63, %c0_64, %c0_65] : memref<9x64x256xbf16, #tpu.memory_space<vmem>>, vector<1x64x256xbf16>
    %62 = vector.shape_cast %61 : vector<1x64x256xbf16> to vector<64x256xbf16>
    %cst_66 = arith.constant dense<0.000000e+00> : vector<64x16xf32>
    %63 = tpu.matmul %62, %39, %cst_66 {dimension_numbers = #tpu.dot_dimension_numbers<[1], [0], [0], [1], [0, 0, 1, 1], [], []>} : vector<64x256xbf16>, vector<256x16xbf16>, vector<64x16xf32> -> vector<64x16xf32>
    %c8_67 = arith.constant 8 : index
    %c0_68 = arith.constant 0 : index
    %c0_69 = arith.constant 0 : index
    %64 = vector.load %arg4[%c8_67, %c0_68, %c0_69] : memref<9x64x256xbf16, #tpu.memory_space<vmem>>, vector<1x64x256xbf16>
    %65 = vector.shape_cast %64 : vector<1x64x256xbf16> to vector<64x256xbf16>
    %cst_70 = arith.constant dense<0.000000e+00> : vector<64x16xf32>
    %66 = tpu.matmul %65, %39, %cst_70 {dimension_numbers = #tpu.dot_dimension_numbers<[1], [0], [0], [1], [0, 0, 1, 1], [], []>} : vector<64x256xbf16>, vector<256x16xbf16>, vector<64x16xf32> -> vector<64x16xf32>
    %67 = tpu.concatenate %42, %45, %48, %51, %54, %57, %60, %63, %66 in 1 : vector<64x16xf32>, vector<64x16xf32>, vector<64x16xf32>, vector<64x16xf32>, vector<64x16xf32>, vector<64x16xf32>, vector<64x16xf32>, vector<64x16xf32>, vector<64x16xf32> -> vector<64x144xf32>
    %68 = tpu.concatenate %38, %67 in 0 : vector<64x144xf32>, vector<64x144xf32> -> vector<128x144xf32>
    %69 = arith.truncf %68 : vector<128x144xf32> to vector<128x144xbf16>
    %c0_71 = arith.constant 0 : index
    %c0_72 = arith.constant 0 : index
    %70 = vector.load %arg5[%c0_71, %c0_72] : memref<144x32xbf16, #tpu.memory_space<vmem>>, vector<144x32xbf16>
    %cst_73 = arith.constant dense<0.000000e+00> : vector<128x32xf32>
    %71 = tpu.matmul %69, %70, %cst_73 {dimension_numbers = #tpu.dot_dimension_numbers<[1], [0], [0], [1], [0, 0, 1, 1], [], []>} : vector<128x144xbf16>, vector<144x32xbf16>, vector<128x32xf32> -> vector<128x32xf32>
    %c0_74 = arith.constant 0 : index
    %c0_75 = arith.constant 0 : index
    %72 = vector.load %arg6[%c0_74, %c0_75] : memref<1x32xf32, #tpu.memory_space<vmem>>, vector<1x32xf32>
    %73 = vector.broadcast %72 : vector<1x32xf32> to vector<128x32xf32>
    %74 = arith.addf %71, %73 : vector<128x32xf32>
    %cst_76 = arith.constant 0.000000e+00 : f32
    %75 = vector.broadcast %cst_76 : f32 to vector<128x32xf32>
    %76 = arith.maximumf %74, %75 : vector<128x32xf32>
    %77 = arith.truncf %76 : vector<128x32xf32> to vector<128x32xbf16>
    %78 = vector.extract_strided_slice %77 {offsets = [0, 0], sizes = [64, 32], strides = [1, 1]} : vector<128x32xbf16> to vector<64x32xbf16>
    %c0_77 = arith.constant 0 : index
    %c0_78 = arith.constant 0 : index
    %c0_79 = arith.constant 0 : index
    %79 = vector.load %arg7[%c0_77, %c0_78, %c0_79] : memref<9x16x64xbf16, #tpu.memory_space<vmem>>, vector<1x16x64xbf16>
    %80 = vector.shape_cast %79 : vector<1x16x64xbf16> to vector<16x64xbf16>
    %cst_80 = arith.constant dense<0.000000e+00> : vector<16x32xf32>
    %81 = tpu.matmul %80, %78, %cst_80 {dimension_numbers = #tpu.dot_dimension_numbers<[1], [0], [0], [1], [0, 0, 1, 1], [], []>} : vector<16x64xbf16>, vector<64x32xbf16>, vector<16x32xf32> -> vector<16x32xf32>
    %c0_81 = arith.constant 0 : index
    %c0_82 = arith.constant 0 : index
    %c0_83 = arith.constant 0 : index
    %82 = vector.load %arg8[%c0_81, %c0_82, %c0_83] : memref<9x1x32xf32, #tpu.memory_space<vmem>>, vector<1x1x32xf32>
    %83 = vector.shape_cast %82 : vector<1x1x32xf32> to vector<1x32xf32>
    %84 = vector.broadcast %83 : vector<1x32xf32> to vector<16x32xf32>
    %85 = arith.mulf %81, %84 : vector<16x32xf32>
    %c1_84 = arith.constant 1 : index
    %c0_85 = arith.constant 0 : index
    %c0_86 = arith.constant 0 : index
    %86 = vector.load %arg7[%c1_84, %c0_85, %c0_86] : memref<9x16x64xbf16, #tpu.memory_space<vmem>>, vector<1x16x64xbf16>
    %87 = vector.shape_cast %86 : vector<1x16x64xbf16> to vector<16x64xbf16>
    %cst_87 = arith.constant dense<0.000000e+00> : vector<16x32xf32>
    %88 = tpu.matmul %87, %78, %cst_87 {dimension_numbers = #tpu.dot_dimension_numbers<[1], [0], [0], [1], [0, 0, 1, 1], [], []>} : vector<16x64xbf16>, vector<64x32xbf16>, vector<16x32xf32> -> vector<16x32xf32>
    %c1_88 = arith.constant 1 : index
    %c0_89 = arith.constant 0 : index
    %c0_90 = arith.constant 0 : index
    %89 = vector.load %arg8[%c1_88, %c0_89, %c0_90] : memref<9x1x32xf32, #tpu.memory_space<vmem>>, vector<1x1x32xf32>
    %90 = vector.shape_cast %89 : vector<1x1x32xf32> to vector<1x32xf32>
    %91 = vector.broadcast %90 : vector<1x32xf32> to vector<16x32xf32>
    %92 = arith.mulf %88, %91 : vector<16x32xf32>
    %93 = arith.addf %85, %92 : vector<16x32xf32>
    %c2_91 = arith.constant 2 : index
    %c0_92 = arith.constant 0 : index
    %c0_93 = arith.constant 0 : index
    %94 = vector.load %arg7[%c2_91, %c0_92, %c0_93] : memref<9x16x64xbf16, #tpu.memory_space<vmem>>, vector<1x16x64xbf16>
    %95 = vector.shape_cast %94 : vector<1x16x64xbf16> to vector<16x64xbf16>
    %cst_94 = arith.constant dense<0.000000e+00> : vector<16x32xf32>
    %96 = tpu.matmul %95, %78, %cst_94 {dimension_numbers = #tpu.dot_dimension_numbers<[1], [0], [0], [1], [0, 0, 1, 1], [], []>} : vector<16x64xbf16>, vector<64x32xbf16>, vector<16x32xf32> -> vector<16x32xf32>
    %c2_95 = arith.constant 2 : index
    %c0_96 = arith.constant 0 : index
    %c0_97 = arith.constant 0 : index
    %97 = vector.load %arg8[%c2_95, %c0_96, %c0_97] : memref<9x1x32xf32, #tpu.memory_space<vmem>>, vector<1x1x32xf32>
    %98 = vector.shape_cast %97 : vector<1x1x32xf32> to vector<1x32xf32>
    %99 = vector.broadcast %98 : vector<1x32xf32> to vector<16x32xf32>
    %100 = arith.mulf %96, %99 : vector<16x32xf32>
    %101 = arith.addf %93, %100 : vector<16x32xf32>
    %c3_98 = arith.constant 3 : index
    %c0_99 = arith.constant 0 : index
    %c0_100 = arith.constant 0 : index
    %102 = vector.load %arg7[%c3_98, %c0_99, %c0_100] : memref<9x16x64xbf16, #tpu.memory_space<vmem>>, vector<1x16x64xbf16>
    %103 = vector.shape_cast %102 : vector<1x16x64xbf16> to vector<16x64xbf16>
    %cst_101 = arith.constant dense<0.000000e+00> : vector<16x32xf32>
    %104 = tpu.matmul %103, %78, %cst_101 {dimension_numbers = #tpu.dot_dimension_numbers<[1], [0], [0], [1], [0, 0, 1, 1], [], []>} : vector<16x64xbf16>, vector<64x32xbf16>, vector<16x32xf32> -> vector<16x32xf32>
    %c3_102 = arith.constant 3 : index
    %c0_103 = arith.constant 0 : index
    %c0_104 = arith.constant 0 : index
    %105 = vector.load %arg8[%c3_102, %c0_103, %c0_104] : memref<9x1x32xf32, #tpu.memory_space<vmem>>, vector<1x1x32xf32>
    %106 = vector.shape_cast %105 : vector<1x1x32xf32> to vector<1x32xf32>
    %107 = vector.broadcast %106 : vector<1x32xf32> to vector<16x32xf32>
    %108 = arith.mulf %104, %107 : vector<16x32xf32>
    %109 = arith.addf %101, %108 : vector<16x32xf32>
    %c4_105 = arith.constant 4 : index
    %c0_106 = arith.constant 0 : index
    %c0_107 = arith.constant 0 : index
    %110 = vector.load %arg7[%c4_105, %c0_106, %c0_107] : memref<9x16x64xbf16, #tpu.memory_space<vmem>>, vector<1x16x64xbf16>
    %111 = vector.shape_cast %110 : vector<1x16x64xbf16> to vector<16x64xbf16>
    %cst_108 = arith.constant dense<0.000000e+00> : vector<16x32xf32>
    %112 = tpu.matmul %111, %78, %cst_108 {dimension_numbers = #tpu.dot_dimension_numbers<[1], [0], [0], [1], [0, 0, 1, 1], [], []>} : vector<16x64xbf16>, vector<64x32xbf16>, vector<16x32xf32> -> vector<16x32xf32>
    %c4_109 = arith.constant 4 : index
    %c0_110 = arith.constant 0 : index
    %c0_111 = arith.constant 0 : index
    %113 = vector.load %arg8[%c4_109, %c0_110, %c0_111] : memref<9x1x32xf32, #tpu.memory_space<vmem>>, vector<1x1x32xf32>
    %114 = vector.shape_cast %113 : vector<1x1x32xf32> to vector<1x32xf32>
    %115 = vector.broadcast %114 : vector<1x32xf32> to vector<16x32xf32>
    %116 = arith.mulf %112, %115 : vector<16x32xf32>
    %117 = arith.addf %109, %116 : vector<16x32xf32>
    %c5_112 = arith.constant 5 : index
    %c0_113 = arith.constant 0 : index
    %c0_114 = arith.constant 0 : index
    %118 = vector.load %arg7[%c5_112, %c0_113, %c0_114] : memref<9x16x64xbf16, #tpu.memory_space<vmem>>, vector<1x16x64xbf16>
    %119 = vector.shape_cast %118 : vector<1x16x64xbf16> to vector<16x64xbf16>
    %cst_115 = arith.constant dense<0.000000e+00> : vector<16x32xf32>
    %120 = tpu.matmul %119, %78, %cst_115 {dimension_numbers = #tpu.dot_dimension_numbers<[1], [0], [0], [1], [0, 0, 1, 1], [], []>} : vector<16x64xbf16>, vector<64x32xbf16>, vector<16x32xf32> -> vector<16x32xf32>
    %c5_116 = arith.constant 5 : index
    %c0_117 = arith.constant 0 : index
    %c0_118 = arith.constant 0 : index
    %121 = vector.load %arg8[%c5_116, %c0_117, %c0_118] : memref<9x1x32xf32, #tpu.memory_space<vmem>>, vector<1x1x32xf32>
    %122 = vector.shape_cast %121 : vector<1x1x32xf32> to vector<1x32xf32>
    %123 = vector.broadcast %122 : vector<1x32xf32> to vector<16x32xf32>
    %124 = arith.mulf %120, %123 : vector<16x32xf32>
    %125 = arith.addf %117, %124 : vector<16x32xf32>
    %c6_119 = arith.constant 6 : index
    %c0_120 = arith.constant 0 : index
    %c0_121 = arith.constant 0 : index
    %126 = vector.load %arg7[%c6_119, %c0_120, %c0_121] : memref<9x16x64xbf16, #tpu.memory_space<vmem>>, vector<1x16x64xbf16>
    %127 = vector.shape_cast %126 : vector<1x16x64xbf16> to vector<16x64xbf16>
    %cst_122 = arith.constant dense<0.000000e+00> : vector<16x32xf32>
    %128 = tpu.matmul %127, %78, %cst_122 {dimension_numbers = #tpu.dot_dimension_numbers<[1], [0], [0], [1], [0, 0, 1, 1], [], []>} : vector<16x64xbf16>, vector<64x32xbf16>, vector<16x32xf32> -> vector<16x32xf32>
    %c6_123 = arith.constant 6 : index
    %c0_124 = arith.constant 0 : index
    %c0_125 = arith.constant 0 : index
    %129 = vector.load %arg8[%c6_123, %c0_124, %c0_125] : memref<9x1x32xf32, #tpu.memory_space<vmem>>, vector<1x1x32xf32>
    %130 = vector.shape_cast %129 : vector<1x1x32xf32> to vector<1x32xf32>
    %131 = vector.broadcast %130 : vector<1x32xf32> to vector<16x32xf32>
    %132 = arith.mulf %128, %131 : vector<16x32xf32>
    %133 = arith.addf %125, %132 : vector<16x32xf32>
    %c7_126 = arith.constant 7 : index
    %c0_127 = arith.constant 0 : index
    %c0_128 = arith.constant 0 : index
    %134 = vector.load %arg7[%c7_126, %c0_127, %c0_128] : memref<9x16x64xbf16, #tpu.memory_space<vmem>>, vector<1x16x64xbf16>
    %135 = vector.shape_cast %134 : vector<1x16x64xbf16> to vector<16x64xbf16>
    %cst_129 = arith.constant dense<0.000000e+00> : vector<16x32xf32>
    %136 = tpu.matmul %135, %78, %cst_129 {dimension_numbers = #tpu.dot_dimension_numbers<[1], [0], [0], [1], [0, 0, 1, 1], [], []>} : vector<16x64xbf16>, vector<64x32xbf16>, vector<16x32xf32> -> vector<16x32xf32>
    %c7_130 = arith.constant 7 : index
    %c0_131 = arith.constant 0 : index
    %c0_132 = arith.constant 0 : index
    %137 = vector.load %arg8[%c7_130, %c0_131, %c0_132] : memref<9x1x32xf32, #tpu.memory_space<vmem>>, vector<1x1x32xf32>
    %138 = vector.shape_cast %137 : vector<1x1x32xf32> to vector<1x32xf32>
    %139 = vector.broadcast %138 : vector<1x32xf32> to vector<16x32xf32>
    %140 = arith.mulf %136, %139 : vector<16x32xf32>
    %141 = arith.addf %133, %140 : vector<16x32xf32>
    %c8_133 = arith.constant 8 : index
    %c0_134 = arith.constant 0 : index
    %c0_135 = arith.constant 0 : index
    %142 = vector.load %arg7[%c8_133, %c0_134, %c0_135] : memref<9x16x64xbf16, #tpu.memory_space<vmem>>, vector<1x16x64xbf16>
    %143 = vector.shape_cast %142 : vector<1x16x64xbf16> to vector<16x64xbf16>
    %cst_136 = arith.constant dense<0.000000e+00> : vector<16x32xf32>
    %144 = tpu.matmul %143, %78, %cst_136 {dimension_numbers = #tpu.dot_dimension_numbers<[1], [0], [0], [1], [0, 0, 1, 1], [], []>} : vector<16x64xbf16>, vector<64x32xbf16>, vector<16x32xf32> -> vector<16x32xf32>
    %c8_137 = arith.constant 8 : index
    %c0_138 = arith.constant 0 : index
    %c0_139 = arith.constant 0 : index
    %145 = vector.load %arg8[%c8_137, %c0_138, %c0_139] : memref<9x1x32xf32, #tpu.memory_space<vmem>>, vector<1x1x32xf32>
    %146 = vector.shape_cast %145 : vector<1x1x32xf32> to vector<1x32xf32>
    %147 = vector.broadcast %146 : vector<1x32xf32> to vector<16x32xf32>
    %148 = arith.mulf %144, %147 : vector<16x32xf32>
    %149 = arith.addf %141, %148 : vector<16x32xf32>
    %150 = vector.extract_strided_slice %77 {offsets = [64, 0], sizes = [64, 32], strides = [1, 1]} : vector<128x32xbf16> to vector<64x32xbf16>
    %c0_140 = arith.constant 0 : index
    %c0_141 = arith.constant 0 : index
    %c0_142 = arith.constant 0 : index
    %151 = vector.load %arg7[%c0_140, %c0_141, %c0_142] : memref<9x16x64xbf16, #tpu.memory_space<vmem>>, vector<1x16x64xbf16>
    %152 = vector.shape_cast %151 : vector<1x16x64xbf16> to vector<16x64xbf16>
    %cst_143 = arith.constant dense<0.000000e+00> : vector<16x32xf32>
    %153 = tpu.matmul %152, %150, %cst_143 {dimension_numbers = #tpu.dot_dimension_numbers<[1], [0], [0], [1], [0, 0, 1, 1], [], []>} : vector<16x64xbf16>, vector<64x32xbf16>, vector<16x32xf32> -> vector<16x32xf32>
    %c0_144 = arith.constant 0 : index
    %c0_145 = arith.constant 0 : index
    %c0_146 = arith.constant 0 : index
    %154 = vector.load %arg8[%c0_144, %c0_145, %c0_146] : memref<9x1x32xf32, #tpu.memory_space<vmem>>, vector<1x1x32xf32>
    %155 = vector.shape_cast %154 : vector<1x1x32xf32> to vector<1x32xf32>
    %156 = vector.broadcast %155 : vector<1x32xf32> to vector<16x32xf32>
    %157 = arith.mulf %153, %156 : vector<16x32xf32>
    %c1_147 = arith.constant 1 : index
    %c0_148 = arith.constant 0 : index
    %c0_149 = arith.constant 0 : index
    %158 = vector.load %arg7[%c1_147, %c0_148, %c0_149] : memref<9x16x64xbf16, #tpu.memory_space<vmem>>, vector<1x16x64xbf16>
    %159 = vector.shape_cast %158 : vector<1x16x64xbf16> to vector<16x64xbf16>
    %cst_150 = arith.constant dense<0.000000e+00> : vector<16x32xf32>
    %160 = tpu.matmul %159, %150, %cst_150 {dimension_numbers = #tpu.dot_dimension_numbers<[1], [0], [0], [1], [0, 0, 1, 1], [], []>} : vector<16x64xbf16>, vector<64x32xbf16>, vector<16x32xf32> -> vector<16x32xf32>
    %c1_151 = arith.constant 1 : index
    %c0_152 = arith.constant 0 : index
    %c0_153 = arith.constant 0 : index
    %161 = vector.load %arg8[%c1_151, %c0_152, %c0_153] : memref<9x1x32xf32, #tpu.memory_space<vmem>>, vector<1x1x32xf32>
    %162 = vector.shape_cast %161 : vector<1x1x32xf32> to vector<1x32xf32>
    %163 = vector.broadcast %162 : vector<1x32xf32> to vector<16x32xf32>
    %164 = arith.mulf %160, %163 : vector<16x32xf32>
    %165 = arith.addf %157, %164 : vector<16x32xf32>
    %c2_154 = arith.constant 2 : index
    %c0_155 = arith.constant 0 : index
    %c0_156 = arith.constant 0 : index
    %166 = vector.load %arg7[%c2_154, %c0_155, %c0_156] : memref<9x16x64xbf16, #tpu.memory_space<vmem>>, vector<1x16x64xbf16>
    %167 = vector.shape_cast %166 : vector<1x16x64xbf16> to vector<16x64xbf16>
    %cst_157 = arith.constant dense<0.000000e+00> : vector<16x32xf32>
    %168 = tpu.matmul %167, %150, %cst_157 {dimension_numbers = #tpu.dot_dimension_numbers<[1], [0], [0], [1], [0, 0, 1, 1], [], []>} : vector<16x64xbf16>, vector<64x32xbf16>, vector<16x32xf32> -> vector<16x32xf32>
    %c2_158 = arith.constant 2 : index
    %c0_159 = arith.constant 0 : index
    %c0_160 = arith.constant 0 : index
    %169 = vector.load %arg8[%c2_158, %c0_159, %c0_160] : memref<9x1x32xf32, #tpu.memory_space<vmem>>, vector<1x1x32xf32>
    %170 = vector.shape_cast %169 : vector<1x1x32xf32> to vector<1x32xf32>
    %171 = vector.broadcast %170 : vector<1x32xf32> to vector<16x32xf32>
    %172 = arith.mulf %168, %171 : vector<16x32xf32>
    %173 = arith.addf %165, %172 : vector<16x32xf32>
    %c3_161 = arith.constant 3 : index
    %c0_162 = arith.constant 0 : index
    %c0_163 = arith.constant 0 : index
    %174 = vector.load %arg7[%c3_161, %c0_162, %c0_163] : memref<9x16x64xbf16, #tpu.memory_space<vmem>>, vector<1x16x64xbf16>
    %175 = vector.shape_cast %174 : vector<1x16x64xbf16> to vector<16x64xbf16>
    %cst_164 = arith.constant dense<0.000000e+00> : vector<16x32xf32>
    %176 = tpu.matmul %175, %150, %cst_164 {dimension_numbers = #tpu.dot_dimension_numbers<[1], [0], [0], [1], [0, 0, 1, 1], [], []>} : vector<16x64xbf16>, vector<64x32xbf16>, vector<16x32xf32> -> vector<16x32xf32>
    %c3_165 = arith.constant 3 : index
    %c0_166 = arith.constant 0 : index
    %c0_167 = arith.constant 0 : index
    %177 = vector.load %arg8[%c3_165, %c0_166, %c0_167] : memref<9x1x32xf32, #tpu.memory_space<vmem>>, vector<1x1x32xf32>
    %178 = vector.shape_cast %177 : vector<1x1x32xf32> to vector<1x32xf32>
    %179 = vector.broadcast %178 : vector<1x32xf32> to vector<16x32xf32>
    %180 = arith.mulf %176, %179 : vector<16x32xf32>
    %181 = arith.addf %173, %180 : vector<16x32xf32>
    %c4_168 = arith.constant 4 : index
    %c0_169 = arith.constant 0 : index
    %c0_170 = arith.constant 0 : index
    %182 = vector.load %arg7[%c4_168, %c0_169, %c0_170] : memref<9x16x64xbf16, #tpu.memory_space<vmem>>, vector<1x16x64xbf16>
    %183 = vector.shape_cast %182 : vector<1x16x64xbf16> to vector<16x64xbf16>
    %cst_171 = arith.constant dense<0.000000e+00> : vector<16x32xf32>
    %184 = tpu.matmul %183, %150, %cst_171 {dimension_numbers = #tpu.dot_dimension_numbers<[1], [0], [0], [1], [0, 0, 1, 1], [], []>} : vector<16x64xbf16>, vector<64x32xbf16>, vector<16x32xf32> -> vector<16x32xf32>
    %c4_172 = arith.constant 4 : index
    %c0_173 = arith.constant 0 : index
    %c0_174 = arith.constant 0 : index
    %185 = vector.load %arg8[%c4_172, %c0_173, %c0_174] : memref<9x1x32xf32, #tpu.memory_space<vmem>>, vector<1x1x32xf32>
    %186 = vector.shape_cast %185 : vector<1x1x32xf32> to vector<1x32xf32>
    %187 = vector.broadcast %186 : vector<1x32xf32> to vector<16x32xf32>
    %188 = arith.mulf %184, %187 : vector<16x32xf32>
    %189 = arith.addf %181, %188 : vector<16x32xf32>
    %c5_175 = arith.constant 5 : index
    %c0_176 = arith.constant 0 : index
    %c0_177 = arith.constant 0 : index
    %190 = vector.load %arg7[%c5_175, %c0_176, %c0_177] : memref<9x16x64xbf16, #tpu.memory_space<vmem>>, vector<1x16x64xbf16>
    %191 = vector.shape_cast %190 : vector<1x16x64xbf16> to vector<16x64xbf16>
    %cst_178 = arith.constant dense<0.000000e+00> : vector<16x32xf32>
    %192 = tpu.matmul %191, %150, %cst_178 {dimension_numbers = #tpu.dot_dimension_numbers<[1], [0], [0], [1], [0, 0, 1, 1], [], []>} : vector<16x64xbf16>, vector<64x32xbf16>, vector<16x32xf32> -> vector<16x32xf32>
    %c5_179 = arith.constant 5 : index
    %c0_180 = arith.constant 0 : index
    %c0_181 = arith.constant 0 : index
    %193 = vector.load %arg8[%c5_179, %c0_180, %c0_181] : memref<9x1x32xf32, #tpu.memory_space<vmem>>, vector<1x1x32xf32>
    %194 = vector.shape_cast %193 : vector<1x1x32xf32> to vector<1x32xf32>
    %195 = vector.broadcast %194 : vector<1x32xf32> to vector<16x32xf32>
    %196 = arith.mulf %192, %195 : vector<16x32xf32>
    %197 = arith.addf %189, %196 : vector<16x32xf32>
    %c6_182 = arith.constant 6 : index
    %c0_183 = arith.constant 0 : index
    %c0_184 = arith.constant 0 : index
    %198 = vector.load %arg7[%c6_182, %c0_183, %c0_184] : memref<9x16x64xbf16, #tpu.memory_space<vmem>>, vector<1x16x64xbf16>
    %199 = vector.shape_cast %198 : vector<1x16x64xbf16> to vector<16x64xbf16>
    %cst_185 = arith.constant dense<0.000000e+00> : vector<16x32xf32>
    %200 = tpu.matmul %199, %150, %cst_185 {dimension_numbers = #tpu.dot_dimension_numbers<[1], [0], [0], [1], [0, 0, 1, 1], [], []>} : vector<16x64xbf16>, vector<64x32xbf16>, vector<16x32xf32> -> vector<16x32xf32>
    %c6_186 = arith.constant 6 : index
    %c0_187 = arith.constant 0 : index
    %c0_188 = arith.constant 0 : index
    %201 = vector.load %arg8[%c6_186, %c0_187, %c0_188] : memref<9x1x32xf32, #tpu.memory_space<vmem>>, vector<1x1x32xf32>
    %202 = vector.shape_cast %201 : vector<1x1x32xf32> to vector<1x32xf32>
    %203 = vector.broadcast %202 : vector<1x32xf32> to vector<16x32xf32>
    %204 = arith.mulf %200, %203 : vector<16x32xf32>
    %205 = arith.addf %197, %204 : vector<16x32xf32>
    %c7_189 = arith.constant 7 : index
    %c0_190 = arith.constant 0 : index
    %c0_191 = arith.constant 0 : index
    %206 = vector.load %arg7[%c7_189, %c0_190, %c0_191] : memref<9x16x64xbf16, #tpu.memory_space<vmem>>, vector<1x16x64xbf16>
    %207 = vector.shape_cast %206 : vector<1x16x64xbf16> to vector<16x64xbf16>
    %cst_192 = arith.constant dense<0.000000e+00> : vector<16x32xf32>
    %208 = tpu.matmul %207, %150, %cst_192 {dimension_numbers = #tpu.dot_dimension_numbers<[1], [0], [0], [1], [0, 0, 1, 1], [], []>} : vector<16x64xbf16>, vector<64x32xbf16>, vector<16x32xf32> -> vector<16x32xf32>
    %c7_193 = arith.constant 7 : index
    %c0_194 = arith.constant 0 : index
    %c0_195 = arith.constant 0 : index
    %209 = vector.load %arg8[%c7_193, %c0_194, %c0_195] : memref<9x1x32xf32, #tpu.memory_space<vmem>>, vector<1x1x32xf32>
    %210 = vector.shape_cast %209 : vector<1x1x32xf32> to vector<1x32xf32>
    %211 = vector.broadcast %210 : vector<1x32xf32> to vector<16x32xf32>
    %212 = arith.mulf %208, %211 : vector<16x32xf32>
    %213 = arith.addf %205, %212 : vector<16x32xf32>
    %c8_196 = arith.constant 8 : index
    %c0_197 = arith.constant 0 : index
    %c0_198 = arith.constant 0 : index
    %214 = vector.load %arg7[%c8_196, %c0_197, %c0_198] : memref<9x16x64xbf16, #tpu.memory_space<vmem>>, vector<1x16x64xbf16>
    %215 = vector.shape_cast %214 : vector<1x16x64xbf16> to vector<16x64xbf16>
    %cst_199 = arith.constant dense<0.000000e+00> : vector<16x32xf32>
    %216 = tpu.matmul %215, %150, %cst_199 {dimension_numbers = #tpu.dot_dimension_numbers<[1], [0], [0], [1], [0, 0, 1, 1], [], []>} : vector<16x64xbf16>, vector<64x32xbf16>, vector<16x32xf32> -> vector<16x32xf32>
    %c8_200 = arith.constant 8 : index
    %c0_201 = arith.constant 0 : index
    %c0_202 = arith.constant 0 : index
    %217 = vector.load %arg8[%c8_200, %c0_201, %c0_202] : memref<9x1x32xf32, #tpu.memory_space<vmem>>, vector<1x1x32xf32>
    %218 = vector.shape_cast %217 : vector<1x1x32xf32> to vector<1x32xf32>
    %219 = vector.broadcast %218 : vector<1x32xf32> to vector<16x32xf32>
    %220 = arith.mulf %216, %219 : vector<16x32xf32>
    %221 = arith.addf %213, %220 : vector<16x32xf32>
    %222 = tpu.concatenate %149, %221 in 0 : vector<16x32xf32>, vector<16x32xf32> -> vector<32x32xf32>
    %c0_203 = arith.constant 0 : index
    %c0_204 = arith.constant 0 : index
    %223 = vector.load %arg9[%c0_203, %c0_204] : memref<1x32xf32, #tpu.memory_space<vmem>>, vector<1x32xf32>
    %224 = vector.broadcast %223 : vector<1x32xf32> to vector<32x32xf32>
    %225 = arith.addf %222, %224 : vector<32x32xf32>
    %cst_205 = arith.constant 0.000000e+00 : f32
    %226 = vector.broadcast %cst_205 : f32 to vector<32x32xf32>
    %227 = arith.maximumf %225, %226 : vector<32x32xf32>
    %228 = arith.truncf %227 : vector<32x32xf32> to vector<32x32xbf16>
    %c0_206 = arith.constant 0 : index
    %c0_207 = arith.constant 0 : index
    %229 = vector.load %arg10[%c0_206, %c0_207] : memref<32x64xbf16, #tpu.memory_space<vmem>>, vector<32x64xbf16>
    %cst_208 = arith.constant dense<0.000000e+00> : vector<32x64xf32>
    %230 = tpu.matmul %228, %229, %cst_208 {dimension_numbers = #tpu.dot_dimension_numbers<[1], [0], [0], [1], [0, 0, 1, 1], [], []>} : vector<32x32xbf16>, vector<32x64xbf16>, vector<32x64xf32> -> vector<32x64xf32>
    %c0_209 = arith.constant 0 : index
    %c0_210 = arith.constant 0 : index
    %231 = vector.load %arg11[%c0_209, %c0_210] : memref<1x64xf32, #tpu.memory_space<vmem>>, vector<1x64xf32>
    %232 = vector.broadcast %231 : vector<1x64xf32> to vector<32x64xf32>
    %233 = arith.addf %230, %232 : vector<32x64xf32>
    %cst_211 = arith.constant 0.000000e+00 : f32
    %234 = vector.broadcast %cst_211 : f32 to vector<32x64xf32>
    %235 = arith.maximumf %233, %234 : vector<32x64xf32>
    %236 = arith.truncf %235 : vector<32x64xf32> to vector<32x64xbf16>
    %237 = vector.extract_strided_slice %236 {offsets = [0, 0], sizes = [16, 64], strides = [1, 1]} : vector<32x64xbf16> to vector<16x64xbf16>
    %c0_212 = arith.constant 0 : index
    %c0_213 = arith.constant 0 : index
    %c0_214 = arith.constant 0 : index
    %238 = vector.load %arg12[%c0_212, %c0_213, %c0_214] : memref<9x16x16xbf16, #tpu.memory_space<vmem>>, vector<1x16x16xbf16>
    %239 = vector.shape_cast %238 : vector<1x16x16xbf16> to vector<16x16xbf16>
    %cst_215 = arith.constant dense<0.000000e+00> : vector<16x64xf32>
    %240 = tpu.matmul %239, %237, %cst_215 {dimension_numbers = #tpu.dot_dimension_numbers<[1], [0], [0], [1], [0, 0, 1, 1], [], []>} : vector<16x16xbf16>, vector<16x64xbf16>, vector<16x64xf32> -> vector<16x64xf32>
    %c1_216 = arith.constant 1 : index
    %c0_217 = arith.constant 0 : index
    %c0_218 = arith.constant 0 : index
    %241 = vector.load %arg12[%c1_216, %c0_217, %c0_218] : memref<9x16x16xbf16, #tpu.memory_space<vmem>>, vector<1x16x16xbf16>
    %242 = vector.shape_cast %241 : vector<1x16x16xbf16> to vector<16x16xbf16>
    %cst_219 = arith.constant dense<0.000000e+00> : vector<16x64xf32>
    %243 = tpu.matmul %242, %237, %cst_219 {dimension_numbers = #tpu.dot_dimension_numbers<[1], [0], [0], [1], [0, 0, 1, 1], [], []>} : vector<16x16xbf16>, vector<16x64xbf16>, vector<16x64xf32> -> vector<16x64xf32>
    %c2_220 = arith.constant 2 : index
    %c0_221 = arith.constant 0 : index
    %c0_222 = arith.constant 0 : index
    %244 = vector.load %arg12[%c2_220, %c0_221, %c0_222] : memref<9x16x16xbf16, #tpu.memory_space<vmem>>, vector<1x16x16xbf16>
    %245 = vector.shape_cast %244 : vector<1x16x16xbf16> to vector<16x16xbf16>
    %cst_223 = arith.constant dense<0.000000e+00> : vector<16x64xf32>
    %246 = tpu.matmul %245, %237, %cst_223 {dimension_numbers = #tpu.dot_dimension_numbers<[1], [0], [0], [1], [0, 0, 1, 1], [], []>} : vector<16x16xbf16>, vector<16x64xbf16>, vector<16x64xf32> -> vector<16x64xf32>
    %c3_224 = arith.constant 3 : index
    %c0_225 = arith.constant 0 : index
    %c0_226 = arith.constant 0 : index
    %247 = vector.load %arg12[%c3_224, %c0_225, %c0_226] : memref<9x16x16xbf16, #tpu.memory_space<vmem>>, vector<1x16x16xbf16>
    %248 = vector.shape_cast %247 : vector<1x16x16xbf16> to vector<16x16xbf16>
    %cst_227 = arith.constant dense<0.000000e+00> : vector<16x64xf32>
    %249 = tpu.matmul %248, %237, %cst_227 {dimension_numbers = #tpu.dot_dimension_numbers<[1], [0], [0], [1], [0, 0, 1, 1], [], []>} : vector<16x16xbf16>, vector<16x64xbf16>, vector<16x64xf32> -> vector<16x64xf32>
    %c4_228 = arith.constant 4 : index
    %c0_229 = arith.constant 0 : index
    %c0_230 = arith.constant 0 : index
    %250 = vector.load %arg12[%c4_228, %c0_229, %c0_230] : memref<9x16x16xbf16, #tpu.memory_space<vmem>>, vector<1x16x16xbf16>
    %251 = vector.shape_cast %250 : vector<1x16x16xbf16> to vector<16x16xbf16>
    %cst_231 = arith.constant dense<0.000000e+00> : vector<16x64xf32>
    %252 = tpu.matmul %251, %237, %cst_231 {dimension_numbers = #tpu.dot_dimension_numbers<[1], [0], [0], [1], [0, 0, 1, 1], [], []>} : vector<16x16xbf16>, vector<16x64xbf16>, vector<16x64xf32> -> vector<16x64xf32>
    %c5_232 = arith.constant 5 : index
    %c0_233 = arith.constant 0 : index
    %c0_234 = arith.constant 0 : index
    %253 = vector.load %arg12[%c5_232, %c0_233, %c0_234] : memref<9x16x16xbf16, #tpu.memory_space<vmem>>, vector<1x16x16xbf16>
    %254 = vector.shape_cast %253 : vector<1x16x16xbf16> to vector<16x16xbf16>
    %cst_235 = arith.constant dense<0.000000e+00> : vector<16x64xf32>
    %255 = tpu.matmul %254, %237, %cst_235 {dimension_numbers = #tpu.dot_dimension_numbers<[1], [0], [0], [1], [0, 0, 1, 1], [], []>} : vector<16x16xbf16>, vector<16x64xbf16>, vector<16x64xf32> -> vector<16x64xf32>
    %c6_236 = arith.constant 6 : index
    %c0_237 = arith.constant 0 : index
    %c0_238 = arith.constant 0 : index
    %256 = vector.load %arg12[%c6_236, %c0_237, %c0_238] : memref<9x16x16xbf16, #tpu.memory_space<vmem>>, vector<1x16x16xbf16>
    %257 = vector.shape_cast %256 : vector<1x16x16xbf16> to vector<16x16xbf16>
    %cst_239 = arith.constant dense<0.000000e+00> : vector<16x64xf32>
    %258 = tpu.matmul %257, %237, %cst_239 {dimension_numbers = #tpu.dot_dimension_numbers<[1], [0], [0], [1], [0, 0, 1, 1], [], []>} : vector<16x16xbf16>, vector<16x64xbf16>, vector<16x64xf32> -> vector<16x64xf32>
    %c7_240 = arith.constant 7 : index
    %c0_241 = arith.constant 0 : index
    %c0_242 = arith.constant 0 : index
    %259 = vector.load %arg12[%c7_240, %c0_241, %c0_242] : memref<9x16x16xbf16, #tpu.memory_space<vmem>>, vector<1x16x16xbf16>
    %260 = vector.shape_cast %259 : vector<1x16x16xbf16> to vector<16x16xbf16>
    %cst_243 = arith.constant dense<0.000000e+00> : vector<16x64xf32>
    %261 = tpu.matmul %260, %237, %cst_243 {dimension_numbers = #tpu.dot_dimension_numbers<[1], [0], [0], [1], [0, 0, 1, 1], [], []>} : vector<16x16xbf16>, vector<16x64xbf16>, vector<16x64xf32> -> vector<16x64xf32>
    %c8_244 = arith.constant 8 : index
    %c0_245 = arith.constant 0 : index
    %c0_246 = arith.constant 0 : index
    %262 = vector.load %arg12[%c8_244, %c0_245, %c0_246] : memref<9x16x16xbf16, #tpu.memory_space<vmem>>, vector<1x16x16xbf16>
    %263 = vector.shape_cast %262 : vector<1x16x16xbf16> to vector<16x16xbf16>
    %cst_247 = arith.constant dense<0.000000e+00> : vector<16x64xf32>
    %264 = tpu.matmul %263, %237, %cst_247 {dimension_numbers = #tpu.dot_dimension_numbers<[1], [0], [0], [1], [0, 0, 1, 1], [], []>} : vector<16x16xbf16>, vector<16x64xbf16>, vector<16x64xf32> -> vector<16x64xf32>
    %265 = tpu.concatenate %240, %243, %246, %249, %252, %255, %258, %261, %264 in 1 : vector<16x64xf32>, vector<16x64xf32>, vector<16x64xf32>, vector<16x64xf32>, vector<16x64xf32>, vector<16x64xf32>, vector<16x64xf32>, vector<16x64xf32>, vector<16x64xf32> -> vector<16x576xf32>
    %266 = vector.extract_strided_slice %236 {offsets = [16, 0], sizes = [16, 64], strides = [1, 1]} : vector<32x64xbf16> to vector<16x64xbf16>
    %c0_248 = arith.constant 0 : index
    %c0_249 = arith.constant 0 : index
    %c0_250 = arith.constant 0 : index
    %267 = vector.load %arg12[%c0_248, %c0_249, %c0_250] : memref<9x16x16xbf16, #tpu.memory_space<vmem>>, vector<1x16x16xbf16>
    %268 = vector.shape_cast %267 : vector<1x16x16xbf16> to vector<16x16xbf16>
    %cst_251 = arith.constant dense<0.000000e+00> : vector<16x64xf32>
    %269 = tpu.matmul %268, %266, %cst_251 {dimension_numbers = #tpu.dot_dimension_numbers<[1], [0], [0], [1], [0, 0, 1, 1], [], []>} : vector<16x16xbf16>, vector<16x64xbf16>, vector<16x64xf32> -> vector<16x64xf32>
    %c1_252 = arith.constant 1 : index
    %c0_253 = arith.constant 0 : index
    %c0_254 = arith.constant 0 : index
    %270 = vector.load %arg12[%c1_252, %c0_253, %c0_254] : memref<9x16x16xbf16, #tpu.memory_space<vmem>>, vector<1x16x16xbf16>
    %271 = vector.shape_cast %270 : vector<1x16x16xbf16> to vector<16x16xbf16>
    %cst_255 = arith.constant dense<0.000000e+00> : vector<16x64xf32>
    %272 = tpu.matmul %271, %266, %cst_255 {dimension_numbers = #tpu.dot_dimension_numbers<[1], [0], [0], [1], [0, 0, 1, 1], [], []>} : vector<16x16xbf16>, vector<16x64xbf16>, vector<16x64xf32> -> vector<16x64xf32>
    %c2_256 = arith.constant 2 : index
    %c0_257 = arith.constant 0 : index
    %c0_258 = arith.constant 0 : index
    %273 = vector.load %arg12[%c2_256, %c0_257, %c0_258] : memref<9x16x16xbf16, #tpu.memory_space<vmem>>, vector<1x16x16xbf16>
    %274 = vector.shape_cast %273 : vector<1x16x16xbf16> to vector<16x16xbf16>
    %cst_259 = arith.constant dense<0.000000e+00> : vector<16x64xf32>
    %275 = tpu.matmul %274, %266, %cst_259 {dimension_numbers = #tpu.dot_dimension_numbers<[1], [0], [0], [1], [0, 0, 1, 1], [], []>} : vector<16x16xbf16>, vector<16x64xbf16>, vector<16x64xf32> -> vector<16x64xf32>
    %c3_260 = arith.constant 3 : index
    %c0_261 = arith.constant 0 : index
    %c0_262 = arith.constant 0 : index
    %276 = vector.load %arg12[%c3_260, %c0_261, %c0_262] : memref<9x16x16xbf16, #tpu.memory_space<vmem>>, vector<1x16x16xbf16>
    %277 = vector.shape_cast %276 : vector<1x16x16xbf16> to vector<16x16xbf16>
    %cst_263 = arith.constant dense<0.000000e+00> : vector<16x64xf32>
    %278 = tpu.matmul %277, %266, %cst_263 {dimension_numbers = #tpu.dot_dimension_numbers<[1], [0], [0], [1], [0, 0, 1, 1], [], []>} : vector<16x16xbf16>, vector<16x64xbf16>, vector<16x64xf32> -> vector<16x64xf32>
    %c4_264 = arith.constant 4 : index
    %c0_265 = arith.constant 0 : index
    %c0_266 = arith.constant 0 : index
    %279 = vector.load %arg12[%c4_264, %c0_265, %c0_266] : memref<9x16x16xbf16, #tpu.memory_space<vmem>>, vector<1x16x16xbf16>
    %280 = vector.shape_cast %279 : vector<1x16x16xbf16> to vector<16x16xbf16>
    %cst_267 = arith.constant dense<0.000000e+00> : vector<16x64xf32>
    %281 = tpu.matmul %280, %266, %cst_267 {dimension_numbers = #tpu.dot_dimension_numbers<[1], [0], [0], [1], [0, 0, 1, 1], [], []>} : vector<16x16xbf16>, vector<16x64xbf16>, vector<16x64xf32> -> vector<16x64xf32>
    %c5_268 = arith.constant 5 : index
    %c0_269 = arith.constant 0 : index
    %c0_270 = arith.constant 0 : index
    %282 = vector.load %arg12[%c5_268, %c0_269, %c0_270] : memref<9x16x16xbf16, #tpu.memory_space<vmem>>, vector<1x16x16xbf16>
    %283 = vector.shape_cast %282 : vector<1x16x16xbf16> to vector<16x16xbf16>
    %cst_271 = arith.constant dense<0.000000e+00> : vector<16x64xf32>
    %284 = tpu.matmul %283, %266, %cst_271 {dimension_numbers = #tpu.dot_dimension_numbers<[1], [0], [0], [1], [0, 0, 1, 1], [], []>} : vector<16x16xbf16>, vector<16x64xbf16>, vector<16x64xf32> -> vector<16x64xf32>
    %c6_272 = arith.constant 6 : index
    %c0_273 = arith.constant 0 : index
    %c0_274 = arith.constant 0 : index
    %285 = vector.load %arg12[%c6_272, %c0_273, %c0_274] : memref<9x16x16xbf16, #tpu.memory_space<vmem>>, vector<1x16x16xbf16>
    %286 = vector.shape_cast %285 : vector<1x16x16xbf16> to vector<16x16xbf16>
    %cst_275 = arith.constant dense<0.000000e+00> : vector<16x64xf32>
    %287 = tpu.matmul %286, %266, %cst_275 {dimension_numbers = #tpu.dot_dimension_numbers<[1], [0], [0], [1], [0, 0, 1, 1], [], []>} : vector<16x16xbf16>, vector<16x64xbf16>, vector<16x64xf32> -> vector<16x64xf32>
    %c7_276 = arith.constant 7 : index
    %c0_277 = arith.constant 0 : index
    %c0_278 = arith.constant 0 : index
    %288 = vector.load %arg12[%c7_276, %c0_277, %c0_278] : memref<9x16x16xbf16, #tpu.memory_space<vmem>>, vector<1x16x16xbf16>
    %289 = vector.shape_cast %288 : vector<1x16x16xbf16> to vector<16x16xbf16>
    %cst_279 = arith.constant dense<0.000000e+00> : vector<16x64xf32>
    %290 = tpu.matmul %289, %266, %cst_279 {dimension_numbers = #tpu.dot_dimension_numbers<[1], [0], [0], [1], [0, 0, 1, 1], [], []>} : vector<16x16xbf16>, vector<16x64xbf16>, vector<16x64xf32> -> vector<16x64xf32>
    %c8_280 = arith.constant 8 : index
    %c0_281 = arith.constant 0 : index
    %c0_282 = arith.constant 0 : index
    %291 = vector.load %arg12[%c8_280, %c0_281, %c0_282] : memref<9x16x16xbf16, #tpu.memory_space<vmem>>, vector<1x16x16xbf16>
    %292 = vector.shape_cast %291 : vector<1x16x16xbf16> to vector<16x16xbf16>
    %cst_283 = arith.constant dense<0.000000e+00> : vector<16x64xf32>
    %293 = tpu.matmul %292, %266, %cst_283 {dimension_numbers = #tpu.dot_dimension_numbers<[1], [0], [0], [1], [0, 0, 1, 1], [], []>} : vector<16x16xbf16>, vector<16x64xbf16>, vector<16x64xf32> -> vector<16x64xf32>
    %294 = tpu.concatenate %269, %272, %275, %278, %281, %284, %287, %290, %293 in 1 : vector<16x64xf32>, vector<16x64xf32>, vector<16x64xf32>, vector<16x64xf32>, vector<16x64xf32>, vector<16x64xf32>, vector<16x64xf32>, vector<16x64xf32>, vector<16x64xf32> -> vector<16x576xf32>
    %295 = tpu.concatenate %265, %294 in 0 : vector<16x576xf32>, vector<16x576xf32> -> vector<32x576xf32>
    %296 = arith.truncf %295 : vector<32x576xf32> to vector<32x576xbf16>
    %c0_284 = arith.constant 0 : index
    %c0_285 = arith.constant 0 : index
    %297 = vector.load %arg13[%c0_284, %c0_285] : memref<576x128xbf16, #tpu.memory_space<vmem>>, vector<576x128xbf16>
    %cst_286 = arith.constant dense<0.000000e+00> : vector<32x128xf32>
    %298 = tpu.matmul %296, %297, %cst_286 {dimension_numbers = #tpu.dot_dimension_numbers<[1], [0], [0], [1], [0, 0, 1, 1], [], []>} : vector<32x576xbf16>, vector<576x128xbf16>, vector<32x128xf32> -> vector<32x128xf32>
    %c0_287 = arith.constant 0 : index
    %c0_288 = arith.constant 0 : index
    %299 = vector.load %arg14[%c0_287, %c0_288] : memref<1x128xf32, #tpu.memory_space<vmem>>, vector<1x128xf32>
    %300 = vector.broadcast %299 : vector<1x128xf32> to vector<32x128xf32>
    %301 = arith.addf %298, %300 : vector<32x128xf32>
    %cst_289 = arith.constant 0.000000e+00 : f32
    %302 = vector.broadcast %cst_289 : f32 to vector<32x128xf32>
    %303 = arith.maximumf %301, %302 : vector<32x128xf32>
    %304 = vector.extract_strided_slice %303 {offsets = [0, 0], sizes = [16, 128], strides = [1, 1]} : vector<32x128xf32> to vector<16x128xf32>
    %cst_290 = arith.constant dense<0.000000e+00> : vector<128xf32>
    %305 = vector.multi_reduction <add>, %304, %cst_290 [0] : vector<16x128xf32> to vector<128xf32>
    %306 = vector.shape_cast %305 : vector<128xf32> to vector<1x128xf32>
    %cst_291 = arith.constant 1.600000e+01 : f32
    %307 = vector.broadcast %cst_291 : f32 to vector<1x128xf32>
    %308 = arith.divf %306, %307 : vector<1x128xf32>
    %309 = vector.extract_strided_slice %303 {offsets = [16, 0], sizes = [16, 128], strides = [1, 1]} : vector<32x128xf32> to vector<16x128xf32>
    %cst_292 = arith.constant dense<0.000000e+00> : vector<128xf32>
    %310 = vector.multi_reduction <add>, %309, %cst_292 [0] : vector<16x128xf32> to vector<128xf32>
    %311 = vector.shape_cast %310 : vector<128xf32> to vector<1x128xf32>
    %cst_293 = arith.constant 1.600000e+01 : f32
    %312 = vector.broadcast %cst_293 : f32 to vector<1x128xf32>
    %313 = arith.divf %311, %312 : vector<1x128xf32>
    %314 = tpu.concatenate %308, %313 in 0 : vector<1x128xf32>, vector<1x128xf32> -> vector<2x128xf32>
    %315 = arith.truncf %314 : vector<2x128xf32> to vector<2x128xbf16>
    %c0_294 = arith.constant 0 : index
    %c0_295 = arith.constant 0 : index
    %316 = vector.load %arg15[%c0_294, %c0_295] : memref<128x128xbf16, #tpu.memory_space<vmem>>, vector<128x128xbf16>
    %cst_296 = arith.constant dense<0.000000e+00> : vector<2x128xf32>
    %317 = tpu.matmul %315, %316, %cst_296 {dimension_numbers = #tpu.dot_dimension_numbers<[1], [0], [0], [1], [0, 0, 1, 1], [], []>} : vector<2x128xbf16>, vector<128x128xbf16>, vector<2x128xf32> -> vector<2x128xf32>
    %c0_297 = arith.constant 0 : index
    %c0_298 = arith.constant 0 : index
    %318 = vector.load %arg16[%c0_297, %c0_298] : memref<1x128xf32, #tpu.memory_space<vmem>>, vector<1x128xf32>
    %319 = vector.broadcast %318 : vector<1x128xf32> to vector<2x128xf32>
    %320 = arith.addf %317, %319 : vector<2x128xf32>
    %321 = vector.shape_cast %320 : vector<2x128xf32> to vector<2x1x128xf32>
    %c0_299 = arith.constant 0 : index
    %c0_300 = arith.constant 0 : index
    %c0_301 = arith.constant 0 : index
    %322 = vector.load %arg17[%c0_299, %c0_300, %c0_301] : memref<2x1x128xf32, #tpu.memory_space<vmem>>, vector<2x1x128xf32>
    tpu.vector_store %arg17[%c0_299, %c0_300, %c0_301], %321 {strides = array<i32>} : memref<2x1x128xf32, #tpu.memory_space<vmem>>, vector<2x1x128xf32>,
    return
  }
  func.func @transform_0(%arg0: i32) -> (i32, i32, i32) {
    %c0_i32 = arith.constant 0 : i32
    %c0_i32_0 = arith.constant 0 : i32
    %c0_i32_1 = arith.constant 0 : i32
    return %arg0, %c0_i32, %c0_i32_0 : i32, i32, i32
  }
  func.func @transform_1(%arg0: i32) -> (i32, i32) {
    %c0_i32 = arith.constant 0 : i32
    %c0_i32_0 = arith.constant 0 : i32
    %c0_i32_1 = arith.constant 0 : i32
    return %c0_i32, %c0_i32_0 : i32, i32
  }
  func.func @transform_2(%arg0: i32) -> (i32, i32) {
    %c0_i32 = arith.constant 0 : i32
    %c0_i32_0 = arith.constant 0 : i32
    %c0_i32_1 = arith.constant 0 : i32
    return %c0_i32, %c0_i32_0 : i32, i32
  }
  func.func @transform_3(%arg0: i32) -> (i32, i32, i32) {
    %c0_i32 = arith.constant 0 : i32
    %c0_i32_0 = arith.constant 0 : i32
    %c0_i32_1 = arith.constant 0 : i32
    %c0_i32_2 = arith.constant 0 : i32
    return %c0_i32, %c0_i32_0, %c0_i32_1 : i32, i32, i32
  }
  func.func @transform_4(%arg0: i32) -> (i32, i32) {
    %c0_i32 = arith.constant 0 : i32
    %c0_i32_0 = arith.constant 0 : i32
    %c0_i32_1 = arith.constant 0 : i32
    return %c0_i32, %c0_i32_0 : i32, i32
  }
  func.func @transform_5(%arg0: i32) -> (i32, i32) {
    %c0_i32 = arith.constant 0 : i32
    %c0_i32_0 = arith.constant 0 : i32
    %c0_i32_1 = arith.constant 0 : i32
    return %c0_i32, %c0_i32_0 : i32, i32
  }
  func.func @transform_6(%arg0: i32) -> (i32, i32, i32) {
    %c0_i32 = arith.constant 0 : i32
    %c0_i32_0 = arith.constant 0 : i32
    %c0_i32_1 = arith.constant 0 : i32
    %c0_i32_2 = arith.constant 0 : i32
    return %c0_i32, %c0_i32_0, %c0_i32_1 : i32, i32, i32
  }
  func.func @transform_7(%arg0: i32) -> (i32, i32, i32) {
    %c0_i32 = arith.constant 0 : i32
    %c0_i32_0 = arith.constant 0 : i32
    %c0_i32_1 = arith.constant 0 : i32
    %c0_i32_2 = arith.constant 0 : i32
    return %c0_i32, %c0_i32_0, %c0_i32_1 : i32, i32, i32
  }
  func.func @transform_8(%arg0: i32) -> (i32, i32) {
    %c0_i32 = arith.constant 0 : i32
    %c0_i32_0 = arith.constant 0 : i32
    %c0_i32_1 = arith.constant 0 : i32
    return %c0_i32, %c0_i32_0 : i32, i32
  }
  func.func @transform_9(%arg0: i32) -> (i32, i32) {
    %c0_i32 = arith.constant 0 : i32
    %c0_i32_0 = arith.constant 0 : i32
    %c0_i32_1 = arith.constant 0 : i32
    return %c0_i32, %c0_i32_0 : i32, i32
  }
  func.func @transform_10(%arg0: i32) -> (i32, i32) {
    %c0_i32 = arith.constant 0 : i32
    %c0_i32_0 = arith.constant 0 : i32
    %c0_i32_1 = arith.constant 0 : i32
    return %c0_i32, %c0_i32_0 : i32, i32
  }
  func.func @transform_11(%arg0: i32) -> (i32, i32, i32) {
    %c0_i32 = arith.constant 0 : i32
    %c0_i32_0 = arith.constant 0 : i32
    %c0_i32_1 = arith.constant 0 : i32
    %c0_i32_2 = arith.constant 0 : i32
    return %c0_i32, %c0_i32_0, %c0_i32_1 : i32, i32, i32
  }
  func.func @transform_12(%arg0: i32) -> (i32, i32) {
    %c0_i32 = arith.constant 0 : i32
    %c0_i32_0 = arith.constant 0 : i32
    %c0_i32_1 = arith.constant 0 : i32
    return %c0_i32, %c0_i32_0 : i32, i32
  }
  func.func @transform_13(%arg0: i32) -> (i32, i32) {
    %c0_i32 = arith.constant 0 : i32
    %c0_i32_0 = arith.constant 0 : i32
    %c0_i32_1 = arith.constant 0 : i32
    return %c0_i32, %c0_i32_0 : i32, i32
  }
  func.func @transform_14(%arg0: i32) -> (i32, i32) {
    %c0_i32 = arith.constant 0 : i32
    %c0_i32_0 = arith.constant 0 : i32
    %c0_i32_1 = arith.constant 0 : i32
    return %c0_i32, %c0_i32_0 : i32, i32
  }
  func.func @transform_15(%arg0: i32) -> (i32, i32) {
    %c0_i32 = arith.constant 0 : i32
    %c0_i32_0 = arith.constant 0 : i32
    %c0_i32_1 = arith.constant 0 : i32
    return %c0_i32, %c0_i32_0 : i32, i32
  }
  func.func @transform_16(%arg0: i32) -> (i32, i32, i32) {
    %c0_i32 = arith.constant 0 : i32
    %c0_i32_0 = arith.constant 0 : i32
    %c0_i32_1 = arith.constant 0 : i32
    return %arg0, %c0_i32, %c0_i32_0 : i32, i32, i32
  }
}

</mosaic_0001>

<llo_original>
// kernel: forward.1
$region0: #{forward.1}
  #allocation0 [shape = 'u32[]', space=smem, size = 0x4, offset = 0x4, fixed_abs, tag = 'smem constant byte address 0x4 - core index']
  #allocation1 [shape = 'u32[144,128]{1,0:T(1,128)}', space=vmem, size = 0x12000, scoped, tag = 'internal scratch']
  %s0 = inlined_call_operand.vmem [shape: bf16[2,256,27], index: 0, kind: input, shape index: {}]
  %s1 = inlined_call_operand.vmem [shape: bf16[27,16], index: 1, kind: input, shape index: {}]
  %s2 = inlined_call_operand.vmem [shape: f32[1,16], index: 2, kind: input, shape index: {}]
  %s3 = inlined_call_operand.vmem [shape: bf16[9,64,256], index: 3, kind: input, shape index: {}]
  %s4 = inlined_call_operand.vmem [shape: bf16[144,32], index: 4, kind: input, shape index: {}]
  %s5 = inlined_call_operand.vmem [shape: f32[1,32], index: 5, kind: input, shape index: {}]
  %s6 = inlined_call_operand.vmem [shape: bf16[9,16,64], index: 6, kind: input, shape index: {}]
  %s7 = inlined_call_operand.vmem [shape: f32[9,1,32], index: 7, kind: input, shape index: {}]
  %s8 = inlined_call_operand.vmem [shape: f32[1,32], index: 8, kind: input, shape index: {}]
  %s9 = inlined_call_operand.vmem [shape: bf16[32,64], index: 9, kind: input, shape index: {}]
  %s10 = inlined_call_operand.vmem [shape: f32[1,64], index: 10, kind: input, shape index: {}]
  %s11 = inlined_call_operand.vmem [shape: bf16[9,16,16], index: 11, kind: input, shape index: {}]
  %s12 = inlined_call_operand.vmem [shape: bf16[576,128], index: 12, kind: input, shape index: {}]
  %s13 = inlined_call_operand.vmem [shape: f32[1,128], index: 13, kind: input, shape index: {}]
  %s14 = inlined_call_operand.vmem [shape: bf16[128,128], index: 14, kind: input, shape index: {}]
  %s15 = inlined_call_operand.vmem [shape: f32[1,128], index: 15, kind: input, shape index: {}]
  %s16 = inlined_call_operand.hbm [shape: f32[2,1,128], index: 16, kind: output, shape index: {}]
  %s17 = sld [smem:[#allocation0]]
  $region74: #{forward.1} parent=0
    _
  %s19 = ssub.s32 1, %s17
  %s20 = scalar_select 0, %s19, %s17
  $region1: #{forward.1} parent=0
    #allocation2 [shape = 'u8[1024]{0}', space=vmem, size = 0x400, scoped, tag = 'output window, operand 0, single buffered']
    #allocation3 [shape = 's32[1]{0}', space=sflag, size = 0x4, scoped, tag = 'scoped memory for forward.1']
    %21 = vsyncpa [#allocation3], 0
    // Predicated region
    $region2: #{forward.1} parent=1 // pred_check
      _
    $region3: #{forward.1} parent=1 // pred_check_branch
      %23 = sbr.rel (0) target = $region5
    $region4: #{forward.1} parent=1 // pred_region
      _
    $region5: #{forward.1} parent=1 // pred_fallthru
      _
    // Predicated region
    $region6: #{forward.1} parent=1 // pred_check
      _
    $region7: #{forward.1} parent=1 // pred_check_branch
      %25 = sbr.rel (0) target = $region9
    $region8: #{forward.1} parent=1 // pred_region
      _
    $region9: #{forward.1} parent=1 // pred_fallthru
      _
    // Predicated region
    $region10: #{forward.1} parent=1 // pred_check
      _
    $region11: #{forward.1} parent=1 // pred_check_branch
      %27 = sbr.rel (0) target = $region13
    $region12: #{forward.1} parent=1 // pred_region
      _
    $region13: #{forward.1} parent=1 // pred_fallthru
      _
    // Predicated region
    $region14: #{forward.1} parent=1 // pred_check
      _
    $region15: #{forward.1} parent=1 // pred_check_branch
      %29 = sbr.rel (0) target = $region17
    $region16: #{forward.1} parent=1 // pred_region
      _
    $region17: #{forward.1} parent=1 // pred_fallthru
      _
    // Predicated region
    $region18: #{forward.1} parent=1 // pred_check
      _
    $region19: #{forward.1} parent=1 // pred_check_branch
      %31 = sbr.rel (0) target = $region21
    $region20: #{forward.1} parent=1 // pred_region
      _
    $region21: #{forward.1} parent=1 // pred_fallthru
      _
    // Predicated region
    $region22: #{forward.1} parent=1 // pred_check
      _
    $region23: #{forward.1} parent=1 // pred_check_branch
      %33 = sbr.rel (0) target = $region25
    $region24: #{forward.1} parent=1 // pred_region
      _
    $region25: #{forward.1} parent=1 // pred_fallthru
      _
    // Predicated region
    $region26: #{forward.1} parent=1 // pred_check
      _
    $region27: #{forward.1} parent=1 // pred_check_branch
      %35 = sbr.rel (0) target = $region29
    $region28: #{forward.1} parent=1 // pred_region
      _
    $region29: #{forward.1} parent=1 // pred_fallthru
      _
    // Predicated region
    $region30: #{forward.1} parent=1 // pred_check
      _
    $region31: #{forward.1} parent=1 // pred_check_branch
      %37 = sbr.rel (0) target = $region33
    $region32: #{forward.1} parent=1 // pred_region
      _
    $region33: #{forward.1} parent=1 // pred_fallthru
      _
    // Predicated region
    $region34: #{forward.1} parent=1 // pred_check
      _
    $region35: #{forward.1} parent=1 // pred_check_branch
      %39 = sbr.rel (0) target = $region37
    $region36: #{forward.1} parent=1 // pred_region
      _
    $region37: #{forward.1} parent=1 // pred_fallthru
      _
    // Predicated region
    $region38: #{forward.1} parent=1 // pred_check
      _
    $region39: #{forward.1} parent=1 // pred_check_branch
      %41 = sbr.rel (0) target = $region41
    $region40: #{forward.1} parent=1 // pred_region
      _
    $region41: #{forward.1} parent=1 // pred_fallthru
      _
    // Predicated region
    $region42: #{forward.1} parent=1 // pred_check
      _
    $region43: #{forward.1} parent=1 // pred_check_branch
      %43 = sbr.rel (0) target = $region45
    $region44: #{forward.1} parent=1 // pred_region
      _
    $region45: #{forward.1} parent=1 // pred_fallthru
      _
    // Predicated region
    $region46: #{forward.1} parent=1 // pred_check
      _
    $region47: #{forward.1} parent=1 // pred_check_branch
      %45 = sbr.rel (0) target = $region49
    $region48: #{forward.1} parent=1 // pred_region
      _
    $region49: #{forward.1} parent=1 // pred_fallthru
      _
    // Predicated region
    $region50: #{forward.1} parent=1 // pred_check
      _
    $region51: #{forward.1} parent=1 // pred_check_branch
      %47 = sbr.rel (0) target = $region53
    $region52: #{forward.1} parent=1 // pred_region
      _
    $region53: #{forward.1} parent=1 // pred_fallthru
      _
    // Predicated region
    $region54: #{forward.1} parent=1 // pred_check
      _
    $region55: #{forward.1} parent=1 // pred_check_branch
      %49 = sbr.rel (0) target = $region57
    $region56: #{forward.1} parent=1 // pred_region
      _
    $region57: #{forward.1} parent=1 // pred_fallthru
      _
    // Predicated region
    $region58: #{forward.1} parent=1 // pred_check
      _
    $region59: #{forward.1} parent=1 // pred_check_branch
      %51 = sbr.rel (0) target = $region61
    $region60: #{forward.1} parent=1 // pred_region
      _
    $region61: #{forward.1} parent=1 // pred_fallthru
      _
    // Predicated region
    $region62: #{forward.1} parent=1 // pred_check
      _
    $region63: #{forward.1} parent=1 // pred_check_branch
      %53 = sbr.rel (0) target = $region65
    $region64: #{forward.1} parent=1 // pred_region
      _
    $region65: #{forward.1} parent=1 // pred_fallthru
      _
    %v55 = vld [vmem:[%s0] sm:$0xf]
    %v56 = vld [vmem:[%s0 + $0x4] sm:$0xf]
    %v57 = vld [vmem:[%s0 + $0x8] sm:$0xf]
    %v58 = vld [vmem:[%s0 + $0xc] sm:$0xf]
    %v59 = vld [vmem:[%s0 + $0x10] sm:$0xf]
    %v60 = vld [vmem:[%s0 + $0x14] sm:$0xf]
    %v61 = vld [vmem:[%s0 + $0x18] sm:$0xf]
    %v62 = vld [vmem:[%s0 + $0x1c] sm:$0xf]
    %v63 = vld [vmem:[%s0 + $0x20] sm:$0xf]
    %v64 = vld [vmem:[%s0 + $0x24] sm:$0xf]
    %v65 = vld [vmem:[%s0 + $0x28] sm:$0xf]
    %v66 = vld [vmem:[%s0 + $0x2c] sm:$0xf]
    %v67 = vld [vmem:[%s0 + $0x30] sm:$0xf]
    %v68 = vld [vmem:[%s0 + $0x34] sm:$0xf]
    %v69 = vld [vmem:[%s0 + $0x38] sm:$0xf]
    %v70 = vld [vmem:[%s0 + $0x3c] sm:$0xf]
    %v71 = vld [vmem:[%s0 + $0x40] sm:$0xf]
    %v72 = vld [vmem:[%s0 + $0x44] sm:$0xf]
    %v73 = vld [vmem:[%s0 + $0x48] sm:$0xf]
    %v74 = vld [vmem:[%s0 + $0x4c] sm:$0xf]
    %v75 = vld [vmem:[%s0 + $0x50] sm:$0xf]
    %v76 = vld [vmem:[%s0 + $0x54] sm:$0xf]
    %v77 = vld [vmem:[%s0 + $0x58] sm:$0xf]
    %v78 = vld [vmem:[%s0 + $0x5c] sm:$0xf]
    %v79 = vld [vmem:[%s0 + $0x60] sm:$0xf]
    %v80 = vld [vmem:[%s0 + $0x64] sm:$0xf]
    %v81 = vld [vmem:[%s0 + $0x68] sm:$0xf]
    %v82 = vld [vmem:[%s0 + $0x6c] sm:$0xf]
    %v83 = vld [vmem:[%s0 + $0x70] sm:$0xf]
    %v84 = vld [vmem:[%s0 + $0x74] sm:$0xf]
    %v85 = vld [vmem:[%s0 + $0x78] sm:$0xf]
    %v86 = vld [vmem:[%s0 + $0x7c] sm:$0xf]
    %v87 = vld [vmem:[%s0 + $0x80] sm:$0xf]
    %v88 = vld [vmem:[%s0 + $0x84] sm:$0xf]
    %v89 = vld [vmem:[%s0 + $0x88] sm:$0xf]
    %v90 = vld [vmem:[%s0 + $0x8c] sm:$0xf]
    %v91 = vld [vmem:[%s0 + $0x90] sm:$0xf]
    %v92 = vld [vmem:[%s0 + $0x94] sm:$0xf]
    %v93 = vld [vmem:[%s0 + $0x98] sm:$0xf]
    %v94 = vld [vmem:[%s0 + $0x9c] sm:$0xf]
    %v95 = vld [vmem:[%s0 + $0xa0] sm:$0xf]
    %v96 = vld [vmem:[%s0 + $0xa4] sm:$0xf]
    %v97 = vld [vmem:[%s0 + $0xa8] sm:$0xf]
    %v98 = vld [vmem:[%s0 + $0xac] sm:$0xf]
    %v99 = vld [vmem:[%s0 + $0xb0] sm:$0xf]
    %v100 = vld [vmem:[%s0 + $0xb4] sm:$0xf]
    %v101 = vld [vmem:[%s0 + $0xb8] sm:$0xf]
    %v102 = vld [vmem:[%s0 + $0xbc] sm:$0xf]
    %v103 = vld [vmem:[%s0 + $0xc0] sm:$0xf]
    %v104 = vld [vmem:[%s0 + $0xc4] sm:$0xf]
    %v105 = vld [vmem:[%s0 + $0xc8] sm:$0xf]
    %v106 = vld [vmem:[%s0 + $0xcc] sm:$0xf]
    %v107 = vld [vmem:[%s0 + $0xd0] sm:$0xf]
    %v108 = vld [vmem:[%s0 + $0xd4] sm:$0xf]
    %v109 = vld [vmem:[%s0 + $0xd8] sm:$0xf]
    %v110 = vld [vmem:[%s0 + $0xdc] sm:$0xf]
    %v111 = vld [vmem:[%s0 + $0xe0] sm:$0xf]
    %v112 = vld [vmem:[%s0 + $0xe4] sm:$0xf]
    %v113 = vld [vmem:[%s0 + $0xe8] sm:$0xf]
    %v114 = vld [vmem:[%s0 + $0xec] sm:$0xf]
    %v115 = vld [vmem:[%s0 + $0xf0] sm:$0xf]
    %v116 = vld [vmem:[%s0 + $0xf4] sm:$0xf]
    %v117 = vld [vmem:[%s0 + $0xf8] sm:$0xf]
    %v118 = vld [vmem:[%s0 + $0xfc] sm:$0xf]
    %v119 = vld [vmem:[%s1] sm:$0xf]
    %v120 = vld [vmem:[%s1 + $0x4] sm:$0xf]
    %v121 = vld [vmem:[%s1 + $0x8] sm:$0xf]
    %v122 = vld [vmem:[%s1 + $0xc] sm:$0x3]
    %v123 = vld [vmem:[%s2] sm:$0x1]
    %v125 = vlaneseq
    %v126 = vshrl.u32 %v125, 7
    %v127 = vsub.s32 0, %v126
    %v128 = vrot.slane %v123, %v127
    %v194 = vunpack.c.l.b16 %v55
    %v195 = vunpack.c.l.b16 %v56
    %v196 = vunpack.c.l.b16 %v57
    %v197 = vunpack.c.l.b16 %v58
    %v198 = vunpack.c.l.b16 %v59
    %v199 = vunpack.c.l.b16 %v60
    %v200 = vunpack.c.l.b16 %v61
    %v201 = vunpack.c.l.b16 %v62
    %v202 = vunpack.c.l.b16 %v63
    %v203 = vunpack.c.l.b16 %v64
    %v204 = vunpack.c.l.b16 %v65
    %v205 = vunpack.c.l.b16 %v66
    %v206 = vunpack.c.l.b16 %v67
    %v207 = vunpack.c.l.b16 %v68
    %v208 = vunpack.c.l.b16 %v69
    %v209 = vunpack.c.l.b16 %v70
    %v210 = vunpack.c.l.b16 %v71
    %v211 = vunpack.c.l.b16 %v72
    %v212 = vunpack.c.l.b16 %v73
    %v213 = vunpack.c.l.b16 %v74
    %v214 = vunpack.c.l.b16 %v75
    %v215 = vunpack.c.l.b16 %v76
    %v216 = vunpack.c.l.b16 %v77
    %v217 = vunpack.c.l.b16 %v78
    %v218 = vunpack.c.l.b16 %v79
    %v219 = vunpack.c.l.b16 %v80
    %v220 = vunpack.c.l.b16 %v81
    %v221 = vunpack.c.l.b16 %v82
    %v222 = vunpack.c.l.b16 %v83
    %v223 = vunpack.c.l.b16 %v84
    %v224 = vunpack.c.l.b16 %v85
    %v225 = vunpack.c.l.b16 %v86
    %v226 = vunpack.c.l.b16 %v87
    %v227 = vunpack.c.l.b16 %v88
    %v228 = vunpack.c.l.b16 %v89
    %v229 = vunpack.c.l.b16 %v90
    %v230 = vunpack.c.l.b16 %v91
    %v231 = vunpack.c.l.b16 %v92
    %v232 = vunpack.c.l.b16 %v93
    %v233 = vunpack.c.l.b16 %v94
    %v234 = vunpack.c.l.b16 %v95
    %v235 = vunpack.c.l.b16 %v96
    %v236 = vunpack.c.l.b16 %v97
    %v237 = vunpack.c.l.b16 %v98
    %v238 = vunpack.c.l.b16 %v99
    %v239 = vunpack.c.l.b16 %v100
    %v240 = vunpack.c.l.b16 %v101
    %v241 = vunpack.c.l.b16 %v102
    %v242 = vunpack.c.l.b16 %v103
    %v243 = vunpack.c.l.b16 %v104
    %v244 = vunpack.c.l.b16 %v105
    %v245 = vunpack.c.l.b16 %v106
    %v246 = vunpack.c.l.b16 %v107
    %v247 = vunpack.c.l.b16 %v108
    %v248 = vunpack.c.l.b16 %v109
    %v249 = vunpack.c.l.b16 %v110
    %v250 = vunpack.c.l.b16 %v111
    %v251 = vunpack.c.l.b16 %v112
    %v252 = vunpack.c.l.b16 %v113
    %v253 = vunpack.c.l.b16 %v114
    %v254 = vunpack.c.l.b16 %v115
    %v255 = vunpack.c.l.b16 %v116
    %v256 = vunpack.c.l.b16 %v117
    %v257 = vunpack.c.l.b16 %v118
    %v258 = vpack.c.b16 %v195, %v194
    %v259 = vpack.c.b16 %v197, %v196
    %v260 = vpack.c.b16 %v199, %v198
    %v261 = vpack.c.b16 %v201, %v200
    %v262 = vpack.c.b16 %v203, %v202
    %v263 = vpack.c.b16 %v205, %v204
    %v264 = vpack.c.b16 %v207, %v206
    %v265 = vpack.c.b16 %v209, %v208
    %v266 = vpack.c.b16 %v211, %v210
    %v267 = vpack.c.b16 %v213, %v212
    %v268 = vpack.c.b16 %v215, %v214
    %v269 = vpack.c.b16 %v217, %v216
    %v270 = vpack.c.b16 %v219, %v218
    %v271 = vpack.c.b16 %v221, %v220
    %v272 = vpack.c.b16 %v223, %v222
    %v273 = vpack.c.b16 %v225, %v224
    %v274 = vpack.c.b16 %v227, %v226
    %v275 = vpack.c.b16 %v229, %v228
    %v276 = vpack.c.b16 %v231, %v230
    %v277 = vpack.c.b16 %v233, %v232
    %v278 = vpack.c.b16 %v235, %v234
    %v279 = vpack.c.b16 %v237, %v236
    %v280 = vpack.c.b16 %v239, %v238
    %v281 = vpack.c.b16 %v241, %v240
    %v282 = vpack.c.b16 %v243, %v242
    %v283 = vpack.c.b16 %v245, %v244
    %v284 = vpack.c.b16 %v247, %v246
    %v285 = vpack.c.b16 %v249, %v248
    %v286 = vpack.c.b16 %v251, %v250
    %v287 = vpack.c.b16 %v253, %v252
    %v288 = vpack.c.b16 %v255, %v254
    %v289 = vpack.c.b16 %v257, %v256
    %v294 = vunpack.c.l.b16 %v119
    %v295 = vunpack.c.l.b16 %v120
    %v296 = vunpack.c.l.b16 %v121
    %v297 = vunpack.c.l.b16 %v122
    %v298 = vpack.c.b16 %v295, %v294
    %v299 = vpack.c.b16 %v297, %v296
    %vm301 = vcmask 220160
    %v303 = vsel %vm301, %v258, 0
    %v306 = vsel %vm301, %v259, 0
    %v309 = vsel %vm301, %v260, 0
    %v312 = vsel %vm301, %v261, 0
    %v315 = vsel %vm301, %v262, 0
    %v318 = vsel %vm301, %v263, 0
    %v321 = vsel %vm301, %v264, 0
    %v324 = vsel %vm301, %v265, 0
    %v327 = vsel %vm301, %v266, 0
    %v330 = vsel %vm301, %v267, 0
    %v333 = vsel %vm301, %v268, 0
    %v336 = vsel %vm301, %v269, 0
    %v339 = vsel %vm301, %v270, 0
    %v342 = vsel %vm301, %v271, 0
    %v345 = vsel %vm301, %v272, 0
    %v348 = vsel %vm301, %v273, 0
    %v351 = vsel %vm301, %v274, 0
    %v354 = vsel %vm301, %v275, 0
    %v357 = vsel %vm301, %v276, 0
    %v360 = vsel %vm301, %v277, 0
    %v363 = vsel %vm301, %v278, 0
    %v366 = vsel %vm301, %v279, 0
    %v369 = vsel %vm301, %v280, 0
    %v372 = vsel %vm301, %v281, 0
    %v375 = vsel %vm301, %v282, 0
    %v378 = vsel %vm301, %v283, 0
    %v381 = vsel %vm301, %v284, 0
    %v384 = vsel %vm301, %v285, 0
    %v387 = vsel %vm301, %v286, 0
    %v390 = vsel %vm301, %v287, 0
    %v393 = vsel %vm301, %v288, 0
    %v396 = vsel %vm301, %v289, 0
    %vm398 = vcmask 1044480
    %vm399 = vcmask 1045504
    %v400 = vsel %vm398, 4294967295, 65535
    %v401 = vsel %vm399, %v400, 0
    %v403 = vand.u32 %v299, %v401
    %405 = vmatprep.subr.bf16.mxu0 0
    %406 = vmatpush1.bf16.msra.mxu0 %v298
    %407 = vmatprep.subr.bf16.mxu0 0
    %408 = vmatpush1.bf16.msra.mxu0 %v403
    %409 = vmatprep.subr.bf16.mxu0 0
    %410 = vmatpush1.bf16.msra.mxu0 0
    %411 = vmatprep.subr.bf16.mxu0 0
    %412 = vmatpush1.bf16.msra.mxu0 0
    %413 = vmatprep.subr.bf16.mxu0 0
    %414 = vmatpush1.bf16.msra.mxu0 0
    %415 = vmatprep.subr.bf16.mxu0 0
    %416 = vmatpush1.bf16.msra.mxu0 0
    %417 = vmatprep.subr.bf16.mxu0 0
    %418 = vmatpush1.bf16.msra.mxu0 0
    %419 = vmatprep.subr.bf16.mxu0 0
    %420 = vmatpush1.bf16.msra.mxu0 0
    %421 = vmatprep.subr.bf16.mxu0 0
    %422 = vmatpush1.bf16.msra.mxu0 0
    %423 = vmatprep.subr.bf16.mxu0 0
    %424 = vmatpush1.bf16.msra.mxu0 0
    %425 = vmatprep.subr.bf16.mxu0 0
    %426 = vmatpush1.bf16.msra.mxu0 0
    %427 = vmatprep.subr.bf16.mxu0 0
    %428 = vmatpush1.bf16.msra.mxu0 0
    %429 = vmatprep.subr.bf16.mxu0 0
    %430 = vmatpush1.bf16.msra.mxu0 0
    %431 = vmatprep.subr.bf16.mxu0 0
    %432 = vmatpush1.bf16.msra.mxu0 0
    %433 = vmatprep.subr.bf16.mxu0 0
    %434 = vmatpush1.bf16.msra.mxu0 0
    %435 = vmatprep.subr.bf16.mxu0 0
    %436 = vmatpush1.bf16.msra.mxu0 0
    %437 = vmatprep.mubr.bf16.mxu0 0
    %438 = vmatmul.mubr.bf16.gmra.mrb[0].mxu0 %v303
    %v439 = vpop.f32.mrb[0].mxu0
    %v440 = vadd.f32 %v128, %v439
    %v441 = vpop.f32.mrb[0].mxu0
    %v442 = vpop.f32.mrb[0].mxu0
    %v443 = vadd.f32 %v128, %v442
    %v444 = vpop.f32.mrb[0].mxu0
    %445 = vmatprep.mubr.bf16.mxu0 0
    %446 = vmatmul.mubr.bf16.gmra.mrb[0].mxu0 %v306
    %v447 = vpop.f32.mrb[0].mxu0
    %v448 = vadd.f32 %v128, %v447
    %v449 = vpop.f32.mrb[0].mxu0
    %v450 = vpop.f32.mrb[0].mxu0
    %v451 = vadd.f32 %v128, %v450
    %v452 = vpop.f32.mrb[0].mxu0
    %453 = vmatprep.mubr.bf16.mxu0 0
    %454 = vmatmul.mubr.bf16.gmra.mrb[0].mxu0 %v309
    %v455 = vpop.f32.mrb[0].mxu0
    %v456 = vadd.f32 %v128, %v455
    %v457 = vpop.f32.mrb[0].mxu0
    %v458 = vpop.f32.mrb[0].mxu0
    %v459 = vadd.f32 %v128, %v458
    %v460 = vpop.f32.mrb[0].mxu0
    %461 = vmatprep.mubr.bf16.mxu0 0
    %462 = vmatmul.mubr.bf16.gmra.mrb[0].mxu0 %v312
    %v463 = vpop.f32.mrb[0].mxu0
    %v464 = vadd.f32 %v128, %v463
    %v465 = vpop.f32.mrb[0].mxu0
    %v466 = vpop.f32.mrb[0].mxu0
    %v467 = vadd.f32 %v128, %v466
    %v468 = vpop.f32.mrb[0].mxu0
    %469 = vmatprep.mubr.bf16.mxu0 0
    %470 = vmatmul.mubr.bf16.gmra.mrb[0].mxu0 %v315
    %v471 = vpop.f32.mrb[0].mxu0
    %v472 = vadd.f32 %v128, %v471
    %v473 = vpop.f32.mrb[0].mxu0
    %v474 = vpop.f32.mrb[0].mxu0
    %v475 = vadd.f32 %v128, %v474
    %v476 = vpop.f32.mrb[0].mxu0
    %477 = vmatprep.mubr.bf16.mxu0 0
    %478 = vmatmul.mubr.bf16.gmra.mrb[0].mxu0 %v318
    %v479 = vpop.f32.mrb[0].mxu0
    %v480 = vadd.f32 %v128, %v479
    %v481 = vpop.f32.mrb[0].mxu0
    %v482 = vpop.f32.mrb[0].mxu0
    %v483 = vadd.f32 %v128, %v482
    %v484 = vpop.f32.mrb[0].mxu0
    %485 = vmatprep.mubr.bf16.mxu0 0
    %486 = vmatmul.mubr.bf16.gmra.mrb[0].mxu0 %v321
    %v487 = vpop.f32.mrb[0].mxu0
    %v488 = vadd.f32 %v128, %v487
    %v489 = vpop.f32.mrb[0].mxu0
    %v490 = vpop.f32.mrb[0].mxu0
    %v491 = vadd.f32 %v128, %v490
    %v492 = vpop.f32.mrb[0].mxu0
    %493 = vmatprep.mubr.bf16.mxu0 0
    %494 = vmatmul.mubr.bf16.gmra.mrb[0].mxu0 %v324
    %v495 = vpop.f32.mrb[0].mxu0
    %v496 = vadd.f32 %v128, %v495
    %v497 = vpop.f32.mrb[0].mxu0
    %v498 = vpop.f32.mrb[0].mxu0
    %v499 = vadd.f32 %v128, %v498
    %v500 = vpop.f32.mrb[0].mxu0
    %501 = vmatprep.mubr.bf16.mxu0 0
    %502 = vmatmul.mubr.bf16.gmra.mrb[0].mxu0 %v327
    %v503 = vpop.f32.mrb[0].mxu0
    %v504 = vadd.f32 %v128, %v503
    %v505 = vpop.f32.mrb[0].mxu0
    %v506 = vpop.f32.mrb[0].mxu0
    %v507 = vadd.f32 %v128, %v506
    %v508 = vpop.f32.mrb[0].mxu0
    %509 = vmatprep.mubr.bf16.mxu0 0
    %510 = vmatmul.mubr.bf16.gmra.mrb[0].mxu0 %v330
    %v511 = vpop.f32.mrb[0].mxu0
    %v512 = vadd.f32 %v128, %v511
    %v513 = vpop.f32.mrb[0].mxu0
    %v514 = vpop.f32.mrb[0].mxu0
    %v515 = vadd.f32 %v128, %v514
    %v516 = vpop.f32.mrb[0].mxu0
    %517 = vmatprep.mubr.bf16.mxu0 0
    %518 = vmatmul.mubr.bf16.gmra.mrb[0].mxu0 %v333
    %v519 = vpop.f32.mrb[0].mxu0
    %v520 = vadd.f32 %v128, %v519
    %v521 = vpop.f32.mrb[0].mxu0
    %v522 = vpop.f32.mrb[0].mxu0
    %v523 = vadd.f32 %v128, %v522
    %v524 = vpop.f32.mrb[0].mxu0
    %525 = vmatprep.mubr.bf16.mxu0 0
    %526 = vmatmul.mubr.bf16.gmra.mrb[0].mxu0 %v336
    %v527 = vpop.f32.mrb[0].mxu0
    %v528 = vadd.f32 %v128, %v527
    %v529 = vpop.f32.mrb[0].mxu0
    %v530 = vpop.f32.mrb[0].mxu0
    %v531 = vadd.f32 %v128, %v530
    %v532 = vpop.f32.mrb[0].mxu0
    %533 = vmatprep.mubr.bf16.mxu0 0
    %534 = vmatmul.mubr.bf16.gmra.mrb[0].mxu0 %v339
    %v535 = vpop.f32.mrb[0].mxu0
    %v536 = vadd.f32 %v128, %v535
    %v537 = vpop.f32.mrb[0].mxu0
    %v538 = vpop.f32.mrb[0].mxu0
    %v539 = vadd.f32 %v128, %v538
    %v540 = vpop.f32.mrb[0].mxu0
    %541 = vmatprep.mubr.bf16.mxu0 0
    %542 = vmatmul.mubr.bf16.gmra.mrb[0].mxu0 %v342
    %v543 = vpop.f32.mrb[0].mxu0
    %v544 = vadd.f32 %v128, %v543
    %v545 = vpop.f32.mrb[0].mxu0
    %v546 = vpop.f32.mrb[0].mxu0
    %v547 = vadd.f32 %v128, %v546
    %v548 = vpop.f32.mrb[0].mxu0
    %549 = vmatprep.mubr.bf16.mxu0 0
    %550 = vmatmul.mubr.bf16.gmra.mrb[0].mxu0 %v345
    %v551 = vpop.f32.mrb[0].mxu0
    %v552 = vadd.f32 %v128, %v551
    %v553 = vpop.f32.mrb[0].mxu0
    %v554 = vpop.f32.mrb[0].mxu0
    %v555 = vadd.f32 %v128, %v554
    %v556 = vpop.f32.mrb[0].mxu0
    %557 = vmatprep.mubr.bf16.mxu0 0
    %558 = vmatmul.mubr.bf16.gmra.mrb[0].mxu0 %v348
    %v559 = vpop.f32.mrb[0].mxu0
    %v560 = vadd.f32 %v128, %v559
    %v561 = vpop.f32.mrb[0].mxu0
    %v562 = vpop.f32.mrb[0].mxu0
    %v563 = vadd.f32 %v128, %v562
    %v564 = vpop.f32.mrb[0].mxu0
    %565 = vmatprep.mubr.bf16.mxu0 0
    %566 = vmatmul.mubr.bf16.gmra.mrb[0].mxu0 %v351
    %v567 = vpop.f32.mrb[0].mxu0
    %v568 = vadd.f32 %v128, %v567
    %v569 = vpop.f32.mrb[0].mxu0
    %v570 = vpop.f32.mrb[0].mxu0
    %v571 = vadd.f32 %v128, %v570
    %v572 = vpop.f32.mrb[0].mxu0
    %573 = vmatprep.mubr.bf16.mxu0 0
    %574 = vmatmul.mubr.bf16.gmra.mrb[0].mxu0 %v354
    %v575 = vpop.f32.mrb[0].mxu0
    %v576 = vadd.f32 %v128, %v575
    %v577 = vpop.f32.mrb[0].mxu0
    %v578 = vpop.f32.mrb[0].mxu0
    %v579 = vadd.f32 %v128, %v578
    %v580 = vpop.f32.mrb[0].mxu0
    %581 = vmatprep.mubr.bf16.mxu0 0
    %582 = vmatmul.mubr.bf16.gmra.mrb[0].mxu0 %v357
    %v583 = vpop.f32.mrb[0].mxu0
    %v584 = vadd.f32 %v128, %v583
    %v585 = vpop.f32.mrb[0].mxu0
    %v586 = vpop.f32.mrb[0].mxu0
    %v587 = vadd.f32 %v128, %v586
    %v588 = vpop.f32.mrb[0].mxu0
    %589 = vmatprep.mubr.bf16.mxu0 0
    %590 = vmatmul.mubr.bf16.gmra.mrb[0].mxu0 %v360
    %v591 = vpop.f32.mrb[0].mxu0
    %v592 = vadd.f32 %v128, %v591
    %v593 = vpop.f32.mrb[0].mxu0
    %v594 = vpop.f32.mrb[0].mxu0
    %v595 = vadd.f32 %v128, %v594
    %v596 = vpop.f32.mrb[0].mxu0
    %597 = vmatprep.mubr.bf16.mxu0 0
    %598 = vmatmul.mubr.bf16.gmra.mrb[0].mxu0 %v363
    %v599 = vpop.f32.mrb[0].mxu0
    %v600 = vadd.f32 %v128, %v599
    %v601 = vpop.f32.mrb[0].mxu0
    %v602 = vpop.f32.mrb[0].mxu0
    %v603 = vadd.f32 %v128, %v602
    %v604 = vpop.f32.mrb[0].mxu0
    %605 = vmatprep.mubr.bf16.mxu0 0
    %606 = vmatmul.mubr.bf16.gmra.mrb[0].mxu0 %v366
    %v607 = vpop.f32.mrb[0].mxu0
    %v608 = vadd.f32 %v128, %v607
    %v609 = vpop.f32.mrb[0].mxu0
    %v610 = vpop.f32.mrb[0].mxu0
    %v611 = vadd.f32 %v128, %v610
    %v612 = vpop.f32.mrb[0].mxu0
    %613 = vmatprep.mubr.bf16.mxu0 0
    %614 = vmatmul.mubr.bf16.gmra.mrb[0].mxu0 %v369
    %v615 = vpop.f32.mrb[0].mxu0
    %v616 = vadd.f32 %v128, %v615
    %v617 = vpop.f32.mrb[0].mxu0
    %v618 = vpop.f32.mrb[0].mxu0
    %v619 = vadd.f32 %v128, %v618
    %v620 = vpop.f32.mrb[0].mxu0
    %621 = vmatprep.mubr.bf16.mxu0 0
    %622 = vmatmul.mubr.bf16.gmra.mrb[0].mxu0 %v372
    %v623 = vpop.f32.mrb[0].mxu0
    %v624 = vadd.f32 %v128, %v623
    %v625 = vpop.f32.mrb[0].mxu0
    %v626 = vpop.f32.mrb[0].mxu0
    %v627 = vadd.f32 %v128, %v626
    %v628 = vpop.f32.mrb[0].mxu0
    %629 = vmatprep.mubr.bf16.mxu0 0
    %630 = vmatmul.mubr.bf16.gmra.mrb[0].mxu0 %v375
    %v631 = vpop.f32.mrb[0].mxu0
    %v632 = vadd.f32 %v128, %v631
    %v633 = vpop.f32.mrb[0].mxu0
    %v634 = vpop.f32.mrb[0].mxu0
    %v635 = vadd.f32 %v128, %v634
    %v636 = vpop.f32.mrb[0].mxu0
    %637 = vmatprep.mubr.bf16.mxu0 0
    %638 = vmatmul.mubr.bf16.gmra.mrb[0].mxu0 %v378
    %v639 = vpop.f32.mrb[0].mxu0
    %v640 = vadd.f32 %v128, %v639
    %v641 = vpop.f32.mrb[0].mxu0
    %v642 = vpop.f32.mrb[0].mxu0
    %v643 = vadd.f32 %v128, %v642
    %v644 = vpop.f32.mrb[0].mxu0
    %645 = vmatprep.mubr.bf16.mxu0 0
    %646 = vmatmul.mubr.bf16.gmra.mrb[0].mxu0 %v381
    %v647 = vpop.f32.mrb[0].mxu0
    %v648 = vadd.f32 %v128, %v647
    %v649 = vpop.f32.mrb[0].mxu0
    %v650 = vpop.f32.mrb[0].mxu0
    %v651 = vadd.f32 %v128, %v650
    %v652 = vpop.f32.mrb[0].mxu0
    %653 = vmatprep.mubr.bf16.mxu0 0
    %654 = vmatmul.mubr.bf16.gmra.mrb[0].mxu0 %v384
    %v655 = vpop.f32.mrb[0].mxu0
    %v656 = vadd.f32 %v128, %v655
    %v657 = vpop.f32.mrb[0].mxu0
    %v658 = vpop.f32.mrb[0].mxu0
    %v659 = vadd.f32 %v128, %v658
    %v660 = vpop.f32.mrb[0].mxu0
    %661 = vmatprep.mubr.bf16.mxu0 0
    %662 = vmatmul.mubr.bf16.gmra.mrb[0].mxu0 %v387
    %v663 = vpop.f32.mrb[0].mxu0
    %v664 = vadd.f32 %v128, %v663
    %v665 = vpop.f32.mrb[0].mxu0
    %v666 = vpop.f32.mrb[0].mxu0
    %v667 = vadd.f32 %v128, %v666
    %v668 = vpop.f32.mrb[0].mxu0
    %669 = vmatprep.mubr.bf16.mxu0 0
    %670 = vmatmul.mubr.bf16.gmra.mrb[0].mxu0 %v390
    %v671 = vpop.f32.mrb[0].mxu0
    %v672 = vadd.f32 %v128, %v671
    %v673 = vpop.f32.mrb[0].mxu0
    %v674 = vpop.f32.mrb[0].mxu0
    %v675 = vadd.f32 %v128, %v674
    %v676 = vpop.f32.mrb[0].mxu0
    %677 = vmatprep.mubr.bf16.mxu0 0
    %678 = vmatmul.mubr.bf16.gmra.mrb[0].mxu0 %v393
    %v679 = vpop.f32.mrb[0].mxu0
    %v680 = vadd.f32 %v128, %v679
    %v681 = vpop.f32.mrb[0].mxu0
    %v682 = vpop.f32.mrb[0].mxu0
    %v683 = vadd.f32 %v128, %v682
    %v684 = vpop.f32.mrb[0].mxu0
    %685 = vmatprep.mubr.bf16.mxu0 0
    %686 = vmatmul.mubr.bf16.gmra.mrb[0].mxu0 %v396
    %v687 = vpop.f32.mrb[0].mxu0
    %v688 = vadd.f32 %v128, %v687
    %v689 = vpop.f32.mrb[0].mxu0
    %v690 = vpop.f32.mrb[0].mxu0
    %v691 = vadd.f32 %v128, %v690
    %v692 = vpop.f32.mrb[0].mxu0
    %693 = vdwg.mxu0
    %v694 = vmax.f32 %v440, 0.0
    %v695 = vmax.f32 %v443, 0.0
    %v696 = vmax.f32 %v448, 0.0
    %v697 = vmax.f32 %v451, 0.0
    %v698 = vmax.f32 %v456, 0.0
    %v699 = vmax.f32 %v459, 0.0
    %v700 = vmax.f32 %v464, 0.0
    %v701 = vmax.f32 %v467, 0.0
    %v702 = vmax.f32 %v472, 0.0
    %v703 = vmax.f32 %v475, 0.0
    %v704 = vmax.f32 %v480, 0.0
    %v705 = vmax.f32 %v483, 0.0
    %v706 = vmax.f32 %v488, 0.0
    %v707 = vmax.f32 %v491, 0.0
    %v708 = vmax.f32 %v496, 0.0
    %v709 = vmax.f32 %v499, 0.0
    %v710 = vmax.f32 %v504, 0.0
    %v711 = vmax.f32 %v507, 0.0
    %v712 = vmax.f32 %v512, 0.0
    %v713 = vmax.f32 %v515, 0.0
    %v714 = vmax.f32 %v520, 0.0
    %v715 = vmax.f32 %v523, 0.0
    %v716 = vmax.f32 %v528, 0.0
    %v717 = vmax.f32 %v531, 0.0
    %v718 = vmax.f32 %v536, 0.0
    %v719 = vmax.f32 %v539, 0.0
    %v720 = vmax.f32 %v544, 0.0
    %v721 = vmax.f32 %v547, 0.0
    %v722 = vmax.f32 %v552, 0.0
    %v723 = vmax.f32 %v555, 0.0
    %v724 = vmax.f32 %v560, 0.0
    %v725 = vmax.f32 %v563, 0.0
    %v726 = vmax.f32 %v568, 0.0
    %v727 = vmax.f32 %v571, 0.0
    %v728 = vmax.f32 %v576, 0.0
    %v729 = vmax.f32 %v579, 0.0
    %v730 = vmax.f32 %v584, 0.0
    %v731 = vmax.f32 %v587, 0.0
    %v732 = vmax.f32 %v592, 0.0
    %v733 = vmax.f32 %v595, 0.0
    %v734 = vmax.f32 %v600, 0.0
    %v735 = vmax.f32 %v603, 0.0
    %v736 = vmax.f32 %v608, 0.0
    %v737 = vmax.f32 %v611, 0.0
    %v738 = vmax.f32 %v616, 0.0
    %v739 = vmax.f32 %v619, 0.0
    %v740 = vmax.f32 %v624, 0.0
    %v741 = vmax.f32 %v627, 0.0
    %v742 = vmax.f32 %v632, 0.0
    %v743 = vmax.f32 %v635, 0.0
    %v744 = vmax.f32 %v640, 0.0
    %v745 = vmax.f32 %v643, 0.0
    %v746 = vmax.f32 %v648, 0.0
    %v747 = vmax.f32 %v651, 0.0
    %v748 = vmax.f32 %v656, 0.0
    %v749 = vmax.f32 %v659, 0.0
    %v750 = vmax.f32 %v664, 0.0
    %v751 = vmax.f32 %v667, 0.0
    %v752 = vmax.f32 %v672, 0.0
    %v753 = vmax.f32 %v675, 0.0
    %v754 = vmax.f32 %v680, 0.0
    %v755 = vmax.f32 %v683, 0.0
    %v756 = vmax.f32 %v688, 0.0
    %v757 = vmax.f32 %v691, 0.0
    %v758 = vpack.c.bf16 %v695, %v694
    %v759 = vpack.c.bf16 %v697, %v696
    %v760 = vpack.c.bf16 %v699, %v698
    %v761 = vpack.c.bf16 %v701, %v700
    %v762 = vpack.c.bf16 %v703, %v702
    %v763 = vpack.c.bf16 %v705, %v704
    %v764 = vpack.c.bf16 %v707, %v706
    %v765 = vpack.c.bf16 %v709, %v708
    %v766 = vpack.c.bf16 %v711, %v710
    %v767 = vpack.c.bf16 %v713, %v712
    %v768 = vpack.c.bf16 %v715, %v714
    %v769 = vpack.c.bf16 %v717, %v716
    %v770 = vpack.c.bf16 %v719, %v718
    %v771 = vpack.c.bf16 %v721, %v720
    %v772 = vpack.c.bf16 %v723, %v722
    %v773 = vpack.c.bf16 %v725, %v724
    %v774 = vpack.c.bf16 %v727, %v726
    %v775 = vpack.c.bf16 %v729, %v728
    %v776 = vpack.c.bf16 %v731, %v730
    %v777 = vpack.c.bf16 %v733, %v732
    %v778 = vpack.c.bf16 %v735, %v734
    %v779 = vpack.c.bf16 %v737, %v736
    %v780 = vpack.c.bf16 %v739, %v738
    %v781 = vpack.c.bf16 %v741, %v740
    %v782 = vpack.c.bf16 %v743, %v742
    %v783 = vpack.c.bf16 %v745, %v744
    %v784 = vpack.c.bf16 %v747, %v746
    %v785 = vpack.c.bf16 %v749, %v748
    %v786 = vpack.c.bf16 %v751, %v750
    %v787 = vpack.c.bf16 %v753, %v752
    %v788 = vpack.c.bf16 %v755, %v754
    %v789 = vpack.c.bf16 %v757, %v756
    %v790 = vld [vmem:[%s3] sm:$0xff]
    %v791 = vld [vmem:[%s3 + $0x8] sm:$0xff]
    %v792 = vld [vmem:[%s3 + $0x10] sm:$0xff]
    %v793 = vld [vmem:[%s3 + $0x18] sm:$0xff]
    %v794 = vld [vmem:[%s3 + $0x20] sm:$0xff]
    %v795 = vld [vmem:[%s3 + $0x28] sm:$0xff]
    %v796 = vld [vmem:[%s3 + $0x30] sm:$0xff]
    %v797 = vld [vmem:[%s3 + $0x38] sm:$0xff]
    %v806 = vunpack.c.l.b16 %v790
    %v807 = vunpack.c.h.b16 %v790
    %v808 = vunpack.c.l.b16 %v791
    %v809 = vunpack.c.h.b16 %v791
    %v810 = vunpack.c.l.b16 %v792
    %v811 = vunpack.c.h.b16 %v792
    %v812 = vunpack.c.l.b16 %v793
    %v813 = vunpack.c.h.b16 %v793
    %v814 = vunpack.c.l.b16 %v794
    %v815 = vunpack.c.h.b16 %v794
    %v816 = vunpack.c.l.b16 %v795
    %v817 = vunpack.c.h.b16 %v795
    %v818 = vunpack.c.l.b16 %v796
    %v819 = vunpack.c.h.b16 %v796
    %v820 = vunpack.c.l.b16 %v797
    %v821 = vunpack.c.h.b16 %v797
    %v822 = vpack.c.b16 %v808, %v806
    %v823 = vpack.c.b16 %v809, %v807
    %v824 = vpack.c.b16 %v812, %v810
    %v825 = vpack.c.b16 %v813, %v811
    %v826 = vpack.c.b16 %v816, %v814
    %v827 = vpack.c.b16 %v817, %v815
    %v828 = vpack.c.b16 %v820, %v818
    %v829 = vpack.c.b16 %v821, %v819
    %838 = vmatprep.subr.bf16.mxu0 0
    %839 = vmatpush1.bf16.msra.mxu0 %v758
    %840 = vmatprep.subr.bf16.mxu0 0
    %841 = vmatpush1.bf16.msra.mxu0 %v759
    %842 = vmatprep.subr.bf16.mxu0 0
    %843 = vmatpush1.bf16.msra.mxu0 %v760
    %844 = vmatprep.subr.bf16.mxu0 0
    %845 = vmatpush1.bf16.msra.mxu0 %v761
    %846 = vmatprep.subr.bf16.mxu0 0
    %847 = vmatpush1.bf16.msra.mxu0 %v762
    %848 = vmatprep.subr.bf16.mxu0 0
    %849 = vmatpush1.bf16.msra.mxu0 %v763
    %850 = vmatprep.subr.bf16.mxu0 0
    %851 = vmatpush1.bf16.msra.mxu0 %v764
    %852 = vmatprep.subr.bf16.mxu0 0
    %853 = vmatpush1.bf16.msra.mxu0 %v765
    %854 = vmatprep.subr.bf16.mxu0 0
    %855 = vmatpush1.bf16.msra.mxu0 %v766
    %856 = vmatprep.subr.bf16.mxu0 0
    %857 = vmatpush1.bf16.msra.mxu0 %v767
    %858 = vmatprep.subr.bf16.mxu0 0
    %859 = vmatpush1.bf16.msra.mxu0 %v768
    %860 = vmatprep.subr.bf16.mxu0 0
    %861 = vmatpush1.bf16.msra.mxu0 %v769
    %862 = vmatprep.subr.bf16.mxu0 0
    %863 = vmatpush1.bf16.msra.mxu0 %v770
    %864 = vmatprep.subr.bf16.mxu0 0
    %865 = vmatpush1.bf16.msra.mxu0 %v771
    %866 = vmatprep.subr.bf16.mxu0 0
    %867 = vmatpush1.bf16.msra.mxu0 %v772
    %868 = vmatprep.subr.bf16.mxu0 0
    %869 = vmatpush1.bf16.msra.mxu0 %v773
    %870 = vmatprep.mubr.bf16.mxu0 %v823
    %871 = vmatmul.mubr.bf16.gmra.mrb[0].mxu0 %v822
    %v872 = vpop.f32.mrb[0].mxu0
    %v873 = vadd.f32 0.0, %v872
    %v874 = vpop.f32.mrb[0].mxu0
    %v875 = vpop.f32.mrb[0].mxu0
    %v876 = vadd.f32 0.0, %v875
    %v877 = vpop.f32.mrb[0].mxu0
    %878 = vmatprep.mubr.bf16.mxu0 %v825
    %879 = vmatmul.mubr.bf16.gmra.mrb[0].mxu0 %v824
    %v880 = vpop.f32.mrb[0].mxu0
    %v881 = vadd.f32 0.0, %v880
    %v882 = vpop.f32.mrb[0].mxu0
    %v883 = vpop.f32.mrb[0].mxu0
    %v884 = vadd.f32 0.0, %v883
    %v885 = vpop.f32.mrb[0].mxu0
    %886 = vmatprep.mubr.bf16.mxu0 %v827
    %887 = vmatmul.mubr.bf16.gmra.mrb[0].mxu0 %v826
    %v888 = vpop.f32.mrb[0].mxu0
    %v889 = vadd.f32 0.0, %v888
    %v890 = vpop.f32.mrb[0].mxu0
    %v891 = vpop.f32.mrb[0].mxu0
    %v892 = vadd.f32 0.0, %v891
    %v893 = vpop.f32.mrb[0].mxu0
    %894 = vmatprep.mubr.bf16.mxu0 %v829
    %895 = vmatmul.mubr.bf16.gmra.mrb[0].mxu0 %v828
    %v896 = vpop.f32.mrb[0].mxu0
    %v897 = vadd.f32 0.0, %v896
    %v898 = vpop.f32.mrb[0].mxu0
    %v899 = vpop.f32.mrb[0].mxu0
    %v900 = vadd.f32 0.0, %v899
    %v901 = vpop.f32.mrb[0].mxu0
    %902 = vdwg.mxu0
    %s903 = scalar_lea.vmem %s3, 64
    %v904 = vld [vmem:[%s903] sm:$0xff]
    %v905 = vld [vmem:[%s903 + $0x8] sm:$0xff]
    %v906 = vld [vmem:[%s903 + $0x10] sm:$0xff]
    %v907 = vld [vmem:[%s903 + $0x18] sm:$0xff]
    %v908 = vld [vmem:[%s903 + $0x20] sm:$0xff]
    %v909 = vld [vmem:[%s903 + $0x28] sm:$0xff]
    %v910 = vld [vmem:[%s903 + $0x30] sm:$0xff]
    %v911 = vld [vmem:[%s903 + $0x38] sm:$0xff]
    %v920 = vunpack.c.l.b16 %v904
    %v921 = vunpack.c.h.b16 %v904
    %v922 = vunpack.c.l.b16 %v905
    %v923 = vunpack.c.h.b16 %v905
    %v924 = vunpack.c.l.b16 %v906
    %v925 = vunpack.c.h.b16 %v906
    %v926 = vunpack.c.l.b16 %v907
    %v927 = vunpack.c.h.b16 %v907
    %v928 = vunpack.c.l.b16 %v908
    %v929 = vunpack.c.h.b16 %v908
    %v930 = vunpack.c.l.b16 %v909
    %v931 = vunpack.c.h.b16 %v909
    %v932 = vunpack.c.l.b16 %v910
    %v933 = vunpack.c.h.b16 %v910
    %v934 = vunpack.c.l.b16 %v911
    %v935 = vunpack.c.h.b16 %v911
    %v936 = vpack.c.b16 %v922, %v920
    %v937 = vpack.c.b16 %v923, %v921
    %v938 = vpack.c.b16 %v926, %v924
    %v939 = vpack.c.b16 %v927, %v925
    %v940 = vpack.c.b16 %v930, %v928
    %v941 = vpack.c.b16 %v931, %v929
    %v942 = vpack.c.b16 %v934, %v932
    %v943 = vpack.c.b16 %v935, %v933
    %952 = vmatprep.subr.bf16.mxu0 0
    %953 = vmatpush1.bf16.msra.mxu0 %v758
    %954 = vmatprep.subr.bf16.mxu0 0
    %955 = vmatpush1.bf16.msra.mxu0 %v759
    %956 = vmatprep.subr.bf16.mxu0 0
    %957 = vmatpush1.bf16.msra.mxu0 %v760
    %958 = vmatprep.subr.bf16.mxu0 0
    %959 = vmatpush1.bf16.msra.mxu0 %v761
    %960 = vmatprep.subr.bf16.mxu0 0
    %961 = vmatpush1.bf16.msra.mxu0 %v762
    %962 = vmatprep.subr.bf16.mxu0 0
    %963 = vmatpush1.bf16.msra.mxu0 %v763
    %964 = vmatprep.subr.bf16.mxu0 0
    %965 = vmatpush1.bf16.msra.mxu0 %v764
    %966 = vmatprep.subr.bf16.mxu0 0
    %967 = vmatpush1.bf16.msra.mxu0 %v765
    %968 = vmatprep.subr.bf16.mxu0 0
    %969 = vmatpush1.bf16.msra.mxu0 %v766
    %970 = vmatprep.subr.bf16.mxu0 0
    %971 = vmatpush1.bf16.msra.mxu0 %v767
    %972 = vmatprep.subr.bf16.mxu0 0
    %973 = vmatpush1.bf16.msra.mxu0 %v768
    %974 = vmatprep.subr.bf16.mxu0 0
    %975 = vmatpush1.bf16.msra.mxu0 %v769
    %976 = vmatprep.subr.bf16.mxu0 0
    %977 = vmatpush1.bf16.msra.mxu0 %v770
    %978 = vmatprep.subr.bf16.mxu0 0
    %979 = vmatpush1.bf16.msra.mxu0 %v771
    %980 = vmatprep.subr.bf16.mxu0 0
    %981 = vmatpush1.bf16.msra.mxu0 %v772
    %982 = vmatprep.subr.bf16.mxu0 0
    %983 = vmatpush1.bf16.msra.mxu0 %v773
    %984 = vmatprep.mubr.bf16.mxu0 %v937
    %985 = vmatmul.mubr.bf16.gmra.mrb[0].mxu0 %v936
    %v986 = vpop.f32.mrb[0].mxu0
    %v987 = vadd.f32 0.0, %v986
    %v988 = vpop.f32.mrb[0].mxu0
    %v989 = vpop.f32.mrb[0].mxu0
    %v990 = vadd.f32 0.0, %v989
    %v991 = vpop.f32.mrb[0].mxu0
    %992 = vmatprep.mubr.bf16.mxu0 %v939
    %993 = vmatmul.mubr.bf16.gmra.mrb[0].mxu0 %v938
    %v994 = vpop.f32.mrb[0].mxu0
    %v995 = vadd.f32 0.0, %v994
    %v996 = vpop.f32.mrb[0].mxu0
    %v997 = vpop.f32.mrb[0].mxu0
    %v998 = vadd.f32 0.0, %v997
    %v999 = vpop.f32.mrb[0].mxu0
    %1000 = vmatprep.mubr.bf16.mxu0 %v941
    %1001 = vmatmul.mubr.bf16.gmra.mrb[0].mxu0 %v940
    %v1002 = vpop.f32.mrb[0].mxu0
    %v1003 = vadd.f32 0.0, %v1002
    %v1004 = vpop.f32.mrb[0].mxu0
    %v1005 = vpop.f32.mrb[0].mxu0
    %v1006 = vadd.f32 0.0, %v1005
    %v1007 = vpop.f32.mrb[0].mxu0
    %1008 = vmatprep.mubr.bf16.mxu0 %v943
    %1009 = vmatmul.mubr.bf16.gmra.mrb[0].mxu0 %v942
    %v1010 = vpop.f32.mrb[0].mxu0
    %v1011 = vadd.f32 0.0, %v1010
    %v1012 = vpop.f32.mrb[0].mxu0
    %v1013 = vpop.f32.mrb[0].mxu0
    %v1014 = vadd.f32 0.0, %v1013
    %v1015 = vpop.f32.mrb[0].mxu0
    %1016 = vdwg.mxu0
    %s1017 = scalar_lea.vmem %s3, 128
    %v1018 = vld [vmem:[%s1017] sm:$0xff]
    %v1019 = vld [vmem:[%s1017 + $0x8] sm:$0xff]
    %v1020 = vld [vmem:[%s1017 + $0x10] sm:$0xff]
    %v1021 = vld [vmem:[%s1017 + $0x18] sm:$0xff]
    %v1022 = vld [vmem:[%s1017 + $0x20] sm:$0xff]
    %v1023 = vld [vmem:[%s1017 + $0x28] sm:$0xff]
    %v1024 = vld [vmem:[%s1017 + $0x30] sm:$0xff]
    %v1025 = vld [vmem:[%s1017 + $0x38] sm:$0xff]
    %v1034 = vunpack.c.l.b16 %v1018
    %v1035 = vunpack.c.h.b16 %v1018
    %v1036 = vunpack.c.l.b16 %v1019
    %v1037 = vunpack.c.h.b16 %v1019
    %v1038 = vunpack.c.l.b16 %v1020
    %v1039 = vunpack.c.h.b16 %v1020
    %v1040 = vunpack.c.l.b16 %v1021
    %v1041 = vunpack.c.h.b16 %v1021
    %v1042 = vunpack.c.l.b16 %v1022
    %v1043 = vunpack.c.h.b16 %v1022
    %v1044 = vunpack.c.l.b16 %v1023
    %v1045 = vunpack.c.h.b16 %v1023
    %v1046 = vunpack.c.l.b16 %v1024
    %v1047 = vunpack.c.h.b16 %v1024
    %v1048 = vunpack.c.l.b16 %v1025
    %v1049 = vunpack.c.h.b16 %v1025
    %v1050 = vpack.c.b16 %v1036, %v1034
    %v1051 = vpack.c.b16 %v1037, %v1035
    %v1052 = vpack.c.b16 %v1040, %v1038
    %v1053 = vpack.c.b16 %v1041, %v1039
    %v1054 = vpack.c.b16 %v1044, %v1042
    %v1055 = vpack.c.b16 %v1045, %v1043
    %v1056 = vpack.c.b16 %v1048, %v1046
    %v1057 = vpack.c.b16 %v1049, %v1047
    %1066 = vmatprep.subr.bf16.mxu0 0
    %1067 = vmatpush1.bf16.msra.mxu0 %v758
    %1068 = vmatprep.subr.bf16.mxu0 0
    %1069 = vmatpush1.bf16.msra.mxu0 %v759
    %1070 = vmatprep.subr.bf16.mxu0 0
    %1071 = vmatpush1.bf16.msra.mxu0 %v760
    %1072 = vmatprep.subr.bf16.mxu0 0
    %1073 = vmatpush1.bf16.msra.mxu0 %v761
    %1074 = vmatprep.subr.bf16.mxu0 0
    %1075 = vmatpush1.bf16.msra.mxu0 %v762
    %1076 = vmatprep.subr.bf16.mxu0 0
    %1077 = vmatpush1.bf16.msra.mxu0 %v763
    %1078 = vmatprep.subr.bf16.mxu0 0
    %1079 = vmatpush1.bf16.msra.mxu0 %v764
    %1080 = vmatprep.subr.bf16.mxu0 0
    %1081 = vmatpush1.bf16.msra.mxu0 %v765
    %1082 = vmatprep.subr.bf16.mxu0 0
    %1083 = vmatpush1.bf16.msra.mxu0 %v766
    %1084 = vmatprep.subr.bf16.mxu0 0
    %1085 = vmatpush1.bf16.msra.mxu0 %v767
    %1086 = vmatprep.subr.bf16.mxu0 0
    %1087 = vmatpush1.bf16.msra.mxu0 %v768
    %1088 = vmatprep.subr.bf16.mxu0 0
    %1089 = vmatpush1.bf16.msra.mxu0 %v769
    %1090 = vmatprep.subr.bf16.mxu0 0
    %1091 = vmatpush1.bf16.msra.mxu0 %v770
    %1092 = vmatprep.subr.bf16.mxu0 0
    %1093 = vmatpush1.bf16.msra.mxu0 %v771
    %1094 = vmatprep.subr.bf16.mxu0 0
    %1095 = vmatpush1.bf16.msra.mxu0 %v772
    %1096 = vmatprep.subr.bf16.mxu0 0
    %1097 = vmatpush1.bf16.msra.mxu0 %v773
    %1098 = vmatprep.mubr.bf16.mxu0 %v1051
    %1099 = vmatmul.mubr.bf16.gmra.mrb[0].mxu0 %v1050
    %v1100 = vpop.f32.mrb[0].mxu0
    %v1101 = vadd.f32 0.0, %v1100
    %v1102 = vpop.f32.mrb[0].mxu0
    %v1103 = vpop.f32.mrb[0].mxu0
    %v1104 = vadd.f32 0.0, %v1103
    %v1105 = vpop.f32.mrb[0].mxu0
    %1106 = vmatprep.mubr.bf16.mxu0 %v1053
    %1107 = vmatmul.mubr.bf16.gmra.mrb[0].mxu0 %v1052
    %v1108 = vpop.f32.mrb[0].mxu0
    %v1109 = vadd.f32 0.0, %v1108
    %v1110 = vpop.f32.mrb[0].mxu0
    %v1111 = vpop.f32.mrb[0].mxu0
    %v1112 = vadd.f32 0.0, %v1111
    %v1113 = vpop.f32.mrb[0].mxu0
    %1114 = vmatprep.mubr.bf16.mxu0 %v1055
    %1115 = vmatmul.mubr.bf16.gmra.mrb[0].mxu0 %v1054
    %v1116 = vpop.f32.mrb[0].mxu0
    %v1117 = vadd.f32 0.0, %v1116
    %v1118 = vpop.f32.mrb[0].mxu0
    %v1119 = vpop.f32.mrb[0].mxu0
    %v1120 = vadd.f32 0.0, %v1119
    %v1121 = vpop.f32.mrb[0].mxu0
    %1122 = vmatprep.mubr.bf16.mxu0 %v1057
    %1123 = vmatmul.mubr.bf16.gmra.mrb[0].mxu0 %v1056
    %v1124 = vpop.f32.mrb[0].mxu0
    %v1125 = vadd.f32 0.0, %v1124
    %v1126 = vpop.f32.mrb[0].mxu0
    %v1127 = vpop.f32.mrb[0].mxu0
    %v1128 = vadd.f32 0.0, %v1127
    %v1129 = vpop.f32.mrb[0].mxu0
    %1130 = vdwg.mxu0
    %s1131 = scalar_lea.vmem %s3, 192
    %v1132 = vld [vmem:[%s1131] sm:$0xff]
    %v1133 = vld [vmem:[%s1131 + $0x8] sm:$0xff]
    %v1134 = vld [vmem:[%s1131 + $0x10] sm:$0xff]
    %v1135 = vld [vmem:[%s1131 + $0x18] sm:$0xff]
    %v1136 = vld [vmem:[%s1131 + $0x20] sm:$0xff]
    %v1137 = vld [vmem:[%s1131 + $0x28] sm:$0xff]
    %v1138 = vld [vmem:[%s1131 + $0x30] sm:$0xff]
    %v1139 = vld [vmem:[%s1131 + $0x38] sm:$0xff]
    %v1148 = vunpack.c.l.b16 %v1132
    %v1149 = vunpack.c.h.b16 %v1132
    %v1150 = vunpack.c.l.b16 %v1133
    %v1151 = vunpack.c.h.b16 %v1133
    %v1152 = vunpack.c.l.b16 %v1134
    %v1153 = vunpack.c.h.b16 %v1134
    %v1154 = vunpack.c.l.b16 %v1135
    %v1155 = vunpack.c.h.b16 %v1135
    %v1156 = vunpack.c.l.b16 %v1136
    %v1157 = vunpack.c.h.b16 %v1136
    %v1158 = vunpack.c.l.b16 %v1137
    %v1159 = vunpack.c.h.b16 %v1137
    %v1160 = vunpack.c.l.b16 %v1138
    %v1161 = vunpack.c.h.b16 %v1138
    %v1162 = vunpack.c.l.b16 %v1139
    %v1163 = vunpack.c.h.b16 %v1139
    %v1164 = vpack.c.b16 %v1150, %v1148
    %v1165 = vpack.c.b16 %v1151, %v1149
    %v1166 = vpack.c.b16 %v1154, %v1152
    %v1167 = vpack.c.b16 %v1155, %v1153
    %v1168 = vpack.c.b16 %v1158, %v1156
    %v1169 = vpack.c.b16 %v1159, %v1157
    %v1170 = vpack.c.b16 %v1162, %v1160
    %v1171 = vpack.c.b16 %v1163, %v1161
    %1180 = vmatprep.subr.bf16.mxu0 0
    %1181 = vmatpush1.bf16.msra.mxu0 %v758
    %1182 = vmatprep.subr.bf16.mxu0 0
    %1183 = vmatpush1.bf16.msra.mxu0 %v759
    %1184 = vmatprep.subr.bf16.mxu0 0
    %1185 = vmatpush1.bf16.msra.mxu0 %v760
    %1186 = vmatprep.subr.bf16.mxu0 0
    %1187 = vmatpush1.bf16.msra.mxu0 %v761
    %1188 = vmatprep.subr.bf16.mxu0 0
    %1189 = vmatpush1.bf16.msra.mxu0 %v762
    %1190 = vmatprep.subr.bf16.mxu0 0
    %1191 = vmatpush1.bf16.msra.mxu0 %v763
    %1192 = vmatprep.subr.bf16.mxu0 0
    %1193 = vmatpush1.bf16.msra.mxu0 %v764
    %1194 = vmatprep.subr.bf16.mxu0 0
    %1195 = vmatpush1.bf16.msra.mxu0 %v765
    %1196 = vmatprep.subr.bf16.mxu0 0
    %1197 = vmatpush1.bf16.msra.mxu0 %v766
    %1198 = vmatprep.subr.bf16.mxu0 0
    %1199 = vmatpush1.bf16.msra.mxu0 %v767
    %1200 = vmatprep.subr.bf16.mxu0 0
    %1201 = vmatpush1.bf16.msra.mxu0 %v768
    %1202 = vmatprep.subr.bf16.mxu0 0
    %1203 = vmatpush1.bf16.msra.mxu0 %v769
    %1204 = vmatprep.subr.bf16.mxu0 0
    %1205 = vmatpush1.bf16.msra.mxu0 %v770
    %1206 = vmatprep.subr.bf16.mxu0 0
    %1207 = vmatpush1.bf16.msra.mxu0 %v771
    %1208 = vmatprep.subr.bf16.mxu0 0
    %1209 = vmatpush1.bf16.msra.mxu0 %v772
    %1210 = vmatprep.subr.bf16.mxu0 0
    %1211 = vmatpush1.bf16.msra.mxu0 %v773
    %1212 = vmatprep.mubr.bf16.mxu0 %v1165
    %1213 = vmatmul.mubr.bf16.gmra.mrb[0].mxu0 %v1164
    %v1214 = vpop.f32.mrb[0].mxu0
    %v1215 = vadd.f32 0.0, %v1214
    %v1216 = vpop.f32.mrb[0].mxu0
    %v1217 = vpop.f32.mrb[0].mxu0
    %v1218 = vadd.f32 0.0, %v1217
    %v1219 = vpop.f32.mrb[0].mxu0
    %1220 = vmatprep.mubr.bf16.mxu0 %v1167
    %1221 = vmatmul.mubr.bf16.gmra.mrb[0].mxu0 %v1166
    %v1222 = vpop.f32.mrb[0].mxu0
    %v1223 = vadd.f32 0.0, %v1222
    %v1224 = vpop.f32.mrb[0].mxu0
    %v1225 = vpop.f32.mrb[0].mxu0
    %v1226 = vadd.f32 0.0, %v1225
    %v1227 = vpop.f32.mrb[0].mxu0
    %1228 = vmatprep.mubr.bf16.mxu0 %v1169
    %1229 = vmatmul.mubr.bf16.gmra.mrb[0].mxu0 %v1168
    %v1230 = vpop.f32.mrb[0].mxu0
    %v1231 = vadd.f32 0.0, %v1230
    %v1232 = vpop.f32.mrb[0].mxu0
    %v1233 = vpop.f32.mrb[0].mxu0
    %v1234 = vadd.f32 0.0, %v1233
    %v1235 = vpop.f32.mrb[0].mxu0
    %1236 = vmatprep.mubr.bf16.mxu0 %v1171
    %1237 = vmatmul.mubr.bf16.gmra.mrb[0].mxu0 %v1170
    %v1238 = vpop.f32.mrb[0].mxu0
    %v1239 = vadd.f32 0.0, %v1238
    %v1240 = vpop.f32.mrb[0].mxu0
    %v1241 = vpop.f32.mrb[0].mxu0
    %v1242 = vadd.f32 0.0, %v1241
    %v1243 = vpop.f32.mrb[0].mxu0
    %1244 = vdwg.mxu0
    %s1245 = scalar_lea.vmem %s3, 256
    %v1246 = vld [vmem:[%s1245] sm:$0xff]
    %v1247 = vld [vmem:[%s1245 + $0x8] sm:$0xff]
    %v1248 = vld [vmem:[%s1245 + $0x10] sm:$0xff]
    %v1249 = vld [vmem:[%s1245 + $0x18] sm:$0xff]
    %v1250 = vld [vmem:[%s1245 + $0x20] sm:$0xff]
    %v1251 = vld [vmem:[%s1245 + $0x28] sm:$0xff]
    %v1252 = vld [vmem:[%s1245 + $0x30] sm:$0xff]
    %v1253 = vld [vmem:[%s1245 + $0x38] sm:$0xff]
    %v1262 = vunpack.c.l.b16 %v1246
    %v1263 = vunpack.c.h.b16 %v1246
    %v1264 = vunpack.c.l.b16 %v1247
    %v1265 = vunpack.c.h.b16 %v1247
    %v1266 = vunpack.c.l.b16 %v1248
    %v1267 = vunpack.c.h.b16 %v1248
    %v1268 = vunpack.c.l.b16 %v1249
    %v1269 = vunpack.c.h.b16 %v1249
    %v1270 = vunpack.c.l.b16 %v1250
    %v1271 = vunpack.c.h.b16 %v1250
    %v1272 = vunpack.c.l.b16 %v1251
    %v1273 = vunpack.c.h.b16 %v1251
    %v1274 = vunpack.c.l.b16 %v1252
    %v1275 = vunpack.c.h.b16 %v1252
    %v1276 = vunpack.c.l.b16 %v1253
    %v1277 = vunpack.c.h.b16 %v1253
    %v1278 = vpack.c.b16 %v1264, %v1262
    %v1279 = vpack.c.b16 %v1265, %v1263
    %v1280 = vpack.c.b16 %v1268, %v1266
    %v1281 = vpack.c.b16 %v1269, %v1267
    %v1282 = vpack.c.b16 %v1272, %v1270
    %v1283 = vpack.c.b16 %v1273, %v1271
    %v1284 = vpack.c.b16 %v1276, %v1274
    %v1285 = vpack.c.b16 %v1277, %v1275
    %1294 = vmatprep.subr.bf16.mxu0 0
    %1295 = vmatpush1.bf16.msra.mxu0 %v758
    %1296 = vmatprep.subr.bf16.mxu0 0
    %1297 = vmatpush1.bf16.msra.mxu0 %v759
    %1298 = vmatprep.subr.bf16.mxu0 0
    %1299 = vmatpush1.bf16.msra.mxu0 %v760
    %1300 = vmatprep.subr.bf16.mxu0 0
    %1301 = vmatpush1.bf16.msra.mxu0 %v761
    %1302 = vmatprep.subr.bf16.mxu0 0
    %1303 = vmatpush1.bf16.msra.mxu0 %v762
    %1304 = vmatprep.subr.bf16.mxu0 0
    %1305 = vmatpush1.bf16.msra.mxu0 %v763
    %1306 = vmatprep.subr.bf16.mxu0 0
    %1307 = vmatpush1.bf16.msra.mxu0 %v764
    %1308 = vmatprep.subr.bf16.mxu0 0
    %1309 = vmatpush1.bf16.msra.mxu0 %v765
    %1310 = vmatprep.subr.bf16.mxu0 0
    %1311 = vmatpush1.bf16.msra.mxu0 %v766
    %1312 = vmatprep.subr.bf16.mxu0 0
    %1313 = vmatpush1.bf16.msra.mxu0 %v767
    %1314 = vmatprep.subr.bf16.mxu0 0
    %1315 = vmatpush1.bf16.msra.mxu0 %v768
    %1316 = vmatprep.subr.bf16.mxu0 0
    %1317 = vmatpush1.bf16.msra.mxu0 %v769
    %1318 = vmatprep.subr.bf16.mxu0 0
    %1319 = vmatpush1.bf16.msra.mxu0 %v770
    %1320 = vmatprep.subr.bf16.mxu0 0
    %1321 = vmatpush1.bf16.msra.mxu0 %v771
    %1322 = vmatprep.subr.bf16.mxu0 0
    %1323 = vmatpush1.bf16.msra.mxu0 %v772
    %1324 = vmatprep.subr.bf16.mxu0 0
    %1325 = vmatpush1.bf16.msra.mxu0 %v773
    %1326 = vmatprep.mubr.bf16.mxu0 %v1279
    %1327 = vmatmul.mubr.bf16.gmra.mrb[0].mxu0 %v1278
    %v1328 = vpop.f32.mrb[0].mxu0
    %v1329 = vadd.f32 0.0, %v1328
    %v1330 = vpop.f32.mrb[0].mxu0
    %v1331 = vpop.f32.mrb[0].mxu0
    %v1332 = vadd.f32 0.0, %v1331
    %v1333 = vpop.f32.mrb[0].mxu0
    %1334 = vmatprep.mubr.bf16.mxu0 %v1281
    %1335 = vmatmul.mubr.bf16.gmra.mrb[0].mxu0 %v1280
    %v1336 = vpop.f32.mrb[0].mxu0
    %v1337 = vadd.f32 0.0, %v1336
    %v1338 = vpop.f32.mrb[0].mxu0
    %v1339 = vpop.f32.mrb[0].mxu0
    %v1340 = vadd.f32 0.0, %v1339
    %v1341 = vpop.f32.mrb[0].mxu0
    %1342 = vmatprep.mubr.bf16.mxu0 %v1283
    %1343 = vmatmul.mubr.bf16.gmra.mrb[0].mxu0 %v1282
    %v1344 = vpop.f32.mrb[0].mxu0
    %v1345 = vadd.f32 0.0, %v1344
    %v1346 = vpop.f32.mrb[0].mxu0
    %v1347 = vpop.f32.mrb[0].mxu0
    %v1348 = vadd.f32 0.0, %v1347
    %v1349 = vpop.f32.mrb[0].mxu0
    %1350 = vmatprep.mubr.bf16.mxu0 %v1285
    %1351 = vmatmul.mubr.bf16.gmra.mrb[0].mxu0 %v1284
    %v1352 = vpop.f32.mrb[0].mxu0
    %v1353 = vadd.f32 0.0, %v1352
    %v1354 = vpop.f32.mrb[0].mxu0
    %v1355 = vpop.f32.mrb[0].mxu0
    %v1356 = vadd.f32 0.0, %v1355
    %v1357 = vpop.f32.mrb[0].mxu0
    %1358 = vdwg.mxu0
    %s1359 = scalar_lea.vmem %s3, 320
    %v1360 = vld [vmem:[%s1359] sm:$0xff]
    %v1361 = vld [vmem:[%s1359 + $0x8] sm:$0xff]
    %v1362 = vld [vmem:[%s1359 + $0x10] sm:$0xff]
    %v1363 = vld [vmem:[%s1359 + $0x18] sm:$0xff]
    %v1364 = vld [vmem:[%s1359 + $0x20] sm:$0xff]
    %v1365 = vld [vmem:[%s1359 + $0x28] sm:$0xff]
    %v1366 = vld [vmem:[%s1359 + $0x30] sm:$0xff]
    %v1367 = vld [vmem:[%s1359 + $0x38] sm:$0xff]
    %v1376 = vunpack.c.l.b16 %v1360
    %v1377 = vunpack.c.h.b16 %v1360
    %v1378 = vunpack.c.l.b16 %v1361
    %v1379 = vunpack.c.h.b16 %v1361
    %v1380 = vunpack.c.l.b16 %v1362
    %v1381 = vunpack.c.h.b16 %v1362
    %v1382 = vunpack.c.l.b16 %v1363
    %v1383 = vunpack.c.h.b16 %v1363
    %v1384 = vunpack.c.l.b16 %v1364
    %v1385 = vunpack.c.h.b16 %v1364
    %v1386 = vunpack.c.l.b16 %v1365
    %v1387 = vunpack.c.h.b16 %v1365
    %v1388 = vunpack.c.l.b16 %v1366
    %v1389 = vunpack.c.h.b16 %v1366
    %v1390 = vunpack.c.l.b16 %v1367
    %v1391 = vunpack.c.h.b16 %v1367
    %v1392 = vpack.c.b16 %v1378, %v1376
    %v1393 = vpack.c.b16 %v1379, %v1377
    %v1394 = vpack.c.b16 %v1382, %v1380
    %v1395 = vpack.c.b16 %v1383, %v1381
    %v1396 = vpack.c.b16 %v1386, %v1384
    %v1397 = vpack.c.b16 %v1387, %v1385
    %v1398 = vpack.c.b16 %v1390, %v1388
    %v1399 = vpack.c.b16 %v1391, %v1389
    %1408 = vmatprep.subr.bf16.mxu0 0
    %1409 = vmatpush1.bf16.msra.mxu0 %v758
    %1410 = vmatprep.subr.bf16.mxu0 0
    %1411 = vmatpush1.bf16.msra.mxu0 %v759
    %1412 = vmatprep.subr.bf16.mxu0 0
    %1413 = vmatpush1.bf16.msra.mxu0 %v760
    %1414 = vmatprep.subr.bf16.mxu0 0
    %1415 = vmatpush1.bf16.msra.mxu0 %v761
    %1416 = vmatprep.subr.bf16.mxu0 0
    %1417 = vmatpush1.bf16.msra.mxu0 %v762
    %1418 = vmatprep.subr.bf16.mxu0 0
    %1419 = vmatpush1.bf16.msra.mxu0 %v763
    %1420 = vmatprep.subr.bf16.mxu0 0
    %1421 = vmatpush1.bf16.msra.mxu0 %v764
    %1422 = vmatprep.subr.bf16.mxu0 0
    %1423 = vmatpush1.bf16.msra.mxu0 %v765
    %1424 = vmatprep.subr.bf16.mxu0 0
    %1425 = vmatpush1.bf16.msra.mxu0 %v766
    %1426 = vmatprep.subr.bf16.mxu0 0
    %1427 = vmatpush1.bf16.msra.mxu0 %v767
    %1428 = vmatprep.subr.bf16.mxu0 0
    %1429 = vmatpush1.bf16.msra.mxu0 %v768
    %1430 = vmatprep.subr.bf16.mxu0 0
    %1431 = vmatpush1.bf16.msra.mxu0 %v769
    %1432 = vmatprep.subr.bf16.mxu0 0
    %1433 = vmatpush1.bf16.msra.mxu0 %v770
    %1434 = vmatprep.subr.bf16.mxu0 0
    %1435 = vmatpush1.bf16.msra.mxu0 %v771
    %1436 = vmatprep.subr.bf16.mxu0 0
    %1437 = vmatpush1.bf16.msra.mxu0 %v772
    %1438 = vmatprep.subr.bf16.mxu0 0
    %1439 = vmatpush1.bf16.msra.mxu0 %v773
    %1440 = vmatprep.mubr.bf16.mxu0 %v1393
    %1441 = vmatmul.mubr.bf16.gmra.mrb[0].mxu0 %v1392
    %v1442 = vpop.f32.mrb[0].mxu0
    %v1443 = vadd.f32 0.0, %v1442
    %v1444 = vpop.f32.mrb[0].mxu0
    %v1445 = vpop.f32.mrb[0].mxu0
    %v1446 = vadd.f32 0.0, %v1445
    %v1447 = vpop.f32.mrb[0].mxu0
    %1448 = vmatprep.mubr.bf16.mxu0 %v1395
    %1449 = vmatmul.mubr.bf16.gmra.mrb[0].mxu0 %v1394
    %v1450 = vpop.f32.mrb[0].mxu0
    %v1451 = vadd.f32 0.0, %v1450
    %v1452 = vpop.f32.mrb[0].mxu0
    %v1453 = vpop.f32.mrb[0].mxu0
    %v1454 = vadd.f32 0.0, %v1453
    %v1455 = vpop.f32.mrb[0].mxu0
    %1456 = vmatprep.mubr.bf16.mxu0 %v1397
    %1457 = vmatmul.mubr.bf16.gmra.mrb[0].mxu0 %v1396
    %v1458 = vpop.f32.mrb[0].mxu0
    %v1459 = vadd.f32 0.0, %v1458
    %v1460 = vpop.f32.mrb[0].mxu0
    %v1461 = vpop.f32.mrb[0].mxu0
    %v1462 = vadd.f32 0.0, %v1461
    %v1463 = vpop.f32.mrb[0].mxu0
    %1464 = vmatprep.mubr.bf16.mxu0 %v1399
    %1465 = vmatmul.mubr.bf16.gmra.mrb[0].mxu0 %v1398
    %v1466 = vpop.f32.mrb[0].mxu0
    %v1467 = vadd.f32 0.0, %v1466
    %v1468 = vpop.f32.mrb[0].mxu0
    %v1469 = vpop.f32.mrb[0].mxu0
    %v1470 = vadd.f32 0.0, %v1469
    %v1471 = vpop.f32.mrb[0].mxu0
    %1472 = vdwg.mxu0
    %s1473 = scalar_lea.vmem %s3, 384
    %v1474 = vld [vmem:[%s1473] sm:$0xff]
    %v1475 = vld [vmem:[%s1473 + $0x8] sm:$0xff]
    %v1476 = vld [vmem:[%s1473 + $0x10] sm:$0xff]
    %v1477 = vld [vmem:[%s1473 + $0x18] sm:$0xff]
    %v1478 = vld [vmem:[%s1473 + $0x20] sm:$0xff]
    %v1479 = vld [vmem:[%s1473 + $0x28] sm:$0xff]
    %v1480 = vld [vmem:[%s1473 + $0x30] sm:$0xff]
    %v1481 = vld [vmem:[%s1473 + $0x38] sm:$0xff]
    %v1490 = vunpack.c.l.b16 %v1474
    %v1491 = vunpack.c.h.b16 %v1474
    %v1492 = vunpack.c.l.b16 %v1475
    %v1493 = vunpack.c.h.b16 %v1475
    %v1494 = vunpack.c.l.b16 %v1476
    %v1495 = vunpack.c.h.b16 %v1476
    %v1496 = vunpack.c.l.b16 %v1477
    %v1497 = vunpack.c.h.b16 %v1477
    %v1498 = vunpack.c.l.b16 %v1478
    %v1499 = vunpack.c.h.b16 %v1478
    %v1500 = vunpack.c.l.b16 %v1479
    %v1501 = vunpack.c.h.b16 %v1479
    %v1502 = vunpack.c.l.b16 %v1480
    %v1503 = vunpack.c.h.b16 %v1480
    %v1504 = vunpack.c.l.b16 %v1481
    %v1505 = vunpack.c.h.b16 %v1481
    %v1506 = vpack.c.b16 %v1492, %v1490
    %v1507 = vpack.c.b16 %v1493, %v1491
    %v1508 = vpack.c.b16 %v1496, %v1494
    %v1509 = vpack.c.b16 %v1497, %v1495
    %v1510 = vpack.c.b16 %v1500, %v1498
    %v1511 = vpack.c.b16 %v1501, %v1499
    %v1512 = vpack.c.b16 %v1504, %v1502
    %v1513 = vpack.c.b16 %v1505, %v1503
    %1522 = vmatprep.subr.bf16.mxu0 0
    %1523 = vmatpush1.bf16.msra.mxu0 %v758
    %1524 = vmatprep.subr.bf16.mxu0 0
    %1525 = vmatpush1.bf16.msra.mxu0 %v759
    %1526 = vmatprep.subr.bf16.mxu0 0
    %1527 = vmatpush1.bf16.msra.mxu0 %v760
    %1528 = vmatprep.subr.bf16.mxu0 0
    %1529 = vmatpush1.bf16.msra.mxu0 %v761
    %1530 = vmatprep.subr.bf16.mxu0 0
    %1531 = vmatpush1.bf16.msra.mxu0 %v762
    %1532 = vmatprep.subr.bf16.mxu0 0
    %1533 = vmatpush1.bf16.msra.mxu0 %v763
    %1534 = vmatprep.subr.bf16.mxu0 0
    %1535 = vmatpush1.bf16.msra.mxu0 %v764
    %1536 = vmatprep.subr.bf16.mxu0 0
    %1537 = vmatpush1.bf16.msra.mxu0 %v765
    %1538 = vmatprep.subr.bf16.mxu0 0
    %1539 = vmatpush1.bf16.msra.mxu0 %v766
    %1540 = vmatprep.subr.bf16.mxu0 0
    %1541 = vmatpush1.bf16.msra.mxu0 %v767
    %1542 = vmatprep.subr.bf16.mxu0 0
    %1543 = vmatpush1.bf16.msra.mxu0 %v768
    %1544 = vmatprep.subr.bf16.mxu0 0
    %1545 = vmatpush1.bf16.msra.mxu0 %v769
    %1546 = vmatprep.subr.bf16.mxu0 0
    %1547 = vmatpush1.bf16.msra.mxu0 %v770
    %1548 = vmatprep.subr.bf16.mxu0 0
    %1549 = vmatpush1.bf16.msra.mxu0 %v771
    %1550 = vmatprep.subr.bf16.mxu0 0
    %1551 = vmatpush1.bf16.msra.mxu0 %v772
    %1552 = vmatprep.subr.bf16.mxu0 0
    %1553 = vmatpush1.bf16.msra.mxu0 %v773
    %1554 = vmatprep.mubr.bf16.mxu0 %v1507
    %1555 = vmatmul.mubr.bf16.gmra.mrb[0].mxu0 %v1506
    %v1556 = vpop.f32.mrb[0].mxu0
    %v1557 = vadd.f32 0.0, %v1556
    %v1558 = vpop.f32.mrb[0].mxu0
    %v1559 = vpop.f32.mrb[0].mxu0
    %v1560 = vadd.f32 0.0, %v1559
    %v1561 = vpop.f32.mrb[0].mxu0
    %1562 = vmatprep.mubr.bf16.mxu0 %v1509
    %1563 = vmatmul.mubr.bf16.gmra.mrb[0].mxu0 %v1508
    %v1564 = vpop.f32.mrb[0].mxu0
    %v1565 = vadd.f32 0.0, %v1564
    %v1566 = vpop.f32.mrb[0].mxu0
    %v1567 = vpop.f32.mrb[0].mxu0
    %v1568 = vadd.f32 0.0, %v1567
    %v1569 = vpop.f32.mrb[0].mxu0
    %1570 = vmatprep.mubr.bf16.mxu0 %v1511
    %1571 = vmatmul.mubr.bf16.gmra.mrb[0].mxu0 %v1510
    %v1572 = vpop.f32.mrb[0].mxu0
    %v1573 = vadd.f32 0.0, %v1572
    %v1574 = vpop.f32.mrb[0].mxu0
    %v1575 = vpop.f32.mrb[0].mxu0
    %v1576 = vadd.f32 0.0, %v1575
    %v1577 = vpop.f32.mrb[0].mxu0
    %1578 = vmatprep.mubr.bf16.mxu0 %v1513
    %1579 = vmatmul.mubr.bf16.gmra.mrb[0].mxu0 %v1512
    %v1580 = vpop.f32.mrb[0].mxu0
    %v1581 = vadd.f32 0.0, %v1580
    %v1582 = vpop.f32.mrb[0].mxu0
    %v1583 = vpop.f32.mrb[0].mxu0
    %v1584 = vadd.f32 0.0, %v1583
    %v1585 = vpop.f32.mrb[0].mxu0
    %1586 = vdwg.mxu0
    %s1587 = scalar_lea.vmem %s3, 448
    %v1588 = vld [vmem:[%s1587] sm:$0xff]
    %v1589 = vld [vmem:[%s1587 + $0x8] sm:$0xff]
    %v1590 = vld [vmem:[%s1587 + $0x10] sm:$0xff]
    %v1591 = vld [vmem:[%s1587 + $0x18] sm:$0xff]
    %v1592 = vld [vmem:[%s1587 + $0x20] sm:$0xff]
    %v1593 = vld [vmem:[%s1587 + $0x28] sm:$0xff]
    %v1594 = vld [vmem:[%s1587 + $0x30] sm:$0xff]
    %v1595 = vld [vmem:[%s1587 + $0x38] sm:$0xff]
    %v1604 = vunpack.c.l.b16 %v1588
    %v1605 = vunpack.c.h.b16 %v1588
    %v1606 = vunpack.c.l.b16 %v1589
    %v1607 = vunpack.c.h.b16 %v1589
    %v1608 = vunpack.c.l.b16 %v1590
    %v1609 = vunpack.c.h.b16 %v1590
    %v1610 = vunpack.c.l.b16 %v1591
    %v1611 = vunpack.c.h.b16 %v1591
    %v1612 = vunpack.c.l.b16 %v1592
    %v1613 = vunpack.c.h.b16 %v1592
    %v1614 = vunpack.c.l.b16 %v1593
    %v1615 = vunpack.c.h.b16 %v1593
    %v1616 = vunpack.c.l.b16 %v1594
    %v1617 = vunpack.c.h.b16 %v1594
    %v1618 = vunpack.c.l.b16 %v1595
    %v1619 = vunpack.c.h.b16 %v1595
    %v1620 = vpack.c.b16 %v1606, %v1604
    %v1621 = vpack.c.b16 %v1607, %v1605
    %v1622 = vpack.c.b16 %v1610, %v1608
    %v1623 = vpack.c.b16 %v1611, %v1609
    %v1624 = vpack.c.b16 %v1614, %v1612
    %v1625 = vpack.c.b16 %v1615, %v1613
    %v1626 = vpack.c.b16 %v1618, %v1616
    %v1627 = vpack.c.b16 %v1619, %v1617
    %1636 = vmatprep.subr.bf16.mxu0 0
    %1637 = vmatpush1.bf16.msra.mxu0 %v758
    %1638 = vmatprep.subr.bf16.mxu0 0
    %1639 = vmatpush1.bf16.msra.mxu0 %v759
    %1640 = vmatprep.subr.bf16.mxu0 0
    %1641 = vmatpush1.bf16.msra.mxu0 %v760
    %1642 = vmatprep.subr.bf16.mxu0 0
    %1643 = vmatpush1.bf16.msra.mxu0 %v761
    %1644 = vmatprep.subr.bf16.mxu0 0
    %1645 = vmatpush1.bf16.msra.mxu0 %v762
    %1646 = vmatprep.subr.bf16.mxu0 0
    %1647 = vmatpush1.bf16.msra.mxu0 %v763
    %1648 = vmatprep.subr.bf16.mxu0 0
    %1649 = vmatpush1.bf16.msra.mxu0 %v764
    %1650 = vmatprep.subr.bf16.mxu0 0
    %1651 = vmatpush1.bf16.msra.mxu0 %v765
    %1652 = vmatprep.subr.bf16.mxu0 0
    %1653 = vmatpush1.bf16.msra.mxu0 %v766
    %1654 = vmatprep.subr.bf16.mxu0 0
    %1655 = vmatpush1.bf16.msra.mxu0 %v767
    %1656 = vmatprep.subr.bf16.mxu0 0
    %1657 = vmatpush1.bf16.msra.mxu0 %v768
    %1658 = vmatprep.subr.bf16.mxu0 0
    %1659 = vmatpush1.bf16.msra.mxu0 %v769
    %1660 = vmatprep.subr.bf16.mxu0 0
    %1661 = vmatpush1.bf16.msra.mxu0 %v770
    %1662 = vmatprep.subr.bf16.mxu0 0
    %1663 = vmatpush1.bf16.msra.mxu0 %v771
    %1664 = vmatprep.subr.bf16.mxu0 0
    %1665 = vmatpush1.bf16.msra.mxu0 %v772
    %1666 = vmatprep.subr.bf16.mxu0 0
    %1667 = vmatpush1.bf16.msra.mxu0 %v773
    %1668 = vmatprep.mubr.bf16.mxu0 %v1621
    %1669 = vmatmul.mubr.bf16.gmra.mrb[0].mxu0 %v1620
    %v1670 = vpop.f32.mrb[0].mxu0
    %v1671 = vadd.f32 0.0, %v1670
    %v1672 = vpop.f32.mrb[0].mxu0
    %v1673 = vpop.f32.mrb[0].mxu0
    %v1674 = vadd.f32 0.0, %v1673
    %v1675 = vpop.f32.mrb[0].mxu0
    %1676 = vmatprep.mubr.bf16.mxu0 %v1623
    %1677 = vmatmul.mubr.bf16.gmra.mrb[0].mxu0 %v1622
    %v1678 = vpop.f32.mrb[0].mxu0
    %v1679 = vadd.f32 0.0, %v1678
    %v1680 = vpop.f32.mrb[0].mxu0
    %v1681 = vpop.f32.mrb[0].mxu0
    %v1682 = vadd.f32 0.0, %v1681
    %v1683 = vpop.f32.mrb[0].mxu0
    %1684 = vmatprep.mubr.bf16.mxu0 %v1625
    %1685 = vmatmul.mubr.bf16.gmra.mrb[0].mxu0 %v1624
    %v1686 = vpop.f32.mrb[0].mxu0
    %v1687 = vadd.f32 0.0, %v1686
    %v1688 = vpop.f32.mrb[0].mxu0
    %v1689 = vpop.f32.mrb[0].mxu0
    %v1690 = vadd.f32 0.0, %v1689
    %v1691 = vpop.f32.mrb[0].mxu0
    %1692 = vmatprep.mubr.bf16.mxu0 %v1627
    %1693 = vmatmul.mubr.bf16.gmra.mrb[0].mxu0 %v1626
    %v1694 = vpop.f32.mrb[0].mxu0
    %v1695 = vadd.f32 0.0, %v1694
    %v1696 = vpop.f32.mrb[0].mxu0
    %v1697 = vpop.f32.mrb[0].mxu0
    %v1698 = vadd.f32 0.0, %v1697
    %v1699 = vpop.f32.mrb[0].mxu0
    %1700 = vdwg.mxu0
    %s1701 = scalar_lea.vmem %s3, 512
    %v1702 = vld [vmem:[%s1701] sm:$0xff]
    %v1703 = vld [vmem:[%s1701 + $0x8] sm:$0xff]
    %v1704 = vld [vmem:[%s1701 + $0x10] sm:$0xff]
    %v1705 = vld [vmem:[%s1701 + $0x18] sm:$0xff]
    %v1706 = vld [vmem:[%s1701 + $0x20] sm:$0xff]
    %v1707 = vld [vmem:[%s1701 + $0x28] sm:$0xff]
    %v1708 = vld [vmem:[%s1701 + $0x30] sm:$0xff]
    %v1709 = vld [vmem:[%s1701 + $0x38] sm:$0xff]
    %v1718 = vunpack.c.l.b16 %v1702
    %v1719 = vunpack.c.h.b16 %v1702
    %v1720 = vunpack.c.l.b16 %v1703
    %v1721 = vunpack.c.h.b16 %v1703
    %v1722 = vunpack.c.l.b16 %v1704
    %v1723 = vunpack.c.h.b16 %v1704
    %v1724 = vunpack.c.l.b16 %v1705
    %v1725 = vunpack.c.h.b16 %v1705
    %v1726 = vunpack.c.l.b16 %v1706
    %v1727 = vunpack.c.h.b16 %v1706
    %v1728 = vunpack.c.l.b16 %v1707
    %v1729 = vunpack.c.h.b16 %v1707
    %v1730 = vunpack.c.l.b16 %v1708
    %v1731 = vunpack.c.h.b16 %v1708
    %v1732 = vunpack.c.l.b16 %v1709
    %v1733 = vunpack.c.h.b16 %v1709
    %v1734 = vpack.c.b16 %v1720, %v1718
    %v1735 = vpack.c.b16 %v1721, %v1719
    %v1736 = vpack.c.b16 %v1724, %v1722
    %v1737 = vpack.c.b16 %v1725, %v1723
    %v1738 = vpack.c.b16 %v1728, %v1726
    %v1739 = vpack.c.b16 %v1729, %v1727
    %v1740 = vpack.c.b16 %v1732, %v1730
    %v1741 = vpack.c.b16 %v1733, %v1731
    %1750 = vmatprep.subr.bf16.mxu0 0
    %1751 = vmatpush1.bf16.msra.mxu0 %v758
    %1752 = vmatprep.subr.bf16.mxu0 0
    %1753 = vmatpush1.bf16.msra.mxu0 %v759
    %1754 = vmatprep.subr.bf16.mxu0 0
    %1755 = vmatpush1.bf16.msra.mxu0 %v760
    %1756 = vmatprep.subr.bf16.mxu0 0
    %1757 = vmatpush1.bf16.msra.mxu0 %v761
    %1758 = vmatprep.subr.bf16.mxu0 0
    %1759 = vmatpush1.bf16.msra.mxu0 %v762
    %1760 = vmatprep.subr.bf16.mxu0 0
    %1761 = vmatpush1.bf16.msra.mxu0 %v763
    %1762 = vmatprep.subr.bf16.mxu0 0
    %1763 = vmatpush1.bf16.msra.mxu0 %v764
    %1764 = vmatprep.subr.bf16.mxu0 0
    %1765 = vmatpush1.bf16.msra.mxu0 %v765
    %1766 = vmatprep.subr.bf16.mxu0 0
    %1767 = vmatpush1.bf16.msra.mxu0 %v766
    %1768 = vmatprep.subr.bf16.mxu0 0
    %1769 = vmatpush1.bf16.msra.mxu0 %v767
    %1770 = vmatprep.subr.bf16.mxu0 0
    %1771 = vmatpush1.bf16.msra.mxu0 %v768
    %1772 = vmatprep.subr.bf16.mxu0 0
    %1773 = vmatpush1.bf16.msra.mxu0 %v769
    %1774 = vmatprep.subr.bf16.mxu0 0
    %1775 = vmatpush1.bf16.msra.mxu0 %v770
    %1776 = vmatprep.subr.bf16.mxu0 0
    %1777 = vmatpush1.bf16.msra.mxu0 %v771
    %1778 = vmatprep.subr.bf16.mxu0 0
    %1779 = vmatpush1.bf16.msra.mxu0 %v772
    %1780 = vmatprep.subr.bf16.mxu0 0
    %1781 = vmatpush1.bf16.msra.mxu0 %v773
    %1782 = vmatprep.mubr.bf16.mxu0 %v1735
    %1783 = vmatmul.mubr.bf16.gmra.mrb[0].mxu0 %v1734
    %v1784 = vpop.f32.mrb[0].mxu0
    %v1785 = vadd.f32 0.0, %v1784
    %v1786 = vpop.f32.mrb[0].mxu0
    %v1787 = vpop.f32.mrb[0].mxu0
    %v1788 = vadd.f32 0.0, %v1787
    %v1789 = vpop.f32.mrb[0].mxu0
    %1790 = vmatprep.mubr.bf16.mxu0 %v1737
    %1791 = vmatmul.mubr.bf16.gmra.mrb[0].mxu0 %v1736
    %v1792 = vpop.f32.mrb[0].mxu0
    %v1793 = vadd.f32 0.0, %v1792
    %v1794 = vpop.f32.mrb[0].mxu0
    %v1795 = vpop.f32.mrb[0].mxu0
    %v1796 = vadd.f32 0.0, %v1795
    %v1797 = vpop.f32.mrb[0].mxu0
    %1798 = vmatprep.mubr.bf16.mxu0 %v1739
    %1799 = vmatmul.mubr.bf16.gmra.mrb[0].mxu0 %v1738
    %v1800 = vpop.f32.mrb[0].mxu0
    %v1801 = vadd.f32 0.0, %v1800
    %v1802 = vpop.f32.mrb[0].mxu0
    %v1803 = vpop.f32.mrb[0].mxu0
    %v1804 = vadd.f32 0.0, %v1803
    %v1805 = vpop.f32.mrb[0].mxu0
    %1806 = vmatprep.mubr.bf16.mxu0 %v1741
    %1807 = vmatmul.mubr.bf16.gmra.mrb[0].mxu0 %v1740
    %v1808 = vpop.f32.mrb[0].mxu0
    %v1809 = vadd.f32 0.0, %v1808
    %v1810 = vpop.f32.mrb[0].mxu0
    %v1811 = vpop.f32.mrb[0].mxu0
    %v1812 = vadd.f32 0.0, %v1811
    %v1813 = vpop.f32.mrb[0].mxu0
    %1814 = vdwg.mxu0
    %1823 = vrot.lane.b32.xlu0 %v987, 16
    %v1824 = vpop.permute.xlu0 %1823
    %1825 = vrot.lane.b32.xlu0 %v990, 16
    %v1826 = vpop.permute.xlu0 %1825
    %1827 = vrot.lane.b32.xlu0 %v995, 16
    %v1828 = vpop.permute.xlu0 %1827
    %1829 = vrot.lane.b32.xlu0 %v998, 16
    %v1830 = vpop.permute.xlu0 %1829
    %1831 = vrot.lane.b32.xlu0 %v1003, 16
    %v1832 = vpop.permute.xlu0 %1831
    %1833 = vrot.lane.b32.xlu0 %v1006, 16
    %v1834 = vpop.permute.xlu0 %1833
    %1835 = vrot.lane.b32.xlu0 %v1011, 16
    %v1836 = vpop.permute.xlu0 %1835
    %1837 = vrot.lane.b32.xlu0 %v1014, 16
    %v1838 = vpop.permute.xlu0 %1837
    %1855 = vrot.lane.b32.xlu0 %v1101, 32
    %v1856 = vpop.permute.xlu0 %1855
    %1857 = vrot.lane.b32.xlu0 %v1104, 32
    %v1858 = vpop.permute.xlu0 %1857
    %1859 = vrot.lane.b32.xlu0 %v1109, 32
    %v1860 = vpop.permute.xlu0 %1859
    %1861 = vrot.lane.b32.xlu0 %v1112, 32
    %v1862 = vpop.permute.xlu0 %1861
    %1863 = vrot.lane.b32.xlu0 %v1117, 32
    %v1864 = vpop.permute.xlu0 %1863
    %1865 = vrot.lane.b32.xlu0 %v1120, 32
    %v1866 = vpop.permute.xlu0 %1865
    %1867 = vrot.lane.b32.xlu0 %v1125, 32
    %v1868 = vpop.permute.xlu0 %1867
    %1869 = vrot.lane.b32.xlu0 %v1128, 32
    %v1870 = vpop.permute.xlu0 %1869
    %1887 = vrot.lane.b32.xlu0 %v1215, 48
    %v1888 = vpop.permute.xlu0 %1887
    %1889 = vrot.lane.b32.xlu0 %v1218, 48
    %v1890 = vpop.permute.xlu0 %1889
    %1891 = vrot.lane.b32.xlu0 %v1223, 48
    %v1892 = vpop.permute.xlu0 %1891
    %1893 = vrot.lane.b32.xlu0 %v1226, 48
    %v1894 = vpop.permute.xlu0 %1893
    %1895 = vrot.lane.b32.xlu0 %v1231, 48
    %v1896 = vpop.permute.xlu0 %1895
    %1897 = vrot.lane.b32.xlu0 %v1234, 48
    %v1898 = vpop.permute.xlu0 %1897
    %1899 = vrot.lane.b32.xlu0 %v1239, 48
    %v1900 = vpop.permute.xlu0 %1899
    %1901 = vrot.lane.b32.xlu0 %v1242, 48
    %v1902 = vpop.permute.xlu0 %1901
    %1919 = vrot.lane.b32.xlu0 %v1329, 64
    %v1920 = vpop.permute.xlu0 %1919
    %1921 = vrot.lane.b32.xlu0 %v1332, 64
    %v1922 = vpop.permute.xlu0 %1921
    %1923 = vrot.lane.b32.xlu0 %v1337, 64
    %v1924 = vpop.permute.xlu0 %1923
    %1925 = vrot.lane.b32.xlu0 %v1340, 64
    %v1926 = vpop.permute.xlu0 %1925
    %1927 = vrot.lane.b32.xlu0 %v1345, 64
    %v1928 = vpop.permute.xlu0 %1927
    %1929 = vrot.lane.b32.xlu0 %v1348, 64
    %v1930 = vpop.permute.xlu0 %1929
    %1931 = vrot.lane.b32.xlu0 %v1353, 64
    %v1932 = vpop.permute.xlu0 %1931
    %1933 = vrot.lane.b32.xlu0 %v1356, 64
    %v1934 = vpop.permute.xlu0 %1933
    %1951 = vrot.lane.b32.xlu0 %v1443, 80
    %v1952 = vpop.permute.xlu0 %1951
    %1953 = vrot.lane.b32.xlu0 %v1446, 80
    %v1954 = vpop.permute.xlu0 %1953
    %1955 = vrot.lane.b32.xlu0 %v1451, 80
    %v1956 = vpop.permute.xlu0 %1955
    %1957 = vrot.lane.b32.xlu0 %v1454, 80
    %v1958 = vpop.permute.xlu0 %1957
    %1959 = vrot.lane.b32.xlu0 %v1459, 80
    %v1960 = vpop.permute.xlu0 %1959
    %1961 = vrot.lane.b32.xlu0 %v1462, 80
    %v1962 = vpop.permute.xlu0 %1961
    %1963 = vrot.lane.b32.xlu0 %v1467, 80
    %v1964 = vpop.permute.xlu0 %1963
    %1965 = vrot.lane.b32.xlu0 %v1470, 80
    %v1966 = vpop.permute.xlu0 %1965
    %1983 = vrot.lane.b32.xlu0 %v1557, 96
    %v1984 = vpop.permute.xlu0 %1983
    %1985 = vrot.lane.b32.xlu0 %v1560, 96
    %v1986 = vpop.permute.xlu0 %1985
    %1987 = vrot.lane.b32.xlu0 %v1565, 96
    %v1988 = vpop.permute.xlu0 %1987
    %1989 = vrot.lane.b32.xlu0 %v1568, 96
    %v1990 = vpop.permute.xlu0 %1989
    %1991 = vrot.lane.b32.xlu0 %v1573, 96
    %v1992 = vpop.permute.xlu0 %1991
    %1993 = vrot.lane.b32.xlu0 %v1576, 96
    %v1994 = vpop.permute.xlu0 %1993
    %1995 = vrot.lane.b32.xlu0 %v1581, 96
    %v1996 = vpop.permute.xlu0 %1995
    %1997 = vrot.lane.b32.xlu0 %v1584, 96
    %v1998 = vpop.permute.xlu0 %1997
    %2015 = vrot.lane.b32.xlu0 %v1671, 112
    %v2016 = vpop.permute.xlu0 %2015
    %2017 = vrot.lane.b32.xlu0 %v1674, 112
    %v2018 = vpop.permute.xlu0 %2017
    %2019 = vrot.lane.b32.xlu0 %v1679, 112
    %v2020 = vpop.permute.xlu0 %2019
    %2021 = vrot.lane.b32.xlu0 %v1682, 112
    %v2022 = vpop.permute.xlu0 %2021
    %2023 = vrot.lane.b32.xlu0 %v1687, 112
    %v2024 = vpop.permute.xlu0 %2023
    %2025 = vrot.lane.b32.xlu0 %v1690, 112
    %v2026 = vpop.permute.xlu0 %2025
    %2027 = vrot.lane.b32.xlu0 %v1695, 112
    %v2028 = vpop.permute.xlu0 %2027
    %2029 = vrot.lane.b32.xlu0 %v1698, 112
    %v2030 = vpop.permute.xlu0 %2029
    %vm2039 = vcmask 130048
    %v2040 = vsel %vm2039, %v873, %v1824
    %v2041 = vsel %vm2039, %v876, %v1826
    %v2042 = vsel %vm2039, %v881, %v1828
    %v2043 = vsel %vm2039, %v884, %v1830
    %v2044 = vsel %vm2039, %v889, %v1832
    %v2045 = vsel %vm2039, %v892, %v1834
    %v2046 = vsel %vm2039, %v897, %v1836
    %v2047 = vsel %vm2039, %v900, %v1838
    %vm2048 = vcmask 261120
    %v2049 = vsel %vm2048, %v2040, %v1856
    %v2050 = vsel %vm2048, %v2041, %v1858
    %v2051 = vsel %vm2048, %v2042, %v1860
    %v2052 = vsel %vm2048, %v2043, %v1862
    %v2053 = vsel %vm2048, %v2044, %v1864
    %v2054 = vsel %vm2048, %v2045, %v1866
    %v2055 = vsel %vm2048, %v2046, %v1868
    %v2056 = vsel %vm2048, %v2047, %v1870
    %vm2057 = vcmask 392192
    %v2058 = vsel %vm2057, %v2049, %v1888
    %v2059 = vsel %vm2057, %v2050, %v1890
    %v2060 = vsel %vm2057, %v2051, %v1892
    %v2061 = vsel %vm2057, %v2052, %v1894
    %v2062 = vsel %vm2057, %v2053, %v1896
    %v2063 = vsel %vm2057, %v2054, %v1898
    %v2064 = vsel %vm2057, %v2055, %v1900
    %v2065 = vsel %vm2057, %v2056, %v1902
    %vm2066 = vcmask 523264
    %v2067 = vsel %vm2066, %v2058, %v1920
    %v2068 = vsel %vm2066, %v2059, %v1922
    %v2069 = vsel %vm2066, %v2060, %v1924
    %v2070 = vsel %vm2066, %v2061, %v1926
    %v2071 = vsel %vm2066, %v2062, %v1928
    %v2072 = vsel %vm2066, %v2063, %v1930
    %v2073 = vsel %vm2066, %v2064, %v1932
    %v2074 = vsel %vm2066, %v2065, %v1934
    %vm2075 = vcmask 654336
    %v2076 = vsel %vm2075, %v2067, %v1952
    %v2077 = vsel %vm2075, %v2068, %v1954
    %v2078 = vsel %vm2075, %v2069, %v1956
    %v2079 = vsel %vm2075, %v2070, %v1958
    %v2080 = vsel %vm2075, %v2071, %v1960
    %v2081 = vsel %vm2075, %v2072, %v1962
    %v2082 = vsel %vm2075, %v2073, %v1964
    %v2083 = vsel %vm2075, %v2074, %v1966
    %vm2084 = vcmask 785408
    %v2085 = vsel %vm2084, %v2076, %v1984
    %v2086 = vsel %vm2084, %v2077, %v1986
    %v2087 = vsel %vm2084, %v2078, %v1988
    %v2088 = vsel %vm2084, %v2079, %v1990
    %v2089 = vsel %vm2084, %v2080, %v1992
    %v2090 = vsel %vm2084, %v2081, %v1994
    %v2091 = vsel %vm2084, %v2082, %v1996
    %v2092 = vsel %vm2084, %v2083, %v1998
    %vm2093 = vcmask 916480
    %v2094 = vsel %vm2093, %v2085, %v2016
    %v2095 = vsel %vm2093, %v2086, %v2018
    %v2096 = vsel %vm2093, %v2087, %v2020
    %v2097 = vsel %vm2093, %v2088, %v2022
    %v2098 = vsel %vm2093, %v2089, %v2024
    %v2099 = vsel %vm2093, %v2090, %v2026
    %v2100 = vsel %vm2093, %v2091, %v2028
    %v2101 = vsel %vm2093, %v2092, %v2030
    %2102 = vmatprep.subr.bf16.mxu0 0
    %2103 = vmatpush1.bf16.msra.mxu0 %v774
    %2104 = vmatprep.subr.bf16.mxu0 0
    %2105 = vmatpush1.bf16.msra.mxu0 %v775
    %2106 = vmatprep.subr.bf16.mxu0 0
    %2107 = vmatpush1.bf16.msra.mxu0 %v776
    %2108 = vmatprep.subr.bf16.mxu0 0
    %2109 = vmatpush1.bf16.msra.mxu0 %v777
    %2110 = vmatprep.subr.bf16.mxu0 0
    %2111 = vmatpush1.bf16.msra.mxu0 %v778
    %2112 = vmatprep.subr.bf16.mxu0 0
    %2113 = vmatpush1.bf16.msra.mxu0 %v779
    %2114 = vmatprep.subr.bf16.mxu0 0
    %2115 = vmatpush1.bf16.msra.mxu0 %v780
    %2116 = vmatprep.subr.bf16.mxu0 0
    %2117 = vmatpush1.bf16.msra.mxu0 %v781
    %2118 = vmatprep.subr.bf16.mxu0 0
    %2119 = vmatpush1.bf16.msra.mxu0 %v782
    %2120 = vmatprep.subr.bf16.mxu0 0
    %2121 = vmatpush1.bf16.msra.mxu0 %v783
    %2122 = vmatprep.subr.bf16.mxu0 0
    %2123 = vmatpush1.bf16.msra.mxu0 %v784
    %2124 = vmatprep.subr.bf16.mxu0 0
    %2125 = vmatpush1.bf16.msra.mxu0 %v785
    %2126 = vmatprep.subr.bf16.mxu0 0
    %2127 = vmatpush1.bf16.msra.mxu0 %v786
    %2128 = vmatprep.subr.bf16.mxu0 0
    %2129 = vmatpush1.bf16.msra.mxu0 %v787
    %2130 = vmatprep.subr.bf16.mxu0 0
    %2131 = vmatpush1.bf16.msra.mxu0 %v788
    %2132 = vmatprep.subr.bf16.mxu0 0
    %2133 = vmatpush1.bf16.msra.mxu0 %v789
    %2134 = vmatprep.mubr.bf16.mxu0 %v823
    %2135 = vmatmul.mubr.bf16.gmra.mrb[0].mxu0 %v822
    %v2136 = vpop.f32.mrb[0].mxu0
    %v2137 = vadd.f32 0.0, %v2136
    %v2138 = vpop.f32.mrb[0].mxu0
    %v2139 = vpop.f32.mrb[0].mxu0
    %v2140 = vadd.f32 0.0, %v2139
    %v2141 = vpop.f32.mrb[0].mxu0
    %2142 = vmatprep.mubr.bf16.mxu0 %v825
    %2143 = vmatmul.mubr.bf16.gmra.mrb[0].mxu0 %v824
    %v2144 = vpop.f32.mrb[0].mxu0
    %v2145 = vadd.f32 0.0, %v2144
    %v2146 = vpop.f32.mrb[0].mxu0
    %v2147 = vpop.f32.mrb[0].mxu0
    %v2148 = vadd.f32 0.0, %v2147
    %v2149 = vpop.f32.mrb[0].mxu0
    %2150 = vmatprep.mubr.bf16.mxu0 %v827
    %2151 = vmatmul.mubr.bf16.gmra.mrb[0].mxu0 %v826
    %v2152 = vpop.f32.mrb[0].mxu0
    %v2153 = vadd.f32 0.0, %v2152
    %v2154 = vpop.f32.mrb[0].mxu0
    %v2155 = vpop.f32.mrb[0].mxu0
    %v2156 = vadd.f32 0.0, %v2155
    %v2157 = vpop.f32.mrb[0].mxu0
    %2158 = vmatprep.mubr.bf16.mxu0 %v829
    %2159 = vmatmul.mubr.bf16.gmra.mrb[0].mxu0 %v828
    %v2160 = vpop.f32.mrb[0].mxu0
    %v2161 = vadd.f32 0.0, %v2160
    %v2162 = vpop.f32.mrb[0].mxu0
    %v2163 = vpop.f32.mrb[0].mxu0
    %v2164 = vadd.f32 0.0, %v2163
    %v2165 = vpop.f32.mrb[0].mxu0
    %2166 = vdwg.mxu0
    %2167 = vmatprep.subr.bf16.mxu0 0
    %2168 = vmatpush1.bf16.msra.mxu0 %v774
    %2169 = vmatprep.subr.bf16.mxu0 0
    %2170 = vmatpush1.bf16.msra.mxu0 %v775
    %2171 = vmatprep.subr.bf16.mxu0 0
    %2172 = vmatpush1.bf16.msra.mxu0 %v776
    %2173 = vmatprep.subr.bf16.mxu0 0
    %2174 = vmatpush1.bf16.msra.mxu0 %v777
    %2175 = vmatprep.subr.bf16.mxu0 0
    %2176 = vmatpush1.bf16.msra.mxu0 %v778
    %2177 = vmatprep.subr.bf16.mxu0 0
    %2178 = vmatpush1.bf16.msra.mxu0 %v779
    %2179 = vmatprep.subr.bf16.mxu0 0
    %2180 = vmatpush1.bf16.msra.mxu0 %v780
    %2181 = vmatprep.subr.bf16.mxu0 0
    %2182 = vmatpush1.bf16.msra.mxu0 %v781
    %2183 = vmatprep.subr.bf16.mxu0 0
    %2184 = vmatpush1.bf16.msra.mxu0 %v782
    %2185 = vmatprep.subr.bf16.mxu0 0
    %2186 = vmatpush1.bf16.msra.mxu0 %v783
    %2187 = vmatprep.subr.bf16.mxu0 0
    %2188 = vmatpush1.bf16.msra.mxu0 %v784
    %2189 = vmatprep.subr.bf16.mxu0 0
    %2190 = vmatpush1.bf16.msra.mxu0 %v785
    %2191 = vmatprep.subr.bf16.mxu0 0
    %2192 = vmatpush1.bf16.msra.mxu0 %v786
    %2193 = vmatprep.subr.bf16.mxu0 0
    %2194 = vmatpush1.bf16.msra.mxu0 %v787
    %2195 = vmatprep.subr.bf16.mxu0 0
    %2196 = vmatpush1.bf16.msra.mxu0 %v788
    %2197 = vmatprep.subr.bf16.mxu0 0
    %2198 = vmatpush1.bf16.msra.mxu0 %v789
    %2199 = vmatprep.mubr.bf16.mxu0 %v937
    %2200 = vmatmul.mubr.bf16.gmra.mrb[0].mxu0 %v936
    %v2201 = vpop.f32.mrb[0].mxu0
    %v2202 = vadd.f32 0.0, %v2201
    %v2203 = vpop.f32.mrb[0].mxu0
    %v2204 = vpop.f32.mrb[0].mxu0
    %v2205 = vadd.f32 0.0, %v2204
    %v2206 = vpop.f32.mrb[0].mxu0
    %2207 = vmatprep.mubr.bf16.mxu0 %v939
    %2208 = vmatmul.mubr.bf16.gmra.mrb[0].mxu0 %v938
    %v2209 = vpop.f32.mrb[0].mxu0
    %v2210 = vadd.f32 0.0, %v2209
    %v2211 = vpop.f32.mrb[0].mxu0
    %v2212 = vpop.f32.mrb[0].mxu0
    %v2213 = vadd.f32 0.0, %v2212
    %v2214 = vpop.f32.mrb[0].mxu0
    %2215 = vmatprep.mubr.bf16.mxu0 %v941
    %2216 = vmatmul.mubr.bf16.gmra.mrb[0].mxu0 %v940
    %v2217 = vpop.f32.mrb[0].mxu0
    %v2218 = vadd.f32 0.0, %v2217
    %v2219 = vpop.f32.mrb[0].mxu0
    %v2220 = vpop.f32.mrb[0].mxu0
    %v2221 = vadd.f32 0.0, %v2220
    %v2222 = vpop.f32.mrb[0].mxu0
    %2223 = vmatprep.mubr.bf16.mxu0 %v943
    %2224 = vmatmul.mubr.bf16.gmra.mrb[0].mxu0 %v942
    %v2225 = vpop.f32.mrb[0].mxu0
    %v2226 = vadd.f32 0.0, %v2225
    %v2227 = vpop.f32.mrb[0].mxu0
    %v2228 = vpop.f32.mrb[0].mxu0
    %v2229 = vadd.f32 0.0, %v2228
    %v2230 = vpop.f32.mrb[0].mxu0
    %2231 = vdwg.mxu0
    %2232 = vmatprep.subr.bf16.mxu0 0
    %2233 = vmatpush1.bf16.msra.mxu0 %v774
    %2234 = vmatprep.subr.bf16.mxu0 0
    %2235 = vmatpush1.bf16.msra.mxu0 %v775
    %2236 = vmatprep.subr.bf16.mxu0 0
    %2237 = vmatpush1.bf16.msra.mxu0 %v776
    %2238 = vmatprep.subr.bf16.mxu0 0
    %2239 = vmatpush1.bf16.msra.mxu0 %v777
    %2240 = vmatprep.subr.bf16.mxu0 0
    %2241 = vmatpush1.bf16.msra.mxu0 %v778
    %2242 = vmatprep.subr.bf16.mxu0 0
    %2243 = vmatpush1.bf16.msra.mxu0 %v779
    %2244 = vmatprep.subr.bf16.mxu0 0
    %2245 = vmatpush1.bf16.msra.mxu0 %v780
    %2246 = vmatprep.subr.bf16.mxu0 0
    %2247 = vmatpush1.bf16.msra.mxu0 %v781
    %2248 = vmatprep.subr.bf16.mxu0 0
    %2249 = vmatpush1.bf16.msra.mxu0 %v782
    %2250 = vmatprep.subr.bf16.mxu0 0
    %2251 = vmatpush1.bf16.msra.mxu0 %v783
    %2252 = vmatprep.subr.bf16.mxu0 0
    %2253 = vmatpush1.bf16.msra.mxu0 %v784
    %2254 = vmatprep.subr.bf16.mxu0 0
    %2255 = vmatpush1.bf16.msra.mxu0 %v785
    %2256 = vmatprep.subr.bf16.mxu0 0
    %2257 = vmatpush1.bf16.msra.mxu0 %v786
    %2258 = vmatprep.subr.bf16.mxu0 0
    %2259 = vmatpush1.bf16.msra.mxu0 %v787
    %2260 = vmatprep.subr.bf16.mxu0 0
    %2261 = vmatpush1.bf16.msra.mxu0 %v788
    %2262 = vmatprep.subr.bf16.mxu0 0
    %2263 = vmatpush1.bf16.msra.mxu0 %v789
    %2264 = vmatprep.mubr.bf16.mxu0 %v1051
    %2265 = vmatmul.mubr.bf16.gmra.mrb[0].mxu0 %v1050
    %v2266 = vpop.f32.mrb[0].mxu0
    %v2267 = vadd.f32 0.0, %v2266
    %v2268 = vpop.f32.mrb[0].mxu0
    %v2269 = vpop.f32.mrb[0].mxu0
    %v2270 = vadd.f32 0.0, %v2269
    %v2271 = vpop.f32.mrb[0].mxu0
    %2272 = vmatprep.mubr.bf16.mxu0 %v1053
    %2273 = vmatmul.mubr.bf16.gmra.mrb[0].mxu0 %v1052
    %v2274 = vpop.f32.mrb[0].mxu0
    %v2275 = vadd.f32 0.0, %v2274
    %v2276 = vpop.f32.mrb[0].mxu0
    %v2277 = vpop.f32.mrb[0].mxu0
    %v2278 = vadd.f32 0.0, %v2277
    %v2279 = vpop.f32.mrb[0].mxu0
    %2280 = vmatprep.mubr.bf16.mxu0 %v1055
    %2281 = vmatmul.mubr.bf16.gmra.mrb[0].mxu0 %v1054
    %v2282 = vpop.f32.mrb[0].mxu0
    %v2283 = vadd.f32 0.0, %v2282
    %v2284 = vpop.f32.mrb[0].mxu0
    %v2285 = vpop.f32.mrb[0].mxu0
    %v2286 = vadd.f32 0.0, %v2285
    %v2287 = vpop.f32.mrb[0].mxu0
    %2288 = vmatprep.mubr.bf16.mxu0 %v1057
    %2289 = vmatmul.mubr.bf16.gmra.mrb[0].mxu0 %v1056
    %v2290 = vpop.f32.mrb[0].mxu0
    %v2291 = vadd.f32 0.0, %v2290
    %v2292 = vpop.f32.mrb[0].mxu0
    %v2293 = vpop.f32.mrb[0].mxu0
    %v2294 = vadd.f32 0.0, %v2293
    %v2295 = vpop.f32.mrb[0].mxu0
    %2296 = vdwg.mxu0
    %2297 = vmatprep.subr.bf16.mxu0 0
    %2298 = vmatpush1.bf16.msra.mxu0 %v774
    %2299 = vmatprep.subr.bf16.mxu0 0
    %2300 = vmatpush1.bf16.msra.mxu0 %v775
    %2301 = vmatprep.subr.bf16.mxu0 0
    %2302 = vmatpush1.bf16.msra.mxu0 %v776
    %2303 = vmatprep.subr.bf16.mxu0 0
    %2304 = vmatpush1.bf16.msra.mxu0 %v777
    %2305 = vmatprep.subr.bf16.mxu0 0
    %2306 = vmatpush1.bf16.msra.mxu0 %v778
    %2307 = vmatprep.subr.bf16.mxu0 0
    %2308 = vmatpush1.bf16.msra.mxu0 %v779
    %2309 = vmatprep.subr.bf16.mxu0 0
    %2310 = vmatpush1.bf16.msra.mxu0 %v780
    %2311 = vmatprep.subr.bf16.mxu0 0
    %2312 = vmatpush1.bf16.msra.mxu0 %v781
    %2313 = vmatprep.subr.bf16.mxu0 0
    %2314 = vmatpush1.bf16.msra.mxu0 %v782
    %2315 = vmatprep.subr.bf16.mxu0 0
    %2316 = vmatpush1.bf16.msra.mxu0 %v783
    %2317 = vmatprep.subr.bf16.mxu0 0
    %2318 = vmatpush1.bf16.msra.mxu0 %v784
    %2319 = vmatprep.subr.bf16.mxu0 0
    %2320 = vmatpush1.bf16.msra.mxu0 %v785
    %2321 = vmatprep.subr.bf16.mxu0 0
    %2322 = vmatpush1.bf16.msra.mxu0 %v786
    %2323 = vmatprep.subr.bf16.mxu0 0
    %2324 = vmatpush1.bf16.msra.mxu0 %v787
    %2325 = vmatprep.subr.bf16.mxu0 0
    %2326 = vmatpush1.bf16.msra.mxu0 %v788
    %2327 = vmatprep.subr.bf16.mxu0 0
    %2328 = vmatpush1.bf16.msra.mxu0 %v789
    %2329 = vmatprep.mubr.bf16.mxu0 %v1165
    %2330 = vmatmul.mubr.bf16.gmra.mrb[0].mxu0 %v1164
    %v2331 = vpop.f32.mrb[0].mxu0
    %v2332 = vadd.f32 0.0, %v2331
    %v2333 = vpop.f32.mrb[0].mxu0
    %v2334 = vpop.f32.mrb[0].mxu0
    %v2335 = vadd.f32 0.0, %v2334
    %v2336 = vpop.f32.mrb[0].mxu0
    %2337 = vmatprep.mubr.bf16.mxu0 %v1167
    %2338 = vmatmul.mubr.bf16.gmra.mrb[0].mxu0 %v1166
    %v2339 = vpop.f32.mrb[0].mxu0
    %v2340 = vadd.f32 0.0, %v2339
    %v2341 = vpop.f32.mrb[0].mxu0
    %v2342 = vpop.f32.mrb[0].mxu0
    %v2343 = vadd.f32 0.0, %v2342
    %v2344 = vpop.f32.mrb[0].mxu0
    %2345 = vmatprep.mubr.bf16.mxu0 %v1169
    %2346 = vmatmul.mubr.bf16.gmra.mrb[0].mxu0 %v1168
    %v2347 = vpop.f32.mrb[0].mxu0
    %v2348 = vadd.f32 0.0, %v2347
    %v2349 = vpop.f32.mrb[0].mxu0
    %v2350 = vpop.f32.mrb[0].mxu0
    %v2351 = vadd.f32 0.0, %v2350
    %v2352 = vpop.f32.mrb[0].mxu0
    %2353 = vmatprep.mubr.bf16.mxu0 %v1171
    %2354 = vmatmul.mubr.bf16.gmra.mrb[0].mxu0 %v1170
    %v2355 = vpop.f32.mrb[0].mxu0
    %v2356 = vadd.f32 0.0, %v2355
    %v2357 = vpop.f32.mrb[0].mxu0
    %v2358 = vpop.f32.mrb[0].mxu0
    %v2359 = vadd.f32 0.0, %v2358
    %v2360 = vpop.f32.mrb[0].mxu0
    %2361 = vdwg.mxu0
    %2362 = vmatprep.subr.bf16.mxu0 0
    %2363 = vmatpush1.bf16.msra.mxu0 %v774
    %2364 = vmatprep.subr.bf16.mxu0 0
    %2365 = vmatpush1.bf16.msra.mxu0 %v775
    %2366 = vmatprep.subr.bf16.mxu0 0
    %2367 = vmatpush1.bf16.msra.mxu0 %v776
    %2368 = vmatprep.subr.bf16.mxu0 0
    %2369 = vmatpush1.bf16.msra.mxu0 %v777
    %2370 = vmatprep.subr.bf16.mxu0 0
    %2371 = vmatpush1.bf16.msra.mxu0 %v778
    %2372 = vmatprep.subr.bf16.mxu0 0
    %2373 = vmatpush1.bf16.msra.mxu0 %v779
    %2374 = vmatprep.subr.bf16.mxu0 0
    %2375 = vmatpush1.bf16.msra.mxu0 %v780
    %2376 = vmatprep.subr.bf16.mxu0 0
    %2377 = vmatpush1.bf16.msra.mxu0 %v781
    %2378 = vmatprep.subr.bf16.mxu0 0
    %2379 = vmatpush1.bf16.msra.mxu0 %v782
    %2380 = vmatprep.subr.bf16.mxu0 0
    %2381 = vmatpush1.bf16.msra.mxu0 %v783
    %2382 = vmatprep.subr.bf16.mxu0 0
    %2383 = vmatpush1.bf16.msra.mxu0 %v784
    %2384 = vmatprep.subr.bf16.mxu0 0
    %2385 = vmatpush1.bf16.msra.mxu0 %v785
    %2386 = vmatprep.subr.bf16.mxu0 0
    %2387 = vmatpush1.bf16.msra.mxu0 %v786
    %2388 = vmatprep.subr.bf16.mxu0 0
    %2389 = vmatpush1.bf16.msra.mxu0 %v787
    %2390 = vmatprep.subr.bf16.mxu0 0
    %2391 = vmatpush1.bf16.msra.mxu0 %v788
    %2392 = vmatprep.subr.bf16.mxu0 0
    %2393 = vmatpush1.bf16.msra.mxu0 %v789
    %2394 = vmatprep.mubr.bf16.mxu0 %v1279
    %2395 = vmatmul.mubr.bf16.gmra.mrb[0].mxu0 %v1278
    %v2396 = vpop.f32.mrb[0].mxu0
    %v2397 = vadd.f32 0.0, %v2396
    %v2398 = vpop.f32.mrb[0].mxu0
    %v2399 = vpop.f32.mrb[0].mxu0
    %v2400 = vadd.f32 0.0, %v2399
    %v2401 = vpop.f32.mrb[0].mxu0
    %2402 = vmatprep.mubr.bf16.mxu0 %v1281
    %2403 = vmatmul.mubr.bf16.gmra.mrb[0].mxu0 %v1280
    %v2404 = vpop.f32.mrb[0].mxu0
    %v2405 = vadd.f32 0.0, %v2404
    %v2406 = vpop.f32.mrb[0].mxu0
    %v2407 = vpop.f32.mrb[0].mxu0
    %v2408 = vadd.f32 0.0, %v2407
    %v2409 = vpop.f32.mrb[0].mxu0
    %2410 = vmatprep.mubr.bf16.mxu0 %v1283
    %2411 = vmatmul.mubr.bf16.gmra.mrb[0].mxu0 %v1282
    %v2412 = vpop.f32.mrb[0].mxu0
    %v2413 = vadd.f32 0.0, %v2412
    %v2414 = vpop.f32.mrb[0].mxu0
    %v2415 = vpop.f32.mrb[0].mxu0
    %v2416 = vadd.f32 0.0, %v2415
    %v2417 = vpop.f32.mrb[0].mxu0
    %2418 = vmatprep.mubr.bf16.mxu0 %v1285
    %2419 = vmatmul.mubr.bf16.gmra.mrb[0].mxu0 %v1284
    %v2420 = vpop.f32.mrb[0].mxu0
    %v2421 = vadd.f32 0.0, %v2420
    %v2422 = vpop.f32.mrb[0].mxu0
    %v2423 = vpop.f32.mrb[0].mxu0
    %v2424 = vadd.f32 0.0, %v2423
    %v2425 = vpop.f32.mrb[0].mxu0
    %2426 = vdwg.mxu0
    %2427 = vmatprep.subr.bf16.mxu0 0
    %2428 = vmatpush1.bf16.msra.mxu0 %v774
    %2429 = vmatprep.subr.bf16.mxu0 0
    %2430 = vmatpush1.bf16.msra.mxu0 %v775
    %2431 = vmatprep.subr.bf16.mxu0 0
    %2432 = vmatpush1.bf16.msra.mxu0 %v776
    %2433 = vmatprep.subr.bf16.mxu0 0
    %2434 = vmatpush1.bf16.msra.mxu0 %v777
    %2435 = vmatprep.subr.bf16.mxu0 0
    %2436 = vmatpush1.bf16.msra.mxu0 %v778
    %2437 = vmatprep.subr.bf16.mxu0 0
    %2438 = vmatpush1.bf16.msra.mxu0 %v779
    %2439 = vmatprep.subr.bf16.mxu0 0
    %2440 = vmatpush1.bf16.msra.mxu0 %v780
    %2441 = vmatprep.subr.bf16.mxu0 0
    %2442 = vmatpush1.bf16.msra.mxu0 %v781
    %2443 = vmatprep.subr.bf16.mxu0 0
    %2444 = vmatpush1.bf16.msra.mxu0 %v782
    %2445 = vmatprep.subr.bf16.mxu0 0
    %2446 = vmatpush1.bf16.msra.mxu0 %v783
    %2447 = vmatprep.subr.bf16.mxu0 0
    %2448 = vmatpush1.bf16.msra.mxu0 %v784
    %2449 = vmatprep.subr.bf16.mxu0 0
    %2450 = vmatpush1.bf16.msra.mxu0 %v785
    %2451 = vmatprep.subr.bf16.mxu0 0
    %2452 = vmatpush1.bf16.msra.mxu0 %v786
    %2453 = vmatprep.subr.bf16.mxu0 0
    %2454 = vmatpush1.bf16.msra.mxu0 %v787
    %2455 = vmatprep.subr.bf16.mxu0 0
    %2456 = vmatpush1.bf16.msra.mxu0 %v788
    %2457 = vmatprep.subr.bf16.mxu0 0
    %2458 = vmatpush1.bf16.msra.mxu0 %v789
    %2459 = vmatprep.mubr.bf16.mxu0 %v1393
    %2460 = vmatmul.mubr.bf16.gmra.mrb[0].mxu0 %v1392
    %v2461 = vpop.f32.mrb[0].mxu0
    %v2462 = vadd.f32 0.0, %v2461
    %v2463 = vpop.f32.mrb[0].mxu0
    %v2464 = vpop.f32.mrb[0].mxu0
    %v2465 = vadd.f32 0.0, %v2464
    %v2466 = vpop.f32.mrb[0].mxu0
    %2467 = vmatprep.mubr.bf16.mxu0 %v1395
    %2468 = vmatmul.mubr.bf16.gmra.mrb[0].mxu0 %v1394
    %v2469 = vpop.f32.mrb[0].mxu0
    %v2470 = vadd.f32 0.0, %v2469
    %v2471 = vpop.f32.mrb[0].mxu0
    %v2472 = vpop.f32.mrb[0].mxu0
    %v2473 = vadd.f32 0.0, %v2472
    %v2474 = vpop.f32.mrb[0].mxu0
    %2475 = vmatprep.mubr.bf16.mxu0 %v1397
    %2476 = vmatmul.mubr.bf16.gmra.mrb[0].mxu0 %v1396
    %v2477 = vpop.f32.mrb[0].mxu0
    %v2478 = vadd.f32 0.0, %v2477
    %v2479 = vpop.f32.mrb[0].mxu0
    %v2480 = vpop.f32.mrb[0].mxu0
    %v2481 = vadd.f32 0.0, %v2480
    %v2482 = vpop.f32.mrb[0].mxu0
    %2483 = vmatprep.mubr.bf16.mxu0 %v1399
    %2484 = vmatmul.mubr.bf16.gmra.mrb[0].mxu0 %v1398
    %v2485 = vpop.f32.mrb[0].mxu0
    %v2486 = vadd.f32 0.0, %v2485
    %v2487 = vpop.f32.mrb[0].mxu0
    %v2488 = vpop.f32.mrb[0].mxu0
    %v2489 = vadd.f32 0.0, %v2488
    %v2490 = vpop.f32.mrb[0].mxu0
    %2491 = vdwg.mxu0
    %2492 = vmatprep.subr.bf16.mxu0 0
    %2493 = vmatpush1.bf16.msra.mxu0 %v774
    %2494 = vmatprep.subr.bf16.mxu0 0
    %2495 = vmatpush1.bf16.msra.mxu0 %v775
    %2496 = vmatprep.subr.bf16.mxu0 0
    %2497 = vmatpush1.bf16.msra.mxu0 %v776
    %2498 = vmatprep.subr.bf16.mxu0 0
    %2499 = vmatpush1.bf16.msra.mxu0 %v777
    %2500 = vmatprep.subr.bf16.mxu0 0
    %2501 = vmatpush1.bf16.msra.mxu0 %v778
    %2502 = vmatprep.subr.bf16.mxu0 0
    %2503 = vmatpush1.bf16.msra.mxu0 %v779
    %2504 = vmatprep.subr.bf16.mxu0 0
    %2505 = vmatpush1.bf16.msra.mxu0 %v780
    %2506 = vmatprep.subr.bf16.mxu0 0
    %2507 = vmatpush1.bf16.msra.mxu0 %v781
    %2508 = vmatprep.subr.bf16.mxu0 0
    %2509 = vmatpush1.bf16.msra.mxu0 %v782
    %2510 = vmatprep.subr.bf16.mxu0 0
    %2511 = vmatpush1.bf16.msra.mxu0 %v783
    %2512 = vmatprep.subr.bf16.mxu0 0
    %2513 = vmatpush1.bf16.msra.mxu0 %v784
    %2514 = vmatprep.subr.bf16.mxu0 0
    %2515 = vmatpush1.bf16.msra.mxu0 %v785
    %2516 = vmatprep.subr.bf16.mxu0 0
    %2517 = vmatpush1.bf16.msra.mxu0 %v786
    %2518 = vmatprep.subr.bf16.mxu0 0
    %2519 = vmatpush1.bf16.msra.mxu0 %v787
    %2520 = vmatprep.subr.bf16.mxu0 0
    %2521 = vmatpush1.bf16.msra.mxu0 %v788
    %2522 = vmatprep.subr.bf16.mxu0 0
    %2523 = vmatpush1.bf16.msra.mxu0 %v789
    %2524 = vmatprep.mubr.bf16.mxu0 %v1507
    %2525 = vmatmul.mubr.bf16.gmra.mrb[0].mxu0 %v1506
    %v2526 = vpop.f32.mrb[0].mxu0
    %v2527 = vadd.f32 0.0, %v2526
    %v2528 = vpop.f32.mrb[0].mxu0
    %v2529 = vpop.f32.mrb[0].mxu0
    %v2530 = vadd.f32 0.0, %v2529
    %v2531 = vpop.f32.mrb[0].mxu0
    %2532 = vmatprep.mubr.bf16.mxu0 %v1509
    %2533 = vmatmul.mubr.bf16.gmra.mrb[0].mxu0 %v1508
    %v2534 = vpop.f32.mrb[0].mxu0
    %v2535 = vadd.f32 0.0, %v2534
    %v2536 = vpop.f32.mrb[0].mxu0
    %v2537 = vpop.f32.mrb[0].mxu0
    %v2538 = vadd.f32 0.0, %v2537
    %v2539 = vpop.f32.mrb[0].mxu0
    %2540 = vmatprep.mubr.bf16.mxu0 %v1511
    %2541 = vmatmul.mubr.bf16.gmra.mrb[0].mxu0 %v1510
    %v2542 = vpop.f32.mrb[0].mxu0
    %v2543 = vadd.f32 0.0, %v2542
    %v2544 = vpop.f32.mrb[0].mxu0
    %v2545 = vpop.f32.mrb[0].mxu0
    %v2546 = vadd.f32 0.0, %v2545
    %v2547 = vpop.f32.mrb[0].mxu0
    %2548 = vmatprep.mubr.bf16.mxu0 %v1513
    %2549 = vmatmul.mubr.bf16.gmra.mrb[0].mxu0 %v1512
    %v2550 = vpop.f32.mrb[0].mxu0
    %v2551 = vadd.f32 0.0, %v2550
    %v2552 = vpop.f32.mrb[0].mxu0
    %v2553 = vpop.f32.mrb[0].mxu0
    %v2554 = vadd.f32 0.0, %v2553
    %v2555 = vpop.f32.mrb[0].mxu0
    %2556 = vdwg.mxu0
    %2557 = vmatprep.subr.bf16.mxu0 0
    %2558 = vmatpush1.bf16.msra.mxu0 %v774
    %2559 = vmatprep.subr.bf16.mxu0 0
    %2560 = vmatpush1.bf16.msra.mxu0 %v775
    %2561 = vmatprep.subr.bf16.mxu0 0
    %2562 = vmatpush1.bf16.msra.mxu0 %v776
    %2563 = vmatprep.subr.bf16.mxu0 0
    %2564 = vmatpush1.bf16.msra.mxu0 %v777
    %2565 = vmatprep.subr.bf16.mxu0 0
    %2566 = vmatpush1.bf16.msra.mxu0 %v778
    %2567 = vmatprep.subr.bf16.mxu0 0
    %2568 = vmatpush1.bf16.msra.mxu0 %v779
    %2569 = vmatprep.subr.bf16.mxu0 0
    %2570 = vmatpush1.bf16.msra.mxu0 %v780
    %2571 = vmatprep.subr.bf16.mxu0 0
    %2572 = vmatpush1.bf16.msra.mxu0 %v781
    %2573 = vmatprep.subr.bf16.mxu0 0
    %2574 = vmatpush1.bf16.msra.mxu0 %v782
    %2575 = vmatprep.subr.bf16.mxu0 0
    %2576 = vmatpush1.bf16.msra.mxu0 %v783
    %2577 = vmatprep.subr.bf16.mxu0 0
    %2578 = vmatpush1.bf16.msra.mxu0 %v784
    %2579 = vmatprep.subr.bf16.mxu0 0
    %2580 = vmatpush1.bf16.msra.mxu0 %v785
    %2581 = vmatprep.subr.bf16.mxu0 0
    %2582 = vmatpush1.bf16.msra.mxu0 %v786
    %2583 = vmatprep.subr.bf16.mxu0 0
    %2584 = vmatpush1.bf16.msra.mxu0 %v787
    %2585 = vmatprep.subr.bf16.mxu0 0
    %2586 = vmatpush1.bf16.msra.mxu0 %v788
    %2587 = vmatprep.subr.bf16.mxu0 0
    %2588 = vmatpush1.bf16.msra.mxu0 %v789
    %2589 = vmatprep.mubr.bf16.mxu0 %v1621
    %2590 = vmatmul.mubr.bf16.gmra.mrb[0].mxu0 %v1620
    %v2591 = vpop.f32.mrb[0].mxu0
    %v2592 = vadd.f32 0.0, %v2591
    %v2593 = vpop.f32.mrb[0].mxu0
    %v2594 = vpop.f32.mrb[0].mxu0
    %v2595 = vadd.f32 0.0, %v2594
    %v2596 = vpop.f32.mrb[0].mxu0
    %2597 = vmatprep.mubr.bf16.mxu0 %v1623
    %2598 = vmatmul.mubr.bf16.gmra.mrb[0].mxu0 %v1622
    %v2599 = vpop.f32.mrb[0].mxu0
    %v2600 = vadd.f32 0.0, %v2599
    %v2601 = vpop.f32.mrb[0].mxu0
    %v2602 = vpop.f32.mrb[0].mxu0
    %v2603 = vadd.f32 0.0, %v2602
    %v2604 = vpop.f32.mrb[0].mxu0
    %2605 = vmatprep.mubr.bf16.mxu0 %v1625
    %2606 = vmatmul.mubr.bf16.gmra.mrb[0].mxu0 %v1624
    %v2607 = vpop.f32.mrb[0].mxu0
    %v2608 = vadd.f32 0.0, %v2607
    %v2609 = vpop.f32.mrb[0].mxu0
    %v2610 = vpop.f32.mrb[0].mxu0
    %v2611 = vadd.f32 0.0, %v2610
    %v2612 = vpop.f32.mrb[0].mxu0
    %2613 = vmatprep.mubr.bf16.mxu0 %v1627
    %2614 = vmatmul.mubr.bf16.gmra.mrb[0].mxu0 %v1626
    %v2615 = vpop.f32.mrb[0].mxu0
    %v2616 = vadd.f32 0.0, %v2615
    %v2617 = vpop.f32.mrb[0].mxu0
    %v2618 = vpop.f32.mrb[0].mxu0
    %v2619 = vadd.f32 0.0, %v2618
    %v2620 = vpop.f32.mrb[0].mxu0
    %2621 = vdwg.mxu0
    %2622 = vmatprep.subr.bf16.mxu0 0
    %2623 = vmatpush1.bf16.msra.mxu0 %v774
    %2624 = vmatprep.subr.bf16.mxu0 0
    %2625 = vmatpush1.bf16.msra.mxu0 %v775
    %2626 = vmatprep.subr.bf16.mxu0 0
    %2627 = vmatpush1.bf16.msra.mxu0 %v776
    %2628 = vmatprep.subr.bf16.mxu0 0
    %2629 = vmatpush1.bf16.msra.mxu0 %v777
    %2630 = vmatprep.subr.bf16.mxu0 0
    %2631 = vmatpush1.bf16.msra.mxu0 %v778
    %2632 = vmatprep.subr.bf16.mxu0 0
    %2633 = vmatpush1.bf16.msra.mxu0 %v779
    %2634 = vmatprep.subr.bf16.mxu0 0
    %2635 = vmatpush1.bf16.msra.mxu0 %v780
    %2636 = vmatprep.subr.bf16.mxu0 0
    %2637 = vmatpush1.bf16.msra.mxu0 %v781
    %2638 = vmatprep.subr.bf16.mxu0 0
    %2639 = vmatpush1.bf16.msra.mxu0 %v782
    %2640 = vmatprep.subr.bf16.mxu0 0
    %2641 = vmatpush1.bf16.msra.mxu0 %v783
    %2642 = vmatprep.subr.bf16.mxu0 0
    %2643 = vmatpush1.bf16.msra.mxu0 %v784
    %2644 = vmatprep.subr.bf16.mxu0 0
    %2645 = vmatpush1.bf16.msra.mxu0 %v785
    %2646 = vmatprep.subr.bf16.mxu0 0
    %2647 = vmatpush1.bf16.msra.mxu0 %v786
    %2648 = vmatprep.subr.bf16.mxu0 0
    %2649 = vmatpush1.bf16.msra.mxu0 %v787
    %2650 = vmatprep.subr.bf16.mxu0 0
    %2651 = vmatpush1.bf16.msra.mxu0 %v788
    %2652 = vmatprep.subr.bf16.mxu0 0
    %2653 = vmatpush1.bf16.msra.mxu0 %v789
    %2654 = vmatprep.mubr.bf16.mxu0 %v1735
    %2655 = vmatmul.mubr.bf16.gmra.mrb[0].mxu0 %v1734
    %v2656 = vpop.f32.mrb[0].mxu0
    %v2657 = vadd.f32 0.0, %v2656
    %v2658 = vpop.f32.mrb[0].mxu0
    %v2659 = vpop.f32.mrb[0].mxu0
    %v2660 = vadd.f32 0.0, %v2659
    %v2661 = vpop.f32.mrb[0].mxu0
    %2662 = vmatprep.mubr.bf16.mxu0 %v1737
    %2663 = vmatmul.mubr.bf16.gmra.mrb[0].mxu0 %v1736
    %v2664 = vpop.f32.mrb[0].mxu0
    %v2665 = vadd.f32 0.0, %v2664
    %v2666 = vpop.f32.mrb[0].mxu0
    %v2667 = vpop.f32.mrb[0].mxu0
    %v2668 = vadd.f32 0.0, %v2667
    %v2669 = vpop.f32.mrb[0].mxu0
    %2670 = vmatprep.mubr.bf16.mxu0 %v1739
    %2671 = vmatmul.mubr.bf16.gmra.mrb[0].mxu0 %v1738
    %v2672 = vpop.f32.mrb[0].mxu0
    %v2673 = vadd.f32 0.0, %v2672
    %v2674 = vpop.f32.mrb[0].mxu0
    %v2675 = vpop.f32.mrb[0].mxu0
    %v2676 = vadd.f32 0.0, %v2675
    %v2677 = vpop.f32.mrb[0].mxu0
    %2678 = vmatprep.mubr.bf16.mxu0 %v1741
    %2679 = vmatmul.mubr.bf16.gmra.mrb[0].mxu0 %v1740
    %v2680 = vpop.f32.mrb[0].mxu0
    %v2681 = vadd.f32 0.0, %v2680
    %v2682 = vpop.f32.mrb[0].mxu0
    %v2683 = vpop.f32.mrb[0].mxu0
    %v2684 = vadd.f32 0.0, %v2683
    %v2685 = vpop.f32.mrb[0].mxu0
    %2686 = vdwg.mxu0
    %2695 = vrot.lane.b32.xlu0 %v2202, 16
    %v2696 = vpop.permute.xlu0 %2695
    %2697 = vrot.lane.b32.xlu0 %v2205, 16
    %v2698 = vpop.permute.xlu0 %2697
    %2699 = vrot.lane.b32.xlu0 %v2210, 16
    %v2700 = vpop.permute.xlu0 %2699
    %2701 = vrot.lane.b32.xlu0 %v2213, 16
    %v2702 = vpop.permute.xlu0 %2701
    %2703 = vrot.lane.b32.xlu0 %v2218, 16
    %v2704 = vpop.permute.xlu0 %2703
    %2705 = vrot.lane.b32.xlu0 %v2221, 16
    %v2706 = vpop.permute.xlu0 %2705
    %2707 = vrot.lane.b32.xlu0 %v2226, 16
    %v2708 = vpop.permute.xlu0 %2707
    %2709 = vrot.lane.b32.xlu0 %v2229, 16
    %v2710 = vpop.permute.xlu0 %2709
    %2727 = vrot.lane.b32.xlu0 %v2267, 32
    %v2728 = vpop.permute.xlu0 %2727
    %2729 = vrot.lane.b32.xlu0 %v2270, 32
    %v2730 = vpop.permute.xlu0 %2729
    %2731 = vrot.lane.b32.xlu0 %v2275, 32
    %v2732 = vpop.permute.xlu0 %2731
    %2733 = vrot.lane.b32.xlu0 %v2278, 32
    %v2734 = vpop.permute.xlu0 %2733
    %2735 = vrot.lane.b32.xlu0 %v2283, 32
    %v2736 = vpop.permute.xlu0 %2735
    %2737 = vrot.lane.b32.xlu0 %v2286, 32
    %v2738 = vpop.permute.xlu0 %2737
    %2739 = vrot.lane.b32.xlu0 %v2291, 32
    %v2740 = vpop.permute.xlu0 %2739
    %2741 = vrot.lane.b32.xlu0 %v2294, 32
    %v2742 = vpop.permute.xlu0 %2741
    %2759 = vrot.lane.b32.xlu0 %v2332, 48
    %v2760 = vpop.permute.xlu0 %2759
    %2761 = vrot.lane.b32.xlu0 %v2335, 48
    %v2762 = vpop.permute.xlu0 %2761
    %2763 = vrot.lane.b32.xlu0 %v2340, 48
    %v2764 = vpop.permute.xlu0 %2763
    %2765 = vrot.lane.b32.xlu0 %v2343, 48
    %v2766 = vpop.permute.xlu0 %2765
    %2767 = vrot.lane.b32.xlu0 %v2348, 48
    %v2768 = vpop.permute.xlu0 %2767
    %2769 = vrot.lane.b32.xlu0 %v2351, 48
    %v2770 = vpop.permute.xlu0 %2769
    %2771 = vrot.lane.b32.xlu0 %v2356, 48
    %v2772 = vpop.permute.xlu0 %2771
    %2773 = vrot.lane.b32.xlu0 %v2359, 48
    %v2774 = vpop.permute.xlu0 %2773
    %2791 = vrot.lane.b32.xlu0 %v2397, 64
    %v2792 = vpop.permute.xlu0 %2791
    %2793 = vrot.lane.b32.xlu0 %v2400, 64
    %v2794 = vpop.permute.xlu0 %2793
    %2795 = vrot.lane.b32.xlu0 %v2405, 64
    %v2796 = vpop.permute.xlu0 %2795
    %2797 = vrot.lane.b32.xlu0 %v2408, 64
    %v2798 = vpop.permute.xlu0 %2797
    %2799 = vrot.lane.b32.xlu0 %v2413, 64
    %v2800 = vpop.permute.xlu0 %2799
    %2801 = vrot.lane.b32.xlu0 %v2416, 64
    %v2802 = vpop.permute.xlu0 %2801
    %2803 = vrot.lane.b32.xlu0 %v2421, 64
    %v2804 = vpop.permute.xlu0 %2803
    %2805 = vrot.lane.b32.xlu0 %v2424, 64
    %v2806 = vpop.permute.xlu0 %2805
    %2823 = vrot.lane.b32.xlu0 %v2462, 80
    %v2824 = vpop.permute.xlu0 %2823
    %2825 = vrot.lane.b32.xlu0 %v2465, 80
    %v2826 = vpop.permute.xlu0 %2825
    %2827 = vrot.lane.b32.xlu0 %v2470, 80
    %v2828 = vpop.permute.xlu0 %2827
    %2829 = vrot.lane.b32.xlu0 %v2473, 80
    %v2830 = vpop.permute.xlu0 %2829
    %2831 = vrot.lane.b32.xlu0 %v2478, 80
    %v2832 = vpop.permute.xlu0 %2831
    %2833 = vrot.lane.b32.xlu0 %v2481, 80
    %v2834 = vpop.permute.xlu0 %2833
    %2835 = vrot.lane.b32.xlu0 %v2486, 80
    %v2836 = vpop.permute.xlu0 %2835
    %2837 = vrot.lane.b32.xlu0 %v2489, 80
    %v2838 = vpop.permute.xlu0 %2837
    %2855 = vrot.lane.b32.xlu0 %v2527, 96
    %v2856 = vpop.permute.xlu0 %2855
    %2857 = vrot.lane.b32.xlu0 %v2530, 96
    %v2858 = vpop.permute.xlu0 %2857
    %2859 = vrot.lane.b32.xlu0 %v2535, 96
    %v2860 = vpop.permute.xlu0 %2859
    %2861 = vrot.lane.b32.xlu0 %v2538, 96
    %v2862 = vpop.permute.xlu0 %2861
    %2863 = vrot.lane.b32.xlu0 %v2543, 96
    %v2864 = vpop.permute.xlu0 %2863
    %2865 = vrot.lane.b32.xlu0 %v2546, 96
    %v2866 = vpop.permute.xlu0 %2865
    %2867 = vrot.lane.b32.xlu0 %v2551, 96
    %v2868 = vpop.permute.xlu0 %2867
    %2869 = vrot.lane.b32.xlu0 %v2554, 96
    %v2870 = vpop.permute.xlu0 %2869
    %2887 = vrot.lane.b32.xlu0 %v2592, 112
    %v2888 = vpop.permute.xlu0 %2887
    %2889 = vrot.lane.b32.xlu0 %v2595, 112
    %v2890 = vpop.permute.xlu0 %2889
    %2891 = vrot.lane.b32.xlu0 %v2600, 112
    %v2892 = vpop.permute.xlu0 %2891
    %2893 = vrot.lane.b32.xlu0 %v2603, 112
    %v2894 = vpop.permute.xlu0 %2893
    %2895 = vrot.lane.b32.xlu0 %v2608, 112
    %v2896 = vpop.permute.xlu0 %2895
    %2897 = vrot.lane.b32.xlu0 %v2611, 112
    %v2898 = vpop.permute.xlu0 %2897
    %2899 = vrot.lane.b32.xlu0 %v2616, 112
    %v2900 = vpop.permute.xlu0 %2899
    %2901 = vrot.lane.b32.xlu0 %v2619, 112
    %v2902 = vpop.permute.xlu0 %2901
    %v2911 = vsel %vm2039, %v2137, %v2696
    %v2912 = vsel %vm2039, %v2140, %v2698
    %v2913 = vsel %vm2039, %v2145, %v2700
    %v2914 = vsel %vm2039, %v2148, %v2702
    %v2915 = vsel %vm2039, %v2153, %v2704
    %v2916 = vsel %vm2039, %v2156, %v2706
    %v2917 = vsel %vm2039, %v2161, %v2708
    %v2918 = vsel %vm2039, %v2164, %v2710
    %v2919 = vsel %vm2048, %v2911, %v2728
    %v2920 = vsel %vm2048, %v2912, %v2730
    %v2921 = vsel %vm2048, %v2913, %v2732
    %v2922 = vsel %vm2048, %v2914, %v2734
    %v2923 = vsel %vm2048, %v2915, %v2736
    %v2924 = vsel %vm2048, %v2916, %v2738
    %v2925 = vsel %vm2048, %v2917, %v2740
    %v2926 = vsel %vm2048, %v2918, %v2742
    %v2927 = vsel %vm2057, %v2919, %v2760
    %v2928 = vsel %vm2057, %v2920, %v2762
    %v2929 = vsel %vm2057, %v2921, %v2764
    %v2930 = vsel %vm2057, %v2922, %v2766
    %v2931 = vsel %vm2057, %v2923, %v2768
    %v2932 = vsel %vm2057, %v2924, %v2770
    %v2933 = vsel %vm2057, %v2925, %v2772
    %v2934 = vsel %vm2057, %v2926, %v2774
    %v2935 = vsel %vm2066, %v2927, %v2792
    %v2936 = vsel %vm2066, %v2928, %v2794
    %v2937 = vsel %vm2066, %v2929, %v2796
    %v2938 = vsel %vm2066, %v2930, %v2798
    %v2939 = vsel %vm2066, %v2931, %v2800
    %v2940 = vsel %vm2066, %v2932, %v2802
    %v2941 = vsel %vm2066, %v2933, %v2804
    %v2942 = vsel %vm2066, %v2934, %v2806
    %v2943 = vsel %vm2075, %v2935, %v2824
    %v2944 = vsel %vm2075, %v2936, %v2826
    %v2945 = vsel %vm2075, %v2937, %v2828
    %v2946 = vsel %vm2075, %v2938, %v2830
    %v2947 = vsel %vm2075, %v2939, %v2832
    %v2948 = vsel %vm2075, %v2940, %v2834
    %v2949 = vsel %vm2075, %v2941, %v2836
    %v2950 = vsel %vm2075, %v2942, %v2838
    %v2951 = vsel %vm2084, %v2943, %v2856
    %v2952 = vsel %vm2084, %v2944, %v2858
    %v2953 = vsel %vm2084, %v2945, %v2860
    %v2954 = vsel %vm2084, %v2946, %v2862
    %v2955 = vsel %vm2084, %v2947, %v2864
    %v2956 = vsel %vm2084, %v2948, %v2866
    %v2957 = vsel %vm2084, %v2949, %v2868
    %v2958 = vsel %vm2084, %v2950, %v2870
    %v2959 = vsel %vm2093, %v2951, %v2888
    %v2960 = vsel %vm2093, %v2952, %v2890
    %v2961 = vsel %vm2093, %v2953, %v2892
    %v2962 = vsel %vm2093, %v2954, %v2894
    %v2963 = vsel %vm2093, %v2955, %v2896
    %v2964 = vsel %vm2093, %v2956, %v2898
    %v2965 = vsel %vm2093, %v2957, %v2900
    %v2966 = vsel %vm2093, %v2958, %v2902
    %v2967 = vpack.c.bf16 %v2095, %v2094
    %v2968 = vpack.c.bf16 %v1788, %v1785
    %v2969 = vpack.c.bf16 %v2097, %v2096
    %v2970 = vpack.c.bf16 %v1796, %v1793
    %v2971 = vpack.c.bf16 %v2099, %v2098
    %v2972 = vpack.c.bf16 %v1804, %v1801
    %v2973 = vpack.c.bf16 %v2101, %v2100
    %v2974 = vpack.c.bf16 %v1812, %v1809
    %v2975 = vpack.c.bf16 %v2960, %v2959
    %v2976 = vpack.c.bf16 %v2660, %v2657
    %v2977 = vpack.c.bf16 %v2962, %v2961
    %v2978 = vpack.c.bf16 %v2668, %v2665
    %v2979 = vpack.c.bf16 %v2964, %v2963
    %v2980 = vpack.c.bf16 %v2676, %v2673
    %v2981 = vpack.c.bf16 %v2966, %v2965
    %v2982 = vpack.c.bf16 %v2684, %v2681
    %v2983 = vld [vmem:[%s4] sm:$0xf]
    %v2984 = vld [vmem:[%s4 + $0x4] sm:$0xf]
    %v2985 = vld [vmem:[%s4 + $0x8] sm:$0xf]
    %v2986 = vld [vmem:[%s4 + $0xc] sm:$0xf]
    %v2987 = vld [vmem:[%s4 + $0x10] sm:$0xf]
    %v2988 = vld [vmem:[%s4 + $0x14] sm:$0xf]
    %v2989 = vld [vmem:[%s4 + $0x18] sm:$0xf]
    %v2990 = vld [vmem:[%s4 + $0x1c] sm:$0xf]
    %v2991 = vld [vmem:[%s4 + $0x20] sm:$0xf]
    %v2992 = vld [vmem:[%s4 + $0x24] sm:$0xf]
    %v2993 = vld [vmem:[%s4 + $0x28] sm:$0xf]
    %v2994 = vld [vmem:[%s4 + $0x2c] sm:$0xf]
    %v2995 = vld [vmem:[%s4 + $0x30] sm:$0xf]
    %v2996 = vld [vmem:[%s4 + $0x34] sm:$0xf]
    %v2997 = vld [vmem:[%s4 + $0x38] sm:$0xf]
    %v2998 = vld [vmem:[%s4 + $0x3c] sm:$0xf]
    %v2999 = vld [vmem:[%s4 + $0x40] sm:$0xf]
    %v3000 = vld [vmem:[%s4 + $0x44] sm:$0xf]
    %v3001 = vld [vmem:[%s5] sm:$0x1]
    %v3003 = vlaneseq
    %v3004 = vshrl.u32 %v3003, 7
    %v3005 = vsub.s32 0, %v3004
    %v3006 = vrot.slane %v3001, %v3005
    %v3026 = vunpack.c.l.b16 %v2983
    %v3027 = vunpack.c.l.b16 %v2984
    %v3028 = vunpack.c.l.b16 %v2985
    %v3029 = vunpack.c.l.b16 %v2986
    %v3030 = vunpack.c.l.b16 %v2987
    %v3031 = vunpack.c.l.b16 %v2988
    %v3032 = vunpack.c.l.b16 %v2989
    %v3033 = vunpack.c.l.b16 %v2990
    %v3034 = vunpack.c.l.b16 %v2991
    %v3035 = vunpack.c.l.b16 %v2992
    %v3036 = vunpack.c.l.b16 %v2993
    %v3037 = vunpack.c.l.b16 %v2994
    %v3038 = vunpack.c.l.b16 %v2995
    %v3039 = vunpack.c.l.b16 %v2996
    %v3040 = vunpack.c.l.b16 %v2997
    %v3041 = vunpack.c.l.b16 %v2998
    %v3042 = vunpack.c.l.b16 %v2999
    %v3043 = vunpack.c.l.b16 %v3000
    %v3044 = vpack.c.b16 %v3027, %v3026
    %v3045 = vpack.c.b16 %v3029, %v3028
    %v3046 = vpack.c.b16 %v3031, %v3030
    %v3047 = vpack.c.b16 %v3033, %v3032
    %v3048 = vpack.c.b16 %v3035, %v3034
    %v3049 = vpack.c.b16 %v3037, %v3036
    %v3050 = vpack.c.b16 %v3039, %v3038
    %v3051 = vpack.c.b16 %v3041, %v3040
    %v3052 = vpack.c.b16 %v3043, %v3042
    %v3063 = vsel %vm2039, %v2968, 0
    %v3066 = vsel %vm2039, %v2970, 0
    %v3069 = vsel %vm2039, %v2972, 0
    %v3072 = vsel %vm2039, %v2974, 0
    %v3075 = vsel %vm2039, %v2976, 0
    %v3078 = vsel %vm2039, %v2978, 0
    %v3081 = vsel %vm2039, %v2980, 0
    %v3084 = vsel %vm2039, %v2982, 0
    %3086 = vmatprep.subr.bf16.mxu0 0
    %3087 = vmatpush1.bf16.msra.mxu0 %v3044
    %3088 = vmatprep.subr.bf16.mxu0 0
    %3089 = vmatpush1.bf16.msra.mxu0 %v3045
    %3090 = vmatprep.subr.bf16.mxu0 0
    %3091 = vmatpush1.bf16.msra.mxu0 %v3046
    %3092 = vmatprep.subr.bf16.mxu0 0
    %3093 = vmatpush1.bf16.msra.mxu0 %v3047
    %3094 = vmatprep.subr.bf16.mxu0 0
    %3095 = vmatpush1.bf16.msra.mxu0 %v3048
    %3096 = vmatprep.subr.bf16.mxu0 0
    %3097 = vmatpush1.bf16.msra.mxu0 %v3049
    %3098 = vmatprep.subr.bf16.mxu0 0
    %3099 = vmatpush1.bf16.msra.mxu0 %v3050
    %3100 = vmatprep.subr.bf16.mxu0 0
    %3101 = vmatpush1.bf16.msra.mxu0 %v3051
    %3102 = vmatprep.subr.bf16.mxu0 0
    %3103 = vmatpush1.bf16.msra.mxu0 %v3052
    %3104 = vmatprep.subr.bf16.mxu0 0
    %3105 = vmatpush1.bf16.msra.mxu0 0
    %3106 = vmatprep.subr.bf16.mxu0 0
    %3107 = vmatpush1.bf16.msra.mxu0 0
    %3108 = vmatprep.subr.bf16.mxu0 0
    %3109 = vmatpush1.bf16.msra.mxu0 0
    %3110 = vmatprep.subr.bf16.mxu0 0
    %3111 = vmatpush1.bf16.msra.mxu0 0
    %3112 = vmatprep.subr.bf16.mxu0 0
    %3113 = vmatpush1.bf16.msra.mxu0 0
    %3114 = vmatprep.subr.bf16.mxu0 0
    %3115 = vmatpush1.bf16.msra.mxu0 0
    %3116 = vmatprep.subr.bf16.mxu0 0
    %3117 = vmatpush1.bf16.msra.mxu0 0
    %3118 = vmatprep.mubr.bf16.mxu0 %v3063
    %3119 = vmatmul.mubr.bf16.gmra.mrb[0].mxu0 %v2967
    %v3120 = vpop.f32.mrb[0].mxu0
    %v3121 = vadd.f32 %v3006, %v3120
    %v3122 = vpop.f32.mrb[0].mxu0
    %v3123 = vpop.f32.mrb[0].mxu0
    %v3124 = vadd.f32 %v3006, %v3123
    %v3125 = vpop.f32.mrb[0].mxu0
    %3126 = vmatprep.mubr.bf16.mxu0 %v3066
    %3127 = vmatmul.mubr.bf16.gmra.mrb[0].mxu0 %v2969
    %v3128 = vpop.f32.mrb[0].mxu0
    %v3129 = vadd.f32 %v3006, %v3128
    %v3130 = vpop.f32.mrb[0].mxu0
    %v3131 = vpop.f32.mrb[0].mxu0
    %v3132 = vadd.f32 %v3006, %v3131
    %v3133 = vpop.f32.mrb[0].mxu0
    %3134 = vmatprep.mubr.bf16.mxu0 %v3069
    %3135 = vmatmul.mubr.bf16.gmra.mrb[0].mxu0 %v2971
    %v3136 = vpop.f32.mrb[0].mxu0
    %v3137 = vadd.f32 %v3006, %v3136
    %v3138 = vpop.f32.mrb[0].mxu0
    %v3139 = vpop.f32.mrb[0].mxu0
    %v3140 = vadd.f32 %v3006, %v3139
    %v3141 = vpop.f32.mrb[0].mxu0
    %3142 = vmatprep.mubr.bf16.mxu0 %v3072
    %3143 = vmatmul.mubr.bf16.gmra.mrb[0].mxu0 %v2973
    %v3144 = vpop.f32.mrb[0].mxu0
    %v3145 = vadd.f32 %v3006, %v3144
    %v3146 = vpop.f32.mrb[0].mxu0
    %v3147 = vpop.f32.mrb[0].mxu0
    %v3148 = vadd.f32 %v3006, %v3147
    %v3149 = vpop.f32.mrb[0].mxu0
    %3150 = vmatprep.mubr.bf16.mxu0 %v3075
    %3151 = vmatmul.mubr.bf16.gmra.mrb[0].mxu0 %v2975
    %v3152 = vpop.f32.mrb[0].mxu0
    %v3153 = vadd.f32 %v3006, %v3152
    %v3154 = vpop.f32.mrb[0].mxu0
    %v3155 = vpop.f32.mrb[0].mxu0
    %v3156 = vadd.f32 %v3006, %v3155
    %v3157 = vpop.f32.mrb[0].mxu0
    %3158 = vmatprep.mubr.bf16.mxu0 %v3078
    %3159 = vmatmul.mubr.bf16.gmra.mrb[0].mxu0 %v2977
    %v3160 = vpop.f32.mrb[0].mxu0
    %v3161 = vadd.f32 %v3006, %v3160
    %v3162 = vpop.f32.mrb[0].mxu0
    %v3163 = vpop.f32.mrb[0].mxu0
    %v3164 = vadd.f32 %v3006, %v3163
    %v3165 = vpop.f32.mrb[0].mxu0
    %3166 = vmatprep.mubr.bf16.mxu0 %v3081
    %3167 = vmatmul.mubr.bf16.gmra.mrb[0].mxu0 %v2979
    %v3168 = vpop.f32.mrb[0].mxu0
    %v3169 = vadd.f32 %v3006, %v3168
    %v3170 = vpop.f32.mrb[0].mxu0
    %v3171 = vpop.f32.mrb[0].mxu0
    %v3172 = vadd.f32 %v3006, %v3171
    %v3173 = vpop.f32.mrb[0].mxu0
    %3174 = vmatprep.mubr.bf16.mxu0 %v3084
    %3175 = vmatmul.mubr.bf16.gmra.mrb[0].mxu0 %v2981
    %v3176 = vpop.f32.mrb[0].mxu0
    %v3177 = vadd.f32 %v3006, %v3176
    %v3178 = vpop.f32.mrb[0].mxu0
    %v3179 = vpop.f32.mrb[0].mxu0
    %v3180 = vadd.f32 %v3006, %v3179
    %v3181 = vpop.f32.mrb[0].mxu0
    %3182 = vdwg.mxu0
    %v3183 = vmax.f32 %v3121, 0.0
    %v3184 = vmax.f32 %v3124, 0.0
    %v3185 = vmax.f32 %v3129, 0.0
    %v3186 = vmax.f32 %v3132, 0.0
    %v3187 = vmax.f32 %v3137, 0.0
    %v3188 = vmax.f32 %v3140, 0.0
    %v3189 = vmax.f32 %v3145, 0.0
    %v3190 = vmax.f32 %v3148, 0.0
    %v3191 = vmax.f32 %v3153, 0.0
    %v3192 = vmax.f32 %v3156, 0.0
    %v3193 = vmax.f32 %v3161, 0.0
    %v3194 = vmax.f32 %v3164, 0.0
    %v3195 = vmax.f32 %v3169, 0.0
    %v3196 = vmax.f32 %v3172, 0.0
    %v3197 = vmax.f32 %v3177, 0.0
    %v3198 = vmax.f32 %v3180, 0.0
    %v3199 = vpack.c.bf16 %v3184, %v3183
    %v3200 = vpack.c.bf16 %v3186, %v3185
    %v3201 = vpack.c.bf16 %v3188, %v3187
    %v3202 = vpack.c.bf16 %v3190, %v3189
    %v3203 = vpack.c.bf16 %v3192, %v3191
    %v3204 = vpack.c.bf16 %v3194, %v3193
    %v3205 = vpack.c.bf16 %v3196, %v3195
    %v3206 = vpack.c.bf16 %v3198, %v3197
    %v3207 = vld [vmem:[%s6] sm:$0xf]
    %v3208 = vld [vmem:[%s6 + $0x4] sm:$0xf]
    %v3211 = vunpack.c.l.b16 %v3207
    %v3212 = vunpack.c.l.b16 %v3208
    %v3213 = vpack.c.b16 %v3212, %v3211
    %v3215 = vsel %vm2066, %v3213, 0
    %3217 = vmatprep.subr.bf16.mxu0 0
    %3218 = vmatpush1.bf16.msra.mxu0 %v3199
    %3219 = vmatprep.subr.bf16.mxu0 0
    %3220 = vmatpush1.bf16.msra.mxu0 %v3200
    %3221 = vmatprep.subr.bf16.mxu0 0
    %3222 = vmatpush1.bf16.msra.mxu0 %v3201
    %3223 = vmatprep.subr.bf16.mxu0 0
    %3224 = vmatpush1.bf16.msra.mxu0 %v3202
    %3225 = vmatprep.subr.bf16.mxu0 0
    %3226 = vmatpush1.bf16.msra.mxu0 0
    %3227 = vmatprep.subr.bf16.mxu0 0
    %3228 = vmatpush1.bf16.msra.mxu0 0
    %3229 = vmatprep.subr.bf16.mxu0 0
    %3230 = vmatpush1.bf16.msra.mxu0 0
    %3231 = vmatprep.subr.bf16.mxu0 0
    %3232 = vmatpush1.bf16.msra.mxu0 0
    %3233 = vmatprep.subr.bf16.mxu0 0
    %3234 = vmatpush1.bf16.msra.mxu0 0
    %3235 = vmatprep.subr.bf16.mxu0 0
    %3236 = vmatpush1.bf16.msra.mxu0 0
    %3237 = vmatprep.subr.bf16.mxu0 0
    %3238 = vmatpush1.bf16.msra.mxu0 0
    %3239 = vmatprep.subr.bf16.mxu0 0
    %3240 = vmatpush1.bf16.msra.mxu0 0
    %3241 = vmatprep.subr.bf16.mxu0 0
    %3242 = vmatpush1.bf16.msra.mxu0 0
    %3243 = vmatprep.subr.bf16.mxu0 0
    %3244 = vmatpush1.bf16.msra.mxu0 0
    %3245 = vmatprep.subr.bf16.mxu0 0
    %3246 = vmatpush1.bf16.msra.mxu0 0
    %3247 = vmatprep.subr.bf16.mxu0 0
    %3248 = vmatpush1.bf16.msra.mxu0 0
    %3249 = vmatprep.mubr.bf16.mxu0 0
    %3250 = vmatmul.mubr.bf16.gmra.mrb[0].mxu0 %v3215
    %v3251 = vpop.f32.mrb[0].mxu0
    %v3252 = vadd.f32 0.0, %v3251
    %v3253 = vpop.f32.mrb[0].mxu0
    %v3254 = vpop.f32.mrb[0].mxu0
    %v3255 = vadd.f32 0.0, %v3254
    %v3256 = vpop.f32.mrb[0].mxu0
    %3257 = vdwg.mxu0
    %v3258 = vld [vmem:[%s7] sm:$0x1]
    %v3260 = vlaneseq
    %v3261 = vshrl.u32 %v3260, 7
    %v3262 = vsub.s32 0, %v3261
    %v3263 = vrot.slane %v3258, %v3262
    %v3265 = vmul.f32 %v3252, %v3263
    %v3266 = vmul.f32 %v3255, %v3263
    %s3267 = scalar_lea.vmem %s6, 8
    %v3268 = vld [vmem:[%s3267] sm:$0xf]
    %v3269 = vld [vmem:[%s3267 + $0x4] sm:$0xf]
    %v3272 = vunpack.c.l.b16 %v3268
    %v3273 = vunpack.c.l.b16 %v3269
    %v3274 = vpack.c.b16 %v3273, %v3272
    %v3276 = vsel %vm2066, %v3274, 0
    %3278 = vmatprep.subr.bf16.mxu0 0
    %3279 = vmatpush1.bf16.msra.mxu0 %v3199
    %3280 = vmatprep.subr.bf16.mxu0 0
    %3281 = vmatpush1.bf16.msra.mxu0 %v3200
    %3282 = vmatprep.subr.bf16.mxu0 0
    %3283 = vmatpush1.bf16.msra.mxu0 %v3201
    %3284 = vmatprep.subr.bf16.mxu0 0
    %3285 = vmatpush1.bf16.msra.mxu0 %v3202
    %3286 = vmatprep.subr.bf16.mxu0 0
    %3287 = vmatpush1.bf16.msra.mxu0 0
    %3288 = vmatprep.subr.bf16.mxu0 0
    %3289 = vmatpush1.bf16.msra.mxu0 0
    %3290 = vmatprep.subr.bf16.mxu0 0
    %3291 = vmatpush1.bf16.msra.mxu0 0
    %3292 = vmatprep.subr.bf16.mxu0 0
    %3293 = vmatpush1.bf16.msra.mxu0 0
    %3294 = vmatprep.subr.bf16.mxu0 0
    %3295 = vmatpush1.bf16.msra.mxu0 0
    %3296 = vmatprep.subr.bf16.mxu0 0
    %3297 = vmatpush1.bf16.msra.mxu0 0
    %3298 = vmatprep.subr.bf16.mxu0 0
    %3299 = vmatpush1.bf16.msra.mxu0 0
    %3300 = vmatprep.subr.bf16.mxu0 0
    %3301 = vmatpush1.bf16.msra.mxu0 0
    %3302 = vmatprep.subr.bf16.mxu0 0
    %3303 = vmatpush1.bf16.msra.mxu0 0
    %3304 = vmatprep.subr.bf16.mxu0 0
    %3305 = vmatpush1.bf16.msra.mxu0 0
    %3306 = vmatprep.subr.bf16.mxu0 0
    %3307 = vmatpush1.bf16.msra.mxu0 0
    %3308 = vmatprep.subr.bf16.mxu0 0
    %3309 = vmatpush1.bf16.msra.mxu0 0
    %3310 = vmatprep.mubr.bf16.mxu0 0
    %3311 = vmatmul.mubr.bf16.gmra.mrb[0].mxu0 %v3276
    %v3312 = vpop.f32.mrb[0].mxu0
    %v3313 = vadd.f32 0.0, %v3312
    %v3314 = vpop.f32.mrb[0].mxu0
    %v3315 = vpop.f32.mrb[0].mxu0
    %v3316 = vadd.f32 0.0, %v3315
    %v3317 = vpop.f32.mrb[0].mxu0
    %3318 = vdwg.mxu0
    %s3319 = scalar_lea.vmem %s7, 1
    %v3320 = vld [vmem:[%s3319] sm:$0x1]
    %v3322 = vlaneseq
    %v3323 = vshrl.u32 %v3322, 7
    %v3324 = vsub.s32 0, %v3323
    %v3325 = vrot.slane %v3320, %v3324
    %v3327 = vmul.f32 %v3313, %v3325
    %v3328 = vmul.f32 %v3316, %v3325
    %v3329 = vadd.f32 %v3265, %v3327
    %v3330 = vadd.f32 %v3266, %v3328
    %s3331 = scalar_lea.vmem %s6, 16
    %v3332 = vld [vmem:[%s3331] sm:$0xf]
    %v3333 = vld [vmem:[%s3331 + $0x4] sm:$0xf]
    %v3336 = vunpack.c.l.b16 %v3332
    %v3337 = vunpack.c.l.b16 %v3333
    %v3338 = vpack.c.b16 %v3337, %v3336
    %v3340 = vsel %vm2066, %v3338, 0
    %3342 = vmatprep.subr.bf16.mxu0 0
    %3343 = vmatpush1.bf16.msra.mxu0 %v3199
    %3344 = vmatprep.subr.bf16.mxu0 0
    %3345 = vmatpush1.bf16.msra.mxu0 %v3200
    %3346 = vmatprep.subr.bf16.mxu0 0
    %3347 = vmatpush1.bf16.msra.mxu0 %v3201
    %3348 = vmatprep.subr.bf16.mxu0 0
    %3349 = vmatpush1.bf16.msra.mxu0 %v3202
    %3350 = vmatprep.subr.bf16.mxu0 0
    %3351 = vmatpush1.bf16.msra.mxu0 0
    %3352 = vmatprep.subr.bf16.mxu0 0
    %3353 = vmatpush1.bf16.msra.mxu0 0
    %3354 = vmatprep.subr.bf16.mxu0 0
    %3355 = vmatpush1.bf16.msra.mxu0 0
    %3356 = vmatprep.subr.bf16.mxu0 0
    %3357 = vmatpush1.bf16.msra.mxu0 0
    %3358 = vmatprep.subr.bf16.mxu0 0
    %3359 = vmatpush1.bf16.msra.mxu0 0
    %3360 = vmatprep.subr.bf16.mxu0 0
    %3361 = vmatpush1.bf16.msra.mxu0 0
    %3362 = vmatprep.subr.bf16.mxu0 0
    %3363 = vmatpush1.bf16.msra.mxu0 0
    %3364 = vmatprep.subr.bf16.mxu0 0
    %3365 = vmatpush1.bf16.msra.mxu0 0
    %3366 = vmatprep.subr.bf16.mxu0 0
    %3367 = vmatpush1.bf16.msra.mxu0 0
    %3368 = vmatprep.subr.bf16.mxu0 0
    %3369 = vmatpush1.bf16.msra.mxu0 0
    %3370 = vmatprep.subr.bf16.mxu0 0
    %3371 = vmatpush1.bf16.msra.mxu0 0
    %3372 = vmatprep.subr.bf16.mxu0 0
    %3373 = vmatpush1.bf16.msra.mxu0 0
    %3374 = vmatprep.mubr.bf16.mxu0 0
    %3375 = vmatmul.mubr.bf16.gmra.mrb[0].mxu0 %v3340
    %v3376 = vpop.f32.mrb[0].mxu0
    %v3377 = vadd.f32 0.0, %v3376
    %v3378 = vpop.f32.mrb[0].mxu0
    %v3379 = vpop.f32.mrb[0].mxu0
    %v3380 = vadd.f32 0.0, %v3379
    %v3381 = vpop.f32.mrb[0].mxu0
    %3382 = vdwg.mxu0
    %s3383 = scalar_lea.vmem %s7, 2
    %v3384 = vld [vmem:[%s3383] sm:$0x1]
    %v3386 = vlaneseq
    %v3387 = vshrl.u32 %v3386, 7
    %v3388 = vsub.s32 0, %v3387
    %v3389 = vrot.slane %v3384, %v3388
    %v3391 = vmul.f32 %v3377, %v3389
    %v3392 = vmul.f32 %v3380, %v3389
    %v3393 = vadd.f32 %v3329, %v3391
    %v3394 = vadd.f32 %v3330, %v3392
    %s3395 = scalar_lea.vmem %s6, 24
    %v3396 = vld [vmem:[%s3395] sm:$0xf]
    %v3397 = vld [vmem:[%s3395 + $0x4] sm:$0xf]
    %v3400 = vunpack.c.l.b16 %v3396
    %v3401 = vunpack.c.l.b16 %v3397
    %v3402 = vpack.c.b16 %v3401, %v3400
    %v3404 = vsel %vm2066, %v3402, 0
    %3406 = vmatprep.subr.bf16.mxu0 0
    %3407 = vmatpush1.bf16.msra.mxu0 %v3199
    %3408 = vmatprep.subr.bf16.mxu0 0
    %3409 = vmatpush1.bf16.msra.mxu0 %v3200
    %3410 = vmatprep.subr.bf16.mxu0 0
    %3411 = vmatpush1.bf16.msra.mxu0 %v3201
    %3412 = vmatprep.subr.bf16.mxu0 0
    %3413 = vmatpush1.bf16.msra.mxu0 %v3202
    %3414 = vmatprep.subr.bf16.mxu0 0
    %3415 = vmatpush1.bf16.msra.mxu0 0
    %3416 = vmatprep.subr.bf16.mxu0 0
    %3417 = vmatpush1.bf16.msra.mxu0 0
    %3418 = vmatprep.subr.bf16.mxu0 0
    %3419 = vmatpush1.bf16.msra.mxu0 0
    %3420 = vmatprep.subr.bf16.mxu0 0
    %3421 = vmatpush1.bf16.msra.mxu0 0
    %3422 = vmatprep.subr.bf16.mxu0 0
    %3423 = vmatpush1.bf16.msra.mxu0 0
    %3424 = vmatprep.subr.bf16.mxu0 0
    %3425 = vmatpush1.bf16.msra.mxu0 0
    %3426 = vmatprep.subr.bf16.mxu0 0
    %3427 = vmatpush1.bf16.msra.mxu0 0
    %3428 = vmatprep.subr.bf16.mxu0 0
    %3429 = vmatpush1.bf16.msra.mxu0 0
    %3430 = vmatprep.subr.bf16.mxu0 0
    %3431 = vmatpush1.bf16.msra.mxu0 0
    %3432 = vmatprep.subr.bf16.mxu0 0
    %3433 = vmatpush1.bf16.msra.mxu0 0
    %3434 = vmatprep.subr.bf16.mxu0 0
    %3435 = vmatpush1.bf16.msra.mxu0 0
    %3436 = vmatprep.subr.bf16.mxu0 0
    %3437 = vmatpush1.bf16.msra.mxu0 0
    %3438 = vmatprep.mubr.bf16.mxu0 0
    %3439 = vmatmul.mubr.bf16.gmra.mrb[0].mxu0 %v3404
    %v3440 = vpop.f32.mrb[0].mxu0
    %v3441 = vadd.f32 0.0, %v3440
    %v3442 = vpop.f32.mrb[0].mxu0
    %v3443 = vpop.f32.mrb[0].mxu0
    %v3444 = vadd.f32 0.0, %v3443
    %v3445 = vpop.f32.mrb[0].mxu0
    %3446 = vdwg.mxu0
    %s3447 = scalar_lea.vmem %s7, 3
    %v3448 = vld [vmem:[%s3447] sm:$0x1]
    %v3450 = vlaneseq
    %v3451 = vshrl.u32 %v3450, 7
    %v3452 = vsub.s32 0, %v3451
    %v3453 = vrot.slane %v3448, %v3452
    %v3455 = vmul.f32 %v3441, %v3453
    %v3456 = vmul.f32 %v3444, %v3453
    %v3457 = vadd.f32 %v3393, %v3455
    %v3458 = vadd.f32 %v3394, %v3456
    %s3459 = scalar_lea.vmem %s6, 32
    %v3460 = vld [vmem:[%s3459] sm:$0xf]
    %v3461 = vld [vmem:[%s3459 + $0x4] sm:$0xf]
    %v3464 = vunpack.c.l.b16 %v3460
    %v3465 = vunpack.c.l.b16 %v3461
    %v3466 = vpack.c.b16 %v3465, %v3464
    %v3468 = vsel %vm2066, %v3466, 0
    %3470 = vmatprep.subr.bf16.mxu0 0
    %3471 = vmatpush1.bf16.msra.mxu0 %v3199
    %3472 = vmatprep.subr.bf16.mxu0 0
    %3473 = vmatpush1.bf16.msra.mxu0 %v3200
    %3474 = vmatprep.subr.bf16.mxu0 0
    %3475 = vmatpush1.bf16.msra.mxu0 %v3201
    %3476 = vmatprep.subr.bf16.mxu0 0
    %3477 = vmatpush1.bf16.msra.mxu0 %v3202
    %3478 = vmatprep.subr.bf16.mxu0 0
    %3479 = vmatpush1.bf16.msra.mxu0 0
    %3480 = vmatprep.subr.bf16.mxu0 0
    %3481 = vmatpush1.bf16.msra.mxu0 0
    %3482 = vmatprep.subr.bf16.mxu0 0
    %3483 = vmatpush1.bf16.msra.mxu0 0
    %3484 = vmatprep.subr.bf16.mxu0 0
    %3485 = vmatpush1.bf16.msra.mxu0 0
    %3486 = vmatprep.subr.bf16.mxu0 0
    %3487 = vmatpush1.bf16.msra.mxu0 0
    %3488 = vmatprep.subr.bf16.mxu0 0
    %3489 = vmatpush1.bf16.msra.mxu0 0
    %3490 = vmatprep.subr.bf16.mxu0 0
    %3491 = vmatpush1.bf16.msra.mxu0 0
    %3492 = vmatprep.subr.bf16.mxu0 0
    %3493 = vmatpush1.bf16.msra.mxu0 0
    %3494 = vmatprep.subr.bf16.mxu0 0
    %3495 = vmatpush1.bf16.msra.mxu0 0
    %3496 = vmatprep.subr.bf16.mxu0 0
    %3497 = vmatpush1.bf16.msra.mxu0 0
    %3498 = vmatprep.subr.bf16.mxu0 0
    %3499 = vmatpush1.bf16.msra.mxu0 0
    %3500 = vmatprep.subr.bf16.mxu0 0
    %3501 = vmatpush1.bf16.msra.mxu0 0
    %3502 = vmatprep.mubr.bf16.mxu0 0
    %3503 = vmatmul.mubr.bf16.gmra.mrb[0].mxu0 %v3468
    %v3504 = vpop.f32.mrb[0].mxu0
    %v3505 = vadd.f32 0.0, %v3504
    %v3506 = vpop.f32.mrb[0].mxu0
    %v3507 = vpop.f32.mrb[0].mxu0
    %v3508 = vadd.f32 0.0, %v3507
    %v3509 = vpop.f32.mrb[0].mxu0
    %3510 = vdwg.mxu0
    %s3511 = scalar_lea.vmem %s7, 4
    %v3512 = vld [vmem:[%s3511] sm:$0x1]
    %v3514 = vlaneseq
    %v3515 = vshrl.u32 %v3514, 7
    %v3516 = vsub.s32 0, %v3515
    %v3517 = vrot.slane %v3512, %v3516
    %v3519 = vmul.f32 %v3505, %v3517
    %v3520 = vmul.f32 %v3508, %v3517
    %v3521 = vadd.f32 %v3457, %v3519
    %v3522 = vadd.f32 %v3458, %v3520
    %s3523 = scalar_lea.vmem %s6, 40
    %v3524 = vld [vmem:[%s3523] sm:$0xf]
    %v3525 = vld [vmem:[%s3523 + $0x4] sm:$0xf]
    %v3528 = vunpack.c.l.b16 %v3524
    %v3529 = vunpack.c.l.b16 %v3525
    %v3530 = vpack.c.b16 %v3529, %v3528
    %v3532 = vsel %vm2066, %v3530, 0
    %3534 = vmatprep.subr.bf16.mxu0 0
    %3535 = vmatpush1.bf16.msra.mxu0 %v3199
    %3536 = vmatprep.subr.bf16.mxu0 0
    %3537 = vmatpush1.bf16.msra.mxu0 %v3200
    %3538 = vmatprep.subr.bf16.mxu0 0
    %3539 = vmatpush1.bf16.msra.mxu0 %v3201
    %3540 = vmatprep.subr.bf16.mxu0 0
    %3541 = vmatpush1.bf16.msra.mxu0 %v3202
    %3542 = vmatprep.subr.bf16.mxu0 0
    %3543 = vmatpush1.bf16.msra.mxu0 0
    %3544 = vmatprep.subr.bf16.mxu0 0
    %3545 = vmatpush1.bf16.msra.mxu0 0
    %3546 = vmatprep.subr.bf16.mxu0 0
    %3547 = vmatpush1.bf16.msra.mxu0 0
    %3548 = vmatprep.subr.bf16.mxu0 0
    %3549 = vmatpush1.bf16.msra.mxu0 0
    %3550 = vmatprep.subr.bf16.mxu0 0
    %3551 = vmatpush1.bf16.msra.mxu0 0
    %3552 = vmatprep.subr.bf16.mxu0 0
    %3553 = vmatpush1.bf16.msra.mxu0 0
    %3554 = vmatprep.subr.bf16.mxu0 0
    %3555 = vmatpush1.bf16.msra.mxu0 0
    %3556 = vmatprep.subr.bf16.mxu0 0
    %3557 = vmatpush1.bf16.msra.mxu0 0
    %3558 = vmatprep.subr.bf16.mxu0 0
    %3559 = vmatpush1.bf16.msra.mxu0 0
    %3560 = vmatprep.subr.bf16.mxu0 0
    %3561 = vmatpush1.bf16.msra.mxu0 0
    %3562 = vmatprep.subr.bf16.mxu0 0
    %3563 = vmatpush1.bf16.msra.mxu0 0
    %3564 = vmatprep.subr.bf16.mxu0 0
    %3565 = vmatpush1.bf16.msra.mxu0 0
    %3566 = vmatprep.mubr.bf16.mxu0 0
    %3567 = vmatmul.mubr.bf16.gmra.mrb[0].mxu0 %v3532
    %v3568 = vpop.f32.mrb[0].mxu0
    %v3569 = vadd.f32 0.0, %v3568
    %v3570 = vpop.f32.mrb[0].mxu0
    %v3571 = vpop.f32.mrb[0].mxu0
    %v3572 = vadd.f32 0.0, %v3571
    %v3573 = vpop.f32.mrb[0].mxu0
    %3574 = vdwg.mxu0
    %s3575 = scalar_lea.vmem %s7, 5
    %v3576 = vld [vmem:[%s3575] sm:$0x1]
    %v3578 = vlaneseq
    %v3579 = vshrl.u32 %v3578, 7
    %v3580 = vsub.s32 0, %v3579
    %v3581 = vrot.slane %v3576, %v3580
    %v3583 = vmul.f32 %v3569, %v3581
    %v3584 = vmul.f32 %v3572, %v3581
    %v3585 = vadd.f32 %v3521, %v3583
    %v3586 = vadd.f32 %v3522, %v3584
    %s3587 = scalar_lea.vmem %s6, 48
    %v3588 = vld [vmem:[%s3587] sm:$0xf]
    %v3589 = vld [vmem:[%s3587 + $0x4] sm:$0xf]
    %v3592 = vunpack.c.l.b16 %v3588
    %v3593 = vunpack.c.l.b16 %v3589
    %v3594 = vpack.c.b16 %v3593, %v3592
    %v3596 = vsel %vm2066, %v3594, 0
    %3598 = vmatprep.subr.bf16.mxu0 0
    %3599 = vmatpush1.bf16.msra.mxu0 %v3199
    %3600 = vmatprep.subr.bf16.mxu0 0
    %3601 = vmatpush1.bf16.msra.mxu0 %v3200
    %3602 = vmatprep.subr.bf16.mxu0 0
    %3603 = vmatpush1.bf16.msra.mxu0 %v3201
    %3604 = vmatprep.subr.bf16.mxu0 0
    %3605 = vmatpush1.bf16.msra.mxu0 %v3202
    %3606 = vmatprep.subr.bf16.mxu0 0
    %3607 = vmatpush1.bf16.msra.mxu0 0
    %3608 = vmatprep.subr.bf16.mxu0 0
    %3609 = vmatpush1.bf16.msra.mxu0 0
    %3610 = vmatprep.subr.bf16.mxu0 0
    %3611 = vmatpush1.bf16.msra.mxu0 0
    %3612 = vmatprep.subr.bf16.mxu0 0
    %3613 = vmatpush1.bf16.msra.mxu0 0
    %3614 = vmatprep.subr.bf16.mxu0 0
    %3615 = vmatpush1.bf16.msra.mxu0 0
    %3616 = vmatprep.subr.bf16.mxu0 0
    %3617 = vmatpush1.bf16.msra.mxu0 0
    %3618 = vmatprep.subr.bf16.mxu0 0
    %3619 = vmatpush1.bf16.msra.mxu0 0
    %3620 = vmatprep.subr.bf16.mxu0 0
    %3621 = vmatpush1.bf16.msra.mxu0 0
    %3622 = vmatprep.subr.bf16.mxu0 0
    %3623 = vmatpush1.bf16.msra.mxu0 0
    %3624 = vmatprep.subr.bf16.mxu0 0
    %3625 = vmatpush1.bf16.msra.mxu0 0
    %3626 = vmatprep.subr.bf16.mxu0 0
    %3627 = vmatpush1.bf16.msra.mxu0 0
    %3628 = vmatprep.subr.bf16.mxu0 0
    %3629 = vmatpush1.bf16.msra.mxu0 0
    %3630 = vmatprep.mubr.bf16.mxu0 0
    %3631 = vmatmul.mubr.bf16.gmra.mrb[0].mxu0 %v3596
    %v3632 = vpop.f32.mrb[0].mxu0
    %v3633 = vadd.f32 0.0, %v3632
    %v3634 = vpop.f32.mrb[0].mxu0
    %v3635 = vpop.f32.mrb[0].mxu0
    %v3636 = vadd.f32 0.0, %v3635
    %v3637 = vpop.f32.mrb[0].mxu0
    %3638 = vdwg.mxu0
    %s3639 = scalar_lea.vmem %s7, 6
    %v3640 = vld [vmem:[%s3639] sm:$0x1]
    %v3642 = vlaneseq
    %v3643 = vshrl.u32 %v3642, 7
    %v3644 = vsub.s32 0, %v3643
    %v3645 = vrot.slane %v3640, %v3644
    %v3647 = vmul.f32 %v3633, %v3645
    %v3648 = vmul.f32 %v3636, %v3645
    %v3649 = vadd.f32 %v3585, %v3647
    %v3650 = vadd.f32 %v3586, %v3648
    %s3651 = scalar_lea.vmem %s6, 56
    %v3652 = vld [vmem:[%s3651] sm:$0xf]
    %v3653 = vld [vmem:[%s3651 + $0x4] sm:$0xf]
    %v3656 = vunpack.c.l.b16 %v3652
    %v3657 = vunpack.c.l.b16 %v3653
    %v3658 = vpack.c.b16 %v3657, %v3656
    %v3660 = vsel %vm2066, %v3658, 0
    %3662 = vmatprep.subr.bf16.mxu0 0
    %3663 = vmatpush1.bf16.msra.mxu0 %v3199
    %3664 = vmatprep.subr.bf16.mxu0 0
    %3665 = vmatpush1.bf16.msra.mxu0 %v3200
    %3666 = vmatprep.subr.bf16.mxu0 0
    %3667 = vmatpush1.bf16.msra.mxu0 %v3201
    %3668 = vmatprep.subr.bf16.mxu0 0
    %3669 = vmatpush1.bf16.msra.mxu0 %v3202
    %3670 = vmatprep.subr.bf16.mxu0 0
    %3671 = vmatpush1.bf16.msra.mxu0 0
    %3672 = vmatprep.subr.bf16.mxu0 0
    %3673 = vmatpush1.bf16.msra.mxu0 0
    %3674 = vmatprep.subr.bf16.mxu0 0
    %3675 = vmatpush1.bf16.msra.mxu0 0
    %3676 = vmatprep.subr.bf16.mxu0 0
    %3677 = vmatpush1.bf16.msra.mxu0 0
    %3678 = vmatprep.subr.bf16.mxu0 0
    %3679 = vmatpush1.bf16.msra.mxu0 0
    %3680 = vmatprep.subr.bf16.mxu0 0
    %3681 = vmatpush1.bf16.msra.mxu0 0
    %3682 = vmatprep.subr.bf16.mxu0 0
    %3683 = vmatpush1.bf16.msra.mxu0 0
    %3684 = vmatprep.subr.bf16.mxu0 0
    %3685 = vmatpush1.bf16.msra.mxu0 0
    %3686 = vmatprep.subr.bf16.mxu0 0
    %3687 = vmatpush1.bf16.msra.mxu0 0
    %3688 = vmatprep.subr.bf16.mxu0 0
    %3689 = vmatpush1.bf16.msra.mxu0 0
    %3690 = vmatprep.subr.bf16.mxu0 0
    %3691 = vmatpush1.bf16.msra.mxu0 0
    %3692 = vmatprep.subr.bf16.mxu0 0
    %3693 = vmatpush1.bf16.msra.mxu0 0
    %3694 = vmatprep.mubr.bf16.mxu0 0
    %3695 = vmatmul.mubr.bf16.gmra.mrb[0].mxu0 %v3660
    %v3696 = vpop.f32.mrb[0].mxu0
    %v3697 = vadd.f32 0.0, %v3696
    %v3698 = vpop.f32.mrb[0].mxu0
    %v3699 = vpop.f32.mrb[0].mxu0
    %v3700 = vadd.f32 0.0, %v3699
    %v3701 = vpop.f32.mrb[0].mxu0
    %3702 = vdwg.mxu0
    %s3703 = scalar_lea.vmem %s7, 7
    %v3704 = vld [vmem:[%s3703] sm:$0x1]
    %v3706 = vlaneseq
    %v3707 = vshrl.u32 %v3706, 7
    %v3708 = vsub.s32 0, %v3707
    %v3709 = vrot.slane %v3704, %v3708
    %v3711 = vmul.f32 %v3697, %v3709
    %v3712 = vmul.f32 %v3700, %v3709
    %v3713 = vadd.f32 %v3649, %v3711
    %v3714 = vadd.f32 %v3650, %v3712
    %s3715 = scalar_lea.vmem %s6, 64
    %v3716 = vld [vmem:[%s3715] sm:$0xf]
    %v3717 = vld [vmem:[%s3715 + $0x4] sm:$0xf]
    %v3720 = vunpack.c.l.b16 %v3716
    %v3721 = vunpack.c.l.b16 %v3717
    %v3722 = vpack.c.b16 %v3721, %v3720
    %v3724 = vsel %vm2066, %v3722, 0
    %3726 = vmatprep.subr.bf16.mxu0 0
    %3727 = vmatpush1.bf16.msra.mxu0 %v3199
    %3728 = vmatprep.subr.bf16.mxu0 0
    %3729 = vmatpush1.bf16.msra.mxu0 %v3200
    %3730 = vmatprep.subr.bf16.mxu0 0
    %3731 = vmatpush1.bf16.msra.mxu0 %v3201
    %3732 = vmatprep.subr.bf16.mxu0 0
    %3733 = vmatpush1.bf16.msra.mxu0 %v3202
    %3734 = vmatprep.subr.bf16.mxu0 0
    %3735 = vmatpush1.bf16.msra.mxu0 0
    %3736 = vmatprep.subr.bf16.mxu0 0
    %3737 = vmatpush1.bf16.msra.mxu0 0
    %3738 = vmatprep.subr.bf16.mxu0 0
    %3739 = vmatpush1.bf16.msra.mxu0 0
    %3740 = vmatprep.subr.bf16.mxu0 0
    %3741 = vmatpush1.bf16.msra.mxu0 0
    %3742 = vmatprep.subr.bf16.mxu0 0
    %3743 = vmatpush1.bf16.msra.mxu0 0
    %3744 = vmatprep.subr.bf16.mxu0 0
    %3745 = vmatpush1.bf16.msra.mxu0 0
    %3746 = vmatprep.subr.bf16.mxu0 0
    %3747 = vmatpush1.bf16.msra.mxu0 0
    %3748 = vmatprep.subr.bf16.mxu0 0
    %3749 = vmatpush1.bf16.msra.mxu0 0
    %3750 = vmatprep.subr.bf16.mxu0 0
    %3751 = vmatpush1.bf16.msra.mxu0 0
    %3752 = vmatprep.subr.bf16.mxu0 0
    %3753 = vmatpush1.bf16.msra.mxu0 0
    %3754 = vmatprep.subr.bf16.mxu0 0
    %3755 = vmatpush1.bf16.msra.mxu0 0
    %3756 = vmatprep.subr.bf16.mxu0 0
    %3757 = vmatpush1.bf16.msra.mxu0 0
    %3758 = vmatprep.mubr.bf16.mxu0 0
    %3759 = vmatmul.mubr.bf16.gmra.mrb[0].mxu0 %v3724
    %v3760 = vpop.f32.mrb[0].mxu0
    %v3761 = vadd.f32 0.0, %v3760
    %v3762 = vpop.f32.mrb[0].mxu0
    %v3763 = vpop.f32.mrb[0].mxu0
    %v3764 = vadd.f32 0.0, %v3763
    %v3765 = vpop.f32.mrb[0].mxu0
    %3766 = vdwg.mxu0
    %s3767 = scalar_lea.vmem %s7, 8
    %v3768 = vld [vmem:[%s3767] sm:$0x1]
    %v3770 = vlaneseq
    %v3771 = vshrl.u32 %v3770, 7
    %v3772 = vsub.s32 0, %v3771
    %v3773 = vrot.slane %v3768, %v3772
    %v3775 = vmul.f32 %v3761, %v3773
    %v3776 = vmul.f32 %v3764, %v3773
    %v3777 = vadd.f32 %v3713, %v3775
    %v3778 = vadd.f32 %v3714, %v3776
    %3779 = vmatprep.subr.bf16.mxu0 0
    %3780 = vmatpush1.bf16.msra.mxu0 %v3203
    %3781 = vmatprep.subr.bf16.mxu0 0
    %3782 = vmatpush1.bf16.msra.mxu0 %v3204
    %3783 = vmatprep.subr.bf16.mxu0 0
    %3784 = vmatpush1.bf16.msra.mxu0 %v3205
    %3785 = vmatprep.subr.bf16.mxu0 0
    %3786 = vmatpush1.bf16.msra.mxu0 %v3206
    %3787 = vmatprep.subr.bf16.mxu0 0
    %3788 = vmatpush1.bf16.msra.mxu0 0
    %3789 = vmatprep.subr.bf16.mxu0 0
    %3790 = vmatpush1.bf16.msra.mxu0 0
    %3791 = vmatprep.subr.bf16.mxu0 0
    %3792 = vmatpush1.bf16.msra.mxu0 0
    %3793 = vmatprep.subr.bf16.mxu0 0
    %3794 = vmatpush1.bf16.msra.mxu0 0
    %3795 = vmatprep.subr.bf16.mxu0 0
    %3796 = vmatpush1.bf16.msra.mxu0 0
    %3797 = vmatprep.subr.bf16.mxu0 0
    %3798 = vmatpush1.bf16.msra.mxu0 0
    %3799 = vmatprep.subr.bf16.mxu0 0
    %3800 = vmatpush1.bf16.msra.mxu0 0
    %3801 = vmatprep.subr.bf16.mxu0 0
    %3802 = vmatpush1.bf16.msra.mxu0 0
    %3803 = vmatprep.subr.bf16.mxu0 0
    %3804 = vmatpush1.bf16.msra.mxu0 0
    %3805 = vmatprep.subr.bf16.mxu0 0
    %3806 = vmatpush1.bf16.msra.mxu0 0
    %3807 = vmatprep.subr.bf16.mxu0 0
    %3808 = vmatpush1.bf16.msra.mxu0 0
    %3809 = vmatprep.subr.bf16.mxu0 0
    %3810 = vmatpush1.bf16.msra.mxu0 0
    %3811 = vmatprep.mubr.bf16.mxu0 0
    %3812 = vmatmul.mubr.bf16.gmra.mrb[0].mxu0 %v3215
    %v3813 = vpop.f32.mrb[0].mxu0
    %v3814 = vadd.f32 0.0, %v3813
    %v3815 = vpop.f32.mrb[0].mxu0
    %v3816 = vpop.f32.mrb[0].mxu0
    %v3817 = vadd.f32 0.0, %v3816
    %v3818 = vpop.f32.mrb[0].mxu0
    %3819 = vdwg.mxu0
    %v3820 = vmul.f32 %v3814, %v3263
    %v3821 = vmul.f32 %v3817, %v3263
    %3822 = vmatprep.subr.bf16.mxu0 0
    %3823 = vmatpush1.bf16.msra.mxu0 %v3203
    %3824 = vmatprep.subr.bf16.mxu0 0
    %3825 = vmatpush1.bf16.msra.mxu0 %v3204
    %3826 = vmatprep.subr.bf16.mxu0 0
    %3827 = vmatpush1.bf16.msra.mxu0 %v3205
    %3828 = vmatprep.subr.bf16.mxu0 0
    %3829 = vmatpush1.bf16.msra.mxu0 %v3206
    %3830 = vmatprep.subr.bf16.mxu0 0
    %3831 = vmatpush1.bf16.msra.mxu0 0
    %3832 = vmatprep.subr.bf16.mxu0 0
    %3833 = vmatpush1.bf16.msra.mxu0 0
    %3834 = vmatprep.subr.bf16.mxu0 0
    %3835 = vmatpush1.bf16.msra.mxu0 0
    %3836 = vmatprep.subr.bf16.mxu0 0
    %3837 = vmatpush1.bf16.msra.mxu0 0
    %3838 = vmatprep.subr.bf16.mxu0 0
    %3839 = vmatpush1.bf16.msra.mxu0 0
    %3840 = vmatprep.subr.bf16.mxu0 0
    %3841 = vmatpush1.bf16.msra.mxu0 0
    %3842 = vmatprep.subr.bf16.mxu0 0
    %3843 = vmatpush1.bf16.msra.mxu0 0
    %3844 = vmatprep.subr.bf16.mxu0 0
    %3845 = vmatpush1.bf16.msra.mxu0 0
    %3846 = vmatprep.subr.bf16.mxu0 0
    %3847 = vmatpush1.bf16.msra.mxu0 0
    %3848 = vmatprep.subr.bf16.mxu0 0
    %3849 = vmatpush1.bf16.msra.mxu0 0
    %3850 = vmatprep.subr.bf16.mxu0 0
    %3851 = vmatpush1.bf16.msra.mxu0 0
    %3852 = vmatprep.subr.bf16.mxu0 0
    %3853 = vmatpush1.bf16.msra.mxu0 0
    %3854 = vmatprep.mubr.bf16.mxu0 0
    %3855 = vmatmul.mubr.bf16.gmra.mrb[0].mxu0 %v3276
    %v3856 = vpop.f32.mrb[0].mxu0
    %v3857 = vadd.f32 0.0, %v3856
    %v3858 = vpop.f32.mrb[0].mxu0
    %v3859 = vpop.f32.mrb[0].mxu0
    %v3860 = vadd.f32 0.0, %v3859
    %v3861 = vpop.f32.mrb[0].mxu0
    %3862 = vdwg.mxu0
    %v3863 = vmul.f32 %v3857, %v3325
    %v3864 = vmul.f32 %v3860, %v3325
    %v3865 = vadd.f32 %v3820, %v3863
    %v3866 = vadd.f32 %v3821, %v3864
    %3867 = vmatprep.subr.bf16.mxu0 0
    %3868 = vmatpush1.bf16.msra.mxu0 %v3203
    %3869 = vmatprep.subr.bf16.mxu0 0
    %3870 = vmatpush1.bf16.msra.mxu0 %v3204
    %3871 = vmatprep.subr.bf16.mxu0 0
    %3872 = vmatpush1.bf16.msra.mxu0 %v3205
    %3873 = vmatprep.subr.bf16.mxu0 0
    %3874 = vmatpush1.bf16.msra.mxu0 %v3206
    %3875 = vmatprep.subr.bf16.mxu0 0
    %3876 = vmatpush1.bf16.msra.mxu0 0
    %3877 = vmatprep.subr.bf16.mxu0 0
    %3878 = vmatpush1.bf16.msra.mxu0 0
    %3879 = vmatprep.subr.bf16.mxu0 0
    %3880 = vmatpush1.bf16.msra.mxu0 0
    %3881 = vmatprep.subr.bf16.mxu0 0
    %3882 = vmatpush1.bf16.msra.mxu0 0
    %3883 = vmatprep.subr.bf16.mxu0 0
    %3884 = vmatpush1.bf16.msra.mxu0 0
    %3885 = vmatprep.subr.bf16.mxu0 0
    %3886 = vmatpush1.bf16.msra.mxu0 0
    %3887 = vmatprep.subr.bf16.mxu0 0
    %3888 = vmatpush1.bf16.msra.mxu0 0
    %3889 = vmatprep.subr.bf16.mxu0 0
    %3890 = vmatpush1.bf16.msra.mxu0 0
    %3891 = vmatprep.subr.bf16.mxu0 0
    %3892 = vmatpush1.bf16.msra.mxu0 0
    %3893 = vmatprep.subr.bf16.mxu0 0
    %3894 = vmatpush1.bf16.msra.mxu0 0
    %3895 = vmatprep.subr.bf16.mxu0 0
    %3896 = vmatpush1.bf16.msra.mxu0 0
    %3897 = vmatprep.subr.bf16.mxu0 0
    %3898 = vmatpush1.bf16.msra.mxu0 0
    %3899 = vmatprep.mubr.bf16.mxu0 0
    %3900 = vmatmul.mubr.bf16.gmra.mrb[0].mxu0 %v3340
    %v3901 = vpop.f32.mrb[0].mxu0
    %v3902 = vadd.f32 0.0, %v3901
    %v3903 = vpop.f32.mrb[0].mxu0
    %v3904 = vpop.f32.mrb[0].mxu0
    %v3905 = vadd.f32 0.0, %v3904
    %v3906 = vpop.f32.mrb[0].mxu0
    %3907 = vdwg.mxu0
    %v3908 = vmul.f32 %v3902, %v3389
    %v3909 = vmul.f32 %v3905, %v3389
    %v3910 = vadd.f32 %v3865, %v3908
    %v3911 = vadd.f32 %v3866, %v3909
    %3912 = vmatprep.subr.bf16.mxu0 0
    %3913 = vmatpush1.bf16.msra.mxu0 %v3203
    %3914 = vmatprep.subr.bf16.mxu0 0
    %3915 = vmatpush1.bf16.msra.mxu0 %v3204
    %3916 = vmatprep.subr.bf16.mxu0 0
    %3917 = vmatpush1.bf16.msra.mxu0 %v3205
    %3918 = vmatprep.subr.bf16.mxu0 0
    %3919 = vmatpush1.bf16.msra.mxu0 %v3206
    %3920 = vmatprep.subr.bf16.mxu0 0
    %3921 = vmatpush1.bf16.msra.mxu0 0
    %3922 = vmatprep.subr.bf16.mxu0 0
    %3923 = vmatpush1.bf16.msra.mxu0 0
    %3924 = vmatprep.subr.bf16.mxu0 0
    %3925 = vmatpush1.bf16.msra.mxu0 0
    %3926 = vmatprep.subr.bf16.mxu0 0
    %3927 = vmatpush1.bf16.msra.mxu0 0
    %3928 = vmatprep.subr.bf16.mxu0 0
    %3929 = vmatpush1.bf16.msra.mxu0 0
    %3930 = vmatprep.subr.bf16.mxu0 0
    %3931 = vmatpush1.bf16.msra.mxu0 0
    %3932 = vmatprep.subr.bf16.mxu0 0
    %3933 = vmatpush1.bf16.msra.mxu0 0
    %3934 = vmatprep.subr.bf16.mxu0 0
    %3935 = vmatpush1.bf16.msra.mxu0 0
    %3936 = vmatprep.subr.bf16.mxu0 0
    %3937 = vmatpush1.bf16.msra.mxu0 0
    %3938 = vmatprep.subr.bf16.mxu0 0
    %3939 = vmatpush1.bf16.msra.mxu0 0
    %3940 = vmatprep.subr.bf16.mxu0 0
    %3941 = vmatpush1.bf16.msra.mxu0 0
    %3942 = vmatprep.subr.bf16.mxu0 0
    %3943 = vmatpush1.bf16.msra.mxu0 0
    %3944 = vmatprep.mubr.bf16.mxu0 0
    %3945 = vmatmul.mubr.bf16.gmra.mrb[0].mxu0 %v3404
    %v3946 = vpop.f32.mrb[0].mxu0
    %v3947 = vadd.f32 0.0, %v3946
    %v3948 = vpop.f32.mrb[0].mxu0
    %v3949 = vpop.f32.mrb[0].mxu0
    %v3950 = vadd.f32 0.0, %v3949
    %v3951 = vpop.f32.mrb[0].mxu0
    %3952 = vdwg.mxu0
    %v3953 = vmul.f32 %v3947, %v3453
    %v3954 = vmul.f32 %v3950, %v3453
    %v3955 = vadd.f32 %v3910, %v3953
    %v3956 = vadd.f32 %v3911, %v3954
    %3957 = vmatprep.subr.bf16.mxu0 0
    %3958 = vmatpush1.bf16.msra.mxu0 %v3203
    %3959 = vmatprep.subr.bf16.mxu0 0
    %3960 = vmatpush1.bf16.msra.mxu0 %v3204
    %3961 = vmatprep.subr.bf16.mxu0 0
    %3962 = vmatpush1.bf16.msra.mxu0 %v3205
    %3963 = vmatprep.subr.bf16.mxu0 0
    %3964 = vmatpush1.bf16.msra.mxu0 %v3206
    %3965 = vmatprep.subr.bf16.mxu0 0
    %3966 = vmatpush1.bf16.msra.mxu0 0
    %3967 = vmatprep.subr.bf16.mxu0 0
    %3968 = vmatpush1.bf16.msra.mxu0 0
    %3969 = vmatprep.subr.bf16.mxu0 0
    %3970 = vmatpush1.bf16.msra.mxu0 0
    %3971 = vmatprep.subr.bf16.mxu0 0
    %3972 = vmatpush1.bf16.msra.mxu0 0
    %3973 = vmatprep.subr.bf16.mxu0 0
    %3974 = vmatpush1.bf16.msra.mxu0 0
    %3975 = vmatprep.subr.bf16.mxu0 0
    %3976 = vmatpush1.bf16.msra.mxu0 0
    %3977 = vmatprep.subr.bf16.mxu0 0
    %3978 = vmatpush1.bf16.msra.mxu0 0
    %3979 = vmatprep.subr.bf16.mxu0 0
    %3980 = vmatpush1.bf16.msra.mxu0 0
    %3981 = vmatprep.subr.bf16.mxu0 0
    %3982 = vmatpush1.bf16.msra.mxu0 0
    %3983 = vmatprep.subr.bf16.mxu0 0
    %3984 = vmatpush1.bf16.msra.mxu0 0
    %3985 = vmatprep.subr.bf16.mxu0 0
    %3986 = vmatpush1.bf16.msra.mxu0 0
    %3987 = vmatprep.subr.bf16.mxu0 0
    %3988 = vmatpush1.bf16.msra.mxu0 0
    %3989 = vmatprep.mubr.bf16.mxu0 0
    %3990 = vmatmul.mubr.bf16.gmra.mrb[0].mxu0 %v3468
    %v3991 = vpop.f32.mrb[0].mxu0
    %v3992 = vadd.f32 0.0, %v3991
    %v3993 = vpop.f32.mrb[0].mxu0
    %v3994 = vpop.f32.mrb[0].mxu0
    %v3995 = vadd.f32 0.0, %v3994
    %v3996 = vpop.f32.mrb[0].mxu0
    %3997 = vdwg.mxu0
    %v3998 = vmul.f32 %v3992, %v3517
    %v3999 = vmul.f32 %v3995, %v3517
    %v4000 = vadd.f32 %v3955, %v3998
    %v4001 = vadd.f32 %v3956, %v3999
    %4002 = vmatprep.subr.bf16.mxu0 0
    %4003 = vmatpush1.bf16.msra.mxu0 %v3203
    %4004 = vmatprep.subr.bf16.mxu0 0
    %4005 = vmatpush1.bf16.msra.mxu0 %v3204
    %4006 = vmatprep.subr.bf16.mxu0 0
    %4007 = vmatpush1.bf16.msra.mxu0 %v3205
    %4008 = vmatprep.subr.bf16.mxu0 0
    %4009 = vmatpush1.bf16.msra.mxu0 %v3206
    %4010 = vmatprep.subr.bf16.mxu0 0
    %4011 = vmatpush1.bf16.msra.mxu0 0
    %4012 = vmatprep.subr.bf16.mxu0 0
    %4013 = vmatpush1.bf16.msra.mxu0 0
    %4014 = vmatprep.subr.bf16.mxu0 0
    %4015 = vmatpush1.bf16.msra.mxu0 0
    %4016 = vmatprep.subr.bf16.mxu0 0
    %4017 = vmatpush1.bf16.msra.mxu0 0
    %4018 = vmatprep.subr.bf16.mxu0 0
    %4019 = vmatpush1.bf16.msra.mxu0 0
    %4020 = vmatprep.subr.bf16.mxu0 0
    %4021 = vmatpush1.bf16.msra.mxu0 0
    %4022 = vmatprep.subr.bf16.mxu0 0
    %4023 = vmatpush1.bf16.msra.mxu0 0
    %4024 = vmatprep.subr.bf16.mxu0 0
    %4025 = vmatpush1.bf16.msra.mxu0 0
    %4026 = vmatprep.subr.bf16.mxu0 0
    %4027 = vmatpush1.bf16.msra.mxu0 0
    %4028 = vmatprep.subr.bf16.mxu0 0
    %4029 = vmatpush1.bf16.msra.mxu0 0
    %4030 = vmatprep.subr.bf16.mxu0 0
    %4031 = vmatpush1.bf16.msra.mxu0 0
    %4032 = vmatprep.subr.bf16.mxu0 0
    %4033 = vmatpush1.bf16.msra.mxu0 0
    %4034 = vmatprep.mubr.bf16.mxu0 0
    %4035 = vmatmul.mubr.bf16.gmra.mrb[0].mxu0 %v3532
    %v4036 = vpop.f32.mrb[0].mxu0
    %v4037 = vadd.f32 0.0, %v4036
    %v4038 = vpop.f32.mrb[0].mxu0
    %v4039 = vpop.f32.mrb[0].mxu0
    %v4040 = vadd.f32 0.0, %v4039
    %v4041 = vpop.f32.mrb[0].mxu0
    %4042 = vdwg.mxu0
    %v4043 = vmul.f32 %v4037, %v3581
    %v4044 = vmul.f32 %v4040, %v3581
    %v4045 = vadd.f32 %v4000, %v4043
    %v4046 = vadd.f32 %v4001, %v4044
    %4047 = vmatprep.subr.bf16.mxu0 0
    %4048 = vmatpush1.bf16.msra.mxu0 %v3203
    %4049 = vmatprep.subr.bf16.mxu0 0
    %4050 = vmatpush1.bf16.msra.mxu0 %v3204
    %4051 = vmatprep.subr.bf16.mxu0 0
    %4052 = vmatpush1.bf16.msra.mxu0 %v3205
    %4053 = vmatprep.subr.bf16.mxu0 0
    %4054 = vmatpush1.bf16.msra.mxu0 %v3206
    %4055 = vmatprep.subr.bf16.mxu0 0
    %4056 = vmatpush1.bf16.msra.mxu0 0
    %4057 = vmatprep.subr.bf16.mxu0 0
    %4058 = vmatpush1.bf16.msra.mxu0 0
    %4059 = vmatprep.subr.bf16.mxu0 0
    %4060 = vmatpush1.bf16.msra.mxu0 0
    %4061 = vmatprep.subr.bf16.mxu0 0
    %4062 = vmatpush1.bf16.msra.mxu0 0
    %4063 = vmatprep.subr.bf16.mxu0 0
    %4064 = vmatpush1.bf16.msra.mxu0 0
    %4065 = vmatprep.subr.bf16.mxu0 0
    %4066 = vmatpush1.bf16.msra.mxu0 0
    %4067 = vmatprep.subr.bf16.mxu0 0
    %4068 = vmatpush1.bf16.msra.mxu0 0
    %4069 = vmatprep.subr.bf16.mxu0 0
    %4070 = vmatpush1.bf16.msra.mxu0 0
    %4071 = vmatprep.subr.bf16.mxu0 0
    %4072 = vmatpush1.bf16.msra.mxu0 0
    %4073 = vmatprep.subr.bf16.mxu0 0
    %4074 = vmatpush1.bf16.msra.mxu0 0
    %4075 = vmatprep.subr.bf16.mxu0 0
    %4076 = vmatpush1.bf16.msra.mxu0 0
    %4077 = vmatprep.subr.bf16.mxu0 0
    %4078 = vmatpush1.bf16.msra.mxu0 0
    %4079 = vmatprep.mubr.bf16.mxu0 0
    %4080 = vmatmul.mubr.bf16.gmra.mrb[0].mxu0 %v3596
    %v4081 = vpop.f32.mrb[0].mxu0
    %v4082 = vadd.f32 0.0, %v4081
    %v4083 = vpop.f32.mrb[0].mxu0
    %v4084 = vpop.f32.mrb[0].mxu0
    %v4085 = vadd.f32 0.0, %v4084
    %v4086 = vpop.f32.mrb[0].mxu0
    %4087 = vdwg.mxu0
    %v4088 = vmul.f32 %v4082, %v3645
    %v4089 = vmul.f32 %v4085, %v3645
    %v4090 = vadd.f32 %v4045, %v4088
    %v4091 = vadd.f32 %v4046, %v4089
    %4092 = vmatprep.subr.bf16.mxu0 0
    %4093 = vmatpush1.bf16.msra.mxu0 %v3203
    %4094 = vmatprep.subr.bf16.mxu0 0
    %4095 = vmatpush1.bf16.msra.mxu0 %v3204
    %4096 = vmatprep.subr.bf16.mxu0 0
    %4097 = vmatpush1.bf16.msra.mxu0 %v3205
    %4098 = vmatprep.subr.bf16.mxu0 0
    %4099 = vmatpush1.bf16.msra.mxu0 %v3206
    %4100 = vmatprep.subr.bf16.mxu0 0
    %4101 = vmatpush1.bf16.msra.mxu0 0
    %4102 = vmatprep.subr.bf16.mxu0 0
    %4103 = vmatpush1.bf16.msra.mxu0 0
    %4104 = vmatprep.subr.bf16.mxu0 0
    %4105 = vmatpush1.bf16.msra.mxu0 0
    %4106 = vmatprep.subr.bf16.mxu0 0
    %4107 = vmatpush1.bf16.msra.mxu0 0
    %4108 = vmatprep.subr.bf16.mxu0 0
    %4109 = vmatpush1.bf16.msra.mxu0 0
    %4110 = vmatprep.subr.bf16.mxu0 0
    %4111 = vmatpush1.bf16.msra.mxu0 0
    %4112 = vmatprep.subr.bf16.mxu0 0
    %4113 = vmatpush1.bf16.msra.mxu0 0
    %4114 = vmatprep.subr.bf16.mxu0 0
    %4115 = vmatpush1.bf16.msra.mxu0 0
    %4116 = vmatprep.subr.bf16.mxu0 0
    %4117 = vmatpush1.bf16.msra.mxu0 0
    %4118 = vmatprep.subr.bf16.mxu0 0
    %4119 = vmatpush1.bf16.msra.mxu0 0
    %4120 = vmatprep.subr.bf16.mxu0 0
    %4121 = vmatpush1.bf16.msra.mxu0 0
    %4122 = vmatprep.subr.bf16.mxu0 0
    %4123 = vmatpush1.bf16.msra.mxu0 0
    %4124 = vmatprep.mubr.bf16.mxu0 0
    %4125 = vmatmul.mubr.bf16.gmra.mrb[0].mxu0 %v3660
    %v4126 = vpop.f32.mrb[0].mxu0
    %v4127 = vadd.f32 0.0, %v4126
    %v4128 = vpop.f32.mrb[0].mxu0
    %v4129 = vpop.f32.mrb[0].mxu0
    %v4130 = vadd.f32 0.0, %v4129
    %v4131 = vpop.f32.mrb[0].mxu0
    %4132 = vdwg.mxu0
    %v4133 = vmul.f32 %v4127, %v3709
    %v4134 = vmul.f32 %v4130, %v3709
    %v4135 = vadd.f32 %v4090, %v4133
    %v4136 = vadd.f32 %v4091, %v4134
    %4137 = vmatprep.subr.bf16.mxu0 0
    %4138 = vmatpush1.bf16.msra.mxu0 %v3203
    %4139 = vmatprep.subr.bf16.mxu0 0
    %4140 = vmatpush1.bf16.msra.mxu0 %v3204
    %4141 = vmatprep.subr.bf16.mxu0 0
    %4142 = vmatpush1.bf16.msra.mxu0 %v3205
    %4143 = vmatprep.subr.bf16.mxu0 0
    %4144 = vmatpush1.bf16.msra.mxu0 %v3206
    %4145 = vmatprep.subr.bf16.mxu0 0
    %4146 = vmatpush1.bf16.msra.mxu0 0
    %4147 = vmatprep.subr.bf16.mxu0 0
    %4148 = vmatpush1.bf16.msra.mxu0 0
    %4149 = vmatprep.subr.bf16.mxu0 0
    %4150 = vmatpush1.bf16.msra.mxu0 0
    %4151 = vmatprep.subr.bf16.mxu0 0
    %4152 = vmatpush1.bf16.msra.mxu0 0
    %4153 = vmatprep.subr.bf16.mxu0 0
    %4154 = vmatpush1.bf16.msra.mxu0 0
    %4155 = vmatprep.subr.bf16.mxu0 0
    %4156 = vmatpush1.bf16.msra.mxu0 0
    %4157 = vmatprep.subr.bf16.mxu0 0
    %4158 = vmatpush1.bf16.msra.mxu0 0
    %4159 = vmatprep.subr.bf16.mxu0 0
    %4160 = vmatpush1.bf16.msra.mxu0 0
    %4161 = vmatprep.subr.bf16.mxu0 0
    %4162 = vmatpush1.bf16.msra.mxu0 0
    %4163 = vmatprep.subr.bf16.mxu0 0
    %4164 = vmatpush1.bf16.msra.mxu0 0
    %4165 = vmatprep.subr.bf16.mxu0 0
    %4166 = vmatpush1.bf16.msra.mxu0 0
    %4167 = vmatprep.subr.bf16.mxu0 0
    %4168 = vmatpush1.bf16.msra.mxu0 0
    %4169 = vmatprep.mubr.bf16.mxu0 0
    %4170 = vmatmul.mubr.bf16.gmra.mrb[0].mxu0 %v3724
    %v4171 = vpop.f32.mrb[0].mxu0
    %v4172 = vadd.f32 0.0, %v4171
    %v4173 = vpop.f32.mrb[0].mxu0
    %v4174 = vpop.f32.mrb[0].mxu0
    %v4175 = vadd.f32 0.0, %v4174
    %v4176 = vpop.f32.mrb[0].mxu0
    %4177 = vdwg.mxu0
    %v4178 = vmul.f32 %v4172, %v3773
    %v4179 = vmul.f32 %v4175, %v3773
    %v4180 = vadd.f32 %v4135, %v4178
    %v4181 = vadd.f32 %v4136, %v4179
    %v4182 = vld [vmem:[%s8] sm:$0x1]
    %v4184 = vlaneseq
    %v4185 = vshrl.u32 %v4184, 7
    %v4186 = vsub.s32 0, %v4185
    %v4187 = vrot.slane %v4182, %v4186
    %v4189 = vadd.f32 %v3777, %v4187
    %v4190 = vadd.f32 %v3778, %v4187
    %v4191 = vadd.f32 %v4180, %v4187
    %v4192 = vadd.f32 %v4181, %v4187
    %v4193 = vmax.f32 %v4189, 0.0
    %v4194 = vmax.f32 %v4190, 0.0
    %v4195 = vmax.f32 %v4191, 0.0
    %v4196 = vmax.f32 %v4192, 0.0
    %v4197 = vpack.c.bf16 %v4194, %v4193
    %v4198 = vpack.c.bf16 %v4196, %v4195
    %v4199 = vld [vmem:[%s9] sm:$0xf]
    %v4200 = vld [vmem:[%s9 + $0x4] sm:$0xf]
    %v4201 = vld [vmem:[%s9 + $0x8] sm:$0xf]
    %v4202 = vld [vmem:[%s9 + $0xc] sm:$0xf]
    %v4203 = vld [vmem:[%s10] sm:$0x1]
    %v4205 = vlaneseq
    %v4206 = vshrl.u32 %v4205, 7
    %v4207 = vsub.s32 0, %v4206
    %v4208 = vrot.slane %v4203, %v4207
    %v4214 = vunpack.c.l.b16 %v4199
    %v4215 = vunpack.c.l.b16 %v4200
    %v4216 = vunpack.c.l.b16 %v4201
    %v4217 = vunpack.c.l.b16 %v4202
    %v4218 = vpack.c.b16 %v4215, %v4214
    %v4219 = vpack.c.b16 %v4217, %v4216
    %v4223 = vsel %vm2048, %v4197, 0
    %v4226 = vsel %vm2048, %v4198, 0
    %4228 = vmatprep.subr.bf16.mxu0 0
    %4229 = vmatpush1.bf16.msra.mxu0 %v4218
    %4230 = vmatprep.subr.bf16.mxu0 0
    %4231 = vmatpush1.bf16.msra.mxu0 %v4219
    %4232 = vmatprep.subr.bf16.mxu0 0
    %4233 = vmatpush1.bf16.msra.mxu0 0
    %4234 = vmatprep.subr.bf16.mxu0 0
    %4235 = vmatpush1.bf16.msra.mxu0 0
    %4236 = vmatprep.subr.bf16.mxu0 0
    %4237 = vmatpush1.bf16.msra.mxu0 0
    %4238 = vmatprep.subr.bf16.mxu0 0
    %4239 = vmatpush1.bf16.msra.mxu0 0
    %4240 = vmatprep.subr.bf16.mxu0 0
    %4241 = vmatpush1.bf16.msra.mxu0 0
    %4242 = vmatprep.subr.bf16.mxu0 0
    %4243 = vmatpush1.bf16.msra.mxu0 0
    %4244 = vmatprep.subr.bf16.mxu0 0
    %4245 = vmatpush1.bf16.msra.mxu0 0
    %4246 = vmatprep.subr.bf16.mxu0 0
    %4247 = vmatpush1.bf16.msra.mxu0 0
    %4248 = vmatprep.subr.bf16.mxu0 0
    %4249 = vmatpush1.bf16.msra.mxu0 0
    %4250 = vmatprep.subr.bf16.mxu0 0
    %4251 = vmatpush1.bf16.msra.mxu0 0
    %4252 = vmatprep.subr.bf16.mxu0 0
    %4253 = vmatpush1.bf16.msra.mxu0 0
    %4254 = vmatprep.subr.bf16.mxu0 0
    %4255 = vmatpush1.bf16.msra.mxu0 0
    %4256 = vmatprep.subr.bf16.mxu0 0
    %4257 = vmatpush1.bf16.msra.mxu0 0
    %4258 = vmatprep.subr.bf16.mxu0 0
    %4259 = vmatpush1.bf16.msra.mxu0 0
    %4260 = vmatprep.mubr.bf16.mxu0 0
    %4261 = vmatmul.mubr.bf16.gmra.mrb[0].mxu0 %v4223
    %v4262 = vpop.f32.mrb[0].mxu0
    %v4263 = vadd.f32 %v4208, %v4262
    %v4264 = vpop.f32.mrb[0].mxu0
    %v4265 = vpop.f32.mrb[0].mxu0
    %v4266 = vadd.f32 %v4208, %v4265
    %v4267 = vpop.f32.mrb[0].mxu0
    %4268 = vmatprep.mubr.bf16.mxu0 0
    %4269 = vmatmul.mubr.bf16.gmra.mrb[0].mxu0 %v4226
    %v4270 = vpop.f32.mrb[0].mxu0
    %v4271 = vadd.f32 %v4208, %v4270
    %v4272 = vpop.f32.mrb[0].mxu0
    %v4273 = vpop.f32.mrb[0].mxu0
    %v4274 = vadd.f32 %v4208, %v4273
    %v4275 = vpop.f32.mrb[0].mxu0
    %4276 = vdwg.mxu0
    %v4277 = vmax.f32 %v4263, 0.0
    %v4278 = vmax.f32 %v4266, 0.0
    %v4279 = vmax.f32 %v4271, 0.0
    %v4280 = vmax.f32 %v4274, 0.0
    %v4281 = vpack.c.bf16 %v4278, %v4277
    %v4282 = vpack.c.bf16 %v4280, %v4279
    %v4283 = vld [vmem:[%s11] sm:$0xf]
    %v4284 = vld [vmem:[%s11 + $0x4] sm:$0xf]
    %v4287 = vunpack.c.l.b16 %v4283
    %v4288 = vunpack.c.l.b16 %v4284
    %v4289 = vpack.c.b16 %v4288, %v4287
    %v4291 = vsel %vm2039, %v4289, 0
    %4293 = vmatprep.subr.bf16.mxu0 0
    %4294 = vmatpush1.bf16.msra.mxu0 %v4281
    %4295 = vmatprep.subr.bf16.mxu0 0
    %4296 = vmatpush1.bf16.msra.mxu0 0
    %4297 = vmatprep.subr.bf16.mxu0 0
    %4298 = vmatpush1.bf16.msra.mxu0 0
    %4299 = vmatprep.subr.bf16.mxu0 0
    %4300 = vmatpush1.bf16.msra.mxu0 0
    %4301 = vmatprep.subr.bf16.mxu0 0
    %4302 = vmatpush1.bf16.msra.mxu0 0
    %4303 = vmatprep.subr.bf16.mxu0 0
    %4304 = vmatpush1.bf16.msra.mxu0 0
    %4305 = vmatprep.subr.bf16.mxu0 0
    %4306 = vmatpush1.bf16.msra.mxu0 0
    %4307 = vmatprep.subr.bf16.mxu0 0
    %4308 = vmatpush1.bf16.msra.mxu0 0
    %4309 = vmatprep.subr.bf16.mxu0 0
    %4310 = vmatpush1.bf16.msra.mxu0 0
    %4311 = vmatprep.subr.bf16.mxu0 0
    %4312 = vmatpush1.bf16.msra.mxu0 0
    %4313 = vmatprep.subr.bf16.mxu0 0
    %4314 = vmatpush1.bf16.msra.mxu0 0
    %4315 = vmatprep.subr.bf16.mxu0 0
    %4316 = vmatpush1.bf16.msra.mxu0 0
    %4317 = vmatprep.subr.bf16.mxu0 0
    %4318 = vmatpush1.bf16.msra.mxu0 0
    %4319 = vmatprep.subr.bf16.mxu0 0
    %4320 = vmatpush1.bf16.msra.mxu0 0
    %4321 = vmatprep.subr.bf16.mxu0 0
    %4322 = vmatpush1.bf16.msra.mxu0 0
    %4323 = vmatprep.subr.bf16.mxu0 0
    %4324 = vmatpush1.bf16.msra.mxu0 0
    %4325 = vmatprep.mubr.bf16.mxu0 0
    %4326 = vmatmul.mubr.bf16.gmra.mrb[0].mxu0 %v4291
    %v4327 = vpop.f32.mrb[0].mxu0
    %v4328 = vadd.f32 0.0, %v4327
    %v4329 = vpop.f32.mrb[0].mxu0
    %v4330 = vpop.f32.mrb[0].mxu0
    %v4331 = vadd.f32 0.0, %v4330
    %v4332 = vpop.f32.mrb[0].mxu0
    %4333 = vdwg.mxu0
    %s4334 = scalar_lea.vmem %s11, 8
    %v4335 = vld [vmem:[%s4334] sm:$0xf]
    %v4336 = vld [vmem:[%s4334 + $0x4] sm:$0xf]
    %v4339 = vunpack.c.l.b16 %v4335
    %v4340 = vunpack.c.l.b16 %v4336
    %v4341 = vpack.c.b16 %v4340, %v4339
    %v4343 = vsel %vm2039, %v4341, 0
    %4345 = vmatprep.subr.bf16.mxu0 0
    %4346 = vmatpush1.bf16.msra.mxu0 %v4281
    %4347 = vmatprep.subr.bf16.mxu0 0
    %4348 = vmatpush1.bf16.msra.mxu0 0
    %4349 = vmatprep.subr.bf16.mxu0 0
    %4350 = vmatpush1.bf16.msra.mxu0 0
    %4351 = vmatprep.subr.bf16.mxu0 0
    %4352 = vmatpush1.bf16.msra.mxu0 0
    %4353 = vmatprep.subr.bf16.mxu0 0
    %4354 = vmatpush1.bf16.msra.mxu0 0
    %4355 = vmatprep.subr.bf16.mxu0 0
    %4356 = vmatpush1.bf16.msra.mxu0 0
    %4357 = vmatprep.subr.bf16.mxu0 0
    %4358 = vmatpush1.bf16.msra.mxu0 0
    %4359 = vmatprep.subr.bf16.mxu0 0
    %4360 = vmatpush1.bf16.msra.mxu0 0
    %4361 = vmatprep.subr.bf16.mxu0 0
    %4362 = vmatpush1.bf16.msra.mxu0 0
    %4363 = vmatprep.subr.bf16.mxu0 0
    %4364 = vmatpush1.bf16.msra.mxu0 0
    %4365 = vmatprep.subr.bf16.mxu0 0
    %4366 = vmatpush1.bf16.msra.mxu0 0
    %4367 = vmatprep.subr.bf16.mxu0 0
    %4368 = vmatpush1.bf16.msra.mxu0 0
    %4369 = vmatprep.subr.bf16.mxu0 0
    %4370 = vmatpush1.bf16.msra.mxu0 0
    %4371 = vmatprep.subr.bf16.mxu0 0
    %4372 = vmatpush1.bf16.msra.mxu0 0
    %4373 = vmatprep.subr.bf16.mxu0 0
    %4374 = vmatpush1.bf16.msra.mxu0 0
    %4375 = vmatprep.subr.bf16.mxu0 0
    %4376 = vmatpush1.bf16.msra.mxu0 0
    %4377 = vmatprep.mubr.bf16.mxu0 0
    %4378 = vmatmul.mubr.bf16.gmra.mrb[0].mxu0 %v4343
    %v4379 = vpop.f32.mrb[0].mxu0
    %v4380 = vadd.f32 0.0, %v4379
    %v4381 = vpop.f32.mrb[0].mxu0
    %v4382 = vpop.f32.mrb[0].mxu0
    %v4383 = vadd.f32 0.0, %v4382
    %v4384 = vpop.f32.mrb[0].mxu0
    %4385 = vdwg.mxu0
    %s4386 = scalar_lea.vmem %s11, 16
    %v4387 = vld [vmem:[%s4386] sm:$0xf]
    %v4388 = vld [vmem:[%s4386 + $0x4] sm:$0xf]
    %v4391 = vunpack.c.l.b16 %v4387
    %v4392 = vunpack.c.l.b16 %v4388
    %v4393 = vpack.c.b16 %v4392, %v4391
    %v4395 = vsel %vm2039, %v4393, 0
    %4397 = vmatprep.subr.bf16.mxu0 0
    %4398 = vmatpush1.bf16.msra.mxu0 %v4281
    %4399 = vmatprep.subr.bf16.mxu0 0
    %4400 = vmatpush1.bf16.msra.mxu0 0
    %4401 = vmatprep.subr.bf16.mxu0 0
    %4402 = vmatpush1.bf16.msra.mxu0 0
    %4403 = vmatprep.subr.bf16.mxu0 0
    %4404 = vmatpush1.bf16.msra.mxu0 0
    %4405 = vmatprep.subr.bf16.mxu0 0
    %4406 = vmatpush1.bf16.msra.mxu0 0
    %4407 = vmatprep.subr.bf16.mxu0 0
    %4408 = vmatpush1.bf16.msra.mxu0 0
    %4409 = vmatprep.subr.bf16.mxu0 0
    %4410 = vmatpush1.bf16.msra.mxu0 0
    %4411 = vmatprep.subr.bf16.mxu0 0
    %4412 = vmatpush1.bf16.msra.mxu0 0
    %4413 = vmatprep.subr.bf16.mxu0 0
    %4414 = vmatpush1.bf16.msra.mxu0 0
    %4415 = vmatprep.subr.bf16.mxu0 0
    %4416 = vmatpush1.bf16.msra.mxu0 0
    %4417 = vmatprep.subr.bf16.mxu0 0
    %4418 = vmatpush1.bf16.msra.mxu0 0
    %4419 = vmatprep.subr.bf16.mxu0 0
    %4420 = vmatpush1.bf16.msra.mxu0 0
    %4421 = vmatprep.subr.bf16.mxu0 0
    %4422 = vmatpush1.bf16.msra.mxu0 0
    %4423 = vmatprep.subr.bf16.mxu0 0
    %4424 = vmatpush1.bf16.msra.mxu0 0
    %4425 = vmatprep.subr.bf16.mxu0 0
    %4426 = vmatpush1.bf16.msra.mxu0 0
    %4427 = vmatprep.subr.bf16.mxu0 0
    %4428 = vmatpush1.bf16.msra.mxu0 0
    %4429 = vmatprep.mubr.bf16.mxu0 0
    %4430 = vmatmul.mubr.bf16.gmra.mrb[0].mxu0 %v4395
    %v4431 = vpop.f32.mrb[0].mxu0
    %v4432 = vadd.f32 0.0, %v4431
    %v4433 = vpop.f32.mrb[0].mxu0
    %v4434 = vpop.f32.mrb[0].mxu0
    %v4435 = vadd.f32 0.0, %v4434
    %v4436 = vpop.f32.mrb[0].mxu0
    %4437 = vdwg.mxu0
    %s4438 = scalar_lea.vmem %s11, 24
    %v4439 = vld [vmem:[%s4438] sm:$0xf]
    %v4440 = vld [vmem:[%s4438 + $0x4] sm:$0xf]
    %v4443 = vunpack.c.l.b16 %v4439
    %v4444 = vunpack.c.l.b16 %v4440
    %v4445 = vpack.c.b16 %v4444, %v4443
    %v4447 = vsel %vm2039, %v4445, 0
    %4449 = vmatprep.subr.bf16.mxu0 0
    %4450 = vmatpush1.bf16.msra.mxu0 %v4281
    %4451 = vmatprep.subr.bf16.mxu0 0
    %4452 = vmatpush1.bf16.msra.mxu0 0
    %4453 = vmatprep.subr.bf16.mxu0 0
    %4454 = vmatpush1.bf16.msra.mxu0 0
    %4455 = vmatprep.subr.bf16.mxu0 0
    %4456 = vmatpush1.bf16.msra.mxu0 0
    %4457 = vmatprep.subr.bf16.mxu0 0
    %4458 = vmatpush1.bf16.msra.mxu0 0
    %4459 = vmatprep.subr.bf16.mxu0 0
    %4460 = vmatpush1.bf16.msra.mxu0 0
    %4461 = vmatprep.subr.bf16.mxu0 0
    %4462 = vmatpush1.bf16.msra.mxu0 0
    %4463 = vmatprep.subr.bf16.mxu0 0
    %4464 = vmatpush1.bf16.msra.mxu0 0
    %4465 = vmatprep.subr.bf16.mxu0 0
    %4466 = vmatpush1.bf16.msra.mxu0 0
    %4467 = vmatprep.subr.bf16.mxu0 0
    %4468 = vmatpush1.bf16.msra.mxu0 0
    %4469 = vmatprep.subr.bf16.mxu0 0
    %4470 = vmatpush1.bf16.msra.mxu0 0
    %4471 = vmatprep.subr.bf16.mxu0 0
    %4472 = vmatpush1.bf16.msra.mxu0 0
    %4473 = vmatprep.subr.bf16.mxu0 0
    %4474 = vmatpush1.bf16.msra.mxu0 0
    %4475 = vmatprep.subr.bf16.mxu0 0
    %4476 = vmatpush1.bf16.msra.mxu0 0
    %4477 = vmatprep.subr.bf16.mxu0 0
    %4478 = vmatpush1.bf16.msra.mxu0 0
    %4479 = vmatprep.subr.bf16.mxu0 0
    %4480 = vmatpush1.bf16.msra.mxu0 0
    %4481 = vmatprep.mubr.bf16.mxu0 0
    %4482 = vmatmul.mubr.bf16.gmra.mrb[0].mxu0 %v4447
    %v4483 = vpop.f32.mrb[0].mxu0
    %v4484 = vadd.f32 0.0, %v4483
    %v4485 = vpop.f32.mrb[0].mxu0
    %v4486 = vpop.f32.mrb[0].mxu0
    %v4487 = vadd.f32 0.0, %v4486
    %v4488 = vpop.f32.mrb[0].mxu0
    %4489 = vdwg.mxu0
    %s4490 = scalar_lea.vmem %s11, 32
    %v4491 = vld [vmem:[%s4490] sm:$0xf]
    %v4492 = vld [vmem:[%s4490 + $0x4] sm:$0xf]
    %v4495 = vunpack.c.l.b16 %v4491
    %v4496 = vunpack.c.l.b16 %v4492
    %v4497 = vpack.c.b16 %v4496, %v4495
    %v4499 = vsel %vm2039, %v4497, 0
    %4501 = vmatprep.subr.bf16.mxu0 0
    %4502 = vmatpush1.bf16.msra.mxu0 %v4281
    %4503 = vmatprep.subr.bf16.mxu0 0
    %4504 = vmatpush1.bf16.msra.mxu0 0
    %4505 = vmatprep.subr.bf16.mxu0 0
    %4506 = vmatpush1.bf16.msra.mxu0 0
    %4507 = vmatprep.subr.bf16.mxu0 0
    %4508 = vmatpush1.bf16.msra.mxu0 0
    %4509 = vmatprep.subr.bf16.mxu0 0
    %4510 = vmatpush1.bf16.msra.mxu0 0
    %4511 = vmatprep.subr.bf16.mxu0 0
    %4512 = vmatpush1.bf16.msra.mxu0 0
    %4513 = vmatprep.subr.bf16.mxu0 0
    %4514 = vmatpush1.bf16.msra.mxu0 0
    %4515 = vmatprep.subr.bf16.mxu0 0
    %4516 = vmatpush1.bf16.msra.mxu0 0
    %4517 = vmatprep.subr.bf16.mxu0 0
    %4518 = vmatpush1.bf16.msra.mxu0 0
    %4519 = vmatprep.subr.bf16.mxu0 0
    %4520 = vmatpush1.bf16.msra.mxu0 0
    %4521 = vmatprep.subr.bf16.mxu0 0
    %4522 = vmatpush1.bf16.msra.mxu0 0
    %4523 = vmatprep.subr.bf16.mxu0 0
    %4524 = vmatpush1.bf16.msra.mxu0 0
    %4525 = vmatprep.subr.bf16.mxu0 0
    %4526 = vmatpush1.bf16.msra.mxu0 0
    %4527 = vmatprep.subr.bf16.mxu0 0
    %4528 = vmatpush1.bf16.msra.mxu0 0
    %4529 = vmatprep.subr.bf16.mxu0 0
    %4530 = vmatpush1.bf16.msra.mxu0 0
    %4531 = vmatprep.subr.bf16.mxu0 0
    %4532 = vmatpush1.bf16.msra.mxu0 0
    %4533 = vmatprep.mubr.bf16.mxu0 0
    %4534 = vmatmul.mubr.bf16.gmra.mrb[0].mxu0 %v4499
    %v4535 = vpop.f32.mrb[0].mxu0
    %v4536 = vadd.f32 0.0, %v4535
    %v4537 = vpop.f32.mrb[0].mxu0
    %v4538 = vpop.f32.mrb[0].mxu0
    %v4539 = vadd.f32 0.0, %v4538
    %v4540 = vpop.f32.mrb[0].mxu0
    %4541 = vdwg.mxu0
    %s4542 = scalar_lea.vmem %s11, 40
    %v4543 = vld [vmem:[%s4542] sm:$0xf]
    %v4544 = vld [vmem:[%s4542 + $0x4] sm:$0xf]
    %v4547 = vunpack.c.l.b16 %v4543
    %v4548 = vunpack.c.l.b16 %v4544
    %v4549 = vpack.c.b16 %v4548, %v4547
    %v4551 = vsel %vm2039, %v4549, 0
    %4553 = vmatprep.subr.bf16.mxu0 0
    %4554 = vmatpush1.bf16.msra.mxu0 %v4281
    %4555 = vmatprep.subr.bf16.mxu0 0
    %4556 = vmatpush1.bf16.msra.mxu0 0
    %4557 = vmatprep.subr.bf16.mxu0 0
    %4558 = vmatpush1.bf16.msra.mxu0 0
    %4559 = vmatprep.subr.bf16.mxu0 0
    %4560 = vmatpush1.bf16.msra.mxu0 0
    %4561 = vmatprep.subr.bf16.mxu0 0
    %4562 = vmatpush1.bf16.msra.mxu0 0
    %4563 = vmatprep.subr.bf16.mxu0 0
    %4564 = vmatpush1.bf16.msra.mxu0 0
    %4565 = vmatprep.subr.bf16.mxu0 0
    %4566 = vmatpush1.bf16.msra.mxu0 0
    %4567 = vmatprep.subr.bf16.mxu0 0
    %4568 = vmatpush1.bf16.msra.mxu0 0
    %4569 = vmatprep.subr.bf16.mxu0 0
    %4570 = vmatpush1.bf16.msra.mxu0 0
    %4571 = vmatprep.subr.bf16.mxu0 0
    %4572 = vmatpush1.bf16.msra.mxu0 0
    %4573 = vmatprep.subr.bf16.mxu0 0
    %4574 = vmatpush1.bf16.msra.mxu0 0
    %4575 = vmatprep.subr.bf16.mxu0 0
    %4576 = vmatpush1.bf16.msra.mxu0 0
    %4577 = vmatprep.subr.bf16.mxu0 0
    %4578 = vmatpush1.bf16.msra.mxu0 0
    %4579 = vmatprep.subr.bf16.mxu0 0
    %4580 = vmatpush1.bf16.msra.mxu0 0
    %4581 = vmatprep.subr.bf16.mxu0 0
    %4582 = vmatpush1.bf16.msra.mxu0 0
    %4583 = vmatprep.subr.bf16.mxu0 0
    %4584 = vmatpush1.bf16.msra.mxu0 0
    %4585 = vmatprep.mubr.bf16.mxu0 0
    %4586 = vmatmul.mubr.bf16.gmra.mrb[0].mxu0 %v4551
    %v4587 = vpop.f32.mrb[0].mxu0
    %v4588 = vadd.f32 0.0, %v4587
    %v4589 = vpop.f32.mrb[0].mxu0
    %v4590 = vpop.f32.mrb[0].mxu0
    %v4591 = vadd.f32 0.0, %v4590
    %v4592 = vpop.f32.mrb[0].mxu0
    %4593 = vdwg.mxu0
    %s4594 = scalar_lea.vmem %s11, 48
    %v4595 = vld [vmem:[%s4594] sm:$0xf]
    %v4596 = vld [vmem:[%s4594 + $0x4] sm:$0xf]
    %v4599 = vunpack.c.l.b16 %v4595
    %v4600 = vunpack.c.l.b16 %v4596
    %v4601 = vpack.c.b16 %v4600, %v4599
    %v4603 = vsel %vm2039, %v4601, 0
    %4605 = vmatprep.subr.bf16.mxu0 0
    %4606 = vmatpush1.bf16.msra.mxu0 %v4281
    %4607 = vmatprep.subr.bf16.mxu0 0
    %4608 = vmatpush1.bf16.msra.mxu0 0
    %4609 = vmatprep.subr.bf16.mxu0 0
    %4610 = vmatpush1.bf16.msra.mxu0 0
    %4611 = vmatprep.subr.bf16.mxu0 0
    %4612 = vmatpush1.bf16.msra.mxu0 0
    %4613 = vmatprep.subr.bf16.mxu0 0
    %4614 = vmatpush1.bf16.msra.mxu0 0
    %4615 = vmatprep.subr.bf16.mxu0 0
    %4616 = vmatpush1.bf16.msra.mxu0 0
    %4617 = vmatprep.subr.bf16.mxu0 0
    %4618 = vmatpush1.bf16.msra.mxu0 0
    %4619 = vmatprep.subr.bf16.mxu0 0
    %4620 = vmatpush1.bf16.msra.mxu0 0
    %4621 = vmatprep.subr.bf16.mxu0 0
    %4622 = vmatpush1.bf16.msra.mxu0 0
    %4623 = vmatprep.subr.bf16.mxu0 0
    %4624 = vmatpush1.bf16.msra.mxu0 0
    %4625 = vmatprep.subr.bf16.mxu0 0
    %4626 = vmatpush1.bf16.msra.mxu0 0
    %4627 = vmatprep.subr.bf16.mxu0 0
    %4628 = vmatpush1.bf16.msra.mxu0 0
    %4629 = vmatprep.subr.bf16.mxu0 0
    %4630 = vmatpush1.bf16.msra.mxu0 0
    %4631 = vmatprep.subr.bf16.mxu0 0
    %4632 = vmatpush1.bf16.msra.mxu0 0
    %4633 = vmatprep.subr.bf16.mxu0 0
    %4634 = vmatpush1.bf16.msra.mxu0 0
    %4635 = vmatprep.subr.bf16.mxu0 0
    %4636 = vmatpush1.bf16.msra.mxu0 0
    %4637 = vmatprep.mubr.bf16.mxu0 0
    %4638 = vmatmul.mubr.bf16.gmra.mrb[0].mxu0 %v4603
    %v4639 = vpop.f32.mrb[0].mxu0
    %v4640 = vadd.f32 0.0, %v4639
    %v4641 = vpop.f32.mrb[0].mxu0
    %v4642 = vpop.f32.mrb[0].mxu0
    %v4643 = vadd.f32 0.0, %v4642
    %v4644 = vpop.f32.mrb[0].mxu0
    %4645 = vdwg.mxu0
    %s4646 = scalar_lea.vmem %s11, 56
    %v4647 = vld [vmem:[%s4646] sm:$0xf]
    %v4648 = vld [vmem:[%s4646 + $0x4] sm:$0xf]
    %v4651 = vunpack.c.l.b16 %v4647
    %v4652 = vunpack.c.l.b16 %v4648
    %v4653 = vpack.c.b16 %v4652, %v4651
    %v4655 = vsel %vm2039, %v4653, 0
    %4657 = vmatprep.subr.bf16.mxu0 0
    %4658 = vmatpush1.bf16.msra.mxu0 %v4281
    %4659 = vmatprep.subr.bf16.mxu0 0
    %4660 = vmatpush1.bf16.msra.mxu0 0
    %4661 = vmatprep.subr.bf16.mxu0 0
    %4662 = vmatpush1.bf16.msra.mxu0 0
    %4663 = vmatprep.subr.bf16.mxu0 0
    %4664 = vmatpush1.bf16.msra.mxu0 0
    %4665 = vmatprep.subr.bf16.mxu0 0
    %4666 = vmatpush1.bf16.msra.mxu0 0
    %4667 = vmatprep.subr.bf16.mxu0 0
    %4668 = vmatpush1.bf16.msra.mxu0 0
    %4669 = vmatprep.subr.bf16.mxu0 0
    %4670 = vmatpush1.bf16.msra.mxu0 0
    %4671 = vmatprep.subr.bf16.mxu0 0
    %4672 = vmatpush1.bf16.msra.mxu0 0
    %4673 = vmatprep.subr.bf16.mxu0 0
    %4674 = vmatpush1.bf16.msra.mxu0 0
    %4675 = vmatprep.subr.bf16.mxu0 0
    %4676 = vmatpush1.bf16.msra.mxu0 0
    %4677 = vmatprep.subr.bf16.mxu0 0
    %4678 = vmatpush1.bf16.msra.mxu0 0
    %4679 = vmatprep.subr.bf16.mxu0 0
    %4680 = vmatpush1.bf16.msra.mxu0 0
    %4681 = vmatprep.subr.bf16.mxu0 0
    %4682 = vmatpush1.bf16.msra.mxu0 0
    %4683 = vmatprep.subr.bf16.mxu0 0
    %4684 = vmatpush1.bf16.msra.mxu0 0
    %4685 = vmatprep.subr.bf16.mxu0 0
    %4686 = vmatpush1.bf16.msra.mxu0 0
    %4687 = vmatprep.subr.bf16.mxu0 0
    %4688 = vmatpush1.bf16.msra.mxu0 0
    %4689 = vmatprep.mubr.bf16.mxu0 0
    %4690 = vmatmul.mubr.bf16.gmra.mrb[0].mxu0 %v4655
    %v4691 = vpop.f32.mrb[0].mxu0
    %v4692 = vadd.f32 0.0, %v4691
    %v4693 = vpop.f32.mrb[0].mxu0
    %v4694 = vpop.f32.mrb[0].mxu0
    %v4695 = vadd.f32 0.0, %v4694
    %v4696 = vpop.f32.mrb[0].mxu0
    %4697 = vdwg.mxu0
    %s4698 = scalar_lea.vmem %s11, 64
    %v4699 = vld [vmem:[%s4698] sm:$0xf]
    %v4700 = vld [vmem:[%s4698 + $0x4] sm:$0xf]
    %v4703 = vunpack.c.l.b16 %v4699
    %v4704 = vunpack.c.l.b16 %v4700
    %v4705 = vpack.c.b16 %v4704, %v4703
    %v4707 = vsel %vm2039, %v4705, 0
    %4709 = vmatprep.subr.bf16.mxu0 0
    %4710 = vmatpush1.bf16.msra.mxu0 %v4281
    %4711 = vmatprep.subr.bf16.mxu0 0
    %4712 = vmatpush1.bf16.msra.mxu0 0
    %4713 = vmatprep.subr.bf16.mxu0 0
    %4714 = vmatpush1.bf16.msra.mxu0 0
    %4715 = vmatprep.subr.bf16.mxu0 0
    %4716 = vmatpush1.bf16.msra.mxu0 0
    %4717 = vmatprep.subr.bf16.mxu0 0
    %4718 = vmatpush1.bf16.msra.mxu0 0
    %4719 = vmatprep.subr.bf16.mxu0 0
    %4720 = vmatpush1.bf16.msra.mxu0 0
    %4721 = vmatprep.subr.bf16.mxu0 0
    %4722 = vmatpush1.bf16.msra.mxu0 0
    %4723 = vmatprep.subr.bf16.mxu0 0
    %4724 = vmatpush1.bf16.msra.mxu0 0
    %4725 = vmatprep.subr.bf16.mxu0 0
    %4726 = vmatpush1.bf16.msra.mxu0 0
    %4727 = vmatprep.subr.bf16.mxu0 0
    %4728 = vmatpush1.bf16.msra.mxu0 0
    %4729 = vmatprep.subr.bf16.mxu0 0
    %4730 = vmatpush1.bf16.msra.mxu0 0
    %4731 = vmatprep.subr.bf16.mxu0 0
    %4732 = vmatpush1.bf16.msra.mxu0 0
    %4733 = vmatprep.subr.bf16.mxu0 0
    %4734 = vmatpush1.bf16.msra.mxu0 0
    %4735 = vmatprep.subr.bf16.mxu0 0
    %4736 = vmatpush1.bf16.msra.mxu0 0
    %4737 = vmatprep.subr.bf16.mxu0 0
    %4738 = vmatpush1.bf16.msra.mxu0 0
    %4739 = vmatprep.subr.bf16.mxu0 0
    %4740 = vmatpush1.bf16.msra.mxu0 0
    %4741 = vmatprep.mubr.bf16.mxu0 0
    %4742 = vmatmul.mubr.bf16.gmra.mrb[0].mxu0 %v4707
    %v4743 = vpop.f32.mrb[0].mxu0
    %v4744 = vadd.f32 0.0, %v4743
    %v4745 = vpop.f32.mrb[0].mxu0
    %v4746 = vpop.f32.mrb[0].mxu0
    %v4747 = vadd.f32 0.0, %v4746
    %v4748 = vpop.f32.mrb[0].mxu0
    %4749 = vdwg.mxu0
    %4752 = vrot.lane.b32.xlu0 %v4380, 64
    %v4753 = vpop.permute.xlu0 %4752
    %4754 = vrot.lane.b32.xlu0 %v4383, 64
    %v4755 = vpop.permute.xlu0 %4754
    %4760 = vrot.lane.b32.xlu0 %v4484, 64
    %v4761 = vpop.permute.xlu0 %4760
    %4762 = vrot.lane.b32.xlu0 %v4487, 64
    %v4763 = vpop.permute.xlu0 %4762
    %4768 = vrot.lane.b32.xlu0 %v4588, 64
    %v4769 = vpop.permute.xlu0 %4768
    %4770 = vrot.lane.b32.xlu0 %v4591, 64
    %v4771 = vpop.permute.xlu0 %4770
    %4776 = vrot.lane.b32.xlu0 %v4692, 64
    %v4777 = vpop.permute.xlu0 %4776
    %4778 = vrot.lane.b32.xlu0 %v4695, 64
    %v4779 = vpop.permute.xlu0 %4778
    %v4782 = vsel %vm2066, %v4328, %v4753
    %v4783 = vsel %vm2066, %v4331, %v4755
    %v4784 = vsel %vm2066, %v4432, %v4761
    %v4785 = vsel %vm2066, %v4435, %v4763
    %v4786 = vsel %vm2066, %v4536, %v4769
    %v4787 = vsel %vm2066, %v4539, %v4771
    %v4788 = vsel %vm2066, %v4640, %v4777
    %v4789 = vsel %vm2066, %v4643, %v4779
    %4790 = vmatprep.subr.bf16.mxu0 0
    %4791 = vmatpush1.bf16.msra.mxu0 %v4282
    %4792 = vmatprep.subr.bf16.mxu0 0
    %4793 = vmatpush1.bf16.msra.mxu0 0
    %4794 = vmatprep.subr.bf16.mxu0 0
    %4795 = vmatpush1.bf16.msra.mxu0 0
    %4796 = vmatprep.subr.bf16.mxu0 0
    %4797 = vmatpush1.bf16.msra.mxu0 0
    %4798 = vmatprep.subr.bf16.mxu0 0
    %4799 = vmatpush1.bf16.msra.mxu0 0
    %4800 = vmatprep.subr.bf16.mxu0 0
    %4801 = vmatpush1.bf16.msra.mxu0 0
    %4802 = vmatprep.subr.bf16.mxu0 0
    %4803 = vmatpush1.bf16.msra.mxu0 0
    %4804 = vmatprep.subr.bf16.mxu0 0
    %4805 = vmatpush1.bf16.msra.mxu0 0
    %4806 = vmatprep.subr.bf16.mxu0 0
    %4807 = vmatpush1.bf16.msra.mxu0 0
    %4808 = vmatprep.subr.bf16.mxu0 0
    %4809 = vmatpush1.bf16.msra.mxu0 0
    %4810 = vmatprep.subr.bf16.mxu0 0
    %4811 = vmatpush1.bf16.msra.mxu0 0
    %4812 = vmatprep.subr.bf16.mxu0 0
    %4813 = vmatpush1.bf16.msra.mxu0 0
    %4814 = vmatprep.subr.bf16.mxu0 0
    %4815 = vmatpush1.bf16.msra.mxu0 0
    %4816 = vmatprep.subr.bf16.mxu0 0
    %4817 = vmatpush1.bf16.msra.mxu0 0
    %4818 = vmatprep.subr.bf16.mxu0 0
    %4819 = vmatpush1.bf16.msra.mxu0 0
    %4820 = vmatprep.subr.bf16.mxu0 0
    %4821 = vmatpush1.bf16.msra.mxu0 0
    %4822 = vmatprep.mubr.bf16.mxu0 0
    %4823 = vmatmul.mubr.bf16.gmra.mrb[0].mxu0 %v4291
    %v4824 = vpop.f32.mrb[0].mxu0
    %v4825 = vadd.f32 0.0, %v4824
    %v4826 = vpop.f32.mrb[0].mxu0
    %v4827 = vpop.f32.mrb[0].mxu0
    %v4828 = vadd.f32 0.0, %v4827
    %v4829 = vpop.f32.mrb[0].mxu0
    %4830 = vdwg.mxu0
    %4831 = vmatprep.subr.bf16.mxu0 0
    %4832 = vmatpush1.bf16.msra.mxu0 %v4282
    %4833 = vmatprep.subr.bf16.mxu0 0
    %4834 = vmatpush1.bf16.msra.mxu0 0
    %4835 = vmatprep.subr.bf16.mxu0 0
    %4836 = vmatpush1.bf16.msra.mxu0 0
    %4837 = vmatprep.subr.bf16.mxu0 0
    %4838 = vmatpush1.bf16.msra.mxu0 0
    %4839 = vmatprep.subr.bf16.mxu0 0
    %4840 = vmatpush1.bf16.msra.mxu0 0
    %4841 = vmatprep.subr.bf16.mxu0 0
    %4842 = vmatpush1.bf16.msra.mxu0 0
    %4843 = vmatprep.subr.bf16.mxu0 0
    %4844 = vmatpush1.bf16.msra.mxu0 0
    %4845 = vmatprep.subr.bf16.mxu0 0
    %4846 = vmatpush1.bf16.msra.mxu0 0
    %4847 = vmatprep.subr.bf16.mxu0 0
    %4848 = vmatpush1.bf16.msra.mxu0 0
    %4849 = vmatprep.subr.bf16.mxu0 0
    %4850 = vmatpush1.bf16.msra.mxu0 0
    %4851 = vmatprep.subr.bf16.mxu0 0
    %4852 = vmatpush1.bf16.msra.mxu0 0
    %4853 = vmatprep.subr.bf16.mxu0 0
    %4854 = vmatpush1.bf16.msra.mxu0 0
    %4855 = vmatprep.subr.bf16.mxu0 0
    %4856 = vmatpush1.bf16.msra.mxu0 0
    %4857 = vmatprep.subr.bf16.mxu0 0
    %4858 = vmatpush1.bf16.msra.mxu0 0
    %4859 = vmatprep.subr.bf16.mxu0 0
    %4860 = vmatpush1.bf16.msra.mxu0 0
    %4861 = vmatprep.subr.bf16.mxu0 0
    %4862 = vmatpush1.bf16.msra.mxu0 0
    %4863 = vmatprep.mubr.bf16.mxu0 0
    %4864 = vmatmul.mubr.bf16.gmra.mrb[0].mxu0 %v4343
    %v4865 = vpop.f32.mrb[0].mxu0
    %v4866 = vadd.f32 0.0, %v4865
    %v4867 = vpop.f32.mrb[0].mxu0
    %v4868 = vpop.f32.mrb[0].mxu0
    %v4869 = vadd.f32 0.0, %v4868
    %v4870 = vpop.f32.mrb[0].mxu0
    %4871 = vdwg.mxu0
    %4872 = vmatprep.subr.bf16.mxu0 0
    %4873 = vmatpush1.bf16.msra.mxu0 %v4282
    %4874 = vmatprep.subr.bf16.mxu0 0
    %4875 = vmatpush1.bf16.msra.mxu0 0
    %4876 = vmatprep.subr.bf16.mxu0 0
    %4877 = vmatpush1.bf16.msra.mxu0 0
    %4878 = vmatprep.subr.bf16.mxu0 0
    %4879 = vmatpush1.bf16.msra.mxu0 0
    %4880 = vmatprep.subr.bf16.mxu0 0
    %4881 = vmatpush1.bf16.msra.mxu0 0
    %4882 = vmatprep.subr.bf16.mxu0 0
    %4883 = vmatpush1.bf16.msra.mxu0 0
    %4884 = vmatprep.subr.bf16.mxu0 0
    %4885 = vmatpush1.bf16.msra.mxu0 0
    %4886 = vmatprep.subr.bf16.mxu0 0
    %4887 = vmatpush1.bf16.msra.mxu0 0
    %4888 = vmatprep.subr.bf16.mxu0 0
    %4889 = vmatpush1.bf16.msra.mxu0 0
    %4890 = vmatprep.subr.bf16.mxu0 0
    %4891 = vmatpush1.bf16.msra.mxu0 0
    %4892 = vmatprep.subr.bf16.mxu0 0
    %4893 = vmatpush1.bf16.msra.mxu0 0
    %4894 = vmatprep.subr.bf16.mxu0 0
    %4895 = vmatpush1.bf16.msra.mxu0 0
    %4896 = vmatprep.subr.bf16.mxu0 0
    %4897 = vmatpush1.bf16.msra.mxu0 0
    %4898 = vmatprep.subr.bf16.mxu0 0
    %4899 = vmatpush1.bf16.msra.mxu0 0
    %4900 = vmatprep.subr.bf16.mxu0 0
    %4901 = vmatpush1.bf16.msra.mxu0 0
    %4902 = vmatprep.subr.bf16.mxu0 0
    %4903 = vmatpush1.bf16.msra.mxu0 0
    %4904 = vmatprep.mubr.bf16.mxu0 0
    %4905 = vmatmul.mubr.bf16.gmra.mrb[0].mxu0 %v4395
    %v4906 = vpop.f32.mrb[0].mxu0
    %v4907 = vadd.f32 0.0, %v4906
    %v4908 = vpop.f32.mrb[0].mxu0
    %v4909 = vpop.f32.mrb[0].mxu0
    %v4910 = vadd.f32 0.0, %v4909
    %v4911 = vpop.f32.mrb[0].mxu0
    %4912 = vdwg.mxu0
    %4913 = vmatprep.subr.bf16.mxu0 0
    %4914 = vmatpush1.bf16.msra.mxu0 %v4282
    %4915 = vmatprep.subr.bf16.mxu0 0
    %4916 = vmatpush1.bf16.msra.mxu0 0
    %4917 = vmatprep.subr.bf16.mxu0 0
    %4918 = vmatpush1.bf16.msra.mxu0 0
    %4919 = vmatprep.subr.bf16.mxu0 0
    %4920 = vmatpush1.bf16.msra.mxu0 0
    %4921 = vmatprep.subr.bf16.mxu0 0
    %4922 = vmatpush1.bf16.msra.mxu0 0
    %4923 = vmatprep.subr.bf16.mxu0 0
    %4924 = vmatpush1.bf16.msra.mxu0 0
    %4925 = vmatprep.subr.bf16.mxu0 0
    %4926 = vmatpush1.bf16.msra.mxu0 0
    %4927 = vmatprep.subr.bf16.mxu0 0
    %4928 = vmatpush1.bf16.msra.mxu0 0
    %4929 = vmatprep.subr.bf16.mxu0 0
    %4930 = vmatpush1.bf16.msra.mxu0 0
    %4931 = vmatprep.subr.bf16.mxu0 0
    %4932 = vmatpush1.bf16.msra.mxu0 0
    %4933 = vmatprep.subr.bf16.mxu0 0
    %4934 = vmatpush1.bf16.msra.mxu0 0
    %4935 = vmatprep.subr.bf16.mxu0 0
    %4936 = vmatpush1.bf16.msra.mxu0 0
    %4937 = vmatprep.subr.bf16.mxu0 0
    %4938 = vmatpush1.bf16.msra.mxu0 0
    %4939 = vmatprep.subr.bf16.mxu0 0
    %4940 = vmatpush1.bf16.msra.mxu0 0
    %4941 = vmatprep.subr.bf16.mxu0 0
    %4942 = vmatpush1.bf16.msra.mxu0 0
    %4943 = vmatprep.subr.bf16.mxu0 0
    %4944 = vmatpush1.bf16.msra.mxu0 0
    %4945 = vmatprep.mubr.bf16.mxu0 0
    %4946 = vmatmul.mubr.bf16.gmra.mrb[0].mxu0 %v4447
    %v4947 = vpop.f32.mrb[0].mxu0
    %v4948 = vadd.f32 0.0, %v4947
    %v4949 = vpop.f32.mrb[0].mxu0
    %v4950 = vpop.f32.mrb[0].mxu0
    %v4951 = vadd.f32 0.0, %v4950
    %v4952 = vpop.f32.mrb[0].mxu0
    %4953 = vdwg.mxu0
    %4954 = vmatprep.subr.bf16.mxu0 0
    %4955 = vmatpush1.bf16.msra.mxu0 %v4282
    %4956 = vmatprep.subr.bf16.mxu0 0
    %4957 = vmatpush1.bf16.msra.mxu0 0
    %4958 = vmatprep.subr.bf16.mxu0 0
    %4959 = vmatpush1.bf16.msra.mxu0 0
    %4960 = vmatprep.subr.bf16.mxu0 0
    %4961 = vmatpush1.bf16.msra.mxu0 0
    %4962 = vmatprep.subr.bf16.mxu0 0
    %4963 = vmatpush1.bf16.msra.mxu0 0
    %4964 = vmatprep.subr.bf16.mxu0 0
    %4965 = vmatpush1.bf16.msra.mxu0 0
    %4966 = vmatprep.subr.bf16.mxu0 0
    %4967 = vmatpush1.bf16.msra.mxu0 0
    %4968 = vmatprep.subr.bf16.mxu0 0
    %4969 = vmatpush1.bf16.msra.mxu0 0
    %4970 = vmatprep.subr.bf16.mxu0 0
    %4971 = vmatpush1.bf16.msra.mxu0 0
    %4972 = vmatprep.subr.bf16.mxu0 0
    %4973 = vmatpush1.bf16.msra.mxu0 0
    %4974 = vmatprep.subr.bf16.mxu0 0
    %4975 = vmatpush1.bf16.msra.mxu0 0
    %4976 = vmatprep.subr.bf16.mxu0 0
    %4977 = vmatpush1.bf16.msra.mxu0 0
    %4978 = vmatprep.subr.bf16.mxu0 0
    %4979 = vmatpush1.bf16.msra.mxu0 0
    %4980 = vmatprep.subr.bf16.mxu0 0
    %4981 = vmatpush1.bf16.msra.mxu0 0
    %4982 = vmatprep.subr.bf16.mxu0 0
    %4983 = vmatpush1.bf16.msra.mxu0 0
    %4984 = vmatprep.subr.bf16.mxu0 0
    %4985 = vmatpush1.bf16.msra.mxu0 0
    %4986 = vmatprep.mubr.bf16.mxu0 0
    %4987 = vmatmul.mubr.bf16.gmra.mrb[0].mxu0 %v4499
    %v4988 = vpop.f32.mrb[0].mxu0
    %v4989 = vadd.f32 0.0, %v4988
    %v4990 = vpop.f32.mrb[0].mxu0
    %v4991 = vpop.f32.mrb[0].mxu0
    %v4992 = vadd.f32 0.0, %v4991
    %v4993 = vpop.f32.mrb[0].mxu0
    %4994 = vdwg.mxu0
    %4995 = vmatprep.subr.bf16.mxu0 0
    %4996 = vmatpush1.bf16.msra.mxu0 %v4282
    %4997 = vmatprep.subr.bf16.mxu0 0
    %4998 = vmatpush1.bf16.msra.mxu0 0
    %4999 = vmatprep.subr.bf16.mxu0 0
    %5000 = vmatpush1.bf16.msra.mxu0 0
    %5001 = vmatprep.subr.bf16.mxu0 0
    %5002 = vmatpush1.bf16.msra.mxu0 0
    %5003 = vmatprep.subr.bf16.mxu0 0
    %5004 = vmatpush1.bf16.msra.mxu0 0
    %5005 = vmatprep.subr.bf16.mxu0 0
    %5006 = vmatpush1.bf16.msra.mxu0 0
    %5007 = vmatprep.subr.bf16.mxu0 0
    %5008 = vmatpush1.bf16.msra.mxu0 0
    %5009 = vmatprep.subr.bf16.mxu0 0
    %5010 = vmatpush1.bf16.msra.mxu0 0
    %5011 = vmatprep.subr.bf16.mxu0 0
    %5012 = vmatpush1.bf16.msra.mxu0 0
    %5013 = vmatprep.subr.bf16.mxu0 0
    %5014 = vmatpush1.bf16.msra.mxu0 0
    %5015 = vmatprep.subr.bf16.mxu0 0
    %5016 = vmatpush1.bf16.msra.mxu0 0
    %5017 = vmatprep.subr.bf16.mxu0 0
    %5018 = vmatpush1.bf16.msra.mxu0 0
    %5019 = vmatprep.subr.bf16.mxu0 0
    %5020 = vmatpush1.bf16.msra.mxu0 0
    %5021 = vmatprep.subr.bf16.mxu0 0
    %5022 = vmatpush1.bf16.msra.mxu0 0
    %5023 = vmatprep.subr.bf16.mxu0 0
    %5024 = vmatpush1.bf16.msra.mxu0 0
    %5025 = vmatprep.subr.bf16.mxu0 0
    %5026 = vmatpush1.bf16.msra.mxu0 0
    %5027 = vmatprep.mubr.bf16.mxu0 0
    %5028 = vmatmul.mubr.bf16.gmra.mrb[0].mxu0 %v4551
    %v5029 = vpop.f32.mrb[0].mxu0
    %v5030 = vadd.f32 0.0, %v5029
    %v5031 = vpop.f32.mrb[0].mxu0
    %v5032 = vpop.f32.mrb[0].mxu0
    %v5033 = vadd.f32 0.0, %v5032
    %v5034 = vpop.f32.mrb[0].mxu0
    %5035 = vdwg.mxu0
    %5036 = vmatprep.subr.bf16.mxu0 0
    %5037 = vmatpush1.bf16.msra.mxu0 %v4282
    %5038 = vmatprep.subr.bf16.mxu0 0
    %5039 = vmatpush1.bf16.msra.mxu0 0
    %5040 = vmatprep.subr.bf16.mxu0 0
    %5041 = vmatpush1.bf16.msra.mxu0 0
    %5042 = vmatprep.subr.bf16.mxu0 0
    %5043 = vmatpush1.bf16.msra.mxu0 0
    %5044 = vmatprep.subr.bf16.mxu0 0
    %5045 = vmatpush1.bf16.msra.mxu0 0
    %5046 = vmatprep.subr.bf16.mxu0 0
    %5047 = vmatpush1.bf16.msra.mxu0 0
    %5048 = vmatprep.subr.bf16.mxu0 0
    %5049 = vmatpush1.bf16.msra.mxu0 0
    %5050 = vmatprep.subr.bf16.mxu0 0
    %5051 = vmatpush1.bf16.msra.mxu0 0
    %5052 = vmatprep.subr.bf16.mxu0 0
    %5053 = vmatpush1.bf16.msra.mxu0 0
    %5054 = vmatprep.subr.bf16.mxu0 0
    %5055 = vmatpush1.bf16.msra.mxu0 0
    %5056 = vmatprep.subr.bf16.mxu0 0
    %5057 = vmatpush1.bf16.msra.mxu0 0
    %5058 = vmatprep.subr.bf16.mxu0 0
    %5059 = vmatpush1.bf16.msra.mxu0 0
    %5060 = vmatprep.subr.bf16.mxu0 0
    %5061 = vmatpush1.bf16.msra.mxu0 0
    %5062 = vmatprep.subr.bf16.mxu0 0
    %5063 = vmatpush1.bf16.msra.mxu0 0
    %5064 = vmatprep.subr.bf16.mxu0 0
    %5065 = vmatpush1.bf16.msra.mxu0 0
    %5066 = vmatprep.subr.bf16.mxu0 0
    %5067 = vmatpush1.bf16.msra.mxu0 0
    %5068 = vmatprep.mubr.bf16.mxu0 0
    %5069 = vmatmul.mubr.bf16.gmra.mrb[0].mxu0 %v4603
    %v5070 = vpop.f32.mrb[0].mxu0
    %v5071 = vadd.f32 0.0, %v5070
    %v5072 = vpop.f32.mrb[0].mxu0
    %v5073 = vpop.f32.mrb[0].mxu0
    %v5074 = vadd.f32 0.0, %v5073
    %v5075 = vpop.f32.mrb[0].mxu0
    %5076 = vdwg.mxu0
    %5077 = vmatprep.subr.bf16.mxu0 0
    %5078 = vmatpush1.bf16.msra.mxu0 %v4282
    %5079 = vmatprep.subr.bf16.mxu0 0
    %5080 = vmatpush1.bf16.msra.mxu0 0
    %5081 = vmatprep.subr.bf16.mxu0 0
    %5082 = vmatpush1.bf16.msra.mxu0 0
    %5083 = vmatprep.subr.bf16.mxu0 0
    %5084 = vmatpush1.bf16.msra.mxu0 0
    %5085 = vmatprep.subr.bf16.mxu0 0
    %5086 = vmatpush1.bf16.msra.mxu0 0
    %5087 = vmatprep.subr.bf16.mxu0 0
    %5088 = vmatpush1.bf16.msra.mxu0 0
    %5089 = vmatprep.subr.bf16.mxu0 0
    %5090 = vmatpush1.bf16.msra.mxu0 0
    %5091 = vmatprep.subr.bf16.mxu0 0
    %5092 = vmatpush1.bf16.msra.mxu0 0
    %5093 = vmatprep.subr.bf16.mxu0 0
    %5094 = vmatpush1.bf16.msra.mxu0 0
    %5095 = vmatprep.subr.bf16.mxu0 0
    %5096 = vmatpush1.bf16.msra.mxu0 0
    %5097 = vmatprep.subr.bf16.mxu0 0
    %5098 = vmatpush1.bf16.msra.mxu0 0
    %5099 = vmatprep.subr.bf16.mxu0 0
    %5100 = vmatpush1.bf16.msra.mxu0 0
    %5101 = vmatprep.subr.bf16.mxu0 0
    %5102 = vmatpush1.bf16.msra.mxu0 0
    %5103 = vmatprep.subr.bf16.mxu0 0
    %5104 = vmatpush1.bf16.msra.mxu0 0
    %5105 = vmatprep.subr.bf16.mxu0 0
    %5106 = vmatpush1.bf16.msra.mxu0 0
    %5107 = vmatprep.subr.bf16.mxu0 0
    %5108 = vmatpush1.bf16.msra.mxu0 0
    %5109 = vmatprep.mubr.bf16.mxu0 0
    %5110 = vmatmul.mubr.bf16.gmra.mrb[0].mxu0 %v4655
    %v5111 = vpop.f32.mrb[0].mxu0
    %v5112 = vadd.f32 0.0, %v5111
    %v5113 = vpop.f32.mrb[0].mxu0
    %v5114 = vpop.f32.mrb[0].mxu0
    %v5115 = vadd.f32 0.0, %v5114
    %v5116 = vpop.f32.mrb[0].mxu0
    %5117 = vdwg.mxu0
    %5118 = vmatprep.subr.bf16.mxu0 0
    %5119 = vmatpush1.bf16.msra.mxu0 %v4282
    %5120 = vmatprep.subr.bf16.mxu0 0
    %5121 = vmatpush1.bf16.msra.mxu0 0
    %5122 = vmatprep.subr.bf16.mxu0 0
    %5123 = vmatpush1.bf16.msra.mxu0 0
    %5124 = vmatprep.subr.bf16.mxu0 0
    %5125 = vmatpush1.bf16.msra.mxu0 0
    %5126 = vmatprep.subr.bf16.mxu0 0
    %5127 = vmatpush1.bf16.msra.mxu0 0
    %5128 = vmatprep.subr.bf16.mxu0 0
    %5129 = vmatpush1.bf16.msra.mxu0 0
    %5130 = vmatprep.subr.bf16.mxu0 0
    %5131 = vmatpush1.bf16.msra.mxu0 0
    %5132 = vmatprep.subr.bf16.mxu0 0
    %5133 = vmatpush1.bf16.msra.mxu0 0
    %5134 = vmatprep.subr.bf16.mxu0 0
    %5135 = vmatpush1.bf16.msra.mxu0 0
    %5136 = vmatprep.subr.bf16.mxu0 0
    %5137 = vmatpush1.bf16.msra.mxu0 0
    %5138 = vmatprep.subr.bf16.mxu0 0
    %5139 = vmatpush1.bf16.msra.mxu0 0
    %5140 = vmatprep.subr.bf16.mxu0 0
    %5141 = vmatpush1.bf16.msra.mxu0 0
    %5142 = vmatprep.subr.bf16.mxu0 0
    %5143 = vmatpush1.bf16.msra.mxu0 0
    %5144 = vmatprep.subr.bf16.mxu0 0
    %5145 = vmatpush1.bf16.msra.mxu0 0
    %5146 = vmatprep.subr.bf16.mxu0 0
    %5147 = vmatpush1.bf16.msra.mxu0 0
    %5148 = vmatprep.subr.bf16.mxu0 0
    %5149 = vmatpush1.bf16.msra.mxu0 0
    %5150 = vmatprep.mubr.bf16.mxu0 0
    %5151 = vmatmul.mubr.bf16.gmra.mrb[0].mxu0 %v4707
    %v5152 = vpop.f32.mrb[0].mxu0
    %v5153 = vadd.f32 0.0, %v5152
    %v5154 = vpop.f32.mrb[0].mxu0
    %v5155 = vpop.f32.mrb[0].mxu0
    %v5156 = vadd.f32 0.0, %v5155
    %v5157 = vpop.f32.mrb[0].mxu0
    %5158 = vdwg.mxu0
    %5161 = vrot.lane.b32.xlu0 %v4866, 64
    %v5162 = vpop.permute.xlu0 %5161
    %5163 = vrot.lane.b32.xlu0 %v4869, 64
    %v5164 = vpop.permute.xlu0 %5163
    %5169 = vrot.lane.b32.xlu0 %v4948, 64
    %v5170 = vpop.permute.xlu0 %5169
    %5171 = vrot.lane.b32.xlu0 %v4951, 64
    %v5172 = vpop.permute.xlu0 %5171
    %5177 = vrot.lane.b32.xlu0 %v5030, 64
    %v5178 = vpop.permute.xlu0 %5177
    %5179 = vrot.lane.b32.xlu0 %v5033, 64
    %v5180 = vpop.permute.xlu0 %5179
    %5185 = vrot.lane.b32.xlu0 %v5112, 64
    %v5186 = vpop.permute.xlu0 %5185
    %5187 = vrot.lane.b32.xlu0 %v5115, 64
    %v5188 = vpop.permute.xlu0 %5187
    %v5191 = vsel %vm2066, %v4825, %v5162
    %v5192 = vsel %vm2066, %v4828, %v5164
    %v5193 = vsel %vm2066, %v4907, %v5170
    %v5194 = vsel %vm2066, %v4910, %v5172
    %v5195 = vsel %vm2066, %v4989, %v5178
    %v5196 = vsel %vm2066, %v4992, %v5180
    %v5197 = vsel %vm2066, %v5071, %v5186
    %v5198 = vsel %vm2066, %v5074, %v5188
    %v5199 = vpack.c.bf16 %v4783, %v4782
    %v5200 = vpack.c.bf16 %v4785, %v4784
    %v5201 = vpack.c.bf16 %v4787, %v4786
    %v5202 = vpack.c.bf16 %v4789, %v4788
    %v5203 = vpack.c.bf16 %v4747, %v4744
    %v5204 = vpack.c.bf16 %v5192, %v5191
    %v5205 = vpack.c.bf16 %v5194, %v5193
    %v5206 = vpack.c.bf16 %v5196, %v5195
    %v5207 = vpack.c.bf16 %v5198, %v5197
    %v5208 = vpack.c.bf16 %v5156, %v5153
    %v5209 = vld [vmem:[%s12] sm:$0xf]
    %v5210 = vld [vmem:[%s12 + $0x4] sm:$0xf]
    %v5211 = vld [vmem:[%s12 + $0x8] sm:$0xf]
    %v5212 = vld [vmem:[%s12 + $0xc] sm:$0xf]
    %v5213 = vld [vmem:[%s12 + $0x10] sm:$0xf]
    %v5214 = vld [vmem:[%s12 + $0x14] sm:$0xf]
    %v5215 = vld [vmem:[%s12 + $0x18] sm:$0xf]
    %v5216 = vld [vmem:[%s12 + $0x1c] sm:$0xf]
    %v5217 = vld [vmem:[%s12 + $0x20] sm:$0xf]
    %v5218 = vld [vmem:[%s12 + $0x24] sm:$0xf]
    %v5219 = vld [vmem:[%s12 + $0x28] sm:$0xf]
    %v5220 = vld [vmem:[%s12 + $0x2c] sm:$0xf]
    %v5221 = vld [vmem:[%s12 + $0x30] sm:$0xf]
    %v5222 = vld [vmem:[%s12 + $0x34] sm:$0xf]
    %v5223 = vld [vmem:[%s12 + $0x38] sm:$0xf]
    %v5224 = vld [vmem:[%s12 + $0x3c] sm:$0xf]
    %v5225 = vld [vmem:[%s12 + $0x40] sm:$0xf]
    %v5226 = vld [vmem:[%s12 + $0x44] sm:$0xf]
    %v5227 = vld [vmem:[%s12 + $0x48] sm:$0xf]
    %v5228 = vld [vmem:[%s12 + $0x4c] sm:$0xf]
    %v5229 = vld [vmem:[%s12 + $0x50] sm:$0xf]
    %v5230 = vld [vmem:[%s12 + $0x54] sm:$0xf]
    %v5231 = vld [vmem:[%s12 + $0x58] sm:$0xf]
    %v5232 = vld [vmem:[%s12 + $0x5c] sm:$0xf]
    %v5233 = vld [vmem:[%s12 + $0x60] sm:$0xf]
    %v5234 = vld [vmem:[%s12 + $0x64] sm:$0xf]
    %v5235 = vld [vmem:[%s12 + $0x68] sm:$0xf]
    %v5236 = vld [vmem:[%s12 + $0x6c] sm:$0xf]
    %v5237 = vld [vmem:[%s12 + $0x70] sm:$0xf]
    %v5238 = vld [vmem:[%s12 + $0x74] sm:$0xf]
    %v5239 = vld [vmem:[%s12 + $0x78] sm:$0xf]
    %v5240 = vld [vmem:[%s12 + $0x7c] sm:$0xf]
    %v5241 = vld [vmem:[%s12 + $0x80] sm:$0xf]
    %v5242 = vld [vmem:[%s12 + $0x84] sm:$0xf]
    %v5243 = vld [vmem:[%s12 + $0x88] sm:$0xf]
    %v5244 = vld [vmem:[%s12 + $0x8c] sm:$0xf]
    %v5245 = vld [vmem:[%s12 + $0x90] sm:$0xf]
    %v5246 = vld [vmem:[%s12 + $0x94] sm:$0xf]
    %v5247 = vld [vmem:[%s12 + $0x98] sm:$0xf]
    %v5248 = vld [vmem:[%s12 + $0x9c] sm:$0xf]
    %v5249 = vld [vmem:[%s12 + $0xa0] sm:$0xf]
    %v5250 = vld [vmem:[%s12 + $0xa4] sm:$0xf]
    %v5251 = vld [vmem:[%s12 + $0xa8] sm:$0xf]
    %v5252 = vld [vmem:[%s12 + $0xac] sm:$0xf]
    %v5253 = vld [vmem:[%s12 + $0xb0] sm:$0xf]
    %v5254 = vld [vmem:[%s12 + $0xb4] sm:$0xf]
    %v5255 = vld [vmem:[%s12 + $0xb8] sm:$0xf]
    %v5256 = vld [vmem:[%s12 + $0xbc] sm:$0xf]
    %v5257 = vld [vmem:[%s12 + $0xc0] sm:$0xf]
    %v5258 = vld [vmem:[%s12 + $0xc4] sm:$0xf]
    %v5259 = vld [vmem:[%s12 + $0xc8] sm:$0xf]
    %v5260 = vld [vmem:[%s12 + $0xcc] sm:$0xf]
    %v5261 = vld [vmem:[%s12 + $0xd0] sm:$0xf]
    %v5262 = vld [vmem:[%s12 + $0xd4] sm:$0xf]
    %v5263 = vld [vmem:[%s12 + $0xd8] sm:$0xf]
    %v5264 = vld [vmem:[%s12 + $0xdc] sm:$0xf]
    %v5265 = vld [vmem:[%s12 + $0xe0] sm:$0xf]
    %v5266 = vld [vmem:[%s12 + $0xe4] sm:$0xf]
    %v5267 = vld [vmem:[%s12 + $0xe8] sm:$0xf]
    %v5268 = vld [vmem:[%s12 + $0xec] sm:$0xf]
    %v5269 = vld [vmem:[%s12 + $0xf0] sm:$0xf]
    %v5270 = vld [vmem:[%s12 + $0xf4] sm:$0xf]
    %v5271 = vld [vmem:[%s12 + $0xf8] sm:$0xf]
    %v5272 = vld [vmem:[%s12 + $0xfc] sm:$0xf]
    %v5273 = vld [vmem:[%s12 + $0x100] sm:$0xf]
    %v5274 = vld [vmem:[%s12 + $0x104] sm:$0xf]
    %v5275 = vld [vmem:[%s12 + $0x108] sm:$0xf]
    %v5276 = vld [vmem:[%s12 + $0x10c] sm:$0xf]
    %v5277 = vld [vmem:[%s12 + $0x110] sm:$0xf]
    %v5278 = vld [vmem:[%s12 + $0x114] sm:$0xf]
    %v5279 = vld [vmem:[%s12 + $0x118] sm:$0xf]
    %v5280 = vld [vmem:[%s12 + $0x11c] sm:$0xf]
    %v5281 = vld [vmem:[%s13] sm:$0x1]
    %v5283 = vlaneseq
    %v5284 = vshrl.u32 %v5283, 7
    %v5285 = vsub.s32 0, %v5284
    %v5286 = vrot.slane %v5281, %v5285
    %v5360 = vunpack.c.l.b16 %v5209
    %v5361 = vunpack.c.l.b16 %v5210
    %v5362 = vunpack.c.l.b16 %v5211
    %v5363 = vunpack.c.l.b16 %v5212
    %v5364 = vunpack.c.l.b16 %v5213
    %v5365 = vunpack.c.l.b16 %v5214
    %v5366 = vunpack.c.l.b16 %v5215
    %v5367 = vunpack.c.l.b16 %v5216
    %v5368 = vunpack.c.l.b16 %v5217
    %v5369 = vunpack.c.l.b16 %v5218
    %v5370 = vunpack.c.l.b16 %v5219
    %v5371 = vunpack.c.l.b16 %v5220
    %v5372 = vunpack.c.l.b16 %v5221
    %v5373 = vunpack.c.l.b16 %v5222
    %v5374 = vunpack.c.l.b16 %v5223
    %v5375 = vunpack.c.l.b16 %v5224
    %v5376 = vunpack.c.l.b16 %v5225
    %v5377 = vunpack.c.l.b16 %v5226
    %v5378 = vunpack.c.l.b16 %v5227
    %v5379 = vunpack.c.l.b16 %v5228
    %v5380 = vunpack.c.l.b16 %v5229
    %v5381 = vunpack.c.l.b16 %v5230
    %v5382 = vunpack.c.l.b16 %v5231
    %v5383 = vunpack.c.l.b16 %v5232
    %v5384 = vunpack.c.l.b16 %v5233
    %v5385 = vunpack.c.l.b16 %v5234
    %v5386 = vunpack.c.l.b16 %v5235
    %v5387 = vunpack.c.l.b16 %v5236
    %v5388 = vunpack.c.l.b16 %v5237
    %v5389 = vunpack.c.l.b16 %v5238
    %v5390 = vunpack.c.l.b16 %v5239
    %v5391 = vunpack.c.l.b16 %v5240
    %v5392 = vunpack.c.l.b16 %v5241
    %v5393 = vunpack.c.l.b16 %v5242
    %v5394 = vunpack.c.l.b16 %v5243
    %v5395 = vunpack.c.l.b16 %v5244
    %v5396 = vunpack.c.l.b16 %v5245
    %v5397 = vunpack.c.l.b16 %v5246
    %v5398 = vunpack.c.l.b16 %v5247
    %v5399 = vunpack.c.l.b16 %v5248
    %v5400 = vunpack.c.l.b16 %v5249
    %v5401 = vunpack.c.l.b16 %v5250
    %v5402 = vunpack.c.l.b16 %v5251
    %v5403 = vunpack.c.l.b16 %v5252
    %v5404 = vunpack.c.l.b16 %v5253
    %v5405 = vunpack.c.l.b16 %v5254
    %v5406 = vunpack.c.l.b16 %v5255
    %v5407 = vunpack.c.l.b16 %v5256
    %v5408 = vunpack.c.l.b16 %v5257
    %v5409 = vunpack.c.l.b16 %v5258
    %v5410 = vunpack.c.l.b16 %v5259
    %v5411 = vunpack.c.l.b16 %v5260
    %v5412 = vunpack.c.l.b16 %v5261
    %v5413 = vunpack.c.l.b16 %v5262
    %v5414 = vunpack.c.l.b16 %v5263
    %v5415 = vunpack.c.l.b16 %v5264
    %v5416 = vunpack.c.l.b16 %v5265
    %v5417 = vunpack.c.l.b16 %v5266
    %v5418 = vunpack.c.l.b16 %v5267
    %v5419 = vunpack.c.l.b16 %v5268
    %v5420 = vunpack.c.l.b16 %v5269
    %v5421 = vunpack.c.l.b16 %v5270
    %v5422 = vunpack.c.l.b16 %v5271
    %v5423 = vunpack.c.l.b16 %v5272
    %v5424 = vunpack.c.l.b16 %v5273
    %v5425 = vunpack.c.l.b16 %v5274
    %v5426 = vunpack.c.l.b16 %v5275
    %v5427 = vunpack.c.l.b16 %v5276
    %v5428 = vunpack.c.l.b16 %v5277
    %v5429 = vunpack.c.l.b16 %v5278
    %v5430 = vunpack.c.l.b16 %v5279
    %v5431 = vunpack.c.l.b16 %v5280
    %v5432 = vpack.c.b16 %v5361, %v5360
    %v5433 = vpack.c.b16 %v5363, %v5362
    %v5434 = vpack.c.b16 %v5365, %v5364
    %v5435 = vpack.c.b16 %v5367, %v5366
    %v5436 = vpack.c.b16 %v5369, %v5368
    %v5437 = vpack.c.b16 %v5371, %v5370
    %v5438 = vpack.c.b16 %v5373, %v5372
    %v5439 = vpack.c.b16 %v5375, %v5374
    %v5440 = vpack.c.b16 %v5377, %v5376
    %v5441 = vpack.c.b16 %v5379, %v5378
    %v5442 = vpack.c.b16 %v5381, %v5380
    %v5443 = vpack.c.b16 %v5383, %v5382
    %v5444 = vpack.c.b16 %v5385, %v5384
    %v5445 = vpack.c.b16 %v5387, %v5386
    %v5446 = vpack.c.b16 %v5389, %v5388
    %v5447 = vpack.c.b16 %v5391, %v5390
    %v5448 = vpack.c.b16 %v5393, %v5392
    %v5449 = vpack.c.b16 %v5395, %v5394
    %v5450 = vpack.c.b16 %v5397, %v5396
    %v5451 = vpack.c.b16 %v5399, %v5398
    %v5452 = vpack.c.b16 %v5401, %v5400
    %v5453 = vpack.c.b16 %v5403, %v5402
    %v5454 = vpack.c.b16 %v5405, %v5404
    %v5455 = vpack.c.b16 %v5407, %v5406
    %v5456 = vpack.c.b16 %v5409, %v5408
    %v5457 = vpack.c.b16 %v5411, %v5410
    %v5458 = vpack.c.b16 %v5413, %v5412
    %v5459 = vpack.c.b16 %v5415, %v5414
    %v5460 = vpack.c.b16 %v5417, %v5416
    %v5461 = vpack.c.b16 %v5419, %v5418
    %v5462 = vpack.c.b16 %v5421, %v5420
    %v5463 = vpack.c.b16 %v5423, %v5422
    %v5464 = vpack.c.b16 %v5425, %v5424
    %v5465 = vpack.c.b16 %v5427, %v5426
    %v5466 = vpack.c.b16 %v5429, %v5428
    %v5467 = vpack.c.b16 %v5431, %v5430
    %v5505 = vsel %vm2066, %v5203, 0
    %v5508 = vsel %vm2066, %v5208, 0
    %5510 = vmatprep.subr.bf16.mxu0 0
    %5511 = vmatpush1.bf16.msra.mxu0 %v5432
    %5512 = vmatprep.subr.bf16.mxu0 0
    %5513 = vmatpush1.bf16.msra.mxu0 %v5433
    %5514 = vmatprep.subr.bf16.mxu0 0
    %5515 = vmatpush1.bf16.msra.mxu0 %v5434
    %5516 = vmatprep.subr.bf16.mxu0 0
    %5517 = vmatpush1.bf16.msra.mxu0 %v5435
    %5518 = vmatprep.subr.bf16.mxu0 0
    %5519 = vmatpush1.bf16.msra.mxu0 %v5436
    %5520 = vmatprep.subr.bf16.mxu0 0
    %5521 = vmatpush1.bf16.msra.mxu0 %v5437
    %5522 = vmatprep.subr.bf16.mxu0 0
    %5523 = vmatpush1.bf16.msra.mxu0 %v5438
    %5524 = vmatprep.subr.bf16.mxu0 0
    %5525 = vmatpush1.bf16.msra.mxu0 %v5439
    %5526 = vmatprep.subr.bf16.mxu0 0
    %5527 = vmatpush1.bf16.msra.mxu0 %v5440
    %5528 = vmatprep.subr.bf16.mxu0 0
    %5529 = vmatpush1.bf16.msra.mxu0 %v5441
    %5530 = vmatprep.subr.bf16.mxu0 0
    %5531 = vmatpush1.bf16.msra.mxu0 %v5442
    %5532 = vmatprep.subr.bf16.mxu0 0
    %5533 = vmatpush1.bf16.msra.mxu0 %v5443
    %5534 = vmatprep.subr.bf16.mxu0 0
    %5535 = vmatpush1.bf16.msra.mxu0 %v5444
    %5536 = vmatprep.subr.bf16.mxu0 0
    %5537 = vmatpush1.bf16.msra.mxu0 %v5445
    %5538 = vmatprep.subr.bf16.mxu0 0
    %5539 = vmatpush1.bf16.msra.mxu0 %v5446
    %5540 = vmatprep.subr.bf16.mxu0 0
    %5541 = vmatpush1.bf16.msra.mxu0 %v5447
    %5542 = vmatprep.mubr.bf16.mxu0 %v5200
    %5543 = vmatmul.mubr.bf16.gmra.mrb[0].mxu0 %v5199
    %v5544 = vpop.f32.mrb[0].mxu0
    %v5545 = vadd.f32 %v5286, %v5544
    %v5546 = vpop.f32.mrb[0].mxu0
    %v5547 = vpop.f32.mrb[0].mxu0
    %v5548 = vadd.f32 %v5286, %v5547
    %v5549 = vpop.f32.mrb[0].mxu0
    %5550 = vmatprep.mubr.bf16.mxu0 %v5205
    %5551 = vmatmul.mubr.bf16.gmra.mrb[0].mxu0 %v5204
    %v5552 = vpop.f32.mrb[0].mxu0
    %v5553 = vadd.f32 %v5286, %v5552
    %v5554 = vpop.f32.mrb[0].mxu0
    %v5555 = vpop.f32.mrb[0].mxu0
    %v5556 = vadd.f32 %v5286, %v5555
    %v5557 = vpop.f32.mrb[0].mxu0
    %5558 = vdwg.mxu0
    %5559 = vmatprep.subr.bf16.mxu0 0
    %5560 = vmatpush1.bf16.msra.mxu0 %v5448
    %5561 = vmatprep.subr.bf16.mxu0 0
    %5562 = vmatpush1.bf16.msra.mxu0 %v5449
    %5563 = vmatprep.subr.bf16.mxu0 0
    %5564 = vmatpush1.bf16.msra.mxu0 %v5450
    %5565 = vmatprep.subr.bf16.mxu0 0
    %5566 = vmatpush1.bf16.msra.mxu0 %v5451
    %5567 = vmatprep.subr.bf16.mxu0 0
    %5568 = vmatpush1.bf16.msra.mxu0 %v5452
    %5569 = vmatprep.subr.bf16.mxu0 0
    %5570 = vmatpush1.bf16.msra.mxu0 %v5453
    %5571 = vmatprep.subr.bf16.mxu0 0
    %5572 = vmatpush1.bf16.msra.mxu0 %v5454
    %5573 = vmatprep.subr.bf16.mxu0 0
    %5574 = vmatpush1.bf16.msra.mxu0 %v5455
    %5575 = vmatprep.subr.bf16.mxu0 0
    %5576 = vmatpush1.bf16.msra.mxu0 %v5456
    %5577 = vmatprep.subr.bf16.mxu0 0
    %5578 = vmatpush1.bf16.msra.mxu0 %v5457
    %5579 = vmatprep.subr.bf16.mxu0 0
    %5580 = vmatpush1.bf16.msra.mxu0 %v5458
    %5581 = vmatprep.subr.bf16.mxu0 0
    %5582 = vmatpush1.bf16.msra.mxu0 %v5459
    %5583 = vmatprep.subr.bf16.mxu0 0
    %5584 = vmatpush1.bf16.msra.mxu0 %v5460
    %5585 = vmatprep.subr.bf16.mxu0 0
    %5586 = vmatpush1.bf16.msra.mxu0 %v5461
    %5587 = vmatprep.subr.bf16.mxu0 0
    %5588 = vmatpush1.bf16.msra.mxu0 %v5462
    %5589 = vmatprep.subr.bf16.mxu0 0
    %5590 = vmatpush1.bf16.msra.mxu0 %v5463
    %5591 = vmatprep.mubr.bf16.mxu0 %v5202
    %5592 = vmatmul.mubr.bf16.gmra.mrb[0].mxu0 %v5201
    %v5593 = vpop.f32.mrb[0].mxu0
    %v5594 = vadd.f32 %v5545, %v5593
    %v5595 = vpop.f32.mrb[0].mxu0
    %v5596 = vpop.f32.mrb[0].mxu0
    %v5597 = vadd.f32 %v5548, %v5596
    %v5598 = vpop.f32.mrb[0].mxu0
    %5599 = vmatprep.mubr.bf16.mxu0 %v5207
    %5600 = vmatmul.mubr.bf16.gmra.mrb[0].mxu0 %v5206
    %v5601 = vpop.f32.mrb[0].mxu0
    %v5602 = vadd.f32 %v5553, %v5601
    %v5603 = vpop.f32.mrb[0].mxu0
    %v5604 = vpop.f32.mrb[0].mxu0
    %v5605 = vadd.f32 %v5556, %v5604
    %v5606 = vpop.f32.mrb[0].mxu0
    %5607 = vdwg.mxu0
    %5608 = vmatprep.subr.bf16.mxu0 0
    %5609 = vmatpush1.bf16.msra.mxu0 %v5464
    %5610 = vmatprep.subr.bf16.mxu0 0
    %5611 = vmatpush1.bf16.msra.mxu0 %v5465
    %5612 = vmatprep.subr.bf16.mxu0 0
    %5613 = vmatpush1.bf16.msra.mxu0 %v5466
    %5614 = vmatprep.subr.bf16.mxu0 0
    %5615 = vmatpush1.bf16.msra.mxu0 %v5467
    %5616 = vmatprep.subr.bf16.mxu0 0
    %5617 = vmatpush1.bf16.msra.mxu0 0
    %5618 = vmatprep.subr.bf16.mxu0 0
    %5619 = vmatpush1.bf16.msra.mxu0 0
    %5620 = vmatprep.subr.bf16.mxu0 0
    %5621 = vmatpush1.bf16.msra.mxu0 0
    %5622 = vmatprep.subr.bf16.mxu0 0
    %5623 = vmatpush1.bf16.msra.mxu0 0
    %5624 = vmatprep.subr.bf16.mxu0 0
    %5625 = vmatpush1.bf16.msra.mxu0 0
    %5626 = vmatprep.subr.bf16.mxu0 0
    %5627 = vmatpush1.bf16.msra.mxu0 0
    %5628 = vmatprep.subr.bf16.mxu0 0
    %5629 = vmatpush1.bf16.msra.mxu0 0
    %5630 = vmatprep.subr.bf16.mxu0 0
    %5631 = vmatpush1.bf16.msra.mxu0 0
    %5632 = vmatprep.subr.bf16.mxu0 0
    %5633 = vmatpush1.bf16.msra.mxu0 0
    %5634 = vmatprep.subr.bf16.mxu0 0
    %5635 = vmatpush1.bf16.msra.mxu0 0
    %5636 = vmatprep.subr.bf16.mxu0 0
    %5637 = vmatpush1.bf16.msra.mxu0 0
    %5638 = vmatprep.subr.bf16.mxu0 0
    %5639 = vmatpush1.bf16.msra.mxu0 0
    %5640 = vmatprep.mubr.bf16.mxu0 0
    %5641 = vmatmul.mubr.bf16.gmra.mrb[0].mxu0 %v5505
    %v5642 = vpop.f32.mrb[0].mxu0
    %v5643 = vadd.f32 %v5594, %v5642
    %v5644 = vpop.f32.mrb[0].mxu0
    %v5645 = vpop.f32.mrb[0].mxu0
    %v5646 = vadd.f32 %v5597, %v5645
    %v5647 = vpop.f32.mrb[0].mxu0
    %5648 = vmatprep.mubr.bf16.mxu0 0
    %5649 = vmatmul.mubr.bf16.gmra.mrb[0].mxu0 %v5508
    %v5650 = vpop.f32.mrb[0].mxu0
    %v5651 = vadd.f32 %v5602, %v5650
    %v5652 = vpop.f32.mrb[0].mxu0
    %v5653 = vpop.f32.mrb[0].mxu0
    %v5654 = vadd.f32 %v5605, %v5653
    %v5655 = vpop.f32.mrb[0].mxu0
    %5656 = vdwg.mxu0
    %v5657 = vmax.f32 %v5643, 0.0
    %v5658 = vmax.f32 %v5646, 0.0
    %v5659 = vmax.f32 %v5651, 0.0
    %v5660 = vmax.f32 %v5654, 0.0
    %v5661 = vadd.f32 %v5657, %v5658
    %v5662 = vrot.slane %v5661, 4
    %v5663 = vadd.f32 %v5661, %v5662
    %v5664 = vrot.slane %v5663, 2
    %v5665 = vadd.f32 %v5663, %v5664
    %v5666 = vrot.slane %v5665, 1
    %v5667 = vadd.f32 %v5665, %v5666
    %v5668 = vrcp.pop 16.0
    %v5669 = vmul.f32 %v5667, %v5668
    %v5670 = vadd.f32 %v5659, %v5660
    %v5671 = vrot.slane %v5670, 4
    %v5672 = vadd.f32 %v5670, %v5671
    %v5673 = vrot.slane %v5672, 2
    %v5674 = vadd.f32 %v5672, %v5673
    %v5675 = vrot.slane %v5674, 1
    %v5676 = vadd.f32 %v5674, %v5675
    %v5677 = vmul.f32 %v5676, %v5668
    %vm5678 = vcmask 1040384
    %v5679 = vsel %vm5678, %v5669, %v5677
    %v5680 = vpack.c.bf16 %v5679, %v5679
    %v5681 = vld [vmem:[%s14] sm:$0xf]
    %v5682 = vld [vmem:[%s14 + $0x4] sm:$0xf]
    %v5683 = vld [vmem:[%s14 + $0x8] sm:$0xf]
    %v5684 = vld [vmem:[%s14 + $0xc] sm:$0xf]
    %v5685 = vld [vmem:[%s14 + $0x10] sm:$0xf]
    %v5686 = vld [vmem:[%s14 + $0x14] sm:$0xf]
    %v5687 = vld [vmem:[%s14 + $0x18] sm:$0xf]
    %v5688 = vld [vmem:[%s14 + $0x1c] sm:$0xf]
    %v5689 = vld [vmem:[%s14 + $0x20] sm:$0xf]
    %v5690 = vld [vmem:[%s14 + $0x24] sm:$0xf]
    %v5691 = vld [vmem:[%s14 + $0x28] sm:$0xf]
    %v5692 = vld [vmem:[%s14 + $0x2c] sm:$0xf]
    %v5693 = vld [vmem:[%s14 + $0x30] sm:$0xf]
    %v5694 = vld [vmem:[%s14 + $0x34] sm:$0xf]
    %v5695 = vld [vmem:[%s14 + $0x38] sm:$0xf]
    %v5696 = vld [vmem:[%s14 + $0x3c] sm:$0xf]
    %v5697 = vld [vmem:[%s15] sm:$0x1]
    %v5699 = vlaneseq
    %v5700 = vshrl.u32 %v5699, 7
    %v5701 = vsub.s32 0, %v5700
    %v5702 = vrot.slane %v5697, %v5701
    %v5720 = vunpack.c.l.b16 %v5681
    %v5721 = vunpack.c.l.b16 %v5682
    %v5722 = vunpack.c.l.b16 %v5683
    %v5723 = vunpack.c.l.b16 %v5684
    %v5724 = vunpack.c.l.b16 %v5685
    %v5725 = vunpack.c.l.b16 %v5686
    %v5726 = vunpack.c.l.b16 %v5687
    %v5727 = vunpack.c.l.b16 %v5688
    %v5728 = vunpack.c.l.b16 %v5689
    %v5729 = vunpack.c.l.b16 %v5690
    %v5730 = vunpack.c.l.b16 %v5691
    %v5731 = vunpack.c.l.b16 %v5692
    %v5732 = vunpack.c.l.b16 %v5693
    %v5733 = vunpack.c.l.b16 %v5694
    %v5734 = vunpack.c.l.b16 %v5695
    %v5735 = vunpack.c.l.b16 %v5696
    %v5736 = vpack.c.b16 %v5721, %v5720
    %v5737 = vpack.c.b16 %v5723, %v5722
    %v5738 = vpack.c.b16 %v5725, %v5724
    %v5739 = vpack.c.b16 %v5727, %v5726
    %v5740 = vpack.c.b16 %v5729, %v5728
    %v5741 = vpack.c.b16 %v5731, %v5730
    %v5742 = vpack.c.b16 %v5733, %v5732
    %v5743 = vpack.c.b16 %v5735, %v5734
    %5752 = vmatprep.subr.bf16.mxu0 0
    %5753 = vmatpush1.bf16.msra.mxu0 %v5736
    %5754 = vmatprep.subr.bf16.mxu0 0
    %5755 = vmatpush1.bf16.msra.mxu0 %v5737
    %5756 = vmatprep.subr.bf16.mxu0 0
    %5757 = vmatpush1.bf16.msra.mxu0 %v5738
    %5758 = vmatprep.subr.bf16.mxu0 0
    %5759 = vmatpush1.bf16.msra.mxu0 %v5739
    %5760 = vmatprep.subr.bf16.mxu0 0
    %5761 = vmatpush1.bf16.msra.mxu0 %v5740
    %5762 = vmatprep.subr.bf16.mxu0 0
    %5763 = vmatpush1.bf16.msra.mxu0 %v5741
    %5764 = vmatprep.subr.bf16.mxu0 0
    %5765 = vmatpush1.bf16.msra.mxu0 %v5742
    %5766 = vmatprep.subr.bf16.mxu0 0
    %5767 = vmatpush1.bf16.msra.mxu0 %v5743
    %5768 = vmatprep.subr.bf16.mxu0 0
    %5769 = vmatpush1.bf16.msra.mxu0 0
    %5770 = vmatprep.subr.bf16.mxu0 0
    %5771 = vmatpush1.bf16.msra.mxu0 0
    %5772 = vmatprep.subr.bf16.mxu0 0
    %5773 = vmatpush1.bf16.msra.mxu0 0
    %5774 = vmatprep.subr.bf16.mxu0 0
    %5775 = vmatpush1.bf16.msra.mxu0 0
    %5776 = vmatprep.subr.bf16.mxu0 0
    %5777 = vmatpush1.bf16.msra.mxu0 0
    %5778 = vmatprep.subr.bf16.mxu0 0
    %5779 = vmatpush1.bf16.msra.mxu0 0
    %5780 = vmatprep.subr.bf16.mxu0 0
    %5781 = vmatpush1.bf16.msra.mxu0 0
    %5782 = vmatprep.subr.bf16.mxu0 0
    %5783 = vmatpush1.bf16.msra.mxu0 0
    %5784 = vmatprep.mubr.bf16.mxu0 0
    %5785 = vmatmul.mubr.bf16.gmra.mrb[0].mxu0 %v5680
    %v5786 = vpop.f32.mrb[0].mxu0
    %v5787 = vadd.f32 %v5702, %v5786
    %v5788 = vpop.f32.mrb[0].mxu0
    %v5789 = vpop.f32.mrb[0].mxu0
    %v5790 = vpop.f32.mrb[0].mxu0
    %5791 = vdwg.mxu0
    %v5794 = vunpack.c.l.s4 1966171168
    %v5795 = vunpack.c.0.s8 %v5794
    %v5796 = vlaneseq
    %v5797 = vshrl.u32 %v5796, 7
    %v5798 = vsub.s32 %v5795, %v5797
    %v5799 = vrot.slane %v5787, %v5798
    %v5800 = vcombine.high %v5799, %v5799
    %v5802 = vunpack.c.l.s4 1966171168
    %v5803 = vunpack.c.0.s8 %v5802
    %v5804 = vlaneseq
    %v5805 = vshrl.u32 %v5804, 7
    %v5806 = vsub.s32 %v5803, %v5805
    %v5807 = vrot.slane %v5799, %v5806
    %v5809 = vunpack.c.l.s4 1966171168
    %v5810 = vunpack.c.0.s8 %v5809
    %v5811 = vlaneseq
    %v5812 = vshrl.u32 %v5811, 7
    %v5813 = vsub.s32 %v5810, %v5812
    %v5814 = vrot.slane %v5800, %v5813
    %5817 = vst [vmem:[#allocation2] sm:$0x1] %v5807
    %5818 = vst [vmem:[#allocation2 + $0x1] sm:$0x1] %v5814
    // Predicated region
    $region66: #{forward.1} parent=1 // pred_check
      _
    $region67: #{forward.1} parent=1 // pred_check_branch
      %5820 = sbr.rel (0) target = $region69
    $region68: #{forward.1} parent=1 // pred_region
      %s5822 = ssub.s32 32, 32
      %5823 = vsyncadd [#allocation3], %s5822
      %s5824 = sshll.u32 [#allocation2], 4
      %s5825 = int_to_ptr.vmem [resolvable:$true] %s5824
      %5830 = dma.vmem_to_hbm [thread:$0]  %s5825, 32, %s16, [#allocation3], 16, 16, 1
    $region69: #{forward.1} parent=1 // pred_fallthru
      _
    // Predicated region
    $region70: #{forward.1} parent=1 // pred_check
      _
    $region71: #{forward.1} parent=1 // pred_check_branch
      %5832 = sbr.rel (0) target = $region73
    $region72: #{forward.1} parent=1 // pred_region
      %5833 = dma.done [#allocation3], 32
    $region73: #{forward.1} parent=1 // pred_fallthru
      _
    %5834 = vsyncpa [#allocation3], 1

</llo_original>
